<compile_context>
chip_gen: v7x
topology: tpu7x:2x2x1
jax: 0.10.0
libtpu: 0.0.40
codegen_flags: <defaults>
</compile_context>

<pallas_src>
import jax
import jax.numpy as jnp
from jax import lax
from jax.experimental import pallas as pl
from jax.experimental.pallas import tpu as pltpu

# Small, self-consistent hyperparameters (scaled down from the original 768-dim module).
BATCH = 4
EMB_DIM = 128                       # PrimaryCaps in_channels (768 in the original)
DCT_SPATIAL = 16                    # DCT feature-map side (320 in the original)
DCT_IN = DCT_SPATIAL * DCT_SPATIAL  # flattened DCT features
PC_CAPS = 8                         # PrimaryCaps num_capsules
PC_ROUTES = 64                      # PrimaryCaps num_routes == out_channels
PC_COLS = PC_CAPS * PC_ROUTES       # 512
DC_CAPS = 2                         # DigitCaps num_capsules
DC_OUT = 64                         # DigitCaps out_channels
DC_ROUTES = 3 * PC_ROUTES           # 192 == DigitCaps num_routes
DC_COLS = DC_CAPS * DC_OUT          # 128
EPS = 1e-7
NUM_ROUTING_ITERS = 3


def capsnet_kernel(img_ref, capt_ref, dctf_ref,
                   w_emb_ref, b_emb_ref,
                   w_img_ref, w_capt_ref, w_dct_ref,
                   b_img_ref, b_capt_ref, b_dct_ref,
                   w_dig_ref,
                   out_ref):
    f32 = jnp.float32
    B = img_ref.shape[0]

    # ---------------- DCT_emb: log|x|, global standard-scale, Linear, ReLU ----------------
    x = jnp.log(jnp.abs(dctf_ref[...]) + 1e-12)                      # (B, Fd)
    n = float(x.shape[0] * x.shape[1])
    mean = jnp.sum(jnp.sum(x, axis=1, keepdims=True), axis=0, keepdims=True) * (1.0 / n)
    xc = x - mean
    # torch .std() is unbiased (n - 1 denominator)
    var = jnp.sum(jnp.sum(xc * xc, axis=1, keepdims=True), axis=0, keepdims=True) * (1.0 / (n - 1.0))
    xs = xc * lax.rsqrt(var)
    dct_emb = jnp.dot(xs.astype(jnp.bfloat16), w_emb_ref[...],
                      preferred_element_type=f32) + b_emb_ref[...]
    dct_emb = jnp.maximum(dct_emb, 0.0)                              # (B, D) f32

    # ---------------- PrimaryCaps: per-modality matmul + capsule-wise squash ----------------
    # Packed columns are capsule-major (j = cap*PC_ROUTES + route), so the per-route capsule
    # sum is a segmented slice-add in VMEM: no G/GT group matrices, no HBM traffic for them.
    def primary(x_f32, w_ref, b_ref):
        y = jnp.dot(x_f32.astype(jnp.bfloat16), w_ref[...],
                    preferred_element_type=f32) + b_ref[...]          # (B, 512) f32
        sq = y * y
        tot = sq[:, 0:PC_ROUTES]
        for cap in range(1, PC_CAPS):
            tot = tot + sq[:, cap * PC_ROUTES:(cap + 1) * PC_ROUTES]  # (B, 64) = |s_route|^2
        sq_b = jnp.concatenate([tot] * PC_CAPS, axis=1)               # broadcast per capsule, (B, 512)
        # squash factor on EUP slots (rsqrt + approx reciprocal), no vector divide
        factor = sq_b * lax.rsqrt(sq_b + EPS) * pl.reciprocal(1.0 + sq_b, approx=True)
        return y * factor                                             # squashed, (B, 512)

    u_img = primary(img_ref[...], w_img_ref, b_img_ref)
    u_capt = primary(capt_ref[...], w_capt_ref, b_capt_ref)
    u_dct = primary(dct_emb, w_dct_ref, b_dct_ref)

    # ---------------- DigitCaps: u_hat + dynamic routing, all in VMEM ----------------
    # comp[i][b, r] = primary-capsule component i of global route r (img | capt | dct order).
    comp = [jnp.concatenate([u_img[:, i * PC_ROUTES:(i + 1) * PC_ROUTES],
                             u_capt[:, i * PC_ROUTES:(i + 1) * PC_ROUTES],
                             u_dct[:, i * PC_ROUTES:(i + 1) * PC_ROUTES]], axis=1)
            for i in range(PC_CAPS)]                                  # each (B, 192)
    wdig = [w_dig_ref[i].astype(f32) for i in range(PC_CAPS)]         # each (128, 192)

    # u_hat[b][jc, r], jc = digit_cap*64 + o  (routes on lanes, output dims on sublanes)
    u_hat = []
    for b in range(B):
        acc = wdig[0] * comp[0][b:b + 1, :]
        for i in range(1, PC_CAPS):
            acc = acc + wdig[i] * comp[i][b:b + 1, :]
        u_hat.append(acc)                                             # (128, 192) f32

    # b_ij logits, replicated over the 64 'o' rows of each digit capsule block.
    blog = jnp.zeros((DC_COLS, DC_ROUTES), f32)
    v = [None] * B
    for it in range(NUM_ROUTING_ITERS):
        # softmax over routes (lane axis); shared across the batch (b_ij has batch dim 1)
        mx = jnp.max(blog, axis=1, keepdims=True)
        e = jnp.exp(blog - mx)
        c_route = e / jnp.sum(e, axis=1, keepdims=True)               # (128, 192)
        for b in range(B):
            s = jnp.sum(c_route * u_hat[b], axis=1, keepdims=True)    # (128, 1)  == s_j[b]
            sq = s * s
            # torch squash over the size-1 trailing dim -> elementwise
            v[b] = sq * s * lax.rsqrt(sq + EPS) * pl.reciprocal(1.0 + sq, approx=True)
        if it < NUM_ROUTING_ITERS - 1:
            agree = u_hat[0] * v[0]
            for b in range(1, B):
                agree = agree + u_hat[b] * v[b]                       # (128, 192)
            new_blocks = []
            for cd in range(DC_CAPS):
                a_cd = jnp.sum(agree[cd * DC_OUT:(cd + 1) * DC_OUT, :],
                               axis=0, keepdims=True) * (1.0 / B)     # (1, 192): mean_b a_ij
                new_blocks.append(blog[cd * DC_OUT:(cd + 1) * DC_OUT, :] + a_cd)
            blog = jnp.concatenate(new_blocks, axis=0)

    # (128, B): one column per batch element (2 KiB); wrapper transposes to (B, 2, 64, 1).
    out_ref[...] = jnp.concatenate(v, axis=1)


# ---------------- parameter init / packing ----------------
def init_params(key):
    """Raw f32 parameters, laid out exactly like the torch module."""
    ks = jax.random.split(key, 9)
    bound_e = 1.0 / float(DCT_IN) ** 0.5
    W_emb = jax.random.uniform(ks[0], (EMB_DIM, DCT_IN), jnp.float32, -bound_e, bound_e)
    b_emb = jax.random.uniform(ks[1], (EMB_DIM,), jnp.float32, -bound_e, bound_e)
    bound_p = 1.0 / float(EMB_DIM) ** 0.5

    def prim(kw, kb):
        W = jax.random.uniform(kw, (PC_CAPS, PC_ROUTES, EMB_DIM), jnp.float32, -bound_p, bound_p)
        b = jax.random.uniform(kb, (PC_CAPS, PC_ROUTES), jnp.float32, -bound_p, bound_p)
        return W, b

    Wi, bi = prim(ks[2], ks[3])
    Wc, bc = prim(ks[4], ks[5])
    Wd, bd = prim(ks[6], ks[7])
    W_dig = jax.random.normal(ks[8], (1, DC_ROUTES, DC_CAPS, DC_OUT, PC_CAPS), jnp.float32)
    return dict(W_emb=W_emb, b_emb=b_emb, Wi=Wi, bi=bi, Wc=Wc, bc=bc, Wd=Wd, bd=bd, W_dig=W_dig)


def pack_params(raw):
    """Kernel layout: bf16 weight matrices, capsule-major packing, f32 biases."""
    def pack_prim(W, b):
        # (C, R, D) -> (D, C*R) with column j = cap*R + route  (capsule-major)
        Wp = jnp.transpose(W, (2, 0, 1)).reshape(EMB_DIM, PC_COLS).astype(jnp.bfloat16)
        bp = b.reshape(1, PC_COLS).astype(jnp.float32)
        return Wp, bp

    w_emb = raw['W_emb'].T.astype(jnp.bfloat16)                       # (Fd, D)
    b_emb = raw['b_emb'].reshape(1, EMB_DIM).astype(jnp.float32)
    wi, bi = pack_prim(raw['Wi'], raw['bi'])
    wc, bc = pack_prim(raw['Wc'], raw['bc'])
    wd, bd = pack_prim(raw['Wd'], raw['bd'])
    # DigitCaps W (1, R, Cd, O, Ci) -> (Ci, Cd*O, R): slab i is used against primary component i.
    wdig = jnp.transpose(raw['W_dig'][0], (3, 1, 2, 0)).reshape(
        PC_CAPS, DC_COLS, DC_ROUTES).astype(jnp.bfloat16)
    return (w_emb, b_emb, wi, wc, wd, bi, bc, bd, wdig)


# ---------------- forward wrapper ----------------
@jax.jit
def capsnet_forward(img_emb, capt_emb, dct_features, packed):
    w_emb, b_emb, wi, wc, wd, bi, bc, bd, wdig = packed
    B = img_emb.shape[0]
    dct_flat = dct_features.reshape(B, -1)                            # torch .view(B, -1)
    vmem = pl.BlockSpec(memory_space=pltpu.MemorySpace.VMEM)
    # NOTE: at B=4 the whole forward is one gridless TensorCore invocation (<1 MiB of
    # weights, ~3 MiB VMEM peak).  For production batches (>=256) add
    # grid=(pl.cdiv(B, 128),) over the batch with dimension_semantics=("parallel",) so
    # v7x's two TensorCores are both used and the MXU rows actually fill up.
    outT = pl.pallas_call(
        capsnet_kernel,
        out_shape=jax.ShapeDtypeStruct((DC_COLS, B), jnp.float32),
        in_specs=[vmem] * 12,
        out_specs=vmem,
    )(img_emb, capt_emb, dct_flat, w_emb, b_emb, wi, wc, wd, bi, bc, bd, wdig)
    return outT.T.reshape(B, DC_CAPS, DC_OUT, 1)                      # == torch v_j.squeeze(1)


# ---------------- pure-JAX f32 reference (faithful to the torch module) ----------------
def reference_forward(img_emb, capt_emb, dct_features, raw):
    B = img_emb.shape[0]
    x = dct_features.reshape(B, -1)
    x = jnp.log(jnp.abs(x) + 1e-12)
    mean = x.mean()
    std = jnp.sqrt(jnp.sum((x - mean) ** 2) / (x.size - 1))
    x = (x - mean) / std
    dct_emb = jax.nn.relu(x @ raw['W_emb'].T + raw['b_emb'])

    def modality(xm, W, b):                                           # W (C,R,D), b (C,R)
        return jnp.einsum('bd,crd->brc', xm, W) + b.T[None]           # (B, R, C)

    combined = jnp.concatenate([modality(img_emb, raw['Wi'], raw['bi']),
                                modality(capt_emb, raw['Wc'], raw['bc']),
                                modality(dct_emb, raw['Wd'], raw['bd'])], axis=1)  # (B,192,8)
    sqn = jnp.sum(combined ** 2, axis=-1, keepdims=True)
    u = sqn * combined / ((1.0 + sqn) * jnp.sqrt(sqn + EPS))

    W = raw['W_dig'][0]                                               # (192, 2, 64, 8)
    u_hat = jnp.einsum('rcoi,bri->brco', W, u)                        # (B, 192, 2, 64)
    b_ij = jnp.zeros((DC_ROUTES, DC_CAPS), jnp.float32)
    v_j = None
    for it in range(NUM_ROUTING_ITERS):
        c_ij = jax.nn.softmax(b_ij, axis=0)
        s_j = jnp.einsum('rc,brco->bco', c_ij, u_hat)
        sq = s_j ** 2
        v_j = sq * s_j / ((1.0 + sq) * jnp.sqrt(sq + EPS))
        if it < NUM_ROUTING_ITERS - 1:
            a_ij = jnp.einsum('brco,bco->brc', u_hat, v_j)
            b_ij = b_ij + a_ij.mean(axis=0)
    return v_j[..., None]                                             # (B, 2, 64, 1)


if __name__ == "__main__":
    key = jax.random.PRNGKey(0)
    k_img, k_capt, k_dct, k_par = jax.random.split(key, 4)
    img_emb = jax.random.normal(k_img, (BATCH, EMB_DIM), jnp.float32)
    capt_emb = jax.random.normal(k_capt, (BATCH, EMB_DIM), jnp.float32)
    dct_features = jax.random.normal(k_dct, (BATCH, DCT_SPATIAL, DCT_SPATIAL), jnp.float32)

    raw = init_params(k_par)
    packed = pack_params(raw)

    out = capsnet_forward(img_emb, capt_emb, dct_features, packed)
    out = jax.block_until_ready(out)
    assert out.shape == (BATCH, DC_CAPS, DC_OUT, 1), out.shape

    ref = reference_forward(img_emb, capt_emb, dct_features, raw)
    err = float(jnp.max(jnp.abs(out - ref)))
    # Tolerance covers the bf16 weight/activation quantization + approx EUP reciprocal
    # recommended by the perf review (reference is the exact f32 torch semantics).
    assert jnp.allclose(out, ref, rtol=5e-2, atol=5e-3), f"max abs err {err}"
    print("KERNEL_OK")
</pallas_src>

<mosaic_0001>
module attributes {stable_mosaic.version = 11 : i64} {
  func.func @capsnet_kernel(%arg0: memref<4x128xf32, #tpu.memory_space<vmem>>, %arg1: memref<4x128xf32, #tpu.memory_space<vmem>>, %arg2: memref<4x256xf32, #tpu.memory_space<vmem>>, %arg3: memref<256x128xbf16, #tpu.memory_space<vmem>>, %arg4: memref<1x128xf32, #tpu.memory_space<vmem>>, %arg5: memref<128x512xbf16, #tpu.memory_space<vmem>>, %arg6: memref<128x512xbf16, #tpu.memory_space<vmem>>, %arg7: memref<128x512xbf16, #tpu.memory_space<vmem>>, %arg8: memref<1x512xf32, #tpu.memory_space<vmem>>, %arg9: memref<1x512xf32, #tpu.memory_space<vmem>>, %arg10: memref<1x512xf32, #tpu.memory_space<vmem>>, %arg11: memref<8x128x192xbf16, #tpu.memory_space<vmem>>, %arg12: memref<128x4xf32, #tpu.memory_space<vmem>>) attributes {dimension_semantics = [], scalar_prefetch = 0 : i64, scratch_operands = 0 : i64, tpu.core_type = #tpu.core_type<tc>} {
    %c0 = arith.constant 0 : index
    %c0_0 = arith.constant 0 : index
    %0 = vector.load %arg2[%c0, %c0_0] : memref<4x256xf32, #tpu.memory_space<vmem>>, vector<4x256xf32>
    %1 = math.absf %0 : vector<4x256xf32>
    %cst = arith.constant 9.99999996E-13 : f32
    %2 = vector.broadcast %cst : f32 to vector<4x256xf32>
    %3 = arith.addf %1, %2 : vector<4x256xf32>
    %4 = math.log %3 : vector<4x256xf32>
    %cst_1 = arith.constant dense<0.000000e+00> : vector<4xf32>
    %5 = vector.multi_reduction <add>, %4, %cst_1 [1] : vector<4x256xf32> to vector<4xf32>
    %6 = vector.shape_cast %5 : vector<4xf32> to vector<4x1xf32>
    %cst_2 = arith.constant dense<0.000000e+00> : vector<1xf32>
    %7 = vector.multi_reduction <add>, %6, %cst_2 [0] : vector<4x1xf32> to vector<1xf32>
    %8 = vector.shape_cast %7 : vector<1xf32> to vector<1x1xf32>
    %cst_3 = arith.constant 9.765625E-4 : f32
    %9 = vector.broadcast %cst_3 : f32 to vector<1x1xf32>
    %10 = arith.mulf %8, %9 : vector<1x1xf32>
    %11 = vector.broadcast %10 : vector<1x1xf32> to vector<4x256xf32>
    %12 = arith.subf %4, %11 : vector<4x256xf32>
    %13 = arith.mulf %12, %12 : vector<4x256xf32>
    %cst_4 = arith.constant dense<0.000000e+00> : vector<4xf32>
    %14 = vector.multi_reduction <add>, %13, %cst_4 [1] : vector<4x256xf32> to vector<4xf32>
    %15 = vector.shape_cast %14 : vector<4xf32> to vector<4x1xf32>
    %cst_5 = arith.constant dense<0.000000e+00> : vector<1xf32>
    %16 = vector.multi_reduction <add>, %15, %cst_5 [0] : vector<4x1xf32> to vector<1xf32>
    %17 = vector.shape_cast %16 : vector<1xf32> to vector<1x1xf32>
    %cst_6 = arith.constant 9.77517105E-4 : f32
    %18 = vector.broadcast %cst_6 : f32 to vector<1x1xf32>
    %19 = arith.mulf %17, %18 : vector<1x1xf32>
    %20 = math.rsqrt %19 : vector<1x1xf32>
    %21 = vector.broadcast %20 : vector<1x1xf32> to vector<4x256xf32>
    %22 = arith.mulf %12, %21 : vector<4x256xf32>
    %23 = arith.truncf %22 : vector<4x256xf32> to vector<4x256xbf16>
    %c0_7 = arith.constant 0 : index
    %c0_8 = arith.constant 0 : index
    %24 = vector.load %arg3[%c0_7, %c0_8] : memref<256x128xbf16, #tpu.memory_space<vmem>>, vector<256x128xbf16>
    %cst_9 = arith.constant dense<0.000000e+00> : vector<4x128xf32>
    %25 = tpu.matmul %23, %24, %cst_9 {dimension_numbers = #tpu.dot_dimension_numbers<[1], [0], [0], [1], [0, 0, 1, 1], [], []>} : vector<4x256xbf16>, vector<256x128xbf16>, vector<4x128xf32> -> vector<4x128xf32>
    %c0_10 = arith.constant 0 : index
    %c0_11 = arith.constant 0 : index
    %26 = vector.load %arg4[%c0_10, %c0_11] : memref<1x128xf32, #tpu.memory_space<vmem>>, vector<1x128xf32>
    %27 = vector.broadcast %26 : vector<1x128xf32> to vector<4x128xf32>
    %28 = arith.addf %25, %27 : vector<4x128xf32>
    %cst_12 = arith.constant 0.000000e+00 : f32
    %29 = vector.broadcast %cst_12 : f32 to vector<4x128xf32>
    %30 = arith.maximumf %28, %29 : vector<4x128xf32>
    %c0_13 = arith.constant 0 : index
    %c0_14 = arith.constant 0 : index
    %31 = vector.load %arg0[%c0_13, %c0_14] : memref<4x128xf32, #tpu.memory_space<vmem>>, vector<4x128xf32>
    %32 = arith.truncf %31 : vector<4x128xf32> to vector<4x128xbf16>
    %c0_15 = arith.constant 0 : index
    %c0_16 = arith.constant 0 : index
    %33 = vector.load %arg5[%c0_15, %c0_16] : memref<128x512xbf16, #tpu.memory_space<vmem>>, vector<128x512xbf16>
    %cst_17 = arith.constant dense<0.000000e+00> : vector<4x512xf32>
    %34 = tpu.matmul %32, %33, %cst_17 {dimension_numbers = #tpu.dot_dimension_numbers<[1], [0], [0], [1], [0, 0, 1, 1], [], []>} : vector<4x128xbf16>, vector<128x512xbf16>, vector<4x512xf32> -> vector<4x512xf32>
    %c0_18 = arith.constant 0 : index
    %c0_19 = arith.constant 0 : index
    %35 = vector.load %arg8[%c0_18, %c0_19] : memref<1x512xf32, #tpu.memory_space<vmem>>, vector<1x512xf32>
    %36 = vector.broadcast %35 : vector<1x512xf32> to vector<4x512xf32>
    %37 = arith.addf %34, %36 : vector<4x512xf32>
    %38 = arith.mulf %37, %37 : vector<4x512xf32>
    %39 = vector.extract_strided_slice %38 {offsets = [0, 0], sizes = [4, 64], strides = [1, 1]} : vector<4x512xf32> to vector<4x64xf32>
    %40 = vector.extract_strided_slice %38 {offsets = [0, 64], sizes = [4, 64], strides = [1, 1]} : vector<4x512xf32> to vector<4x64xf32>
    %41 = arith.addf %39, %40 : vector<4x64xf32>
    %42 = vector.extract_strided_slice %38 {offsets = [0, 128], sizes = [4, 64], strides = [1, 1]} : vector<4x512xf32> to vector<4x64xf32>
    %43 = arith.addf %41, %42 : vector<4x64xf32>
    %44 = vector.extract_strided_slice %38 {offsets = [0, 192], sizes = [4, 64], strides = [1, 1]} : vector<4x512xf32> to vector<4x64xf32>
    %45 = arith.addf %43, %44 : vector<4x64xf32>
    %46 = vector.extract_strided_slice %38 {offsets = [0, 256], sizes = [4, 64], strides = [1, 1]} : vector<4x512xf32> to vector<4x64xf32>
    %47 = arith.addf %45, %46 : vector<4x64xf32>
    %48 = vector.extract_strided_slice %38 {offsets = [0, 320], sizes = [4, 64], strides = [1, 1]} : vector<4x512xf32> to vector<4x64xf32>
    %49 = arith.addf %47, %48 : vector<4x64xf32>
    %50 = vector.extract_strided_slice %38 {offsets = [0, 384], sizes = [4, 64], strides = [1, 1]} : vector<4x512xf32> to vector<4x64xf32>
    %51 = arith.addf %49, %50 : vector<4x64xf32>
    %52 = vector.extract_strided_slice %38 {offsets = [0, 448], sizes = [4, 64], strides = [1, 1]} : vector<4x512xf32> to vector<4x64xf32>
    %53 = arith.addf %51, %52 : vector<4x64xf32>
    %54 = tpu.concatenate %53, %53, %53, %53, %53, %53, %53, %53 in 1 : vector<4x64xf32>, vector<4x64xf32>, vector<4x64xf32>, vector<4x64xf32>, vector<4x64xf32>, vector<4x64xf32>, vector<4x64xf32>, vector<4x64xf32> -> vector<4x512xf32>
    %cst_20 = arith.constant 1.000000e-07 : f32
    %55 = vector.broadcast %cst_20 : f32 to vector<4x512xf32>
    %56 = arith.addf %54, %55 : vector<4x512xf32>
    %57 = math.rsqrt %56 : vector<4x512xf32>
    %58 = arith.mulf %54, %57 : vector<4x512xf32>
    %cst_21 = arith.constant 1.000000e+00 : f32
    %59 = vector.broadcast %cst_21 : f32 to vector<4x512xf32>
    %60 = arith.addf %59, %54 : vector<4x512xf32>
    %61 = tpu.reciprocal %60 {approx = true} : vector<4x512xf32> -> vector<4x512xf32>
    %62 = arith.mulf %58, %61 : vector<4x512xf32>
    %63 = arith.mulf %37, %62 : vector<4x512xf32>
    %c0_22 = arith.constant 0 : index
    %c0_23 = arith.constant 0 : index
    %64 = vector.load %arg1[%c0_22, %c0_23] : memref<4x128xf32, #tpu.memory_space<vmem>>, vector<4x128xf32>
    %65 = arith.truncf %64 : vector<4x128xf32> to vector<4x128xbf16>
    %c0_24 = arith.constant 0 : index
    %c0_25 = arith.constant 0 : index
    %66 = vector.load %arg6[%c0_24, %c0_25] : memref<128x512xbf16, #tpu.memory_space<vmem>>, vector<128x512xbf16>
    %cst_26 = arith.constant dense<0.000000e+00> : vector<4x512xf32>
    %67 = tpu.matmul %65, %66, %cst_26 {dimension_numbers = #tpu.dot_dimension_numbers<[1], [0], [0], [1], [0, 0, 1, 1], [], []>} : vector<4x128xbf16>, vector<128x512xbf16>, vector<4x512xf32> -> vector<4x512xf32>
    %c0_27 = arith.constant 0 : index
    %c0_28 = arith.constant 0 : index
    %68 = vector.load %arg9[%c0_27, %c0_28] : memref<1x512xf32, #tpu.memory_space<vmem>>, vector<1x512xf32>
    %69 = vector.broadcast %68 : vector<1x512xf32> to vector<4x512xf32>
    %70 = arith.addf %67, %69 : vector<4x512xf32>
    %71 = arith.mulf %70, %70 : vector<4x512xf32>
    %72 = vector.extract_strided_slice %71 {offsets = [0, 0], sizes = [4, 64], strides = [1, 1]} : vector<4x512xf32> to vector<4x64xf32>
    %73 = vector.extract_strided_slice %71 {offsets = [0, 64], sizes = [4, 64], strides = [1, 1]} : vector<4x512xf32> to vector<4x64xf32>
    %74 = arith.addf %72, %73 : vector<4x64xf32>
    %75 = vector.extract_strided_slice %71 {offsets = [0, 128], sizes = [4, 64], strides = [1, 1]} : vector<4x512xf32> to vector<4x64xf32>
    %76 = arith.addf %74, %75 : vector<4x64xf32>
    %77 = vector.extract_strided_slice %71 {offsets = [0, 192], sizes = [4, 64], strides = [1, 1]} : vector<4x512xf32> to vector<4x64xf32>
    %78 = arith.addf %76, %77 : vector<4x64xf32>
    %79 = vector.extract_strided_slice %71 {offsets = [0, 256], sizes = [4, 64], strides = [1, 1]} : vector<4x512xf32> to vector<4x64xf32>
    %80 = arith.addf %78, %79 : vector<4x64xf32>
    %81 = vector.extract_strided_slice %71 {offsets = [0, 320], sizes = [4, 64], strides = [1, 1]} : vector<4x512xf32> to vector<4x64xf32>
    %82 = arith.addf %80, %81 : vector<4x64xf32>
    %83 = vector.extract_strided_slice %71 {offsets = [0, 384], sizes = [4, 64], strides = [1, 1]} : vector<4x512xf32> to vector<4x64xf32>
    %84 = arith.addf %82, %83 : vector<4x64xf32>
    %85 = vector.extract_strided_slice %71 {offsets = [0, 448], sizes = [4, 64], strides = [1, 1]} : vector<4x512xf32> to vector<4x64xf32>
    %86 = arith.addf %84, %85 : vector<4x64xf32>
    %87 = tpu.concatenate %86, %86, %86, %86, %86, %86, %86, %86 in 1 : vector<4x64xf32>, vector<4x64xf32>, vector<4x64xf32>, vector<4x64xf32>, vector<4x64xf32>, vector<4x64xf32>, vector<4x64xf32>, vector<4x64xf32> -> vector<4x512xf32>
    %cst_29 = arith.constant 1.000000e-07 : f32
    %88 = vector.broadcast %cst_29 : f32 to vector<4x512xf32>
    %89 = arith.addf %87, %88 : vector<4x512xf32>
    %90 = math.rsqrt %89 : vector<4x512xf32>
    %91 = arith.mulf %87, %90 : vector<4x512xf32>
    %cst_30 = arith.constant 1.000000e+00 : f32
    %92 = vector.broadcast %cst_30 : f32 to vector<4x512xf32>
    %93 = arith.addf %92, %87 : vector<4x512xf32>
    %94 = tpu.reciprocal %93 {approx = true} : vector<4x512xf32> -> vector<4x512xf32>
    %95 = arith.mulf %91, %94 : vector<4x512xf32>
    %96 = arith.mulf %70, %95 : vector<4x512xf32>
    %97 = arith.truncf %30 : vector<4x128xf32> to vector<4x128xbf16>
    %c0_31 = arith.constant 0 : index
    %c0_32 = arith.constant 0 : index
    %98 = vector.load %arg7[%c0_31, %c0_32] : memref<128x512xbf16, #tpu.memory_space<vmem>>, vector<128x512xbf16>
    %cst_33 = arith.constant dense<0.000000e+00> : vector<4x512xf32>
    %99 = tpu.matmul %97, %98, %cst_33 {dimension_numbers = #tpu.dot_dimension_numbers<[1], [0], [0], [1], [0, 0, 1, 1], [], []>} : vector<4x128xbf16>, vector<128x512xbf16>, vector<4x512xf32> -> vector<4x512xf32>
    %c0_34 = arith.constant 0 : index
    %c0_35 = arith.constant 0 : index
    %100 = vector.load %arg10[%c0_34, %c0_35] : memref<1x512xf32, #tpu.memory_space<vmem>>, vector<1x512xf32>
    %101 = vector.broadcast %100 : vector<1x512xf32> to vector<4x512xf32>
    %102 = arith.addf %99, %101 : vector<4x512xf32>
    %103 = arith.mulf %102, %102 : vector<4x512xf32>
    %104 = vector.extract_strided_slice %103 {offsets = [0, 0], sizes = [4, 64], strides = [1, 1]} : vector<4x512xf32> to vector<4x64xf32>
    %105 = vector.extract_strided_slice %103 {offsets = [0, 64], sizes = [4, 64], strides = [1, 1]} : vector<4x512xf32> to vector<4x64xf32>
    %106 = arith.addf %104, %105 : vector<4x64xf32>
    %107 = vector.extract_strided_slice %103 {offsets = [0, 128], sizes = [4, 64], strides = [1, 1]} : vector<4x512xf32> to vector<4x64xf32>
    %108 = arith.addf %106, %107 : vector<4x64xf32>
    %109 = vector.extract_strided_slice %103 {offsets = [0, 192], sizes = [4, 64], strides = [1, 1]} : vector<4x512xf32> to vector<4x64xf32>
    %110 = arith.addf %108, %109 : vector<4x64xf32>
    %111 = vector.extract_strided_slice %103 {offsets = [0, 256], sizes = [4, 64], strides = [1, 1]} : vector<4x512xf32> to vector<4x64xf32>
    %112 = arith.addf %110, %111 : vector<4x64xf32>
    %113 = vector.extract_strided_slice %103 {offsets = [0, 320], sizes = [4, 64], strides = [1, 1]} : vector<4x512xf32> to vector<4x64xf32>
    %114 = arith.addf %112, %113 : vector<4x64xf32>
    %115 = vector.extract_strided_slice %103 {offsets = [0, 384], sizes = [4, 64], strides = [1, 1]} : vector<4x512xf32> to vector<4x64xf32>
    %116 = arith.addf %114, %115 : vector<4x64xf32>
    %117 = vector.extract_strided_slice %103 {offsets = [0, 448], sizes = [4, 64], strides = [1, 1]} : vector<4x512xf32> to vector<4x64xf32>
    %118 = arith.addf %116, %117 : vector<4x64xf32>
    %119 = tpu.concatenate %118, %118, %118, %118, %118, %118, %118, %118 in 1 : vector<4x64xf32>, vector<4x64xf32>, vector<4x64xf32>, vector<4x64xf32>, vector<4x64xf32>, vector<4x64xf32>, vector<4x64xf32>, vector<4x64xf32> -> vector<4x512xf32>
    %cst_36 = arith.constant 1.000000e-07 : f32
    %120 = vector.broadcast %cst_36 : f32 to vector<4x512xf32>
    %121 = arith.addf %119, %120 : vector<4x512xf32>
    %122 = math.rsqrt %121 : vector<4x512xf32>
    %123 = arith.mulf %119, %122 : vector<4x512xf32>
    %cst_37 = arith.constant 1.000000e+00 : f32
    %124 = vector.broadcast %cst_37 : f32 to vector<4x512xf32>
    %125 = arith.addf %124, %119 : vector<4x512xf32>
    %126 = tpu.reciprocal %125 {approx = true} : vector<4x512xf32> -> vector<4x512xf32>
    %127 = arith.mulf %123, %126 : vector<4x512xf32>
    %128 = arith.mulf %102, %127 : vector<4x512xf32>
    %129 = vector.extract_strided_slice %63 {offsets = [0, 0], sizes = [4, 64], strides = [1, 1]} : vector<4x512xf32> to vector<4x64xf32>
    %130 = vector.extract_strided_slice %96 {offsets = [0, 0], sizes = [4, 64], strides = [1, 1]} : vector<4x512xf32> to vector<4x64xf32>
    %131 = vector.extract_strided_slice %128 {offsets = [0, 0], sizes = [4, 64], strides = [1, 1]} : vector<4x512xf32> to vector<4x64xf32>
    %132 = tpu.concatenate %129, %130, %131 in 1 : vector<4x64xf32>, vector<4x64xf32>, vector<4x64xf32> -> vector<4x192xf32>
    %133 = vector.extract_strided_slice %63 {offsets = [0, 64], sizes = [4, 64], strides = [1, 1]} : vector<4x512xf32> to vector<4x64xf32>
    %134 = vector.extract_strided_slice %96 {offsets = [0, 64], sizes = [4, 64], strides = [1, 1]} : vector<4x512xf32> to vector<4x64xf32>
    %135 = vector.extract_strided_slice %128 {offsets = [0, 64], sizes = [4, 64], strides = [1, 1]} : vector<4x512xf32> to vector<4x64xf32>
    %136 = tpu.concatenate %133, %134, %135 in 1 : vector<4x64xf32>, vector<4x64xf32>, vector<4x64xf32> -> vector<4x192xf32>
    %137 = vector.extract_strided_slice %63 {offsets = [0, 128], sizes = [4, 64], strides = [1, 1]} : vector<4x512xf32> to vector<4x64xf32>
    %138 = vector.extract_strided_slice %96 {offsets = [0, 128], sizes = [4, 64], strides = [1, 1]} : vector<4x512xf32> to vector<4x64xf32>
    %139 = vector.extract_strided_slice %128 {offsets = [0, 128], sizes = [4, 64], strides = [1, 1]} : vector<4x512xf32> to vector<4x64xf32>
    %140 = tpu.concatenate %137, %138, %139 in 1 : vector<4x64xf32>, vector<4x64xf32>, vector<4x64xf32> -> vector<4x192xf32>
    %141 = vector.extract_strided_slice %63 {offsets = [0, 192], sizes = [4, 64], strides = [1, 1]} : vector<4x512xf32> to vector<4x64xf32>
    %142 = vector.extract_strided_slice %96 {offsets = [0, 192], sizes = [4, 64], strides = [1, 1]} : vector<4x512xf32> to vector<4x64xf32>
    %143 = vector.extract_strided_slice %128 {offsets = [0, 192], sizes = [4, 64], strides = [1, 1]} : vector<4x512xf32> to vector<4x64xf32>
    %144 = tpu.concatenate %141, %142, %143 in 1 : vector<4x64xf32>, vector<4x64xf32>, vector<4x64xf32> -> vector<4x192xf32>
    %145 = vector.extract_strided_slice %63 {offsets = [0, 256], sizes = [4, 64], strides = [1, 1]} : vector<4x512xf32> to vector<4x64xf32>
    %146 = vector.extract_strided_slice %96 {offsets = [0, 256], sizes = [4, 64], strides = [1, 1]} : vector<4x512xf32> to vector<4x64xf32>
    %147 = vector.extract_strided_slice %128 {offsets = [0, 256], sizes = [4, 64], strides = [1, 1]} : vector<4x512xf32> to vector<4x64xf32>
    %148 = tpu.concatenate %145, %146, %147 in 1 : vector<4x64xf32>, vector<4x64xf32>, vector<4x64xf32> -> vector<4x192xf32>
    %149 = vector.extract_strided_slice %63 {offsets = [0, 320], sizes = [4, 64], strides = [1, 1]} : vector<4x512xf32> to vector<4x64xf32>
    %150 = vector.extract_strided_slice %96 {offsets = [0, 320], sizes = [4, 64], strides = [1, 1]} : vector<4x512xf32> to vector<4x64xf32>
    %151 = vector.extract_strided_slice %128 {offsets = [0, 320], sizes = [4, 64], strides = [1, 1]} : vector<4x512xf32> to vector<4x64xf32>
    %152 = tpu.concatenate %149, %150, %151 in 1 : vector<4x64xf32>, vector<4x64xf32>, vector<4x64xf32> -> vector<4x192xf32>
    %153 = vector.extract_strided_slice %63 {offsets = [0, 384], sizes = [4, 64], strides = [1, 1]} : vector<4x512xf32> to vector<4x64xf32>
    %154 = vector.extract_strided_slice %96 {offsets = [0, 384], sizes = [4, 64], strides = [1, 1]} : vector<4x512xf32> to vector<4x64xf32>
    %155 = vector.extract_strided_slice %128 {offsets = [0, 384], sizes = [4, 64], strides = [1, 1]} : vector<4x512xf32> to vector<4x64xf32>
    %156 = tpu.concatenate %153, %154, %155 in 1 : vector<4x64xf32>, vector<4x64xf32>, vector<4x64xf32> -> vector<4x192xf32>
    %157 = vector.extract_strided_slice %63 {offsets = [0, 448], sizes = [4, 64], strides = [1, 1]} : vector<4x512xf32> to vector<4x64xf32>
    %158 = vector.extract_strided_slice %96 {offsets = [0, 448], sizes = [4, 64], strides = [1, 1]} : vector<4x512xf32> to vector<4x64xf32>
    %159 = vector.extract_strided_slice %128 {offsets = [0, 448], sizes = [4, 64], strides = [1, 1]} : vector<4x512xf32> to vector<4x64xf32>
    %160 = tpu.concatenate %157, %158, %159 in 1 : vector<4x64xf32>, vector<4x64xf32>, vector<4x64xf32> -> vector<4x192xf32>
    %c0_38 = arith.constant 0 : index
    %c0_39 = arith.constant 0 : index
    %c0_40 = arith.constant 0 : index
    %161 = vector.load %arg11[%c0_38, %c0_39, %c0_40] : memref<8x128x192xbf16, #tpu.memory_space<vmem>>, vector<1x128x192xbf16>
    %162 = vector.shape_cast %161 : vector<1x128x192xbf16> to vector<128x192xbf16>
    %163 = arith.extf %162 : vector<128x192xbf16> to vector<128x192xf32>
    %c1 = arith.constant 1 : index
    %c0_41 = arith.constant 0 : index
    %c0_42 = arith.constant 0 : index
    %164 = vector.load %arg11[%c1, %c0_41, %c0_42] : memref<8x128x192xbf16, #tpu.memory_space<vmem>>, vector<1x128x192xbf16>
    %165 = vector.shape_cast %164 : vector<1x128x192xbf16> to vector<128x192xbf16>
    %166 = arith.extf %165 : vector<128x192xbf16> to vector<128x192xf32>
    %c2 = arith.constant 2 : index
    %c0_43 = arith.constant 0 : index
    %c0_44 = arith.constant 0 : index
    %167 = vector.load %arg11[%c2, %c0_43, %c0_44] : memref<8x128x192xbf16, #tpu.memory_space<vmem>>, vector<1x128x192xbf16>
    %168 = vector.shape_cast %167 : vector<1x128x192xbf16> to vector<128x192xbf16>
    %169 = arith.extf %168 : vector<128x192xbf16> to vector<128x192xf32>
    %c3 = arith.constant 3 : index
    %c0_45 = arith.constant 0 : index
    %c0_46 = arith.constant 0 : index
    %170 = vector.load %arg11[%c3, %c0_45, %c0_46] : memref<8x128x192xbf16, #tpu.memory_space<vmem>>, vector<1x128x192xbf16>
    %171 = vector.shape_cast %170 : vector<1x128x192xbf16> to vector<128x192xbf16>
    %172 = arith.extf %171 : vector<128x192xbf16> to vector<128x192xf32>
    %c4 = arith.constant 4 : index
    %c0_47 = arith.constant 0 : index
    %c0_48 = arith.constant 0 : index
    %173 = vector.load %arg11[%c4, %c0_47, %c0_48] : memref<8x128x192xbf16, #tpu.memory_space<vmem>>, vector<1x128x192xbf16>
    %174 = vector.shape_cast %173 : vector<1x128x192xbf16> to vector<128x192xbf16>
    %175 = arith.extf %174 : vector<128x192xbf16> to vector<128x192xf32>
    %c5 = arith.constant 5 : index
    %c0_49 = arith.constant 0 : index
    %c0_50 = arith.constant 0 : index
    %176 = vector.load %arg11[%c5, %c0_49, %c0_50] : memref<8x128x192xbf16, #tpu.memory_space<vmem>>, vector<1x128x192xbf16>
    %177 = vector.shape_cast %176 : vector<1x128x192xbf16> to vector<128x192xbf16>
    %178 = arith.extf %177 : vector<128x192xbf16> to vector<128x192xf32>
    %c6 = arith.constant 6 : index
    %c0_51 = arith.constant 0 : index
    %c0_52 = arith.constant 0 : index
    %179 = vector.load %arg11[%c6, %c0_51, %c0_52] : memref<8x128x192xbf16, #tpu.memory_space<vmem>>, vector<1x128x192xbf16>
    %180 = vector.shape_cast %179 : vector<1x128x192xbf16> to vector<128x192xbf16>
    %181 = arith.extf %180 : vector<128x192xbf16> to vector<128x192xf32>
    %c7 = arith.constant 7 : index
    %c0_53 = arith.constant 0 : index
    %c0_54 = arith.constant 0 : index
    %182 = vector.load %arg11[%c7, %c0_53, %c0_54] : memref<8x128x192xbf16, #tpu.memory_space<vmem>>, vector<1x128x192xbf16>
    %183 = vector.shape_cast %182 : vector<1x128x192xbf16> to vector<128x192xbf16>
    %184 = arith.extf %183 : vector<128x192xbf16> to vector<128x192xf32>
    %185 = vector.extract_strided_slice %132 {offsets = [0, 0], sizes = [1, 192], strides = [1, 1]} : vector<4x192xf32> to vector<1x192xf32>
    %186 = vector.broadcast %185 : vector<1x192xf32> to vector<128x192xf32>
    %187 = arith.mulf %163, %186 : vector<128x192xf32>
    %188 = vector.extract_strided_slice %136 {offsets = [0, 0], sizes = [1, 192], strides = [1, 1]} : vector<4x192xf32> to vector<1x192xf32>
    %189 = vector.broadcast %188 : vector<1x192xf32> to vector<128x192xf32>
    %190 = arith.mulf %166, %189 : vector<128x192xf32>
    %191 = arith.addf %187, %190 : vector<128x192xf32>
    %192 = vector.extract_strided_slice %140 {offsets = [0, 0], sizes = [1, 192], strides = [1, 1]} : vector<4x192xf32> to vector<1x192xf32>
    %193 = vector.broadcast %192 : vector<1x192xf32> to vector<128x192xf32>
    %194 = arith.mulf %169, %193 : vector<128x192xf32>
    %195 = arith.addf %191, %194 : vector<128x192xf32>
    %196 = vector.extract_strided_slice %144 {offsets = [0, 0], sizes = [1, 192], strides = [1, 1]} : vector<4x192xf32> to vector<1x192xf32>
    %197 = vector.broadcast %196 : vector<1x192xf32> to vector<128x192xf32>
    %198 = arith.mulf %172, %197 : vector<128x192xf32>
    %199 = arith.addf %195, %198 : vector<128x192xf32>
    %200 = vector.extract_strided_slice %148 {offsets = [0, 0], sizes = [1, 192], strides = [1, 1]} : vector<4x192xf32> to vector<1x192xf32>
    %201 = vector.broadcast %200 : vector<1x192xf32> to vector<128x192xf32>
    %202 = arith.mulf %175, %201 : vector<128x192xf32>
    %203 = arith.addf %199, %202 : vector<128x192xf32>
    %204 = vector.extract_strided_slice %152 {offsets = [0, 0], sizes = [1, 192], strides = [1, 1]} : vector<4x192xf32> to vector<1x192xf32>
    %205 = vector.broadcast %204 : vector<1x192xf32> to vector<128x192xf32>
    %206 = arith.mulf %178, %205 : vector<128x192xf32>
    %207 = arith.addf %203, %206 : vector<128x192xf32>
    %208 = vector.extract_strided_slice %156 {offsets = [0, 0], sizes = [1, 192], strides = [1, 1]} : vector<4x192xf32> to vector<1x192xf32>
    %209 = vector.broadcast %208 : vector<1x192xf32> to vector<128x192xf32>
    %210 = arith.mulf %181, %209 : vector<128x192xf32>
    %211 = arith.addf %207, %210 : vector<128x192xf32>
    %212 = vector.extract_strided_slice %160 {offsets = [0, 0], sizes = [1, 192], strides = [1, 1]} : vector<4x192xf32> to vector<1x192xf32>
    %213 = vector.broadcast %212 : vector<1x192xf32> to vector<128x192xf32>
    %214 = arith.mulf %184, %213 : vector<128x192xf32>
    %215 = arith.addf %211, %214 : vector<128x192xf32>
    %216 = vector.extract_strided_slice %132 {offsets = [1, 0], sizes = [1, 192], strides = [1, 1]} : vector<4x192xf32> to vector<1x192xf32>
    %217 = vector.broadcast %216 : vector<1x192xf32> to vector<128x192xf32>
    %218 = arith.mulf %163, %217 : vector<128x192xf32>
    %219 = vector.extract_strided_slice %136 {offsets = [1, 0], sizes = [1, 192], strides = [1, 1]} : vector<4x192xf32> to vector<1x192xf32>
    %220 = vector.broadcast %219 : vector<1x192xf32> to vector<128x192xf32>
    %221 = arith.mulf %166, %220 : vector<128x192xf32>
    %222 = arith.addf %218, %221 : vector<128x192xf32>
    %223 = vector.extract_strided_slice %140 {offsets = [1, 0], sizes = [1, 192], strides = [1, 1]} : vector<4x192xf32> to vector<1x192xf32>
    %224 = vector.broadcast %223 : vector<1x192xf32> to vector<128x192xf32>
    %225 = arith.mulf %169, %224 : vector<128x192xf32>
    %226 = arith.addf %222, %225 : vector<128x192xf32>
    %227 = vector.extract_strided_slice %144 {offsets = [1, 0], sizes = [1, 192], strides = [1, 1]} : vector<4x192xf32> to vector<1x192xf32>
    %228 = vector.broadcast %227 : vector<1x192xf32> to vector<128x192xf32>
    %229 = arith.mulf %172, %228 : vector<128x192xf32>
    %230 = arith.addf %226, %229 : vector<128x192xf32>
    %231 = vector.extract_strided_slice %148 {offsets = [1, 0], sizes = [1, 192], strides = [1, 1]} : vector<4x192xf32> to vector<1x192xf32>
    %232 = vector.broadcast %231 : vector<1x192xf32> to vector<128x192xf32>
    %233 = arith.mulf %175, %232 : vector<128x192xf32>
    %234 = arith.addf %230, %233 : vector<128x192xf32>
    %235 = vector.extract_strided_slice %152 {offsets = [1, 0], sizes = [1, 192], strides = [1, 1]} : vector<4x192xf32> to vector<1x192xf32>
    %236 = vector.broadcast %235 : vector<1x192xf32> to vector<128x192xf32>
    %237 = arith.mulf %178, %236 : vector<128x192xf32>
    %238 = arith.addf %234, %237 : vector<128x192xf32>
    %239 = vector.extract_strided_slice %156 {offsets = [1, 0], sizes = [1, 192], strides = [1, 1]} : vector<4x192xf32> to vector<1x192xf32>
    %240 = vector.broadcast %239 : vector<1x192xf32> to vector<128x192xf32>
    %241 = arith.mulf %181, %240 : vector<128x192xf32>
    %242 = arith.addf %238, %241 : vector<128x192xf32>
    %243 = vector.extract_strided_slice %160 {offsets = [1, 0], sizes = [1, 192], strides = [1, 1]} : vector<4x192xf32> to vector<1x192xf32>
    %244 = vector.broadcast %243 : vector<1x192xf32> to vector<128x192xf32>
    %245 = arith.mulf %184, %244 : vector<128x192xf32>
    %246 = arith.addf %242, %245 : vector<128x192xf32>
    %247 = vector.extract_strided_slice %132 {offsets = [2, 0], sizes = [1, 192], strides = [1, 1]} : vector<4x192xf32> to vector<1x192xf32>
    %248 = vector.broadcast %247 : vector<1x192xf32> to vector<128x192xf32>
    %249 = arith.mulf %163, %248 : vector<128x192xf32>
    %250 = vector.extract_strided_slice %136 {offsets = [2, 0], sizes = [1, 192], strides = [1, 1]} : vector<4x192xf32> to vector<1x192xf32>
    %251 = vector.broadcast %250 : vector<1x192xf32> to vector<128x192xf32>
    %252 = arith.mulf %166, %251 : vector<128x192xf32>
    %253 = arith.addf %249, %252 : vector<128x192xf32>
    %254 = vector.extract_strided_slice %140 {offsets = [2, 0], sizes = [1, 192], strides = [1, 1]} : vector<4x192xf32> to vector<1x192xf32>
    %255 = vector.broadcast %254 : vector<1x192xf32> to vector<128x192xf32>
    %256 = arith.mulf %169, %255 : vector<128x192xf32>
    %257 = arith.addf %253, %256 : vector<128x192xf32>
    %258 = vector.extract_strided_slice %144 {offsets = [2, 0], sizes = [1, 192], strides = [1, 1]} : vector<4x192xf32> to vector<1x192xf32>
    %259 = vector.broadcast %258 : vector<1x192xf32> to vector<128x192xf32>
    %260 = arith.mulf %172, %259 : vector<128x192xf32>
    %261 = arith.addf %257, %260 : vector<128x192xf32>
    %262 = vector.extract_strided_slice %148 {offsets = [2, 0], sizes = [1, 192], strides = [1, 1]} : vector<4x192xf32> to vector<1x192xf32>
    %263 = vector.broadcast %262 : vector<1x192xf32> to vector<128x192xf32>
    %264 = arith.mulf %175, %263 : vector<128x192xf32>
    %265 = arith.addf %261, %264 : vector<128x192xf32>
    %266 = vector.extract_strided_slice %152 {offsets = [2, 0], sizes = [1, 192], strides = [1, 1]} : vector<4x192xf32> to vector<1x192xf32>
    %267 = vector.broadcast %266 : vector<1x192xf32> to vector<128x192xf32>
    %268 = arith.mulf %178, %267 : vector<128x192xf32>
    %269 = arith.addf %265, %268 : vector<128x192xf32>
    %270 = vector.extract_strided_slice %156 {offsets = [2, 0], sizes = [1, 192], strides = [1, 1]} : vector<4x192xf32> to vector<1x192xf32>
    %271 = vector.broadcast %270 : vector<1x192xf32> to vector<128x192xf32>
    %272 = arith.mulf %181, %271 : vector<128x192xf32>
    %273 = arith.addf %269, %272 : vector<128x192xf32>
    %274 = vector.extract_strided_slice %160 {offsets = [2, 0], sizes = [1, 192], strides = [1, 1]} : vector<4x192xf32> to vector<1x192xf32>
    %275 = vector.broadcast %274 : vector<1x192xf32> to vector<128x192xf32>
    %276 = arith.mulf %184, %275 : vector<128x192xf32>
    %277 = arith.addf %273, %276 : vector<128x192xf32>
    %278 = vector.extract_strided_slice %132 {offsets = [3, 0], sizes = [1, 192], strides = [1, 1]} : vector<4x192xf32> to vector<1x192xf32>
    %279 = vector.broadcast %278 : vector<1x192xf32> to vector<128x192xf32>
    %280 = arith.mulf %163, %279 : vector<128x192xf32>
    %281 = vector.extract_strided_slice %136 {offsets = [3, 0], sizes = [1, 192], strides = [1, 1]} : vector<4x192xf32> to vector<1x192xf32>
    %282 = vector.broadcast %281 : vector<1x192xf32> to vector<128x192xf32>
    %283 = arith.mulf %166, %282 : vector<128x192xf32>
    %284 = arith.addf %280, %283 : vector<128x192xf32>
    %285 = vector.extract_strided_slice %140 {offsets = [3, 0], sizes = [1, 192], strides = [1, 1]} : vector<4x192xf32> to vector<1x192xf32>
    %286 = vector.broadcast %285 : vector<1x192xf32> to vector<128x192xf32>
    %287 = arith.mulf %169, %286 : vector<128x192xf32>
    %288 = arith.addf %284, %287 : vector<128x192xf32>
    %289 = vector.extract_strided_slice %144 {offsets = [3, 0], sizes = [1, 192], strides = [1, 1]} : vector<4x192xf32> to vector<1x192xf32>
    %290 = vector.broadcast %289 : vector<1x192xf32> to vector<128x192xf32>
    %291 = arith.mulf %172, %290 : vector<128x192xf32>
    %292 = arith.addf %288, %291 : vector<128x192xf32>
    %293 = vector.extract_strided_slice %148 {offsets = [3, 0], sizes = [1, 192], strides = [1, 1]} : vector<4x192xf32> to vector<1x192xf32>
    %294 = vector.broadcast %293 : vector<1x192xf32> to vector<128x192xf32>
    %295 = arith.mulf %175, %294 : vector<128x192xf32>
    %296 = arith.addf %292, %295 : vector<128x192xf32>
    %297 = vector.extract_strided_slice %152 {offsets = [3, 0], sizes = [1, 192], strides = [1, 1]} : vector<4x192xf32> to vector<1x192xf32>
    %298 = vector.broadcast %297 : vector<1x192xf32> to vector<128x192xf32>
    %299 = arith.mulf %178, %298 : vector<128x192xf32>
    %300 = arith.addf %296, %299 : vector<128x192xf32>
    %301 = vector.extract_strided_slice %156 {offsets = [3, 0], sizes = [1, 192], strides = [1, 1]} : vector<4x192xf32> to vector<1x192xf32>
    %302 = vector.broadcast %301 : vector<1x192xf32> to vector<128x192xf32>
    %303 = arith.mulf %181, %302 : vector<128x192xf32>
    %304 = arith.addf %300, %303 : vector<128x192xf32>
    %305 = vector.extract_strided_slice %160 {offsets = [3, 0], sizes = [1, 192], strides = [1, 1]} : vector<4x192xf32> to vector<1x192xf32>
    %306 = vector.broadcast %305 : vector<1x192xf32> to vector<128x192xf32>
    %307 = arith.mulf %184, %306 : vector<128x192xf32>
    %308 = arith.addf %304, %307 : vector<128x192xf32>
    %cst_55 = arith.constant 0.000000e+00 : f32
    %309 = vector.broadcast %cst_55 : f32 to vector<128x192xf32>
    %cst_56 = arith.constant dense<0xFF800000> : vector<128xf32>
    %310 = vector.multi_reduction <maximumf>, %309, %cst_56 [1] : vector<128x192xf32> to vector<128xf32>
    %311 = vector.shape_cast %310 : vector<128xf32> to vector<128x1xf32>
    %312 = vector.broadcast %311 : vector<128x1xf32> to vector<128x192xf32>
    %313 = arith.subf %309, %312 : vector<128x192xf32>
    %314 = math.exp %313 : vector<128x192xf32>
    %cst_57 = arith.constant dense<0.000000e+00> : vector<128xf32>
    %315 = vector.multi_reduction <add>, %314, %cst_57 [1] : vector<128x192xf32> to vector<128xf32>
    %316 = vector.shape_cast %315 : vector<128xf32> to vector<128x1xf32>
    %317 = vector.broadcast %316 : vector<128x1xf32> to vector<128x192xf32>
    %318 = arith.divf %314, %317 : vector<128x192xf32>
    %319 = arith.mulf %318, %215 : vector<128x192xf32>
    %cst_58 = arith.constant dense<0.000000e+00> : vector<128xf32>
    %320 = vector.multi_reduction <add>, %319, %cst_58 [1] : vector<128x192xf32> to vector<128xf32>
    %321 = vector.shape_cast %320 : vector<128xf32> to vector<128x1xf32>
    %322 = arith.mulf %321, %321 : vector<128x1xf32>
    %323 = arith.mulf %322, %321 : vector<128x1xf32>
    %cst_59 = arith.constant 1.000000e-07 : f32
    %324 = vector.broadcast %cst_59 : f32 to vector<128x1xf32>
    %325 = arith.addf %322, %324 : vector<128x1xf32>
    %326 = math.rsqrt %325 : vector<128x1xf32>
    %327 = arith.mulf %323, %326 : vector<128x1xf32>
    %cst_60 = arith.constant 1.000000e+00 : f32
    %328 = vector.broadcast %cst_60 : f32 to vector<128x1xf32>
    %329 = arith.addf %328, %322 : vector<128x1xf32>
    %330 = tpu.reciprocal %329 {approx = true} : vector<128x1xf32> -> vector<128x1xf32>
    %331 = arith.mulf %327, %330 : vector<128x1xf32>
    %332 = arith.mulf %318, %246 : vector<128x192xf32>
    %cst_61 = arith.constant dense<0.000000e+00> : vector<128xf32>
    %333 = vector.multi_reduction <add>, %332, %cst_61 [1] : vector<128x192xf32> to vector<128xf32>
    %334 = vector.shape_cast %333 : vector<128xf32> to vector<128x1xf32>
    %335 = arith.mulf %334, %334 : vector<128x1xf32>
    %336 = arith.mulf %335, %334 : vector<128x1xf32>
    %cst_62 = arith.constant 1.000000e-07 : f32
    %337 = vector.broadcast %cst_62 : f32 to vector<128x1xf32>
    %338 = arith.addf %335, %337 : vector<128x1xf32>
    %339 = math.rsqrt %338 : vector<128x1xf32>
    %340 = arith.mulf %336, %339 : vector<128x1xf32>
    %cst_63 = arith.constant 1.000000e+00 : f32
    %341 = vector.broadcast %cst_63 : f32 to vector<128x1xf32>
    %342 = arith.addf %341, %335 : vector<128x1xf32>
    %343 = tpu.reciprocal %342 {approx = true} : vector<128x1xf32> -> vector<128x1xf32>
    %344 = arith.mulf %340, %343 : vector<128x1xf32>
    %345 = arith.mulf %318, %277 : vector<128x192xf32>
    %cst_64 = arith.constant dense<0.000000e+00> : vector<128xf32>
    %346 = vector.multi_reduction <add>, %345, %cst_64 [1] : vector<128x192xf32> to vector<128xf32>
    %347 = vector.shape_cast %346 : vector<128xf32> to vector<128x1xf32>
    %348 = arith.mulf %347, %347 : vector<128x1xf32>
    %349 = arith.mulf %348, %347 : vector<128x1xf32>
    %cst_65 = arith.constant 1.000000e-07 : f32
    %350 = vector.broadcast %cst_65 : f32 to vector<128x1xf32>
    %351 = arith.addf %348, %350 : vector<128x1xf32>
    %352 = math.rsqrt %351 : vector<128x1xf32>
    %353 = arith.mulf %349, %352 : vector<128x1xf32>
    %cst_66 = arith.constant 1.000000e+00 : f32
    %354 = vector.broadcast %cst_66 : f32 to vector<128x1xf32>
    %355 = arith.addf %354, %348 : vector<128x1xf32>
    %356 = tpu.reciprocal %355 {approx = true} : vector<128x1xf32> -> vector<128x1xf32>
    %357 = arith.mulf %353, %356 : vector<128x1xf32>
    %358 = arith.mulf %318, %308 : vector<128x192xf32>
    %cst_67 = arith.constant dense<0.000000e+00> : vector<128xf32>
    %359 = vector.multi_reduction <add>, %358, %cst_67 [1] : vector<128x192xf32> to vector<128xf32>
    %360 = vector.shape_cast %359 : vector<128xf32> to vector<128x1xf32>
    %361 = arith.mulf %360, %360 : vector<128x1xf32>
    %362 = arith.mulf %361, %360 : vector<128x1xf32>
    %cst_68 = arith.constant 1.000000e-07 : f32
    %363 = vector.broadcast %cst_68 : f32 to vector<128x1xf32>
    %364 = arith.addf %361, %363 : vector<128x1xf32>
    %365 = math.rsqrt %364 : vector<128x1xf32>
    %366 = arith.mulf %362, %365 : vector<128x1xf32>
    %cst_69 = arith.constant 1.000000e+00 : f32
    %367 = vector.broadcast %cst_69 : f32 to vector<128x1xf32>
    %368 = arith.addf %367, %361 : vector<128x1xf32>
    %369 = tpu.reciprocal %368 {approx = true} : vector<128x1xf32> -> vector<128x1xf32>
    %370 = arith.mulf %366, %369 : vector<128x1xf32>
    %371 = vector.broadcast %331 : vector<128x1xf32> to vector<128x192xf32>
    %372 = arith.mulf %215, %371 : vector<128x192xf32>
    %373 = vector.broadcast %344 : vector<128x1xf32> to vector<128x192xf32>
    %374 = arith.mulf %246, %373 : vector<128x192xf32>
    %375 = arith.addf %372, %374 : vector<128x192xf32>
    %376 = vector.broadcast %357 : vector<128x1xf32> to vector<128x192xf32>
    %377 = arith.mulf %277, %376 : vector<128x192xf32>
    %378 = arith.addf %375, %377 : vector<128x192xf32>
    %379 = vector.broadcast %370 : vector<128x1xf32> to vector<128x192xf32>
    %380 = arith.mulf %308, %379 : vector<128x192xf32>
    %381 = arith.addf %378, %380 : vector<128x192xf32>
    %382 = vector.extract_strided_slice %381 {offsets = [0, 0], sizes = [64, 192], strides = [1, 1]} : vector<128x192xf32> to vector<64x192xf32>
    %cst_70 = arith.constant dense<0.000000e+00> : vector<192xf32>
    %383 = vector.multi_reduction <add>, %382, %cst_70 [0] : vector<64x192xf32> to vector<192xf32>
    %384 = vector.shape_cast %383 : vector<192xf32> to vector<1x192xf32>
    %cst_71 = arith.constant 2.500000e-01 : f32
    %385 = vector.broadcast %cst_71 : f32 to vector<1x192xf32>
    %386 = arith.mulf %384, %385 : vector<1x192xf32>
    %387 = vector.extract_strided_slice %309 {offsets = [0, 0], sizes = [64, 192], strides = [1, 1]} : vector<128x192xf32> to vector<64x192xf32>
    %388 = vector.broadcast %386 : vector<1x192xf32> to vector<64x192xf32>
    %389 = arith.addf %387, %388 : vector<64x192xf32>
    %390 = vector.extract_strided_slice %381 {offsets = [64, 0], sizes = [64, 192], strides = [1, 1]} : vector<128x192xf32> to vector<64x192xf32>
    %cst_72 = arith.constant dense<0.000000e+00> : vector<192xf32>
    %391 = vector.multi_reduction <add>, %390, %cst_72 [0] : vector<64x192xf32> to vector<192xf32>
    %392 = vector.shape_cast %391 : vector<192xf32> to vector<1x192xf32>
    %cst_73 = arith.constant 2.500000e-01 : f32
    %393 = vector.broadcast %cst_73 : f32 to vector<1x192xf32>
    %394 = arith.mulf %392, %393 : vector<1x192xf32>
    %395 = vector.extract_strided_slice %309 {offsets = [64, 0], sizes = [64, 192], strides = [1, 1]} : vector<128x192xf32> to vector<64x192xf32>
    %396 = vector.broadcast %394 : vector<1x192xf32> to vector<64x192xf32>
    %397 = arith.addf %395, %396 : vector<64x192xf32>
    %398 = tpu.concatenate %389, %397 in 0 : vector<64x192xf32>, vector<64x192xf32> -> vector<128x192xf32>
    %cst_74 = arith.constant dense<0xFF800000> : vector<128xf32>
    %399 = vector.multi_reduction <maximumf>, %398, %cst_74 [1] : vector<128x192xf32> to vector<128xf32>
    %400 = vector.shape_cast %399 : vector<128xf32> to vector<128x1xf32>
    %401 = vector.broadcast %400 : vector<128x1xf32> to vector<128x192xf32>
    %402 = arith.subf %398, %401 : vector<128x192xf32>
    %403 = math.exp %402 : vector<128x192xf32>
    %cst_75 = arith.constant dense<0.000000e+00> : vector<128xf32>
    %404 = vector.multi_reduction <add>, %403, %cst_75 [1] : vector<128x192xf32> to vector<128xf32>
    %405 = vector.shape_cast %404 : vector<128xf32> to vector<128x1xf32>
    %406 = vector.broadcast %405 : vector<128x1xf32> to vector<128x192xf32>
    %407 = arith.divf %403, %406 : vector<128x192xf32>
    %408 = arith.mulf %407, %215 : vector<128x192xf32>
    %cst_76 = arith.constant dense<0.000000e+00> : vector<128xf32>
    %409 = vector.multi_reduction <add>, %408, %cst_76 [1] : vector<128x192xf32> to vector<128xf32>
    %410 = vector.shape_cast %409 : vector<128xf32> to vector<128x1xf32>
    %411 = arith.mulf %410, %410 : vector<128x1xf32>
    %412 = arith.mulf %411, %410 : vector<128x1xf32>
    %cst_77 = arith.constant 1.000000e-07 : f32
    %413 = vector.broadcast %cst_77 : f32 to vector<128x1xf32>
    %414 = arith.addf %411, %413 : vector<128x1xf32>
    %415 = math.rsqrt %414 : vector<128x1xf32>
    %416 = arith.mulf %412, %415 : vector<128x1xf32>
    %cst_78 = arith.constant 1.000000e+00 : f32
    %417 = vector.broadcast %cst_78 : f32 to vector<128x1xf32>
    %418 = arith.addf %417, %411 : vector<128x1xf32>
    %419 = tpu.reciprocal %418 {approx = true} : vector<128x1xf32> -> vector<128x1xf32>
    %420 = arith.mulf %416, %419 : vector<128x1xf32>
    %421 = arith.mulf %407, %246 : vector<128x192xf32>
    %cst_79 = arith.constant dense<0.000000e+00> : vector<128xf32>
    %422 = vector.multi_reduction <add>, %421, %cst_79 [1] : vector<128x192xf32> to vector<128xf32>
    %423 = vector.shape_cast %422 : vector<128xf32> to vector<128x1xf32>
    %424 = arith.mulf %423, %423 : vector<128x1xf32>
    %425 = arith.mulf %424, %423 : vector<128x1xf32>
    %cst_80 = arith.constant 1.000000e-07 : f32
    %426 = vector.broadcast %cst_80 : f32 to vector<128x1xf32>
    %427 = arith.addf %424, %426 : vector<128x1xf32>
    %428 = math.rsqrt %427 : vector<128x1xf32>
    %429 = arith.mulf %425, %428 : vector<128x1xf32>
    %cst_81 = arith.constant 1.000000e+00 : f32
    %430 = vector.broadcast %cst_81 : f32 to vector<128x1xf32>
    %431 = arith.addf %430, %424 : vector<128x1xf32>
    %432 = tpu.reciprocal %431 {approx = true} : vector<128x1xf32> -> vector<128x1xf32>
    %433 = arith.mulf %429, %432 : vector<128x1xf32>
    %434 = arith.mulf %407, %277 : vector<128x192xf32>
    %cst_82 = arith.constant dense<0.000000e+00> : vector<128xf32>
    %435 = vector.multi_reduction <add>, %434, %cst_82 [1] : vector<128x192xf32> to vector<128xf32>
    %436 = vector.shape_cast %435 : vector<128xf32> to vector<128x1xf32>
    %437 = arith.mulf %436, %436 : vector<128x1xf32>
    %438 = arith.mulf %437, %436 : vector<128x1xf32>
    %cst_83 = arith.constant 1.000000e-07 : f32
    %439 = vector.broadcast %cst_83 : f32 to vector<128x1xf32>
    %440 = arith.addf %437, %439 : vector<128x1xf32>
    %441 = math.rsqrt %440 : vector<128x1xf32>
    %442 = arith.mulf %438, %441 : vector<128x1xf32>
    %cst_84 = arith.constant 1.000000e+00 : f32
    %443 = vector.broadcast %cst_84 : f32 to vector<128x1xf32>
    %444 = arith.addf %443, %437 : vector<128x1xf32>
    %445 = tpu.reciprocal %444 {approx = true} : vector<128x1xf32> -> vector<128x1xf32>
    %446 = arith.mulf %442, %445 : vector<128x1xf32>
    %447 = arith.mulf %407, %308 : vector<128x192xf32>
    %cst_85 = arith.constant dense<0.000000e+00> : vector<128xf32>
    %448 = vector.multi_reduction <add>, %447, %cst_85 [1] : vector<128x192xf32> to vector<128xf32>
    %449 = vector.shape_cast %448 : vector<128xf32> to vector<128x1xf32>
    %450 = arith.mulf %449, %449 : vector<128x1xf32>
    %451 = arith.mulf %450, %449 : vector<128x1xf32>
    %cst_86 = arith.constant 1.000000e-07 : f32
    %452 = vector.broadcast %cst_86 : f32 to vector<128x1xf32>
    %453 = arith.addf %450, %452 : vector<128x1xf32>
    %454 = math.rsqrt %453 : vector<128x1xf32>
    %455 = arith.mulf %451, %454 : vector<128x1xf32>
    %cst_87 = arith.constant 1.000000e+00 : f32
    %456 = vector.broadcast %cst_87 : f32 to vector<128x1xf32>
    %457 = arith.addf %456, %450 : vector<128x1xf32>
    %458 = tpu.reciprocal %457 {approx = true} : vector<128x1xf32> -> vector<128x1xf32>
    %459 = arith.mulf %455, %458 : vector<128x1xf32>
    %460 = vector.broadcast %420 : vector<128x1xf32> to vector<128x192xf32>
    %461 = arith.mulf %215, %460 : vector<128x192xf32>
    %462 = vector.broadcast %433 : vector<128x1xf32> to vector<128x192xf32>
    %463 = arith.mulf %246, %462 : vector<128x192xf32>
    %464 = arith.addf %461, %463 : vector<128x192xf32>
    %465 = vector.broadcast %446 : vector<128x1xf32> to vector<128x192xf32>
    %466 = arith.mulf %277, %465 : vector<128x192xf32>
    %467 = arith.addf %464, %466 : vector<128x192xf32>
    %468 = vector.broadcast %459 : vector<128x1xf32> to vector<128x192xf32>
    %469 = arith.mulf %308, %468 : vector<128x192xf32>
    %470 = arith.addf %467, %469 : vector<128x192xf32>
    %471 = vector.extract_strided_slice %470 {offsets = [0, 0], sizes = [64, 192], strides = [1, 1]} : vector<128x192xf32> to vector<64x192xf32>
    %cst_88 = arith.constant dense<0.000000e+00> : vector<192xf32>
    %472 = vector.multi_reduction <add>, %471, %cst_88 [0] : vector<64x192xf32> to vector<192xf32>
    %473 = vector.shape_cast %472 : vector<192xf32> to vector<1x192xf32>
    %cst_89 = arith.constant 2.500000e-01 : f32
    %474 = vector.broadcast %cst_89 : f32 to vector<1x192xf32>
    %475 = arith.mulf %473, %474 : vector<1x192xf32>
    %476 = vector.extract_strided_slice %398 {offsets = [0, 0], sizes = [64, 192], strides = [1, 1]} : vector<128x192xf32> to vector<64x192xf32>
    %477 = vector.broadcast %475 : vector<1x192xf32> to vector<64x192xf32>
    %478 = arith.addf %476, %477 : vector<64x192xf32>
    %479 = vector.extract_strided_slice %470 {offsets = [64, 0], sizes = [64, 192], strides = [1, 1]} : vector<128x192xf32> to vector<64x192xf32>
    %cst_90 = arith.constant dense<0.000000e+00> : vector<192xf32>
    %480 = vector.multi_reduction <add>, %479, %cst_90 [0] : vector<64x192xf32> to vector<192xf32>
    %481 = vector.shape_cast %480 : vector<192xf32> to vector<1x192xf32>
    %cst_91 = arith.constant 2.500000e-01 : f32
    %482 = vector.broadcast %cst_91 : f32 to vector<1x192xf32>
    %483 = arith.mulf %481, %482 : vector<1x192xf32>
    %484 = vector.extract_strided_slice %398 {offsets = [64, 0], sizes = [64, 192], strides = [1, 1]} : vector<128x192xf32> to vector<64x192xf32>
    %485 = vector.broadcast %483 : vector<1x192xf32> to vector<64x192xf32>
    %486 = arith.addf %484, %485 : vector<64x192xf32>
    %487 = tpu.concatenate %478, %486 in 0 : vector<64x192xf32>, vector<64x192xf32> -> vector<128x192xf32>
    %cst_92 = arith.constant dense<0xFF800000> : vector<128xf32>
    %488 = vector.multi_reduction <maximumf>, %487, %cst_92 [1] : vector<128x192xf32> to vector<128xf32>
    %489 = vector.shape_cast %488 : vector<128xf32> to vector<128x1xf32>
    %490 = vector.broadcast %489 : vector<128x1xf32> to vector<128x192xf32>
    %491 = arith.subf %487, %490 : vector<128x192xf32>
    %492 = math.exp %491 : vector<128x192xf32>
    %cst_93 = arith.constant dense<0.000000e+00> : vector<128xf32>
    %493 = vector.multi_reduction <add>, %492, %cst_93 [1] : vector<128x192xf32> to vector<128xf32>
    %494 = vector.shape_cast %493 : vector<128xf32> to vector<128x1xf32>
    %495 = vector.broadcast %494 : vector<128x1xf32> to vector<128x192xf32>
    %496 = arith.divf %492, %495 : vector<128x192xf32>
    %497 = arith.mulf %496, %215 : vector<128x192xf32>
    %cst_94 = arith.constant dense<0.000000e+00> : vector<128xf32>
    %498 = vector.multi_reduction <add>, %497, %cst_94 [1] : vector<128x192xf32> to vector<128xf32>
    %499 = vector.shape_cast %498 : vector<128xf32> to vector<128x1xf32>
    %500 = arith.mulf %499, %499 : vector<128x1xf32>
    %501 = arith.mulf %500, %499 : vector<128x1xf32>
    %cst_95 = arith.constant 1.000000e-07 : f32
    %502 = vector.broadcast %cst_95 : f32 to vector<128x1xf32>
    %503 = arith.addf %500, %502 : vector<128x1xf32>
    %504 = math.rsqrt %503 : vector<128x1xf32>
    %505 = arith.mulf %501, %504 : vector<128x1xf32>
    %cst_96 = arith.constant 1.000000e+00 : f32
    %506 = vector.broadcast %cst_96 : f32 to vector<128x1xf32>
    %507 = arith.addf %506, %500 : vector<128x1xf32>
    %508 = tpu.reciprocal %507 {approx = true} : vector<128x1xf32> -> vector<128x1xf32>
    %509 = arith.mulf %505, %508 : vector<128x1xf32>
    %510 = arith.mulf %496, %246 : vector<128x192xf32>
    %cst_97 = arith.constant dense<0.000000e+00> : vector<128xf32>
    %511 = vector.multi_reduction <add>, %510, %cst_97 [1] : vector<128x192xf32> to vector<128xf32>
    %512 = vector.shape_cast %511 : vector<128xf32> to vector<128x1xf32>
    %513 = arith.mulf %512, %512 : vector<128x1xf32>
    %514 = arith.mulf %513, %512 : vector<128x1xf32>
    %cst_98 = arith.constant 1.000000e-07 : f32
    %515 = vector.broadcast %cst_98 : f32 to vector<128x1xf32>
    %516 = arith.addf %513, %515 : vector<128x1xf32>
    %517 = math.rsqrt %516 : vector<128x1xf32>
    %518 = arith.mulf %514, %517 : vector<128x1xf32>
    %cst_99 = arith.constant 1.000000e+00 : f32
    %519 = vector.broadcast %cst_99 : f32 to vector<128x1xf32>
    %520 = arith.addf %519, %513 : vector<128x1xf32>
    %521 = tpu.reciprocal %520 {approx = true} : vector<128x1xf32> -> vector<128x1xf32>
    %522 = arith.mulf %518, %521 : vector<128x1xf32>
    %523 = arith.mulf %496, %277 : vector<128x192xf32>
    %cst_100 = arith.constant dense<0.000000e+00> : vector<128xf32>
    %524 = vector.multi_reduction <add>, %523, %cst_100 [1] : vector<128x192xf32> to vector<128xf32>
    %525 = vector.shape_cast %524 : vector<128xf32> to vector<128x1xf32>
    %526 = arith.mulf %525, %525 : vector<128x1xf32>
    %527 = arith.mulf %526, %525 : vector<128x1xf32>
    %cst_101 = arith.constant 1.000000e-07 : f32
    %528 = vector.broadcast %cst_101 : f32 to vector<128x1xf32>
    %529 = arith.addf %526, %528 : vector<128x1xf32>
    %530 = math.rsqrt %529 : vector<128x1xf32>
    %531 = arith.mulf %527, %530 : vector<128x1xf32>
    %cst_102 = arith.constant 1.000000e+00 : f32
    %532 = vector.broadcast %cst_102 : f32 to vector<128x1xf32>
    %533 = arith.addf %532, %526 : vector<128x1xf32>
    %534 = tpu.reciprocal %533 {approx = true} : vector<128x1xf32> -> vector<128x1xf32>
    %535 = arith.mulf %531, %534 : vector<128x1xf32>
    %536 = arith.mulf %496, %308 : vector<128x192xf32>
    %cst_103 = arith.constant dense<0.000000e+00> : vector<128xf32>
    %537 = vector.multi_reduction <add>, %536, %cst_103 [1] : vector<128x192xf32> to vector<128xf32>
    %538 = vector.shape_cast %537 : vector<128xf32> to vector<128x1xf32>
    %539 = arith.mulf %538, %538 : vector<128x1xf32>
    %540 = arith.mulf %539, %538 : vector<128x1xf32>
    %cst_104 = arith.constant 1.000000e-07 : f32
    %541 = vector.broadcast %cst_104 : f32 to vector<128x1xf32>
    %542 = arith.addf %539, %541 : vector<128x1xf32>
    %543 = math.rsqrt %542 : vector<128x1xf32>
    %544 = arith.mulf %540, %543 : vector<128x1xf32>
    %cst_105 = arith.constant 1.000000e+00 : f32
    %545 = vector.broadcast %cst_105 : f32 to vector<128x1xf32>
    %546 = arith.addf %545, %539 : vector<128x1xf32>
    %547 = tpu.reciprocal %546 {approx = true} : vector<128x1xf32> -> vector<128x1xf32>
    %548 = arith.mulf %544, %547 : vector<128x1xf32>
    %549 = tpu.concatenate %509, %522, %535, %548 in 1 : vector<128x1xf32>, vector<128x1xf32>, vector<128x1xf32>, vector<128x1xf32> -> vector<128x4xf32>
    %c0_106 = arith.constant 0 : index
    %c0_107 = arith.constant 0 : index
    %550 = vector.load %arg12[%c0_106, %c0_107] : memref<128x4xf32, #tpu.memory_space<vmem>>, vector<128x4xf32>
    tpu.vector_store %arg12[%c0_106, %c0_107], %549 {strides = array<i32>} : memref<128x4xf32, #tpu.memory_space<vmem>>, vector<128x4xf32>,
    return
  }
}

</mosaic_0001>

<llo_original>
// kernel: capsnet_forward.1
$region0: #{capsnet_forward.1}
  #allocation0 [shape = 'u32[]', space=smem, size = 0x4, offset = 0x4, fixed_abs, tag = 'smem constant byte address 0x4 - core index']
  #allocation1 [shape = 'u32[144,128]{1,0:T(1,128)}', space=vmem, size = 0x12000, scoped, tag = 'internal scratch']
  %s0 = inlined_call_operand.vmem [shape: f32[4,128], index: 0, kind: input, shape index: {}]
  %s1 = inlined_call_operand.vmem [shape: f32[4,128], index: 1, kind: input, shape index: {}]
  %s2 = inlined_call_operand.vmem [shape: f32[4,256], index: 2, kind: input, shape index: {}]
  %s3 = inlined_call_operand.vmem [shape: bf16[256,128], index: 3, kind: input, shape index: {}]
  %s4 = inlined_call_operand.vmem [shape: f32[1,128], index: 4, kind: input, shape index: {}]
  %s5 = inlined_call_operand.vmem [shape: bf16[128,512], index: 5, kind: input, shape index: {}]
  %s6 = inlined_call_operand.vmem [shape: bf16[128,512], index: 6, kind: input, shape index: {}]
  %s7 = inlined_call_operand.vmem [shape: bf16[128,512], index: 7, kind: input, shape index: {}]
  %s8 = inlined_call_operand.vmem [shape: f32[1,512], index: 8, kind: input, shape index: {}]
  %s9 = inlined_call_operand.vmem [shape: f32[1,512], index: 9, kind: input, shape index: {}]
  %s10 = inlined_call_operand.vmem [shape: f32[1,512], index: 10, kind: input, shape index: {}]
  %s11 = inlined_call_operand.vmem [shape: bf16[8,128,192], index: 11, kind: input, shape index: {}]
  %s12 = inlined_call_operand.vmem [shape: f32[128,4], index: 12, kind: output, shape index: {}]
  %s13 = sld [smem:[#allocation0]]
  $region58: #{capsnet_forward.1} parent=0
    _
  %s15 = ssub.s32 1, %s13
  %s16 = scalar_select 0, %s15, %s13
  // Predicated region
  $region2: #{capsnet_forward.1} parent=0 // pred_check
    _
  $region3: #{capsnet_forward.1} parent=0 // pred_check_branch
    %18 = sbr.rel (0) target = $region5
  $region4: #{capsnet_forward.1} parent=0 // pred_region
    _
  $region5: #{capsnet_forward.1} parent=0 // pred_fallthru
    _
  // Predicated region
  $region6: #{capsnet_forward.1} parent=0 // pred_check
    _
  $region7: #{capsnet_forward.1} parent=0 // pred_check_branch
    %20 = sbr.rel (0) target = $region9
  $region8: #{capsnet_forward.1} parent=0 // pred_region
    _
  $region9: #{capsnet_forward.1} parent=0 // pred_fallthru
    _
  // Predicated region
  $region10: #{capsnet_forward.1} parent=0 // pred_check
    _
  $region11: #{capsnet_forward.1} parent=0 // pred_check_branch
    %22 = sbr.rel (0) target = $region13
  $region12: #{capsnet_forward.1} parent=0 // pred_region
    _
  $region13: #{capsnet_forward.1} parent=0 // pred_fallthru
    _
  // Predicated region
  $region14: #{capsnet_forward.1} parent=0 // pred_check
    _
  $region15: #{capsnet_forward.1} parent=0 // pred_check_branch
    %24 = sbr.rel (0) target = $region17
  $region16: #{capsnet_forward.1} parent=0 // pred_region
    _
  $region17: #{capsnet_forward.1} parent=0 // pred_fallthru
    _
  // Predicated region
  $region18: #{capsnet_forward.1} parent=0 // pred_check
    _
  $region19: #{capsnet_forward.1} parent=0 // pred_check_branch
    %26 = sbr.rel (0) target = $region21
  $region20: #{capsnet_forward.1} parent=0 // pred_region
    _
  $region21: #{capsnet_forward.1} parent=0 // pred_fallthru
    _
  // Predicated region
  $region22: #{capsnet_forward.1} parent=0 // pred_check
    _
  $region23: #{capsnet_forward.1} parent=0 // pred_check_branch
    %28 = sbr.rel (0) target = $region25
  $region24: #{capsnet_forward.1} parent=0 // pred_region
    _
  $region25: #{capsnet_forward.1} parent=0 // pred_fallthru
    _
  // Predicated region
  $region26: #{capsnet_forward.1} parent=0 // pred_check
    _
  $region27: #{capsnet_forward.1} parent=0 // pred_check_branch
    %30 = sbr.rel (0) target = $region29
  $region28: #{capsnet_forward.1} parent=0 // pred_region
    _
  $region29: #{capsnet_forward.1} parent=0 // pred_fallthru
    _
  // Predicated region
  $region30: #{capsnet_forward.1} parent=0 // pred_check
    _
  $region31: #{capsnet_forward.1} parent=0 // pred_check_branch
    %32 = sbr.rel (0) target = $region33
  $region32: #{capsnet_forward.1} parent=0 // pred_region
    _
  $region33: #{capsnet_forward.1} parent=0 // pred_fallthru
    _
  // Predicated region
  $region34: #{capsnet_forward.1} parent=0 // pred_check
    _
  $region35: #{capsnet_forward.1} parent=0 // pred_check_branch
    %34 = sbr.rel (0) target = $region37
  $region36: #{capsnet_forward.1} parent=0 // pred_region
    _
  $region37: #{capsnet_forward.1} parent=0 // pred_fallthru
    _
  // Predicated region
  $region38: #{capsnet_forward.1} parent=0 // pred_check
    _
  $region39: #{capsnet_forward.1} parent=0 // pred_check_branch
    %36 = sbr.rel (0) target = $region41
  $region40: #{capsnet_forward.1} parent=0 // pred_region
    _
  $region41: #{capsnet_forward.1} parent=0 // pred_fallthru
    _
  // Predicated region
  $region42: #{capsnet_forward.1} parent=0 // pred_check
    _
  $region43: #{capsnet_forward.1} parent=0 // pred_check_branch
    %38 = sbr.rel (0) target = $region45
  $region44: #{capsnet_forward.1} parent=0 // pred_region
    _
  $region45: #{capsnet_forward.1} parent=0 // pred_fallthru
    _
  // Predicated region
  $region46: #{capsnet_forward.1} parent=0 // pred_check
    _
  $region47: #{capsnet_forward.1} parent=0 // pred_check_branch
    %40 = sbr.rel (0) target = $region49
  $region48: #{capsnet_forward.1} parent=0 // pred_region
    _
  $region49: #{capsnet_forward.1} parent=0 // pred_fallthru
    _
  %v42 = vld [vmem:[%s2] sm:$0xff]
  %v43 = vand.u32 2147483647, %v42
  %v44 = vadd.f32 %v43, 1e-12
  %v45 = vlog2.pop %v44
  %v46 = vmul.f32 %v45, 0.6931472
  %v48 = vcombine.high %v46, %v46
  %vm50 = vcmask 1043456
  %v51 = vsel %vm50, %v46, 0.0
  %v52 = vsel %vm50, %v48, 0.0
  %v53 = vadd.f32 %v51, %v52
  %54 = vadd.xlane.f32.xlu0 %v53
  %v55 = vpop.xlane.xlu0 %54
  %v56 = vsel %vm50, %v55, 0.0
  %v57 = vrot.slane %v56, 4
  %v58 = vadd.f32 %v56, %v57
  %v59 = vrot.slane %v58, 2
  %v60 = vadd.f32 %v58, %v59
  %v61 = vrot.slane %v60, 1
  %v62 = vadd.f32 %v60, %v61
  %v63 = vmul.f32 %v62, 0.0009765625
  %v64 = vsub.f32 %v46, %v63
  %v65 = vmul.f32 %v64, %v64
  %v67 = vcombine.high %v65, %v65
  %v69 = vsel %vm50, %v65, 0.0
  %v70 = vsel %vm50, %v67, 0.0
  %v71 = vadd.f32 %v69, %v70
  %72 = vadd.xlane.f32.xlu0 %v71
  %v73 = vpop.xlane.xlu0 %72
  %v74 = vsel %vm50, %v73, 0.0
  %v75 = vrot.slane %v74, 4
  %v76 = vadd.f32 %v74, %v75
  %v77 = vrot.slane %v76, 2
  %v78 = vadd.f32 %v76, %v77
  %v79 = vrot.slane %v78, 1
  %v80 = vadd.f32 %v78, %v79
  %v81 = vmul.f32 %v80, 0.0009775171
  %v82 = vrsqrt.pop %v81
  %v83 = vmul.f32 %v64, %v82
  %v85 = vcombine.high %v83, %v83
  %v87 = vpack.c.bf16 %v83, %v83
  %v88 = vpack.c.bf16 %v85, %v85
  %v89 = vld [vmem:[%s3] sm:$0xf]
  %v90 = vld [vmem:[%s3 + $0x4] sm:$0xf]
  %v91 = vld [vmem:[%s3 + $0x8] sm:$0xf]
  %v92 = vld [vmem:[%s3 + $0xc] sm:$0xf]
  %v93 = vld [vmem:[%s3 + $0x10] sm:$0xf]
  %v94 = vld [vmem:[%s3 + $0x14] sm:$0xf]
  %v95 = vld [vmem:[%s3 + $0x18] sm:$0xf]
  %v96 = vld [vmem:[%s3 + $0x1c] sm:$0xf]
  %v97 = vld [vmem:[%s3 + $0x20] sm:$0xf]
  %v98 = vld [vmem:[%s3 + $0x24] sm:$0xf]
  %v99 = vld [vmem:[%s3 + $0x28] sm:$0xf]
  %v100 = vld [vmem:[%s3 + $0x2c] sm:$0xf]
  %v101 = vld [vmem:[%s3 + $0x30] sm:$0xf]
  %v102 = vld [vmem:[%s3 + $0x34] sm:$0xf]
  %v103 = vld [vmem:[%s3 + $0x38] sm:$0xf]
  %v104 = vld [vmem:[%s3 + $0x3c] sm:$0xf]
  %v105 = vld [vmem:[%s3 + $0x40] sm:$0xf]
  %v106 = vld [vmem:[%s3 + $0x44] sm:$0xf]
  %v107 = vld [vmem:[%s3 + $0x48] sm:$0xf]
  %v108 = vld [vmem:[%s3 + $0x4c] sm:$0xf]
  %v109 = vld [vmem:[%s3 + $0x50] sm:$0xf]
  %v110 = vld [vmem:[%s3 + $0x54] sm:$0xf]
  %v111 = vld [vmem:[%s3 + $0x58] sm:$0xf]
  %v112 = vld [vmem:[%s3 + $0x5c] sm:$0xf]
  %v113 = vld [vmem:[%s3 + $0x60] sm:$0xf]
  %v114 = vld [vmem:[%s3 + $0x64] sm:$0xf]
  %v115 = vld [vmem:[%s3 + $0x68] sm:$0xf]
  %v116 = vld [vmem:[%s3 + $0x6c] sm:$0xf]
  %v117 = vld [vmem:[%s3 + $0x70] sm:$0xf]
  %v118 = vld [vmem:[%s3 + $0x74] sm:$0xf]
  %v119 = vld [vmem:[%s3 + $0x78] sm:$0xf]
  %v120 = vld [vmem:[%s3 + $0x7c] sm:$0xf]
  %v121 = vld [vmem:[%s4] sm:$0x1]
  %v123 = vlaneseq
  %v124 = vshrl.u32 %v123, 7
  %v125 = vsub.s32 0, %v124
  %v126 = vrot.slane %v121, %v125
  %v160 = vunpack.c.l.b16 %v89
  %v161 = vunpack.c.l.b16 %v90
  %v162 = vunpack.c.l.b16 %v91
  %v163 = vunpack.c.l.b16 %v92
  %v164 = vunpack.c.l.b16 %v93
  %v165 = vunpack.c.l.b16 %v94
  %v166 = vunpack.c.l.b16 %v95
  %v167 = vunpack.c.l.b16 %v96
  %v168 = vunpack.c.l.b16 %v97
  %v169 = vunpack.c.l.b16 %v98
  %v170 = vunpack.c.l.b16 %v99
  %v171 = vunpack.c.l.b16 %v100
  %v172 = vunpack.c.l.b16 %v101
  %v173 = vunpack.c.l.b16 %v102
  %v174 = vunpack.c.l.b16 %v103
  %v175 = vunpack.c.l.b16 %v104
  %v176 = vunpack.c.l.b16 %v105
  %v177 = vunpack.c.l.b16 %v106
  %v178 = vunpack.c.l.b16 %v107
  %v179 = vunpack.c.l.b16 %v108
  %v180 = vunpack.c.l.b16 %v109
  %v181 = vunpack.c.l.b16 %v110
  %v182 = vunpack.c.l.b16 %v111
  %v183 = vunpack.c.l.b16 %v112
  %v184 = vunpack.c.l.b16 %v113
  %v185 = vunpack.c.l.b16 %v114
  %v186 = vunpack.c.l.b16 %v115
  %v187 = vunpack.c.l.b16 %v116
  %v188 = vunpack.c.l.b16 %v117
  %v189 = vunpack.c.l.b16 %v118
  %v190 = vunpack.c.l.b16 %v119
  %v191 = vunpack.c.l.b16 %v120
  %v192 = vpack.c.b16 %v161, %v160
  %v193 = vpack.c.b16 %v163, %v162
  %v194 = vpack.c.b16 %v165, %v164
  %v195 = vpack.c.b16 %v167, %v166
  %v196 = vpack.c.b16 %v169, %v168
  %v197 = vpack.c.b16 %v171, %v170
  %v198 = vpack.c.b16 %v173, %v172
  %v199 = vpack.c.b16 %v175, %v174
  %v200 = vpack.c.b16 %v177, %v176
  %v201 = vpack.c.b16 %v179, %v178
  %v202 = vpack.c.b16 %v181, %v180
  %v203 = vpack.c.b16 %v183, %v182
  %v204 = vpack.c.b16 %v185, %v184
  %v205 = vpack.c.b16 %v187, %v186
  %v206 = vpack.c.b16 %v189, %v188
  %v207 = vpack.c.b16 %v191, %v190
  %224 = vmatprep.subr.bf16.mxu0 0
  %225 = vmatpush1.bf16.msra.mxu0 %v192
  %226 = vmatprep.subr.bf16.mxu0 0
  %227 = vmatpush1.bf16.msra.mxu0 %v193
  %228 = vmatprep.subr.bf16.mxu0 0
  %229 = vmatpush1.bf16.msra.mxu0 %v194
  %230 = vmatprep.subr.bf16.mxu0 0
  %231 = vmatpush1.bf16.msra.mxu0 %v195
  %232 = vmatprep.subr.bf16.mxu0 0
  %233 = vmatpush1.bf16.msra.mxu0 %v196
  %234 = vmatprep.subr.bf16.mxu0 0
  %235 = vmatpush1.bf16.msra.mxu0 %v197
  %236 = vmatprep.subr.bf16.mxu0 0
  %237 = vmatpush1.bf16.msra.mxu0 %v198
  %238 = vmatprep.subr.bf16.mxu0 0
  %239 = vmatpush1.bf16.msra.mxu0 %v199
  %240 = vmatprep.subr.bf16.mxu0 0
  %241 = vmatpush1.bf16.msra.mxu0 %v200
  %242 = vmatprep.subr.bf16.mxu0 0
  %243 = vmatpush1.bf16.msra.mxu0 %v201
  %244 = vmatprep.subr.bf16.mxu0 0
  %245 = vmatpush1.bf16.msra.mxu0 %v202
  %246 = vmatprep.subr.bf16.mxu0 0
  %247 = vmatpush1.bf16.msra.mxu0 %v203
  %248 = vmatprep.subr.bf16.mxu0 0
  %249 = vmatpush1.bf16.msra.mxu0 %v204
  %250 = vmatprep.subr.bf16.mxu0 0
  %251 = vmatpush1.bf16.msra.mxu0 %v205
  %252 = vmatprep.subr.bf16.mxu0 0
  %253 = vmatpush1.bf16.msra.mxu0 %v206
  %254 = vmatprep.subr.bf16.mxu0 0
  %255 = vmatpush1.bf16.msra.mxu0 %v207
  %256 = vmatprep.mubr.bf16.mxu0 %v88
  %257 = vmatmul.mubr.bf16.gmra.mrb[0].mxu0 %v87
  %v258 = vpop.f32.mrb[0].mxu0
  %v259 = vadd.f32 %v126, %v258
  %v260 = vpop.f32.mrb[0].mxu0
  %v261 = vpop.f32.mrb[0].mxu0
  %v262 = vpop.f32.mrb[0].mxu0
  %263 = vdwg.mxu0
  %v264 = vmax.f32 %v259, 0.0
  %v265 = vld [vmem:[%s0] sm:$0xf]
  %v266 = vpack.c.bf16 %v265, %v265
  %v267 = vld [vmem:[%s5] sm:$0xff]
  %v268 = vld [vmem:[%s5 + $0x8] sm:$0xff]
  %v269 = vld [vmem:[%s5 + $0x10] sm:$0xff]
  %v270 = vld [vmem:[%s5 + $0x18] sm:$0xff]
  %v271 = vld [vmem:[%s5 + $0x20] sm:$0xff]
  %v272 = vld [vmem:[%s5 + $0x28] sm:$0xff]
  %v273 = vld [vmem:[%s5 + $0x30] sm:$0xff]
  %v274 = vld [vmem:[%s5 + $0x38] sm:$0xff]
  %v275 = vld [vmem:[%s5 + $0x40] sm:$0xff]
  %v276 = vld [vmem:[%s5 + $0x48] sm:$0xff]
  %v277 = vld [vmem:[%s5 + $0x50] sm:$0xff]
  %v278 = vld [vmem:[%s5 + $0x58] sm:$0xff]
  %v279 = vld [vmem:[%s5 + $0x60] sm:$0xff]
  %v280 = vld [vmem:[%s5 + $0x68] sm:$0xff]
  %v281 = vld [vmem:[%s5 + $0x70] sm:$0xff]
  %v282 = vld [vmem:[%s5 + $0x78] sm:$0xff]
  %v283 = vld [vmem:[%s5 + $0x80] sm:$0xff]
  %v284 = vld [vmem:[%s5 + $0x88] sm:$0xff]
  %v285 = vld [vmem:[%s5 + $0x90] sm:$0xff]
  %v286 = vld [vmem:[%s5 + $0x98] sm:$0xff]
  %v287 = vld [vmem:[%s5 + $0xa0] sm:$0xff]
  %v288 = vld [vmem:[%s5 + $0xa8] sm:$0xff]
  %v289 = vld [vmem:[%s5 + $0xb0] sm:$0xff]
  %v290 = vld [vmem:[%s5 + $0xb8] sm:$0xff]
  %v291 = vld [vmem:[%s5 + $0xc0] sm:$0xff]
  %v292 = vld [vmem:[%s5 + $0xc8] sm:$0xff]
  %v293 = vld [vmem:[%s5 + $0xd0] sm:$0xff]
  %v294 = vld [vmem:[%s5 + $0xd8] sm:$0xff]
  %v295 = vld [vmem:[%s5 + $0xe0] sm:$0xff]
  %v296 = vld [vmem:[%s5 + $0xe8] sm:$0xff]
  %v297 = vld [vmem:[%s5 + $0xf0] sm:$0xff]
  %v298 = vld [vmem:[%s5 + $0xf8] sm:$0xff]
  %v299 = vld [vmem:[%s8] sm:$0xf]
  %v301 = vlaneseq
  %v302 = vshrl.u32 %v301, 7
  %v303 = vsub.s32 0, %v302
  %v304 = vrot.slane %v299, %v303
  %v305 = vlaneseq
  %v306 = vshrl.u32 %v305, 7
  %v307 = vsub.s32 1, %v306
  %v308 = vrot.slane %v299, %v307
  %v309 = vlaneseq
  %v310 = vshrl.u32 %v309, 7
  %v311 = vsub.s32 2, %v310
  %v312 = vrot.slane %v299, %v311
  %v313 = vlaneseq
  %v314 = vshrl.u32 %v313, 7
  %v315 = vsub.s32 3, %v314
  %v316 = vrot.slane %v299, %v315
  %v353 = vunpack.c.l.b16 %v267
  %v354 = vunpack.c.h.b16 %v267
  %v355 = vunpack.c.l.b16 %v268
  %v356 = vunpack.c.h.b16 %v268
  %v357 = vunpack.c.l.b16 %v269
  %v358 = vunpack.c.h.b16 %v269
  %v359 = vunpack.c.l.b16 %v270
  %v360 = vunpack.c.h.b16 %v270
  %v361 = vunpack.c.l.b16 %v271
  %v362 = vunpack.c.h.b16 %v271
  %v363 = vunpack.c.l.b16 %v272
  %v364 = vunpack.c.h.b16 %v272
  %v365 = vunpack.c.l.b16 %v273
  %v366 = vunpack.c.h.b16 %v273
  %v367 = vunpack.c.l.b16 %v274
  %v368 = vunpack.c.h.b16 %v274
  %v369 = vunpack.c.l.b16 %v275
  %v370 = vunpack.c.h.b16 %v275
  %v371 = vunpack.c.l.b16 %v276
  %v372 = vunpack.c.h.b16 %v276
  %v373 = vunpack.c.l.b16 %v277
  %v374 = vunpack.c.h.b16 %v277
  %v375 = vunpack.c.l.b16 %v278
  %v376 = vunpack.c.h.b16 %v278
  %v377 = vunpack.c.l.b16 %v279
  %v378 = vunpack.c.h.b16 %v279
  %v379 = vunpack.c.l.b16 %v280
  %v380 = vunpack.c.h.b16 %v280
  %v381 = vunpack.c.l.b16 %v281
  %v382 = vunpack.c.h.b16 %v281
  %v383 = vunpack.c.l.b16 %v282
  %v384 = vunpack.c.h.b16 %v282
  %v385 = vunpack.c.l.b16 %v283
  %v386 = vunpack.c.h.b16 %v283
  %v387 = vunpack.c.l.b16 %v284
  %v388 = vunpack.c.h.b16 %v284
  %v389 = vunpack.c.l.b16 %v285
  %v390 = vunpack.c.h.b16 %v285
  %v391 = vunpack.c.l.b16 %v286
  %v392 = vunpack.c.h.b16 %v286
  %v393 = vunpack.c.l.b16 %v287
  %v394 = vunpack.c.h.b16 %v287
  %v395 = vunpack.c.l.b16 %v288
  %v396 = vunpack.c.h.b16 %v288
  %v397 = vunpack.c.l.b16 %v289
  %v398 = vunpack.c.h.b16 %v289
  %v399 = vunpack.c.l.b16 %v290
  %v400 = vunpack.c.h.b16 %v290
  %v401 = vunpack.c.l.b16 %v291
  %v402 = vunpack.c.h.b16 %v291
  %v403 = vunpack.c.l.b16 %v292
  %v404 = vunpack.c.h.b16 %v292
  %v405 = vunpack.c.l.b16 %v293
  %v406 = vunpack.c.h.b16 %v293
  %v407 = vunpack.c.l.b16 %v294
  %v408 = vunpack.c.h.b16 %v294
  %v409 = vunpack.c.l.b16 %v295
  %v410 = vunpack.c.h.b16 %v295
  %v411 = vunpack.c.l.b16 %v296
  %v412 = vunpack.c.h.b16 %v296
  %v413 = vunpack.c.l.b16 %v297
  %v414 = vunpack.c.h.b16 %v297
  %v415 = vunpack.c.l.b16 %v298
  %v416 = vunpack.c.h.b16 %v298
  %v417 = vpack.c.b16 %v357, %v353
  %v418 = vpack.c.b16 %v358, %v354
  %v419 = vpack.c.b16 %v359, %v355
  %v420 = vpack.c.b16 %v360, %v356
  %v421 = vpack.c.b16 %v365, %v361
  %v422 = vpack.c.b16 %v366, %v362
  %v423 = vpack.c.b16 %v367, %v363
  %v424 = vpack.c.b16 %v368, %v364
  %v425 = vpack.c.b16 %v373, %v369
  %v426 = vpack.c.b16 %v374, %v370
  %v427 = vpack.c.b16 %v375, %v371
  %v428 = vpack.c.b16 %v376, %v372
  %v429 = vpack.c.b16 %v381, %v377
  %v430 = vpack.c.b16 %v382, %v378
  %v431 = vpack.c.b16 %v383, %v379
  %v432 = vpack.c.b16 %v384, %v380
  %v433 = vpack.c.b16 %v389, %v385
  %v434 = vpack.c.b16 %v390, %v386
  %v435 = vpack.c.b16 %v391, %v387
  %v436 = vpack.c.b16 %v392, %v388
  %v437 = vpack.c.b16 %v397, %v393
  %v438 = vpack.c.b16 %v398, %v394
  %v439 = vpack.c.b16 %v399, %v395
  %v440 = vpack.c.b16 %v400, %v396
  %v441 = vpack.c.b16 %v405, %v401
  %v442 = vpack.c.b16 %v406, %v402
  %v443 = vpack.c.b16 %v407, %v403
  %v444 = vpack.c.b16 %v408, %v404
  %v445 = vpack.c.b16 %v413, %v409
  %v446 = vpack.c.b16 %v414, %v410
  %v447 = vpack.c.b16 %v415, %v411
  %v448 = vpack.c.b16 %v416, %v412
  %481 = vmatprep.subr.bf16.mxu0 %v418
  %482 = vmatpush1.bf16.msra.mxu0 %v417
  %483 = vmatprep.subr.bf16.mxu0 %v422
  %484 = vmatpush1.bf16.msra.mxu0 %v421
  %485 = vmatprep.subr.bf16.mxu0 %v426
  %486 = vmatpush1.bf16.msra.mxu0 %v425
  %487 = vmatprep.subr.bf16.mxu0 %v430
  %488 = vmatpush1.bf16.msra.mxu0 %v429
  %489 = vmatprep.subr.bf16.mxu0 %v434
  %490 = vmatpush1.bf16.msra.mxu0 %v433
  %491 = vmatprep.subr.bf16.mxu0 %v438
  %492 = vmatpush1.bf16.msra.mxu0 %v437
  %493 = vmatprep.subr.bf16.mxu0 %v442
  %494 = vmatpush1.bf16.msra.mxu0 %v441
  %495 = vmatprep.subr.bf16.mxu0 %v446
  %496 = vmatpush1.bf16.msra.mxu0 %v445
  %497 = vmatprep.subr.bf16.mxu0 0
  %498 = vmatpush1.bf16.msra.mxu0 0
  %499 = vmatprep.subr.bf16.mxu0 0
  %500 = vmatpush1.bf16.msra.mxu0 0
  %501 = vmatprep.subr.bf16.mxu0 0
  %502 = vmatpush1.bf16.msra.mxu0 0
  %503 = vmatprep.subr.bf16.mxu0 0
  %504 = vmatpush1.bf16.msra.mxu0 0
  %505 = vmatprep.subr.bf16.mxu0 0
  %506 = vmatpush1.bf16.msra.mxu0 0
  %507 = vmatprep.subr.bf16.mxu0 0
  %508 = vmatpush1.bf16.msra.mxu0 0
  %509 = vmatprep.subr.bf16.mxu0 0
  %510 = vmatpush1.bf16.msra.mxu0 0
  %511 = vmatprep.subr.bf16.mxu0 0
  %512 = vmatpush1.bf16.msra.mxu0 0
  %513 = vmatprep.mubr.bf16.mxu0 0
  %514 = vmatmul.mubr.bf16.gmra.mrb[0].mxu0 %v266
  %v515 = vpop.f32.mrb[0].mxu0
  %v516 = vadd.f32 %v304, %v515
  %v517 = vpop.f32.mrb[0].mxu0
  %v518 = vadd.f32 %v308, %v517
  %v519 = vpop.f32.mrb[0].mxu0
  %v520 = vpop.f32.mrb[0].mxu0
  %521 = vdwg.mxu0
  %522 = vmatprep.subr.bf16.mxu0 %v420
  %523 = vmatpush1.bf16.msra.mxu0 %v419
  %524 = vmatprep.subr.bf16.mxu0 %v424
  %525 = vmatpush1.bf16.msra.mxu0 %v423
  %526 = vmatprep.subr.bf16.mxu0 %v428
  %527 = vmatpush1.bf16.msra.mxu0 %v427
  %528 = vmatprep.subr.bf16.mxu0 %v432
  %529 = vmatpush1.bf16.msra.mxu0 %v431
  %530 = vmatprep.subr.bf16.mxu0 %v436
  %531 = vmatpush1.bf16.msra.mxu0 %v435
  %532 = vmatprep.subr.bf16.mxu0 %v440
  %533 = vmatpush1.bf16.msra.mxu0 %v439
  %534 = vmatprep.subr.bf16.mxu0 %v444
  %535 = vmatpush1.bf16.msra.mxu0 %v443
  %536 = vmatprep.subr.bf16.mxu0 %v448
  %537 = vmatpush1.bf16.msra.mxu0 %v447
  %538 = vmatprep.subr.bf16.mxu0 0
  %539 = vmatpush1.bf16.msra.mxu0 0
  %540 = vmatprep.subr.bf16.mxu0 0
  %541 = vmatpush1.bf16.msra.mxu0 0
  %542 = vmatprep.subr.bf16.mxu0 0
  %543 = vmatpush1.bf16.msra.mxu0 0
  %544 = vmatprep.subr.bf16.mxu0 0
  %545 = vmatpush1.bf16.msra.mxu0 0
  %546 = vmatprep.subr.bf16.mxu0 0
  %547 = vmatpush1.bf16.msra.mxu0 0
  %548 = vmatprep.subr.bf16.mxu0 0
  %549 = vmatpush1.bf16.msra.mxu0 0
  %550 = vmatprep.subr.bf16.mxu0 0
  %551 = vmatpush1.bf16.msra.mxu0 0
  %552 = vmatprep.subr.bf16.mxu0 0
  %553 = vmatpush1.bf16.msra.mxu0 0
  %554 = vmatprep.mubr.bf16.mxu0 0
  %555 = vmatmul.mubr.bf16.gmra.mrb[0].mxu0 %v266
  %v556 = vpop.f32.mrb[0].mxu0
  %v557 = vadd.f32 %v312, %v556
  %v558 = vpop.f32.mrb[0].mxu0
  %v559 = vadd.f32 %v316, %v558
  %v560 = vpop.f32.mrb[0].mxu0
  %v561 = vpop.f32.mrb[0].mxu0
  %562 = vdwg.mxu0
  %v563 = vmul.f32 %v516, %v516
  %v564 = vmul.f32 %v518, %v518
  %v565 = vmul.f32 %v557, %v557
  %v566 = vmul.f32 %v559, %v559
  %568 = vrot.lane.b32.xlu0 %v563, 64
  %v569 = vpop.permute.xlu0 %568
  %v571 = vadd.f32 %v563, %v569
  %v572 = vadd.f32 %v571, %v564
  %574 = vrot.lane.b32.xlu0 %v564, 64
  %v575 = vpop.permute.xlu0 %574
  %v577 = vadd.f32 %v572, %v575
  %v578 = vadd.f32 %v577, %v565
  %580 = vrot.lane.b32.xlu0 %v565, 64
  %v581 = vpop.permute.xlu0 %580
  %v583 = vadd.f32 %v578, %v581
  %v584 = vadd.f32 %v583, %v566
  %586 = vrot.lane.b32.xlu0 %v566, 64
  %v587 = vpop.permute.xlu0 %586
  %v589 = vadd.f32 %v584, %v587
  %591 = vrot.lane.b32.xlu0 %v589, 64
  %v592 = vpop.permute.xlu0 %591
  %vm594 = vcmask 523264
  %v595 = vsel %vm594, %v589, %v592
  %v596 = vadd.f32 %v595, 1e-07
  %v597 = vrsqrt.pop %v596
  %v598 = vmul.f32 %v595, %v597
  %v599 = vadd.f32 %v595, 1.0
  %v600 = vrcp.pop %v599
  %v601 = vmul.f32 %v598, %v600
  %v602 = vmul.f32 %v516, %v601
  %v603 = vmul.f32 %v518, %v601
  %v604 = vmul.f32 %v557, %v601
  %v605 = vmul.f32 %v559, %v601
  %v606 = vld [vmem:[%s1] sm:$0xf]
  %v607 = vpack.c.bf16 %v606, %v606
  %v608 = vld [vmem:[%s6] sm:$0xff]
  %v609 = vld [vmem:[%s6 + $0x8] sm:$0xff]
  %v610 = vld [vmem:[%s6 + $0x10] sm:$0xff]
  %v611 = vld [vmem:[%s6 + $0x18] sm:$0xff]
  %v612 = vld [vmem:[%s6 + $0x20] sm:$0xff]
  %v613 = vld [vmem:[%s6 + $0x28] sm:$0xff]
  %v614 = vld [vmem:[%s6 + $0x30] sm:$0xff]
  %v615 = vld [vmem:[%s6 + $0x38] sm:$0xff]
  %v616 = vld [vmem:[%s6 + $0x40] sm:$0xff]
  %v617 = vld [vmem:[%s6 + $0x48] sm:$0xff]
  %v618 = vld [vmem:[%s6 + $0x50] sm:$0xff]
  %v619 = vld [vmem:[%s6 + $0x58] sm:$0xff]
  %v620 = vld [vmem:[%s6 + $0x60] sm:$0xff]
  %v621 = vld [vmem:[%s6 + $0x68] sm:$0xff]
  %v622 = vld [vmem:[%s6 + $0x70] sm:$0xff]
  %v623 = vld [vmem:[%s6 + $0x78] sm:$0xff]
  %v624 = vld [vmem:[%s6 + $0x80] sm:$0xff]
  %v625 = vld [vmem:[%s6 + $0x88] sm:$0xff]
  %v626 = vld [vmem:[%s6 + $0x90] sm:$0xff]
  %v627 = vld [vmem:[%s6 + $0x98] sm:$0xff]
  %v628 = vld [vmem:[%s6 + $0xa0] sm:$0xff]
  %v629 = vld [vmem:[%s6 + $0xa8] sm:$0xff]
  %v630 = vld [vmem:[%s6 + $0xb0] sm:$0xff]
  %v631 = vld [vmem:[%s6 + $0xb8] sm:$0xff]
  %v632 = vld [vmem:[%s6 + $0xc0] sm:$0xff]
  %v633 = vld [vmem:[%s6 + $0xc8] sm:$0xff]
  %v634 = vld [vmem:[%s6 + $0xd0] sm:$0xff]
  %v635 = vld [vmem:[%s6 + $0xd8] sm:$0xff]
  %v636 = vld [vmem:[%s6 + $0xe0] sm:$0xff]
  %v637 = vld [vmem:[%s6 + $0xe8] sm:$0xff]
  %v638 = vld [vmem:[%s6 + $0xf0] sm:$0xff]
  %v639 = vld [vmem:[%s6 + $0xf8] sm:$0xff]
  %v640 = vld [vmem:[%s9] sm:$0xf]
  %v642 = vlaneseq
  %v643 = vshrl.u32 %v642, 7
  %v644 = vsub.s32 0, %v643
  %v645 = vrot.slane %v640, %v644
  %v646 = vlaneseq
  %v647 = vshrl.u32 %v646, 7
  %v648 = vsub.s32 1, %v647
  %v649 = vrot.slane %v640, %v648
  %v650 = vlaneseq
  %v651 = vshrl.u32 %v650, 7
  %v652 = vsub.s32 2, %v651
  %v653 = vrot.slane %v640, %v652
  %v654 = vlaneseq
  %v655 = vshrl.u32 %v654, 7
  %v656 = vsub.s32 3, %v655
  %v657 = vrot.slane %v640, %v656
  %v694 = vunpack.c.l.b16 %v608
  %v695 = vunpack.c.h.b16 %v608
  %v696 = vunpack.c.l.b16 %v609
  %v697 = vunpack.c.h.b16 %v609
  %v698 = vunpack.c.l.b16 %v610
  %v699 = vunpack.c.h.b16 %v610
  %v700 = vunpack.c.l.b16 %v611
  %v701 = vunpack.c.h.b16 %v611
  %v702 = vunpack.c.l.b16 %v612
  %v703 = vunpack.c.h.b16 %v612
  %v704 = vunpack.c.l.b16 %v613
  %v705 = vunpack.c.h.b16 %v613
  %v706 = vunpack.c.l.b16 %v614
  %v707 = vunpack.c.h.b16 %v614
  %v708 = vunpack.c.l.b16 %v615
  %v709 = vunpack.c.h.b16 %v615
  %v710 = vunpack.c.l.b16 %v616
  %v711 = vunpack.c.h.b16 %v616
  %v712 = vunpack.c.l.b16 %v617
  %v713 = vunpack.c.h.b16 %v617
  %v714 = vunpack.c.l.b16 %v618
  %v715 = vunpack.c.h.b16 %v618
  %v716 = vunpack.c.l.b16 %v619
  %v717 = vunpack.c.h.b16 %v619
  %v718 = vunpack.c.l.b16 %v620
  %v719 = vunpack.c.h.b16 %v620
  %v720 = vunpack.c.l.b16 %v621
  %v721 = vunpack.c.h.b16 %v621
  %v722 = vunpack.c.l.b16 %v622
  %v723 = vunpack.c.h.b16 %v622
  %v724 = vunpack.c.l.b16 %v623
  %v725 = vunpack.c.h.b16 %v623
  %v726 = vunpack.c.l.b16 %v624
  %v727 = vunpack.c.h.b16 %v624
  %v728 = vunpack.c.l.b16 %v625
  %v729 = vunpack.c.h.b16 %v625
  %v730 = vunpack.c.l.b16 %v626
  %v731 = vunpack.c.h.b16 %v626
  %v732 = vunpack.c.l.b16 %v627
  %v733 = vunpack.c.h.b16 %v627
  %v734 = vunpack.c.l.b16 %v628
  %v735 = vunpack.c.h.b16 %v628
  %v736 = vunpack.c.l.b16 %v629
  %v737 = vunpack.c.h.b16 %v629
  %v738 = vunpack.c.l.b16 %v630
  %v739 = vunpack.c.h.b16 %v630
  %v740 = vunpack.c.l.b16 %v631
  %v741 = vunpack.c.h.b16 %v631
  %v742 = vunpack.c.l.b16 %v632
  %v743 = vunpack.c.h.b16 %v632
  %v744 = vunpack.c.l.b16 %v633
  %v745 = vunpack.c.h.b16 %v633
  %v746 = vunpack.c.l.b16 %v634
  %v747 = vunpack.c.h.b16 %v634
  %v748 = vunpack.c.l.b16 %v635
  %v749 = vunpack.c.h.b16 %v635
  %v750 = vunpack.c.l.b16 %v636
  %v751 = vunpack.c.h.b16 %v636
  %v752 = vunpack.c.l.b16 %v637
  %v753 = vunpack.c.h.b16 %v637
  %v754 = vunpack.c.l.b16 %v638
  %v755 = vunpack.c.h.b16 %v638
  %v756 = vunpack.c.l.b16 %v639
  %v757 = vunpack.c.h.b16 %v639
  %v758 = vpack.c.b16 %v698, %v694
  %v759 = vpack.c.b16 %v699, %v695
  %v760 = vpack.c.b16 %v700, %v696
  %v761 = vpack.c.b16 %v701, %v697
  %v762 = vpack.c.b16 %v706, %v702
  %v763 = vpack.c.b16 %v707, %v703
  %v764 = vpack.c.b16 %v708, %v704
  %v765 = vpack.c.b16 %v709, %v705
  %v766 = vpack.c.b16 %v714, %v710
  %v767 = vpack.c.b16 %v715, %v711
  %v768 = vpack.c.b16 %v716, %v712
  %v769 = vpack.c.b16 %v717, %v713
  %v770 = vpack.c.b16 %v722, %v718
  %v771 = vpack.c.b16 %v723, %v719
  %v772 = vpack.c.b16 %v724, %v720
  %v773 = vpack.c.b16 %v725, %v721
  %v774 = vpack.c.b16 %v730, %v726
  %v775 = vpack.c.b16 %v731, %v727
  %v776 = vpack.c.b16 %v732, %v728
  %v777 = vpack.c.b16 %v733, %v729
  %v778 = vpack.c.b16 %v738, %v734
  %v779 = vpack.c.b16 %v739, %v735
  %v780 = vpack.c.b16 %v740, %v736
  %v781 = vpack.c.b16 %v741, %v737
  %v782 = vpack.c.b16 %v746, %v742
  %v783 = vpack.c.b16 %v747, %v743
  %v784 = vpack.c.b16 %v748, %v744
  %v785 = vpack.c.b16 %v749, %v745
  %v786 = vpack.c.b16 %v754, %v750
  %v787 = vpack.c.b16 %v755, %v751
  %v788 = vpack.c.b16 %v756, %v752
  %v789 = vpack.c.b16 %v757, %v753
  %822 = vmatprep.subr.bf16.mxu0 %v759
  %823 = vmatpush1.bf16.msra.mxu0 %v758
  %824 = vmatprep.subr.bf16.mxu0 %v763
  %825 = vmatpush1.bf16.msra.mxu0 %v762
  %826 = vmatprep.subr.bf16.mxu0 %v767
  %827 = vmatpush1.bf16.msra.mxu0 %v766
  %828 = vmatprep.subr.bf16.mxu0 %v771
  %829 = vmatpush1.bf16.msra.mxu0 %v770
  %830 = vmatprep.subr.bf16.mxu0 %v775
  %831 = vmatpush1.bf16.msra.mxu0 %v774
  %832 = vmatprep.subr.bf16.mxu0 %v779
  %833 = vmatpush1.bf16.msra.mxu0 %v778
  %834 = vmatprep.subr.bf16.mxu0 %v783
  %835 = vmatpush1.bf16.msra.mxu0 %v782
  %836 = vmatprep.subr.bf16.mxu0 %v787
  %837 = vmatpush1.bf16.msra.mxu0 %v786
  %838 = vmatprep.subr.bf16.mxu0 0
  %839 = vmatpush1.bf16.msra.mxu0 0
  %840 = vmatprep.subr.bf16.mxu0 0
  %841 = vmatpush1.bf16.msra.mxu0 0
  %842 = vmatprep.subr.bf16.mxu0 0
  %843 = vmatpush1.bf16.msra.mxu0 0
  %844 = vmatprep.subr.bf16.mxu0 0
  %845 = vmatpush1.bf16.msra.mxu0 0
  %846 = vmatprep.subr.bf16.mxu0 0
  %847 = vmatpush1.bf16.msra.mxu0 0
  %848 = vmatprep.subr.bf16.mxu0 0
  %849 = vmatpush1.bf16.msra.mxu0 0
  %850 = vmatprep.subr.bf16.mxu0 0
  %851 = vmatpush1.bf16.msra.mxu0 0
  %852 = vmatprep.subr.bf16.mxu0 0
  %853 = vmatpush1.bf16.msra.mxu0 0
  %854 = vmatprep.mubr.bf16.mxu0 0
  %855 = vmatmul.mubr.bf16.gmra.mrb[0].mxu0 %v607
  %v856 = vpop.f32.mrb[0].mxu0
  %v857 = vadd.f32 %v645, %v856
  %v858 = vpop.f32.mrb[0].mxu0
  %v859 = vadd.f32 %v649, %v858
  %v860 = vpop.f32.mrb[0].mxu0
  %v861 = vpop.f32.mrb[0].mxu0
  %862 = vdwg.mxu0
  %863 = vmatprep.subr.bf16.mxu0 %v761
  %864 = vmatpush1.bf16.msra.mxu0 %v760
  %865 = vmatprep.subr.bf16.mxu0 %v765
  %866 = vmatpush1.bf16.msra.mxu0 %v764
  %867 = vmatprep.subr.bf16.mxu0 %v769
  %868 = vmatpush1.bf16.msra.mxu0 %v768
  %869 = vmatprep.subr.bf16.mxu0 %v773
  %870 = vmatpush1.bf16.msra.mxu0 %v772
  %871 = vmatprep.subr.bf16.mxu0 %v777
  %872 = vmatpush1.bf16.msra.mxu0 %v776
  %873 = vmatprep.subr.bf16.mxu0 %v781
  %874 = vmatpush1.bf16.msra.mxu0 %v780
  %875 = vmatprep.subr.bf16.mxu0 %v785
  %876 = vmatpush1.bf16.msra.mxu0 %v784
  %877 = vmatprep.subr.bf16.mxu0 %v789
  %878 = vmatpush1.bf16.msra.mxu0 %v788
  %879 = vmatprep.subr.bf16.mxu0 0
  %880 = vmatpush1.bf16.msra.mxu0 0
  %881 = vmatprep.subr.bf16.mxu0 0
  %882 = vmatpush1.bf16.msra.mxu0 0
  %883 = vmatprep.subr.bf16.mxu0 0
  %884 = vmatpush1.bf16.msra.mxu0 0
  %885 = vmatprep.subr.bf16.mxu0 0
  %886 = vmatpush1.bf16.msra.mxu0 0
  %887 = vmatprep.subr.bf16.mxu0 0
  %888 = vmatpush1.bf16.msra.mxu0 0
  %889 = vmatprep.subr.bf16.mxu0 0
  %890 = vmatpush1.bf16.msra.mxu0 0
  %891 = vmatprep.subr.bf16.mxu0 0
  %892 = vmatpush1.bf16.msra.mxu0 0
  %893 = vmatprep.subr.bf16.mxu0 0
  %894 = vmatpush1.bf16.msra.mxu0 0
  %895 = vmatprep.mubr.bf16.mxu0 0
  %896 = vmatmul.mubr.bf16.gmra.mrb[0].mxu0 %v607
  %v897 = vpop.f32.mrb[0].mxu0
  %v898 = vadd.f32 %v653, %v897
  %v899 = vpop.f32.mrb[0].mxu0
  %v900 = vadd.f32 %v657, %v899
  %v901 = vpop.f32.mrb[0].mxu0
  %v902 = vpop.f32.mrb[0].mxu0
  %903 = vdwg.mxu0
  %v904 = vmul.f32 %v857, %v857
  %v905 = vmul.f32 %v859, %v859
  %v906 = vmul.f32 %v898, %v898
  %v907 = vmul.f32 %v900, %v900
  %909 = vrot.lane.b32.xlu0 %v904, 64
  %v910 = vpop.permute.xlu0 %909
  %v912 = vadd.f32 %v904, %v910
  %v913 = vadd.f32 %v912, %v905
  %915 = vrot.lane.b32.xlu0 %v905, 64
  %v916 = vpop.permute.xlu0 %915
  %v918 = vadd.f32 %v913, %v916
  %v919 = vadd.f32 %v918, %v906
  %921 = vrot.lane.b32.xlu0 %v906, 64
  %v922 = vpop.permute.xlu0 %921
  %v924 = vadd.f32 %v919, %v922
  %v925 = vadd.f32 %v924, %v907
  %927 = vrot.lane.b32.xlu0 %v907, 64
  %v928 = vpop.permute.xlu0 %927
  %v930 = vadd.f32 %v925, %v928
  %932 = vrot.lane.b32.xlu0 %v930, 64
  %v933 = vpop.permute.xlu0 %932
  %v935 = vsel %vm594, %v930, %v933
  %v936 = vadd.f32 %v935, 1e-07
  %v937 = vrsqrt.pop %v936
  %v938 = vmul.f32 %v935, %v937
  %v939 = vadd.f32 %v935, 1.0
  %v940 = vrcp.pop %v939
  %v941 = vmul.f32 %v938, %v940
  %v942 = vmul.f32 %v857, %v941
  %v943 = vmul.f32 %v859, %v941
  %v944 = vmul.f32 %v898, %v941
  %v945 = vmul.f32 %v900, %v941
  %v946 = vpack.c.bf16 %v264, %v264
  %v947 = vld [vmem:[%s7] sm:$0xff]
  %v948 = vld [vmem:[%s7 + $0x8] sm:$0xff]
  %v949 = vld [vmem:[%s7 + $0x10] sm:$0xff]
  %v950 = vld [vmem:[%s7 + $0x18] sm:$0xff]
  %v951 = vld [vmem:[%s7 + $0x20] sm:$0xff]
  %v952 = vld [vmem:[%s7 + $0x28] sm:$0xff]
  %v953 = vld [vmem:[%s7 + $0x30] sm:$0xff]
  %v954 = vld [vmem:[%s7 + $0x38] sm:$0xff]
  %v955 = vld [vmem:[%s7 + $0x40] sm:$0xff]
  %v956 = vld [vmem:[%s7 + $0x48] sm:$0xff]
  %v957 = vld [vmem:[%s7 + $0x50] sm:$0xff]
  %v958 = vld [vmem:[%s7 + $0x58] sm:$0xff]
  %v959 = vld [vmem:[%s7 + $0x60] sm:$0xff]
  %v960 = vld [vmem:[%s7 + $0x68] sm:$0xff]
  %v961 = vld [vmem:[%s7 + $0x70] sm:$0xff]
  %v962 = vld [vmem:[%s7 + $0x78] sm:$0xff]
  %v963 = vld [vmem:[%s7 + $0x80] sm:$0xff]
  %v964 = vld [vmem:[%s7 + $0x88] sm:$0xff]
  %v965 = vld [vmem:[%s7 + $0x90] sm:$0xff]
  %v966 = vld [vmem:[%s7 + $0x98] sm:$0xff]
  %v967 = vld [vmem:[%s7 + $0xa0] sm:$0xff]
  %v968 = vld [vmem:[%s7 + $0xa8] sm:$0xff]
  %v969 = vld [vmem:[%s7 + $0xb0] sm:$0xff]
  %v970 = vld [vmem:[%s7 + $0xb8] sm:$0xff]
  %v971 = vld [vmem:[%s7 + $0xc0] sm:$0xff]
  %v972 = vld [vmem:[%s7 + $0xc8] sm:$0xff]
  %v973 = vld [vmem:[%s7 + $0xd0] sm:$0xff]
  %v974 = vld [vmem:[%s7 + $0xd8] sm:$0xff]
  %v975 = vld [vmem:[%s7 + $0xe0] sm:$0xff]
  %v976 = vld [vmem:[%s7 + $0xe8] sm:$0xff]
  %v977 = vld [vmem:[%s7 + $0xf0] sm:$0xff]
  %v978 = vld [vmem:[%s7 + $0xf8] sm:$0xff]
  %v979 = vld [vmem:[%s10] sm:$0xf]
  %v981 = vlaneseq
  %v982 = vshrl.u32 %v981, 7
  %v983 = vsub.s32 0, %v982
  %v984 = vrot.slane %v979, %v983
  %v985 = vlaneseq
  %v986 = vshrl.u32 %v985, 7
  %v987 = vsub.s32 1, %v986
  %v988 = vrot.slane %v979, %v987
  %v989 = vlaneseq
  %v990 = vshrl.u32 %v989, 7
  %v991 = vsub.s32 2, %v990
  %v992 = vrot.slane %v979, %v991
  %v993 = vlaneseq
  %v994 = vshrl.u32 %v993, 7
  %v995 = vsub.s32 3, %v994
  %v996 = vrot.slane %v979, %v995
  %v1033 = vunpack.c.l.b16 %v947
  %v1034 = vunpack.c.h.b16 %v947
  %v1035 = vunpack.c.l.b16 %v948
  %v1036 = vunpack.c.h.b16 %v948
  %v1037 = vunpack.c.l.b16 %v949
  %v1038 = vunpack.c.h.b16 %v949
  %v1039 = vunpack.c.l.b16 %v950
  %v1040 = vunpack.c.h.b16 %v950
  %v1041 = vunpack.c.l.b16 %v951
  %v1042 = vunpack.c.h.b16 %v951
  %v1043 = vunpack.c.l.b16 %v952
  %v1044 = vunpack.c.h.b16 %v952
  %v1045 = vunpack.c.l.b16 %v953
  %v1046 = vunpack.c.h.b16 %v953
  %v1047 = vunpack.c.l.b16 %v954
  %v1048 = vunpack.c.h.b16 %v954
  %v1049 = vunpack.c.l.b16 %v955
  %v1050 = vunpack.c.h.b16 %v955
  %v1051 = vunpack.c.l.b16 %v956
  %v1052 = vunpack.c.h.b16 %v956
  %v1053 = vunpack.c.l.b16 %v957
  %v1054 = vunpack.c.h.b16 %v957
  %v1055 = vunpack.c.l.b16 %v958
  %v1056 = vunpack.c.h.b16 %v958
  %v1057 = vunpack.c.l.b16 %v959
  %v1058 = vunpack.c.h.b16 %v959
  %v1059 = vunpack.c.l.b16 %v960
  %v1060 = vunpack.c.h.b16 %v960
  %v1061 = vunpack.c.l.b16 %v961
  %v1062 = vunpack.c.h.b16 %v961
  %v1063 = vunpack.c.l.b16 %v962
  %v1064 = vunpack.c.h.b16 %v962
  %v1065 = vunpack.c.l.b16 %v963
  %v1066 = vunpack.c.h.b16 %v963
  %v1067 = vunpack.c.l.b16 %v964
  %v1068 = vunpack.c.h.b16 %v964
  %v1069 = vunpack.c.l.b16 %v965
  %v1070 = vunpack.c.h.b16 %v965
  %v1071 = vunpack.c.l.b16 %v966
  %v1072 = vunpack.c.h.b16 %v966
  %v1073 = vunpack.c.l.b16 %v967
  %v1074 = vunpack.c.h.b16 %v967
  %v1075 = vunpack.c.l.b16 %v968
  %v1076 = vunpack.c.h.b16 %v968
  %v1077 = vunpack.c.l.b16 %v969
  %v1078 = vunpack.c.h.b16 %v969
  %v1079 = vunpack.c.l.b16 %v970
  %v1080 = vunpack.c.h.b16 %v970
  %v1081 = vunpack.c.l.b16 %v971
  %v1082 = vunpack.c.h.b16 %v971
  %v1083 = vunpack.c.l.b16 %v972
  %v1084 = vunpack.c.h.b16 %v972
  %v1085 = vunpack.c.l.b16 %v973
  %v1086 = vunpack.c.h.b16 %v973
  %v1087 = vunpack.c.l.b16 %v974
  %v1088 = vunpack.c.h.b16 %v974
  %v1089 = vunpack.c.l.b16 %v975
  %v1090 = vunpack.c.h.b16 %v975
  %v1091 = vunpack.c.l.b16 %v976
  %v1092 = vunpack.c.h.b16 %v976
  %v1093 = vunpack.c.l.b16 %v977
  %v1094 = vunpack.c.h.b16 %v977
  %v1095 = vunpack.c.l.b16 %v978
  %v1096 = vunpack.c.h.b16 %v978
  %v1097 = vpack.c.b16 %v1037, %v1033
  %v1098 = vpack.c.b16 %v1038, %v1034
  %v1099 = vpack.c.b16 %v1039, %v1035
  %v1100 = vpack.c.b16 %v1040, %v1036
  %v1101 = vpack.c.b16 %v1045, %v1041
  %v1102 = vpack.c.b16 %v1046, %v1042
  %v1103 = vpack.c.b16 %v1047, %v1043
  %v1104 = vpack.c.b16 %v1048, %v1044
  %v1105 = vpack.c.b16 %v1053, %v1049
  %v1106 = vpack.c.b16 %v1054, %v1050
  %v1107 = vpack.c.b16 %v1055, %v1051
  %v1108 = vpack.c.b16 %v1056, %v1052
  %v1109 = vpack.c.b16 %v1061, %v1057
  %v1110 = vpack.c.b16 %v1062, %v1058
  %v1111 = vpack.c.b16 %v1063, %v1059
  %v1112 = vpack.c.b16 %v1064, %v1060
  %v1113 = vpack.c.b16 %v1069, %v1065
  %v1114 = vpack.c.b16 %v1070, %v1066
  %v1115 = vpack.c.b16 %v1071, %v1067
  %v1116 = vpack.c.b16 %v1072, %v1068
  %v1117 = vpack.c.b16 %v1077, %v1073
  %v1118 = vpack.c.b16 %v1078, %v1074
  %v1119 = vpack.c.b16 %v1079, %v1075
  %v1120 = vpack.c.b16 %v1080, %v1076
  %v1121 = vpack.c.b16 %v1085, %v1081
  %v1122 = vpack.c.b16 %v1086, %v1082
  %v1123 = vpack.c.b16 %v1087, %v1083
  %v1124 = vpack.c.b16 %v1088, %v1084
  %v1125 = vpack.c.b16 %v1093, %v1089
  %v1126 = vpack.c.b16 %v1094, %v1090
  %v1127 = vpack.c.b16 %v1095, %v1091
  %v1128 = vpack.c.b16 %v1096, %v1092
  %1161 = vmatprep.subr.bf16.mxu0 %v1098
  %1162 = vmatpush1.bf16.msra.mxu0 %v1097
  %1163 = vmatprep.subr.bf16.mxu0 %v1102
  %1164 = vmatpush1.bf16.msra.mxu0 %v1101
  %1165 = vmatprep.subr.bf16.mxu0 %v1106
  %1166 = vmatpush1.bf16.msra.mxu0 %v1105
  %1167 = vmatprep.subr.bf16.mxu0 %v1110
  %1168 = vmatpush1.bf16.msra.mxu0 %v1109
  %1169 = vmatprep.subr.bf16.mxu0 %v1114
  %1170 = vmatpush1.bf16.msra.mxu0 %v1113
  %1171 = vmatprep.subr.bf16.mxu0 %v1118
  %1172 = vmatpush1.bf16.msra.mxu0 %v1117
  %1173 = vmatprep.subr.bf16.mxu0 %v1122
  %1174 = vmatpush1.bf16.msra.mxu0 %v1121
  %1175 = vmatprep.subr.bf16.mxu0 %v1126
  %1176 = vmatpush1.bf16.msra.mxu0 %v1125
  %1177 = vmatprep.subr.bf16.mxu0 0
  %1178 = vmatpush1.bf16.msra.mxu0 0
  %1179 = vmatprep.subr.bf16.mxu0 0
  %1180 = vmatpush1.bf16.msra.mxu0 0
  %1181 = vmatprep.subr.bf16.mxu0 0
  %1182 = vmatpush1.bf16.msra.mxu0 0
  %1183 = vmatprep.subr.bf16.mxu0 0
  %1184 = vmatpush1.bf16.msra.mxu0 0
  %1185 = vmatprep.subr.bf16.mxu0 0
  %1186 = vmatpush1.bf16.msra.mxu0 0
  %1187 = vmatprep.subr.bf16.mxu0 0
  %1188 = vmatpush1.bf16.msra.mxu0 0
  %1189 = vmatprep.subr.bf16.mxu0 0
  %1190 = vmatpush1.bf16.msra.mxu0 0
  %1191 = vmatprep.subr.bf16.mxu0 0
  %1192 = vmatpush1.bf16.msra.mxu0 0
  %1193 = vmatprep.mubr.bf16.mxu0 0
  %1194 = vmatmul.mubr.bf16.gmra.mrb[0].mxu0 %v946
  %v1195 = vpop.f32.mrb[0].mxu0
  %v1196 = vadd.f32 %v984, %v1195
  %v1197 = vpop.f32.mrb[0].mxu0
  %v1198 = vadd.f32 %v988, %v1197
  %v1199 = vpop.f32.mrb[0].mxu0
  %v1200 = vpop.f32.mrb[0].mxu0
  %1201 = vdwg.mxu0
  %1202 = vmatprep.subr.bf16.mxu0 %v1100
  %1203 = vmatpush1.bf16.msra.mxu0 %v1099
  %1204 = vmatprep.subr.bf16.mxu0 %v1104
  %1205 = vmatpush1.bf16.msra.mxu0 %v1103
  %1206 = vmatprep.subr.bf16.mxu0 %v1108
  %1207 = vmatpush1.bf16.msra.mxu0 %v1107
  %1208 = vmatprep.subr.bf16.mxu0 %v1112
  %1209 = vmatpush1.bf16.msra.mxu0 %v1111
  %1210 = vmatprep.subr.bf16.mxu0 %v1116
  %1211 = vmatpush1.bf16.msra.mxu0 %v1115
  %1212 = vmatprep.subr.bf16.mxu0 %v1120
  %1213 = vmatpush1.bf16.msra.mxu0 %v1119
  %1214 = vmatprep.subr.bf16.mxu0 %v1124
  %1215 = vmatpush1.bf16.msra.mxu0 %v1123
  %1216 = vmatprep.subr.bf16.mxu0 %v1128
  %1217 = vmatpush1.bf16.msra.mxu0 %v1127
  %1218 = vmatprep.subr.bf16.mxu0 0
  %1219 = vmatpush1.bf16.msra.mxu0 0
  %1220 = vmatprep.subr.bf16.mxu0 0
  %1221 = vmatpush1.bf16.msra.mxu0 0
  %1222 = vmatprep.subr.bf16.mxu0 0
  %1223 = vmatpush1.bf16.msra.mxu0 0
  %1224 = vmatprep.subr.bf16.mxu0 0
  %1225 = vmatpush1.bf16.msra.mxu0 0
  %1226 = vmatprep.subr.bf16.mxu0 0
  %1227 = vmatpush1.bf16.msra.mxu0 0
  %1228 = vmatprep.subr.bf16.mxu0 0
  %1229 = vmatpush1.bf16.msra.mxu0 0
  %1230 = vmatprep.subr.bf16.mxu0 0
  %1231 = vmatpush1.bf16.msra.mxu0 0
  %1232 = vmatprep.subr.bf16.mxu0 0
  %1233 = vmatpush1.bf16.msra.mxu0 0
  %1234 = vmatprep.mubr.bf16.mxu0 0
  %1235 = vmatmul.mubr.bf16.gmra.mrb[0].mxu0 %v946
  %v1236 = vpop.f32.mrb[0].mxu0
  %v1237 = vadd.f32 %v992, %v1236
  %v1238 = vpop.f32.mrb[0].mxu0
  %v1239 = vadd.f32 %v996, %v1238
  %v1240 = vpop.f32.mrb[0].mxu0
  %v1241 = vpop.f32.mrb[0].mxu0
  %1242 = vdwg.mxu0
  %v1243 = vmul.f32 %v1196, %v1196
  %v1244 = vmul.f32 %v1198, %v1198
  %v1245 = vmul.f32 %v1237, %v1237
  %v1246 = vmul.f32 %v1239, %v1239
  %1248 = vrot.lane.b32.xlu0 %v1243, 64
  %v1249 = vpop.permute.xlu0 %1248
  %v1251 = vadd.f32 %v1243, %v1249
  %v1252 = vadd.f32 %v1251, %v1244
  %1254 = vrot.lane.b32.xlu0 %v1244, 64
  %v1255 = vpop.permute.xlu0 %1254
  %v1257 = vadd.f32 %v1252, %v1255
  %v1258 = vadd.f32 %v1257, %v1245
  %1260 = vrot.lane.b32.xlu0 %v1245, 64
  %v1261 = vpop.permute.xlu0 %1260
  %v1263 = vadd.f32 %v1258, %v1261
  %v1264 = vadd.f32 %v1263, %v1246
  %1266 = vrot.lane.b32.xlu0 %v1246, 64
  %v1267 = vpop.permute.xlu0 %1266
  %v1269 = vadd.f32 %v1264, %v1267
  %1271 = vrot.lane.b32.xlu0 %v1269, 64
  %v1272 = vpop.permute.xlu0 %1271
  %v1274 = vsel %vm594, %v1269, %v1272
  %v1275 = vadd.f32 %v1274, 1e-07
  %v1276 = vrsqrt.pop %v1275
  %v1277 = vmul.f32 %v1274, %v1276
  %v1278 = vadd.f32 %v1274, 1.0
  %v1279 = vrcp.pop %v1278
  %v1280 = vmul.f32 %v1277, %v1279
  %v1281 = vmul.f32 %v1196, %v1280
  %v1282 = vmul.f32 %v1198, %v1280
  %v1283 = vmul.f32 %v1237, %v1280
  %v1284 = vmul.f32 %v1239, %v1280
  %1286 = vrot.lane.b32.xlu0 %v942, 64
  %v1287 = vpop.permute.xlu0 %1286
  %v1289 = vsel %vm594, %v602, %v1287
  %1291 = vrot.lane.b32.xlu0 %v602, 64
  %v1292 = vpop.permute.xlu0 %1291
  %1295 = vrot.lane.b32.xlu0 %v1281, 64
  %v1296 = vpop.permute.xlu0 %1295
  %v1298 = vsel %vm594, %v1292, %v942
  %1300 = vrot.lane.b32.xlu0 %v943, 64
  %v1301 = vpop.permute.xlu0 %1300
  %v1303 = vsel %vm594, %v603, %v1301
  %1305 = vrot.lane.b32.xlu0 %v603, 64
  %v1306 = vpop.permute.xlu0 %1305
  %1309 = vrot.lane.b32.xlu0 %v1282, 64
  %v1310 = vpop.permute.xlu0 %1309
  %v1312 = vsel %vm594, %v1306, %v943
  %1314 = vrot.lane.b32.xlu0 %v944, 64
  %v1315 = vpop.permute.xlu0 %1314
  %v1317 = vsel %vm594, %v604, %v1315
  %1319 = vrot.lane.b32.xlu0 %v604, 64
  %v1320 = vpop.permute.xlu0 %1319
  %1323 = vrot.lane.b32.xlu0 %v1283, 64
  %v1324 = vpop.permute.xlu0 %1323
  %v1326 = vsel %vm594, %v1320, %v944
  %1328 = vrot.lane.b32.xlu0 %v945, 64
  %v1329 = vpop.permute.xlu0 %1328
  %v1331 = vsel %vm594, %v605, %v1329
  %1333 = vrot.lane.b32.xlu0 %v605, 64
  %v1334 = vpop.permute.xlu0 %1333
  %1337 = vrot.lane.b32.xlu0 %v1284, 64
  %v1338 = vpop.permute.xlu0 %1337
  %v1340 = vsel %vm594, %v1334, %v945
  %v1341 = vld [vmem:[%s11] sm:$0xff]
  %v1342 = vld [vmem:[%s11 + $0x8] sm:$0xff]
  %v1343 = vld [vmem:[%s11 + $0x10] sm:$0xff]
  %v1344 = vld [vmem:[%s11 + $0x18] sm:$0xff]
  %v1345 = vld [vmem:[%s11 + $0x20] sm:$0xff]
  %v1346 = vld [vmem:[%s11 + $0x28] sm:$0xff]
  %v1347 = vld [vmem:[%s11 + $0x30] sm:$0xff]
  %v1348 = vld [vmem:[%s11 + $0x38] sm:$0xff]
  %v1349 = vld [vmem:[%s11 + $0x40] sm:$0xff]
  %v1350 = vld [vmem:[%s11 + $0x48] sm:$0xff]
  %v1351 = vld [vmem:[%s11 + $0x50] sm:$0xff]
  %v1352 = vld [vmem:[%s11 + $0x58] sm:$0xff]
  %v1353 = vld [vmem:[%s11 + $0x60] sm:$0xff]
  %v1354 = vld [vmem:[%s11 + $0x68] sm:$0xff]
  %v1355 = vld [vmem:[%s11 + $0x70] sm:$0xff]
  %v1356 = vld [vmem:[%s11 + $0x78] sm:$0xff]
  %v1357 = vunpack.c.l.bf16 %v1341
  %v1358 = vunpack.c.h.bf16 %v1341
  %v1359 = vunpack.c.l.bf16 %v1342
  %v1360 = vunpack.c.h.bf16 %v1342
  %v1361 = vunpack.c.l.bf16 %v1343
  %v1362 = vunpack.c.h.bf16 %v1343
  %v1363 = vunpack.c.l.bf16 %v1344
  %v1364 = vunpack.c.h.bf16 %v1344
  %v1365 = vunpack.c.l.bf16 %v1345
  %v1366 = vunpack.c.h.bf16 %v1345
  %v1367 = vunpack.c.l.bf16 %v1346
  %v1368 = vunpack.c.h.bf16 %v1346
  %v1369 = vunpack.c.l.bf16 %v1347
  %v1370 = vunpack.c.h.bf16 %v1347
  %v1371 = vunpack.c.l.bf16 %v1348
  %v1372 = vunpack.c.h.bf16 %v1348
  %v1373 = vunpack.c.l.bf16 %v1349
  %v1374 = vunpack.c.h.bf16 %v1349
  %v1375 = vunpack.c.l.bf16 %v1350
  %v1376 = vunpack.c.h.bf16 %v1350
  %v1377 = vunpack.c.l.bf16 %v1351
  %v1378 = vunpack.c.h.bf16 %v1351
  %v1379 = vunpack.c.l.bf16 %v1352
  %v1380 = vunpack.c.h.bf16 %v1352
  %v1381 = vunpack.c.l.bf16 %v1353
  %v1382 = vunpack.c.h.bf16 %v1353
  %v1383 = vunpack.c.l.bf16 %v1354
  %v1384 = vunpack.c.h.bf16 %v1354
  %v1385 = vunpack.c.l.bf16 %v1355
  %v1386 = vunpack.c.h.bf16 %v1355
  %v1387 = vunpack.c.l.bf16 %v1356
  %v1388 = vunpack.c.h.bf16 %v1356
  %s1389 = scalar_lea.vmem %s11, 128
  %v1390 = vld [vmem:[%s1389] sm:$0xff]
  %v1391 = vld [vmem:[%s1389 + $0x8] sm:$0xff]
  %v1392 = vld [vmem:[%s1389 + $0x10] sm:$0xff]
  %v1393 = vld [vmem:[%s1389 + $0x18] sm:$0xff]
  %v1394 = vld [vmem:[%s1389 + $0x20] sm:$0xff]
  %v1395 = vld [vmem:[%s1389 + $0x28] sm:$0xff]
  %v1396 = vld [vmem:[%s1389 + $0x30] sm:$0xff]
  %v1397 = vld [vmem:[%s1389 + $0x38] sm:$0xff]
  %v1398 = vld [vmem:[%s1389 + $0x40] sm:$0xff]
  %v1399 = vld [vmem:[%s1389 + $0x48] sm:$0xff]
  %v1400 = vld [vmem:[%s1389 + $0x50] sm:$0xff]
  %v1401 = vld [vmem:[%s1389 + $0x58] sm:$0xff]
  %v1402 = vld [vmem:[%s1389 + $0x60] sm:$0xff]
  %v1403 = vld [vmem:[%s1389 + $0x68] sm:$0xff]
  %v1404 = vld [vmem:[%s1389 + $0x70] sm:$0xff]
  %v1405 = vld [vmem:[%s1389 + $0x78] sm:$0xff]
  %v1406 = vunpack.c.l.bf16 %v1390
  %v1407 = vunpack.c.h.bf16 %v1390
  %v1408 = vunpack.c.l.bf16 %v1391
  %v1409 = vunpack.c.h.bf16 %v1391
  %v1410 = vunpack.c.l.bf16 %v1392
  %v1411 = vunpack.c.h.bf16 %v1392
  %v1412 = vunpack.c.l.bf16 %v1393
  %v1413 = vunpack.c.h.bf16 %v1393
  %v1414 = vunpack.c.l.bf16 %v1394
  %v1415 = vunpack.c.h.bf16 %v1394
  %v1416 = vunpack.c.l.bf16 %v1395
  %v1417 = vunpack.c.h.bf16 %v1395
  %v1418 = vunpack.c.l.bf16 %v1396
  %v1419 = vunpack.c.h.bf16 %v1396
  %v1420 = vunpack.c.l.bf16 %v1397
  %v1421 = vunpack.c.h.bf16 %v1397
  %v1422 = vunpack.c.l.bf16 %v1398
  %v1423 = vunpack.c.h.bf16 %v1398
  %v1424 = vunpack.c.l.bf16 %v1399
  %v1425 = vunpack.c.h.bf16 %v1399
  %v1426 = vunpack.c.l.bf16 %v1400
  %v1427 = vunpack.c.h.bf16 %v1400
  %v1428 = vunpack.c.l.bf16 %v1401
  %v1429 = vunpack.c.h.bf16 %v1401
  %v1430 = vunpack.c.l.bf16 %v1402
  %v1431 = vunpack.c.h.bf16 %v1402
  %v1432 = vunpack.c.l.bf16 %v1403
  %v1433 = vunpack.c.h.bf16 %v1403
  %v1434 = vunpack.c.l.bf16 %v1404
  %v1435 = vunpack.c.h.bf16 %v1404
  %v1436 = vunpack.c.l.bf16 %v1405
  %v1437 = vunpack.c.h.bf16 %v1405
  %s1438 = scalar_lea.vmem %s11, 256
  %v1439 = vld [vmem:[%s1438] sm:$0xff]
  %v1440 = vld [vmem:[%s1438 + $0x8] sm:$0xff]
  %v1441 = vld [vmem:[%s1438 + $0x10] sm:$0xff]
  %v1442 = vld [vmem:[%s1438 + $0x18] sm:$0xff]
  %v1443 = vld [vmem:[%s1438 + $0x20] sm:$0xff]
  %v1444 = vld [vmem:[%s1438 + $0x28] sm:$0xff]
  %v1445 = vld [vmem:[%s1438 + $0x30] sm:$0xff]
  %v1446 = vld [vmem:[%s1438 + $0x38] sm:$0xff]
  %v1447 = vld [vmem:[%s1438 + $0x40] sm:$0xff]
  %v1448 = vld [vmem:[%s1438 + $0x48] sm:$0xff]
  %v1449 = vld [vmem:[%s1438 + $0x50] sm:$0xff]
  %v1450 = vld [vmem:[%s1438 + $0x58] sm:$0xff]
  %v1451 = vld [vmem:[%s1438 + $0x60] sm:$0xff]
  %v1452 = vld [vmem:[%s1438 + $0x68] sm:$0xff]
  %v1453 = vld [vmem:[%s1438 + $0x70] sm:$0xff]
  %v1454 = vld [vmem:[%s1438 + $0x78] sm:$0xff]
  %v1455 = vunpack.c.l.bf16 %v1439
  %v1456 = vunpack.c.h.bf16 %v1439
  %v1457 = vunpack.c.l.bf16 %v1440
  %v1458 = vunpack.c.h.bf16 %v1440
  %v1459 = vunpack.c.l.bf16 %v1441
  %v1460 = vunpack.c.h.bf16 %v1441
  %v1461 = vunpack.c.l.bf16 %v1442
  %v1462 = vunpack.c.h.bf16 %v1442
  %v1463 = vunpack.c.l.bf16 %v1443
  %v1464 = vunpack.c.h.bf16 %v1443
  %v1465 = vunpack.c.l.bf16 %v1444
  %v1466 = vunpack.c.h.bf16 %v1444
  %v1467 = vunpack.c.l.bf16 %v1445
  %v1468 = vunpack.c.h.bf16 %v1445
  %v1469 = vunpack.c.l.bf16 %v1446
  %v1470 = vunpack.c.h.bf16 %v1446
  %v1471 = vunpack.c.l.bf16 %v1447
  %v1472 = vunpack.c.h.bf16 %v1447
  %v1473 = vunpack.c.l.bf16 %v1448
  %v1474 = vunpack.c.h.bf16 %v1448
  %v1475 = vunpack.c.l.bf16 %v1449
  %v1476 = vunpack.c.h.bf16 %v1449
  %v1477 = vunpack.c.l.bf16 %v1450
  %v1478 = vunpack.c.h.bf16 %v1450
  %v1479 = vunpack.c.l.bf16 %v1451
  %v1480 = vunpack.c.h.bf16 %v1451
  %v1481 = vunpack.c.l.bf16 %v1452
  %v1482 = vunpack.c.h.bf16 %v1452
  %v1483 = vunpack.c.l.bf16 %v1453
  %v1484 = vunpack.c.h.bf16 %v1453
  %v1485 = vunpack.c.l.bf16 %v1454
  %v1486 = vunpack.c.h.bf16 %v1454
  %s1487 = scalar_lea.vmem %s11, 384
  %v1488 = vld [vmem:[%s1487] sm:$0xff]
  %v1489 = vld [vmem:[%s1487 + $0x8] sm:$0xff]
  %v1490 = vld [vmem:[%s1487 + $0x10] sm:$0xff]
  %v1491 = vld [vmem:[%s1487 + $0x18] sm:$0xff]
  %v1492 = vld [vmem:[%s1487 + $0x20] sm:$0xff]
  %v1493 = vld [vmem:[%s1487 + $0x28] sm:$0xff]
  %v1494 = vld [vmem:[%s1487 + $0x30] sm:$0xff]
  %v1495 = vld [vmem:[%s1487 + $0x38] sm:$0xff]
  %v1496 = vld [vmem:[%s1487 + $0x40] sm:$0xff]
  %v1497 = vld [vmem:[%s1487 + $0x48] sm:$0xff]
  %v1498 = vld [vmem:[%s1487 + $0x50] sm:$0xff]
  %v1499 = vld [vmem:[%s1487 + $0x58] sm:$0xff]
  %v1500 = vld [vmem:[%s1487 + $0x60] sm:$0xff]
  %v1501 = vld [vmem:[%s1487 + $0x68] sm:$0xff]
  %v1502 = vld [vmem:[%s1487 + $0x70] sm:$0xff]
  %v1503 = vld [vmem:[%s1487 + $0x78] sm:$0xff]
  %v1504 = vunpack.c.l.bf16 %v1488
  %v1505 = vunpack.c.h.bf16 %v1488
  %v1506 = vunpack.c.l.bf16 %v1489
  %v1507 = vunpack.c.h.bf16 %v1489
  %v1508 = vunpack.c.l.bf16 %v1490
  %v1509 = vunpack.c.h.bf16 %v1490
  %v1510 = vunpack.c.l.bf16 %v1491
  %v1511 = vunpack.c.h.bf16 %v1491
  %v1512 = vunpack.c.l.bf16 %v1492
  %v1513 = vunpack.c.h.bf16 %v1492
  %v1514 = vunpack.c.l.bf16 %v1493
  %v1515 = vunpack.c.h.bf16 %v1493
  %v1516 = vunpack.c.l.bf16 %v1494
  %v1517 = vunpack.c.h.bf16 %v1494
  %v1518 = vunpack.c.l.bf16 %v1495
  %v1519 = vunpack.c.h.bf16 %v1495
  %v1520 = vunpack.c.l.bf16 %v1496
  %v1521 = vunpack.c.h.bf16 %v1496
  %v1522 = vunpack.c.l.bf16 %v1497
  %v1523 = vunpack.c.h.bf16 %v1497
  %v1524 = vunpack.c.l.bf16 %v1498
  %v1525 = vunpack.c.h.bf16 %v1498
  %v1526 = vunpack.c.l.bf16 %v1499
  %v1527 = vunpack.c.h.bf16 %v1499
  %v1528 = vunpack.c.l.bf16 %v1500
  %v1529 = vunpack.c.h.bf16 %v1500
  %v1530 = vunpack.c.l.bf16 %v1501
  %v1531 = vunpack.c.h.bf16 %v1501
  %v1532 = vunpack.c.l.bf16 %v1502
  %v1533 = vunpack.c.h.bf16 %v1502
  %v1534 = vunpack.c.l.bf16 %v1503
  %v1535 = vunpack.c.h.bf16 %v1503
  %s1536 = scalar_lea.vmem %s11, 512
  %v1537 = vld [vmem:[%s1536] sm:$0xff]
  %v1538 = vld [vmem:[%s1536 + $0x8] sm:$0xff]
  %v1539 = vld [vmem:[%s1536 + $0x10] sm:$0xff]
  %v1540 = vld [vmem:[%s1536 + $0x18] sm:$0xff]
  %v1541 = vld [vmem:[%s1536 + $0x20] sm:$0xff]
  %v1542 = vld [vmem:[%s1536 + $0x28] sm:$0xff]
  %v1543 = vld [vmem:[%s1536 + $0x30] sm:$0xff]
  %v1544 = vld [vmem:[%s1536 + $0x38] sm:$0xff]
  %v1545 = vld [vmem:[%s1536 + $0x40] sm:$0xff]
  %v1546 = vld [vmem:[%s1536 + $0x48] sm:$0xff]
  %v1547 = vld [vmem:[%s1536 + $0x50] sm:$0xff]
  %v1548 = vld [vmem:[%s1536 + $0x58] sm:$0xff]
  %v1549 = vld [vmem:[%s1536 + $0x60] sm:$0xff]
  %v1550 = vld [vmem:[%s1536 + $0x68] sm:$0xff]
  %v1551 = vld [vmem:[%s1536 + $0x70] sm:$0xff]
  %v1552 = vld [vmem:[%s1536 + $0x78] sm:$0xff]
  %v1553 = vunpack.c.l.bf16 %v1537
  %v1554 = vunpack.c.h.bf16 %v1537
  %v1555 = vunpack.c.l.bf16 %v1538
  %v1556 = vunpack.c.h.bf16 %v1538
  %v1557 = vunpack.c.l.bf16 %v1539
  %v1558 = vunpack.c.h.bf16 %v1539
  %v1559 = vunpack.c.l.bf16 %v1540
  %v1560 = vunpack.c.h.bf16 %v1540
  %v1561 = vunpack.c.l.bf16 %v1541
  %v1562 = vunpack.c.h.bf16 %v1541
  %v1563 = vunpack.c.l.bf16 %v1542
  %v1564 = vunpack.c.h.bf16 %v1542
  %v1565 = vunpack.c.l.bf16 %v1543
  %v1566 = vunpack.c.h.bf16 %v1543
  %v1567 = vunpack.c.l.bf16 %v1544
  %v1568 = vunpack.c.h.bf16 %v1544
  %v1569 = vunpack.c.l.bf16 %v1545
  %v1570 = vunpack.c.h.bf16 %v1545
  %v1571 = vunpack.c.l.bf16 %v1546
  %v1572 = vunpack.c.h.bf16 %v1546
  %v1573 = vunpack.c.l.bf16 %v1547
  %v1574 = vunpack.c.h.bf16 %v1547
  %v1575 = vunpack.c.l.bf16 %v1548
  %v1576 = vunpack.c.h.bf16 %v1548
  %v1577 = vunpack.c.l.bf16 %v1549
  %v1578 = vunpack.c.h.bf16 %v1549
  %v1579 = vunpack.c.l.bf16 %v1550
  %v1580 = vunpack.c.h.bf16 %v1550
  %v1581 = vunpack.c.l.bf16 %v1551
  %v1582 = vunpack.c.h.bf16 %v1551
  %v1583 = vunpack.c.l.bf16 %v1552
  %v1584 = vunpack.c.h.bf16 %v1552
  %s1585 = scalar_lea.vmem %s11, 640
  %v1586 = vld [vmem:[%s1585] sm:$0xff]
  %v1587 = vld [vmem:[%s1585 + $0x8] sm:$0xff]
  %v1588 = vld [vmem:[%s1585 + $0x10] sm:$0xff]
  %v1589 = vld [vmem:[%s1585 + $0x18] sm:$0xff]
  %v1590 = vld [vmem:[%s1585 + $0x20] sm:$0xff]
  %v1591 = vld [vmem:[%s1585 + $0x28] sm:$0xff]
  %v1592 = vld [vmem:[%s1585 + $0x30] sm:$0xff]
  %v1593 = vld [vmem:[%s1585 + $0x38] sm:$0xff]
  %v1594 = vld [vmem:[%s1585 + $0x40] sm:$0xff]
  %v1595 = vld [vmem:[%s1585 + $0x48] sm:$0xff]
  %v1596 = vld [vmem:[%s1585 + $0x50] sm:$0xff]
  %v1597 = vld [vmem:[%s1585 + $0x58] sm:$0xff]
  %v1598 = vld [vmem:[%s1585 + $0x60] sm:$0xff]
  %v1599 = vld [vmem:[%s1585 + $0x68] sm:$0xff]
  %v1600 = vld [vmem:[%s1585 + $0x70] sm:$0xff]
  %v1601 = vld [vmem:[%s1585 + $0x78] sm:$0xff]
  %v1602 = vunpack.c.l.bf16 %v1586
  %v1603 = vunpack.c.h.bf16 %v1586
  %v1604 = vunpack.c.l.bf16 %v1587
  %v1605 = vunpack.c.h.bf16 %v1587
  %v1606 = vunpack.c.l.bf16 %v1588
  %v1607 = vunpack.c.h.bf16 %v1588
  %v1608 = vunpack.c.l.bf16 %v1589
  %v1609 = vunpack.c.h.bf16 %v1589
  %v1610 = vunpack.c.l.bf16 %v1590
  %v1611 = vunpack.c.h.bf16 %v1590
  %v1612 = vunpack.c.l.bf16 %v1591
  %v1613 = vunpack.c.h.bf16 %v1591
  %v1614 = vunpack.c.l.bf16 %v1592
  %v1615 = vunpack.c.h.bf16 %v1592
  %v1616 = vunpack.c.l.bf16 %v1593
  %v1617 = vunpack.c.h.bf16 %v1593
  %v1618 = vunpack.c.l.bf16 %v1594
  %v1619 = vunpack.c.h.bf16 %v1594
  %v1620 = vunpack.c.l.bf16 %v1595
  %v1621 = vunpack.c.h.bf16 %v1595
  %v1622 = vunpack.c.l.bf16 %v1596
  %v1623 = vunpack.c.h.bf16 %v1596
  %v1624 = vunpack.c.l.bf16 %v1597
  %v1625 = vunpack.c.h.bf16 %v1597
  %v1626 = vunpack.c.l.bf16 %v1598
  %v1627 = vunpack.c.h.bf16 %v1598
  %v1628 = vunpack.c.l.bf16 %v1599
  %v1629 = vunpack.c.h.bf16 %v1599
  %v1630 = vunpack.c.l.bf16 %v1600
  %v1631 = vunpack.c.h.bf16 %v1600
  %v1632 = vunpack.c.l.bf16 %v1601
  %v1633 = vunpack.c.h.bf16 %v1601
  %s1634 = scalar_lea.vmem %s11, 768
  %v1635 = vld [vmem:[%s1634] sm:$0xff]
  %v1636 = vld [vmem:[%s1634 + $0x8] sm:$0xff]
  %v1637 = vld [vmem:[%s1634 + $0x10] sm:$0xff]
  %v1638 = vld [vmem:[%s1634 + $0x18] sm:$0xff]
  %v1639 = vld [vmem:[%s1634 + $0x20] sm:$0xff]
  %v1640 = vld [vmem:[%s1634 + $0x28] sm:$0xff]
  %v1641 = vld [vmem:[%s1634 + $0x30] sm:$0xff]
  %v1642 = vld [vmem:[%s1634 + $0x38] sm:$0xff]
  %v1643 = vld [vmem:[%s1634 + $0x40] sm:$0xff]
  %v1644 = vld [vmem:[%s1634 + $0x48] sm:$0xff]
  %v1645 = vld [vmem:[%s1634 + $0x50] sm:$0xff]
  %v1646 = vld [vmem:[%s1634 + $0x58] sm:$0xff]
  %v1647 = vld [vmem:[%s1634 + $0x60] sm:$0xff]
  %v1648 = vld [vmem:[%s1634 + $0x68] sm:$0xff]
  %v1649 = vld [vmem:[%s1634 + $0x70] sm:$0xff]
  %v1650 = vld [vmem:[%s1634 + $0x78] sm:$0xff]
  %v1651 = vunpack.c.l.bf16 %v1635
  %v1652 = vunpack.c.h.bf16 %v1635
  %v1653 = vunpack.c.l.bf16 %v1636
  %v1654 = vunpack.c.h.bf16 %v1636
  %v1655 = vunpack.c.l.bf16 %v1637
  %v1656 = vunpack.c.h.bf16 %v1637
  %v1657 = vunpack.c.l.bf16 %v1638
  %v1658 = vunpack.c.h.bf16 %v1638
  %v1659 = vunpack.c.l.bf16 %v1639
  %v1660 = vunpack.c.h.bf16 %v1639
  %v1661 = vunpack.c.l.bf16 %v1640
  %v1662 = vunpack.c.h.bf16 %v1640
  %v1663 = vunpack.c.l.bf16 %v1641
  %v1664 = vunpack.c.h.bf16 %v1641
  %v1665 = vunpack.c.l.bf16 %v1642
  %v1666 = vunpack.c.h.bf16 %v1642
  %v1667 = vunpack.c.l.bf16 %v1643
  %v1668 = vunpack.c.h.bf16 %v1643
  %v1669 = vunpack.c.l.bf16 %v1644
  %v1670 = vunpack.c.h.bf16 %v1644
  %v1671 = vunpack.c.l.bf16 %v1645
  %v1672 = vunpack.c.h.bf16 %v1645
  %v1673 = vunpack.c.l.bf16 %v1646
  %v1674 = vunpack.c.h.bf16 %v1646
  %v1675 = vunpack.c.l.bf16 %v1647
  %v1676 = vunpack.c.h.bf16 %v1647
  %v1677 = vunpack.c.l.bf16 %v1648
  %v1678 = vunpack.c.h.bf16 %v1648
  %v1679 = vunpack.c.l.bf16 %v1649
  %v1680 = vunpack.c.h.bf16 %v1649
  %v1681 = vunpack.c.l.bf16 %v1650
  %v1682 = vunpack.c.h.bf16 %v1650
  %s1683 = scalar_lea.vmem %s11, 896
  %v1684 = vld [vmem:[%s1683] sm:$0xff]
  %v1685 = vld [vmem:[%s1683 + $0x8] sm:$0xff]
  %v1686 = vld [vmem:[%s1683 + $0x10] sm:$0xff]
  %v1687 = vld [vmem:[%s1683 + $0x18] sm:$0xff]
  %v1688 = vld [vmem:[%s1683 + $0x20] sm:$0xff]
  %v1689 = vld [vmem:[%s1683 + $0x28] sm:$0xff]
  %v1690 = vld [vmem:[%s1683 + $0x30] sm:$0xff]
  %v1691 = vld [vmem:[%s1683 + $0x38] sm:$0xff]
  %v1692 = vld [vmem:[%s1683 + $0x40] sm:$0xff]
  %v1693 = vld [vmem:[%s1683 + $0x48] sm:$0xff]
  %v1694 = vld [vmem:[%s1683 + $0x50] sm:$0xff]
  %v1695 = vld [vmem:[%s1683 + $0x58] sm:$0xff]
  %v1696 = vld [vmem:[%s1683 + $0x60] sm:$0xff]
  %v1697 = vld [vmem:[%s1683 + $0x68] sm:$0xff]
  %v1698 = vld [vmem:[%s1683 + $0x70] sm:$0xff]
  %v1699 = vld [vmem:[%s1683 + $0x78] sm:$0xff]
  %v1700 = vunpack.c.l.bf16 %v1684
  %v1701 = vunpack.c.h.bf16 %v1684
  %v1702 = vunpack.c.l.bf16 %v1685
  %v1703 = vunpack.c.h.bf16 %v1685
  %v1704 = vunpack.c.l.bf16 %v1686
  %v1705 = vunpack.c.h.bf16 %v1686
  %v1706 = vunpack.c.l.bf16 %v1687
  %v1707 = vunpack.c.h.bf16 %v1687
  %v1708 = vunpack.c.l.bf16 %v1688
  %v1709 = vunpack.c.h.bf16 %v1688
  %v1710 = vunpack.c.l.bf16 %v1689
  %v1711 = vunpack.c.h.bf16 %v1689
  %v1712 = vunpack.c.l.bf16 %v1690
  %v1713 = vunpack.c.h.bf16 %v1690
  %v1714 = vunpack.c.l.bf16 %v1691
  %v1715 = vunpack.c.h.bf16 %v1691
  %v1716 = vunpack.c.l.bf16 %v1692
  %v1717 = vunpack.c.h.bf16 %v1692
  %v1718 = vunpack.c.l.bf16 %v1693
  %v1719 = vunpack.c.h.bf16 %v1693
  %v1720 = vunpack.c.l.bf16 %v1694
  %v1721 = vunpack.c.h.bf16 %v1694
  %v1722 = vunpack.c.l.bf16 %v1695
  %v1723 = vunpack.c.h.bf16 %v1695
  %v1724 = vunpack.c.l.bf16 %v1696
  %v1725 = vunpack.c.h.bf16 %v1696
  %v1726 = vunpack.c.l.bf16 %v1697
  %v1727 = vunpack.c.h.bf16 %v1697
  %v1728 = vunpack.c.l.bf16 %v1698
  %v1729 = vunpack.c.h.bf16 %v1698
  %v1730 = vunpack.c.l.bf16 %v1699
  %v1731 = vunpack.c.h.bf16 %v1699
  %v1732 = vlaneseq
  %v1733 = vshrl.u32 %v1732, 7
  %v1734 = vsub.s32 0, %v1733
  %v1735 = vrot.slane %v1289, %v1734
  %v1736 = vlaneseq
  %v1737 = vshrl.u32 %v1736, 7
  %v1738 = vsub.s32 0, %v1737
  %v1739 = vrot.slane %v1281, %v1738
  %v1740 = vmul.f32 %v1357, %v1735
  %v1741 = vmul.f32 %v1358, %v1739
  %v1742 = vmul.f32 %v1359, %v1735
  %v1743 = vmul.f32 %v1360, %v1739
  %v1744 = vmul.f32 %v1361, %v1735
  %v1745 = vmul.f32 %v1362, %v1739
  %v1746 = vmul.f32 %v1363, %v1735
  %v1747 = vmul.f32 %v1364, %v1739
  %v1748 = vmul.f32 %v1365, %v1735
  %v1749 = vmul.f32 %v1366, %v1739
  %v1750 = vmul.f32 %v1367, %v1735
  %v1751 = vmul.f32 %v1368, %v1739
  %v1752 = vmul.f32 %v1369, %v1735
  %v1753 = vmul.f32 %v1370, %v1739
  %v1754 = vmul.f32 %v1371, %v1735
  %v1755 = vmul.f32 %v1372, %v1739
  %v1756 = vmul.f32 %v1373, %v1735
  %v1757 = vmul.f32 %v1374, %v1739
  %v1758 = vmul.f32 %v1375, %v1735
  %v1759 = vmul.f32 %v1376, %v1739
  %v1760 = vmul.f32 %v1377, %v1735
  %v1761 = vmul.f32 %v1378, %v1739
  %v1762 = vmul.f32 %v1379, %v1735
  %v1763 = vmul.f32 %v1380, %v1739
  %v1764 = vmul.f32 %v1381, %v1735
  %v1765 = vmul.f32 %v1382, %v1739
  %v1766 = vmul.f32 %v1383, %v1735
  %v1767 = vmul.f32 %v1384, %v1739
  %v1768 = vmul.f32 %v1385, %v1735
  %v1769 = vmul.f32 %v1386, %v1739
  %v1770 = vmul.f32 %v1387, %v1735
  %v1771 = vmul.f32 %v1388, %v1739
  %v1772 = vlaneseq
  %v1773 = vshrl.u32 %v1772, 7
  %v1774 = vsub.s32 0, %v1773
  %v1775 = vrot.slane %v1298, %v1774
  %v1776 = vlaneseq
  %v1777 = vshrl.u32 %v1776, 7
  %v1778 = vsub.s32 0, %v1777
  %v1779 = vrot.slane %v1296, %v1778
  %v1780 = vmul.f32 %v1406, %v1775
  %v1781 = vmul.f32 %v1407, %v1779
  %v1782 = vmul.f32 %v1408, %v1775
  %v1783 = vmul.f32 %v1409, %v1779
  %v1784 = vmul.f32 %v1410, %v1775
  %v1785 = vmul.f32 %v1411, %v1779
  %v1786 = vmul.f32 %v1412, %v1775
  %v1787 = vmul.f32 %v1413, %v1779
  %v1788 = vmul.f32 %v1414, %v1775
  %v1789 = vmul.f32 %v1415, %v1779
  %v1790 = vmul.f32 %v1416, %v1775
  %v1791 = vmul.f32 %v1417, %v1779
  %v1792 = vmul.f32 %v1418, %v1775
  %v1793 = vmul.f32 %v1419, %v1779
  %v1794 = vmul.f32 %v1420, %v1775
  %v1795 = vmul.f32 %v1421, %v1779
  %v1796 = vmul.f32 %v1422, %v1775
  %v1797 = vmul.f32 %v1423, %v1779
  %v1798 = vmul.f32 %v1424, %v1775
  %v1799 = vmul.f32 %v1425, %v1779
  %v1800 = vmul.f32 %v1426, %v1775
  %v1801 = vmul.f32 %v1427, %v1779
  %v1802 = vmul.f32 %v1428, %v1775
  %v1803 = vmul.f32 %v1429, %v1779
  %v1804 = vmul.f32 %v1430, %v1775
  %v1805 = vmul.f32 %v1431, %v1779
  %v1806 = vmul.f32 %v1432, %v1775
  %v1807 = vmul.f32 %v1433, %v1779
  %v1808 = vmul.f32 %v1434, %v1775
  %v1809 = vmul.f32 %v1435, %v1779
  %v1810 = vmul.f32 %v1436, %v1775
  %v1811 = vmul.f32 %v1437, %v1779
  %v1812 = vadd.f32 %v1740, %v1780
  %v1813 = vadd.f32 %v1741, %v1781
  %v1814 = vadd.f32 %v1742, %v1782
  %v1815 = vadd.f32 %v1743, %v1783
  %v1816 = vadd.f32 %v1744, %v1784
  %v1817 = vadd.f32 %v1745, %v1785
  %v1818 = vadd.f32 %v1746, %v1786
  %v1819 = vadd.f32 %v1747, %v1787
  %v1820 = vadd.f32 %v1748, %v1788
  %v1821 = vadd.f32 %v1749, %v1789
  %v1822 = vadd.f32 %v1750, %v1790
  %v1823 = vadd.f32 %v1751, %v1791
  %v1824 = vadd.f32 %v1752, %v1792
  %v1825 = vadd.f32 %v1753, %v1793
  %v1826 = vadd.f32 %v1754, %v1794
  %v1827 = vadd.f32 %v1755, %v1795
  %v1828 = vadd.f32 %v1756, %v1796
  %v1829 = vadd.f32 %v1757, %v1797
  %v1830 = vadd.f32 %v1758, %v1798
  %v1831 = vadd.f32 %v1759, %v1799
  %v1832 = vadd.f32 %v1760, %v1800
  %v1833 = vadd.f32 %v1761, %v1801
  %v1834 = vadd.f32 %v1762, %v1802
  %v1835 = vadd.f32 %v1763, %v1803
  %v1836 = vadd.f32 %v1764, %v1804
  %v1837 = vadd.f32 %v1765, %v1805
  %v1838 = vadd.f32 %v1766, %v1806
  %v1839 = vadd.f32 %v1767, %v1807
  %v1840 = vadd.f32 %v1768, %v1808
  %v1841 = vadd.f32 %v1769, %v1809
  %v1842 = vadd.f32 %v1770, %v1810
  %v1843 = vadd.f32 %v1771, %v1811
  %v1844 = vlaneseq
  %v1845 = vshrl.u32 %v1844, 7
  %v1846 = vsub.s32 0, %v1845
  %v1847 = vrot.slane %v1303, %v1846
  %v1848 = vlaneseq
  %v1849 = vshrl.u32 %v1848, 7
  %v1850 = vsub.s32 0, %v1849
  %v1851 = vrot.slane %v1282, %v1850
  %v1852 = vmul.f32 %v1455, %v1847
  %v1853 = vmul.f32 %v1456, %v1851
  %v1854 = vmul.f32 %v1457, %v1847
  %v1855 = vmul.f32 %v1458, %v1851
  %v1856 = vmul.f32 %v1459, %v1847
  %v1857 = vmul.f32 %v1460, %v1851
  %v1858 = vmul.f32 %v1461, %v1847
  %v1859 = vmul.f32 %v1462, %v1851
  %v1860 = vmul.f32 %v1463, %v1847
  %v1861 = vmul.f32 %v1464, %v1851
  %v1862 = vmul.f32 %v1465, %v1847
  %v1863 = vmul.f32 %v1466, %v1851
  %v1864 = vmul.f32 %v1467, %v1847
  %v1865 = vmul.f32 %v1468, %v1851
  %v1866 = vmul.f32 %v1469, %v1847
  %v1867 = vmul.f32 %v1470, %v1851
  %v1868 = vmul.f32 %v1471, %v1847
  %v1869 = vmul.f32 %v1472, %v1851
  %v1870 = vmul.f32 %v1473, %v1847
  %v1871 = vmul.f32 %v1474, %v1851
  %v1872 = vmul.f32 %v1475, %v1847
  %v1873 = vmul.f32 %v1476, %v1851
  %v1874 = vmul.f32 %v1477, %v1847
  %v1875 = vmul.f32 %v1478, %v1851
  %v1876 = vmul.f32 %v1479, %v1847
  %v1877 = vmul.f32 %v1480, %v1851
  %v1878 = vmul.f32 %v1481, %v1847
  %v1879 = vmul.f32 %v1482, %v1851
  %v1880 = vmul.f32 %v1483, %v1847
  %v1881 = vmul.f32 %v1484, %v1851
  %v1882 = vmul.f32 %v1485, %v1847
  %v1883 = vmul.f32 %v1486, %v1851
  %v1884 = vadd.f32 %v1812, %v1852
  %v1885 = vadd.f32 %v1813, %v1853
  %v1886 = vadd.f32 %v1814, %v1854
  %v1887 = vadd.f32 %v1815, %v1855
  %v1888 = vadd.f32 %v1816, %v1856
  %v1889 = vadd.f32 %v1817, %v1857
  %v1890 = vadd.f32 %v1818, %v1858
  %v1891 = vadd.f32 %v1819, %v1859
  %v1892 = vadd.f32 %v1820, %v1860
  %v1893 = vadd.f32 %v1821, %v1861
  %v1894 = vadd.f32 %v1822, %v1862
  %v1895 = vadd.f32 %v1823, %v1863
  %v1896 = vadd.f32 %v1824, %v1864
  %v1897 = vadd.f32 %v1825, %v1865
  %v1898 = vadd.f32 %v1826, %v1866
  %v1899 = vadd.f32 %v1827, %v1867
  %v1900 = vadd.f32 %v1828, %v1868
  %v1901 = vadd.f32 %v1829, %v1869
  %v1902 = vadd.f32 %v1830, %v1870
  %v1903 = vadd.f32 %v1831, %v1871
  %v1904 = vadd.f32 %v1832, %v1872
  %v1905 = vadd.f32 %v1833, %v1873
  %v1906 = vadd.f32 %v1834, %v1874
  %v1907 = vadd.f32 %v1835, %v1875
  %v1908 = vadd.f32 %v1836, %v1876
  %v1909 = vadd.f32 %v1837, %v1877
  %v1910 = vadd.f32 %v1838, %v1878
  %v1911 = vadd.f32 %v1839, %v1879
  %v1912 = vadd.f32 %v1840, %v1880
  %v1913 = vadd.f32 %v1841, %v1881
  %v1914 = vadd.f32 %v1842, %v1882
  %v1915 = vadd.f32 %v1843, %v1883
  %v1916 = vlaneseq
  %v1917 = vshrl.u32 %v1916, 7
  %v1918 = vsub.s32 0, %v1917
  %v1919 = vrot.slane %v1312, %v1918
  %v1920 = vlaneseq
  %v1921 = vshrl.u32 %v1920, 7
  %v1922 = vsub.s32 0, %v1921
  %v1923 = vrot.slane %v1310, %v1922
  %v1924 = vmul.f32 %v1504, %v1919
  %v1925 = vmul.f32 %v1505, %v1923
  %v1926 = vmul.f32 %v1506, %v1919
  %v1927 = vmul.f32 %v1507, %v1923
  %v1928 = vmul.f32 %v1508, %v1919
  %v1929 = vmul.f32 %v1509, %v1923
  %v1930 = vmul.f32 %v1510, %v1919
  %v1931 = vmul.f32 %v1511, %v1923
  %v1932 = vmul.f32 %v1512, %v1919
  %v1933 = vmul.f32 %v1513, %v1923
  %v1934 = vmul.f32 %v1514, %v1919
  %v1935 = vmul.f32 %v1515, %v1923
  %v1936 = vmul.f32 %v1516, %v1919
  %v1937 = vmul.f32 %v1517, %v1923
  %v1938 = vmul.f32 %v1518, %v1919
  %v1939 = vmul.f32 %v1519, %v1923
  %v1940 = vmul.f32 %v1520, %v1919
  %v1941 = vmul.f32 %v1521, %v1923
  %v1942 = vmul.f32 %v1522, %v1919
  %v1943 = vmul.f32 %v1523, %v1923
  %v1944 = vmul.f32 %v1524, %v1919
  %v1945 = vmul.f32 %v1525, %v1923
  %v1946 = vmul.f32 %v1526, %v1919
  %v1947 = vmul.f32 %v1527, %v1923
  %v1948 = vmul.f32 %v1528, %v1919
  %v1949 = vmul.f32 %v1529, %v1923
  %v1950 = vmul.f32 %v1530, %v1919
  %v1951 = vmul.f32 %v1531, %v1923
  %v1952 = vmul.f32 %v1532, %v1919
  %v1953 = vmul.f32 %v1533, %v1923
  %v1954 = vmul.f32 %v1534, %v1919
  %v1955 = vmul.f32 %v1535, %v1923
  %v1956 = vadd.f32 %v1884, %v1924
  %v1957 = vadd.f32 %v1885, %v1925
  %v1958 = vadd.f32 %v1886, %v1926
  %v1959 = vadd.f32 %v1887, %v1927
  %v1960 = vadd.f32 %v1888, %v1928
  %v1961 = vadd.f32 %v1889, %v1929
  %v1962 = vadd.f32 %v1890, %v1930
  %v1963 = vadd.f32 %v1891, %v1931
  %v1964 = vadd.f32 %v1892, %v1932
  %v1965 = vadd.f32 %v1893, %v1933
  %v1966 = vadd.f32 %v1894, %v1934
  %v1967 = vadd.f32 %v1895, %v1935
  %v1968 = vadd.f32 %v1896, %v1936
  %v1969 = vadd.f32 %v1897, %v1937
  %v1970 = vadd.f32 %v1898, %v1938
  %v1971 = vadd.f32 %v1899, %v1939
  %v1972 = vadd.f32 %v1900, %v1940
  %v1973 = vadd.f32 %v1901, %v1941
  %v1974 = vadd.f32 %v1902, %v1942
  %v1975 = vadd.f32 %v1903, %v1943
  %v1976 = vadd.f32 %v1904, %v1944
  %v1977 = vadd.f32 %v1905, %v1945
  %v1978 = vadd.f32 %v1906, %v1946
  %v1979 = vadd.f32 %v1907, %v1947
  %v1980 = vadd.f32 %v1908, %v1948
  %v1981 = vadd.f32 %v1909, %v1949
  %v1982 = vadd.f32 %v1910, %v1950
  %v1983 = vadd.f32 %v1911, %v1951
  %v1984 = vadd.f32 %v1912, %v1952
  %v1985 = vadd.f32 %v1913, %v1953
  %v1986 = vadd.f32 %v1914, %v1954
  %v1987 = vadd.f32 %v1915, %v1955
  %v1988 = vlaneseq
  %v1989 = vshrl.u32 %v1988, 7
  %v1990 = vsub.s32 0, %v1989
  %v1991 = vrot.slane %v1317, %v1990
  %v1992 = vlaneseq
  %v1993 = vshrl.u32 %v1992, 7
  %v1994 = vsub.s32 0, %v1993
  %v1995 = vrot.slane %v1283, %v1994
  %v1996 = vmul.f32 %v1553, %v1991
  %v1997 = vmul.f32 %v1554, %v1995
  %v1998 = vmul.f32 %v1555, %v1991
  %v1999 = vmul.f32 %v1556, %v1995
  %v2000 = vmul.f32 %v1557, %v1991
  %v2001 = vmul.f32 %v1558, %v1995
  %v2002 = vmul.f32 %v1559, %v1991
  %v2003 = vmul.f32 %v1560, %v1995
  %v2004 = vmul.f32 %v1561, %v1991
  %v2005 = vmul.f32 %v1562, %v1995
  %v2006 = vmul.f32 %v1563, %v1991
  %v2007 = vmul.f32 %v1564, %v1995
  %v2008 = vmul.f32 %v1565, %v1991
  %v2009 = vmul.f32 %v1566, %v1995
  %v2010 = vmul.f32 %v1567, %v1991
  %v2011 = vmul.f32 %v1568, %v1995
  %v2012 = vmul.f32 %v1569, %v1991
  %v2013 = vmul.f32 %v1570, %v1995
  %v2014 = vmul.f32 %v1571, %v1991
  %v2015 = vmul.f32 %v1572, %v1995
  %v2016 = vmul.f32 %v1573, %v1991
  %v2017 = vmul.f32 %v1574, %v1995
  %v2018 = vmul.f32 %v1575, %v1991
  %v2019 = vmul.f32 %v1576, %v1995
  %v2020 = vmul.f32 %v1577, %v1991
  %v2021 = vmul.f32 %v1578, %v1995
  %v2022 = vmul.f32 %v1579, %v1991
  %v2023 = vmul.f32 %v1580, %v1995
  %v2024 = vmul.f32 %v1581, %v1991
  %v2025 = vmul.f32 %v1582, %v1995
  %v2026 = vmul.f32 %v1583, %v1991
  %v2027 = vmul.f32 %v1584, %v1995
  %v2028 = vadd.f32 %v1956, %v1996
  %v2029 = vadd.f32 %v1957, %v1997
  %v2030 = vadd.f32 %v1958, %v1998
  %v2031 = vadd.f32 %v1959, %v1999
  %v2032 = vadd.f32 %v1960, %v2000
  %v2033 = vadd.f32 %v1961, %v2001
  %v2034 = vadd.f32 %v1962, %v2002
  %v2035 = vadd.f32 %v1963, %v2003
  %v2036 = vadd.f32 %v1964, %v2004
  %v2037 = vadd.f32 %v1965, %v2005
  %v2038 = vadd.f32 %v1966, %v2006
  %v2039 = vadd.f32 %v1967, %v2007
  %v2040 = vadd.f32 %v1968, %v2008
  %v2041 = vadd.f32 %v1969, %v2009
  %v2042 = vadd.f32 %v1970, %v2010
  %v2043 = vadd.f32 %v1971, %v2011
  %v2044 = vadd.f32 %v1972, %v2012
  %v2045 = vadd.f32 %v1973, %v2013
  %v2046 = vadd.f32 %v1974, %v2014
  %v2047 = vadd.f32 %v1975, %v2015
  %v2048 = vadd.f32 %v1976, %v2016
  %v2049 = vadd.f32 %v1977, %v2017
  %v2050 = vadd.f32 %v1978, %v2018
  %v2051 = vadd.f32 %v1979, %v2019
  %v2052 = vadd.f32 %v1980, %v2020
  %v2053 = vadd.f32 %v1981, %v2021
  %v2054 = vadd.f32 %v1982, %v2022
  %v2055 = vadd.f32 %v1983, %v2023
  %v2056 = vadd.f32 %v1984, %v2024
  %v2057 = vadd.f32 %v1985, %v2025
  %v2058 = vadd.f32 %v1986, %v2026
  %v2059 = vadd.f32 %v1987, %v2027
  %v2060 = vlaneseq
  %v2061 = vshrl.u32 %v2060, 7
  %v2062 = vsub.s32 0, %v2061
  %v2063 = vrot.slane %v1326, %v2062
  %v2064 = vlaneseq
  %v2065 = vshrl.u32 %v2064, 7
  %v2066 = vsub.s32 0, %v2065
  %v2067 = vrot.slane %v1324, %v2066
  %v2068 = vmul.f32 %v1602, %v2063
  %v2069 = vmul.f32 %v1603, %v2067
  %v2070 = vmul.f32 %v1604, %v2063
  %v2071 = vmul.f32 %v1605, %v2067
  %v2072 = vmul.f32 %v1606, %v2063
  %v2073 = vmul.f32 %v1607, %v2067
  %v2074 = vmul.f32 %v1608, %v2063
  %v2075 = vmul.f32 %v1609, %v2067
  %v2076 = vmul.f32 %v1610, %v2063
  %v2077 = vmul.f32 %v1611, %v2067
  %v2078 = vmul.f32 %v1612, %v2063
  %v2079 = vmul.f32 %v1613, %v2067
  %v2080 = vmul.f32 %v1614, %v2063
  %v2081 = vmul.f32 %v1615, %v2067
  %v2082 = vmul.f32 %v1616, %v2063
  %v2083 = vmul.f32 %v1617, %v2067
  %v2084 = vmul.f32 %v1618, %v2063
  %v2085 = vmul.f32 %v1619, %v2067
  %v2086 = vmul.f32 %v1620, %v2063
  %v2087 = vmul.f32 %v1621, %v2067
  %v2088 = vmul.f32 %v1622, %v2063
  %v2089 = vmul.f32 %v1623, %v2067
  %v2090 = vmul.f32 %v1624, %v2063
  %v2091 = vmul.f32 %v1625, %v2067
  %v2092 = vmul.f32 %v1626, %v2063
  %v2093 = vmul.f32 %v1627, %v2067
  %v2094 = vmul.f32 %v1628, %v2063
  %v2095 = vmul.f32 %v1629, %v2067
  %v2096 = vmul.f32 %v1630, %v2063
  %v2097 = vmul.f32 %v1631, %v2067
  %v2098 = vmul.f32 %v1632, %v2063
  %v2099 = vmul.f32 %v1633, %v2067
  %v2100 = vadd.f32 %v2028, %v2068
  %v2101 = vadd.f32 %v2029, %v2069
  %v2102 = vadd.f32 %v2030, %v2070
  %v2103 = vadd.f32 %v2031, %v2071
  %v2104 = vadd.f32 %v2032, %v2072
  %v2105 = vadd.f32 %v2033, %v2073
  %v2106 = vadd.f32 %v2034, %v2074
  %v2107 = vadd.f32 %v2035, %v2075
  %v2108 = vadd.f32 %v2036, %v2076
  %v2109 = vadd.f32 %v2037, %v2077
  %v2110 = vadd.f32 %v2038, %v2078
  %v2111 = vadd.f32 %v2039, %v2079
  %v2112 = vadd.f32 %v2040, %v2080
  %v2113 = vadd.f32 %v2041, %v2081
  %v2114 = vadd.f32 %v2042, %v2082
  %v2115 = vadd.f32 %v2043, %v2083
  %v2116 = vadd.f32 %v2044, %v2084
  %v2117 = vadd.f32 %v2045, %v2085
  %v2118 = vadd.f32 %v2046, %v2086
  %v2119 = vadd.f32 %v2047, %v2087
  %v2120 = vadd.f32 %v2048, %v2088
  %v2121 = vadd.f32 %v2049, %v2089
  %v2122 = vadd.f32 %v2050, %v2090
  %v2123 = vadd.f32 %v2051, %v2091
  %v2124 = vadd.f32 %v2052, %v2092
  %v2125 = vadd.f32 %v2053, %v2093
  %v2126 = vadd.f32 %v2054, %v2094
  %v2127 = vadd.f32 %v2055, %v2095
  %v2128 = vadd.f32 %v2056, %v2096
  %v2129 = vadd.f32 %v2057, %v2097
  %v2130 = vadd.f32 %v2058, %v2098
  %v2131 = vadd.f32 %v2059, %v2099
  %v2132 = vlaneseq
  %v2133 = vshrl.u32 %v2132, 7
  %v2134 = vsub.s32 0, %v2133
  %v2135 = vrot.slane %v1331, %v2134
  %v2136 = vlaneseq
  %v2137 = vshrl.u32 %v2136, 7
  %v2138 = vsub.s32 0, %v2137
  %v2139 = vrot.slane %v1284, %v2138
  %v2140 = vmul.f32 %v1651, %v2135
  %v2141 = vmul.f32 %v1652, %v2139
  %v2142 = vmul.f32 %v1653, %v2135
  %v2143 = vmul.f32 %v1654, %v2139
  %v2144 = vmul.f32 %v1655, %v2135
  %v2145 = vmul.f32 %v1656, %v2139
  %v2146 = vmul.f32 %v1657, %v2135
  %v2147 = vmul.f32 %v1658, %v2139
  %v2148 = vmul.f32 %v1659, %v2135
  %v2149 = vmul.f32 %v1660, %v2139
  %v2150 = vmul.f32 %v1661, %v2135
  %v2151 = vmul.f32 %v1662, %v2139
  %v2152 = vmul.f32 %v1663, %v2135
  %v2153 = vmul.f32 %v1664, %v2139
  %v2154 = vmul.f32 %v1665, %v2135
  %v2155 = vmul.f32 %v1666, %v2139
  %v2156 = vmul.f32 %v1667, %v2135
  %v2157 = vmul.f32 %v1668, %v2139
  %v2158 = vmul.f32 %v1669, %v2135
  %v2159 = vmul.f32 %v1670, %v2139
  %v2160 = vmul.f32 %v1671, %v2135
  %v2161 = vmul.f32 %v1672, %v2139
  %v2162 = vmul.f32 %v1673, %v2135
  %v2163 = vmul.f32 %v1674, %v2139
  %v2164 = vmul.f32 %v1675, %v2135
  %v2165 = vmul.f32 %v1676, %v2139
  %v2166 = vmul.f32 %v1677, %v2135
  %v2167 = vmul.f32 %v1678, %v2139
  %v2168 = vmul.f32 %v1679, %v2135
  %v2169 = vmul.f32 %v1680, %v2139
  %v2170 = vmul.f32 %v1681, %v2135
  %v2171 = vmul.f32 %v1682, %v2139
  %v2172 = vadd.f32 %v2100, %v2140
  %v2173 = vadd.f32 %v2101, %v2141
  %v2174 = vadd.f32 %v2102, %v2142
  %v2175 = vadd.f32 %v2103, %v2143
  %v2176 = vadd.f32 %v2104, %v2144
  %v2177 = vadd.f32 %v2105, %v2145
  %v2178 = vadd.f32 %v2106, %v2146
  %v2179 = vadd.f32 %v2107, %v2147
  %v2180 = vadd.f32 %v2108, %v2148
  %v2181 = vadd.f32 %v2109, %v2149
  %v2182 = vadd.f32 %v2110, %v2150
  %v2183 = vadd.f32 %v2111, %v2151
  %v2184 = vadd.f32 %v2112, %v2152
  %v2185 = vadd.f32 %v2113, %v2153
  %v2186 = vadd.f32 %v2114, %v2154
  %v2187 = vadd.f32 %v2115, %v2155
  %v2188 = vadd.f32 %v2116, %v2156
  %v2189 = vadd.f32 %v2117, %v2157
  %v2190 = vadd.f32 %v2118, %v2158
  %v2191 = vadd.f32 %v2119, %v2159
  %v2192 = vadd.f32 %v2120, %v2160
  %v2193 = vadd.f32 %v2121, %v2161
  %v2194 = vadd.f32 %v2122, %v2162
  %v2195 = vadd.f32 %v2123, %v2163
  %v2196 = vadd.f32 %v2124, %v2164
  %v2197 = vadd.f32 %v2125, %v2165
  %v2198 = vadd.f32 %v2126, %v2166
  %v2199 = vadd.f32 %v2127, %v2167
  %v2200 = vadd.f32 %v2128, %v2168
  %v2201 = vadd.f32 %v2129, %v2169
  %v2202 = vadd.f32 %v2130, %v2170
  %v2203 = vadd.f32 %v2131, %v2171
  %v2204 = vlaneseq
  %v2205 = vshrl.u32 %v2204, 7
  %v2206 = vsub.s32 0, %v2205
  %v2207 = vrot.slane %v1340, %v2206
  %v2208 = vlaneseq
  %v2209 = vshrl.u32 %v2208, 7
  %v2210 = vsub.s32 0, %v2209
  %v2211 = vrot.slane %v1338, %v2210
  %v2212 = vmul.f32 %v1700, %v2207
  %v2213 = vmul.f32 %v1701, %v2211
  %v2214 = vmul.f32 %v1702, %v2207
  %v2215 = vmul.f32 %v1703, %v2211
  %v2216 = vmul.f32 %v1704, %v2207
  %v2217 = vmul.f32 %v1705, %v2211
  %v2218 = vmul.f32 %v1706, %v2207
  %v2219 = vmul.f32 %v1707, %v2211
  %v2220 = vmul.f32 %v1708, %v2207
  %v2221 = vmul.f32 %v1709, %v2211
  %v2222 = vmul.f32 %v1710, %v2207
  %v2223 = vmul.f32 %v1711, %v2211
  %v2224 = vmul.f32 %v1712, %v2207
  %v2225 = vmul.f32 %v1713, %v2211
  %v2226 = vmul.f32 %v1714, %v2207
  %v2227 = vmul.f32 %v1715, %v2211
  %v2228 = vmul.f32 %v1716, %v2207
  %v2229 = vmul.f32 %v1717, %v2211
  %v2230 = vmul.f32 %v1718, %v2207
  %v2231 = vmul.f32 %v1719, %v2211
  %v2232 = vmul.f32 %v1720, %v2207
  %v2233 = vmul.f32 %v1721, %v2211
  %v2234 = vmul.f32 %v1722, %v2207
  %v2235 = vmul.f32 %v1723, %v2211
  %v2236 = vmul.f32 %v1724, %v2207
  %v2237 = vmul.f32 %v1725, %v2211
  %v2238 = vmul.f32 %v1726, %v2207
  %v2239 = vmul.f32 %v1727, %v2211
  %v2240 = vmul.f32 %v1728, %v2207
  %v2241 = vmul.f32 %v1729, %v2211
  %v2242 = vmul.f32 %v1730, %v2207
  %v2243 = vmul.f32 %v1731, %v2211
  %v2244 = vadd.f32 %v2172, %v2212
  %v2245 = vadd.f32 %v2173, %v2213
  %v2246 = vadd.f32 %v2174, %v2214
  %v2247 = vadd.f32 %v2175, %v2215
  %v2248 = vadd.f32 %v2176, %v2216
  %v2249 = vadd.f32 %v2177, %v2217
  %v2250 = vadd.f32 %v2178, %v2218
  %v2251 = vadd.f32 %v2179, %v2219
  %v2252 = vadd.f32 %v2180, %v2220
  %v2253 = vadd.f32 %v2181, %v2221
  %v2254 = vadd.f32 %v2182, %v2222
  %v2255 = vadd.f32 %v2183, %v2223
  %v2256 = vadd.f32 %v2184, %v2224
  %v2257 = vadd.f32 %v2185, %v2225
  %v2258 = vadd.f32 %v2186, %v2226
  %v2259 = vadd.f32 %v2187, %v2227
  %v2260 = vadd.f32 %v2188, %v2228
  %v2261 = vadd.f32 %v2189, %v2229
  %v2262 = vadd.f32 %v2190, %v2230
  %v2263 = vadd.f32 %v2191, %v2231
  %v2264 = vadd.f32 %v2192, %v2232
  %v2265 = vadd.f32 %v2193, %v2233
  %v2266 = vadd.f32 %v2194, %v2234
  %v2267 = vadd.f32 %v2195, %v2235
  %v2268 = vadd.f32 %v2196, %v2236
  %v2269 = vadd.f32 %v2197, %v2237
  %v2270 = vadd.f32 %v2198, %v2238
  %v2271 = vadd.f32 %v2199, %v2239
  %v2272 = vadd.f32 %v2200, %v2240
  %v2273 = vadd.f32 %v2201, %v2241
  %v2274 = vadd.f32 %v2202, %v2242
  %v2275 = vadd.f32 %v2203, %v2243
  %v2276 = vlaneseq
  %v2277 = vshrl.u32 %v2276, 7
  %v2278 = vsub.s32 1, %v2277
  %v2279 = vrot.slane %v1289, %v2278
  %v2280 = vlaneseq
  %v2281 = vshrl.u32 %v2280, 7
  %v2282 = vsub.s32 1, %v2281
  %v2283 = vrot.slane %v1281, %v2282
  %v2284 = vmul.f32 %v1357, %v2279
  %v2285 = vmul.f32 %v1358, %v2283
  %v2286 = vmul.f32 %v1359, %v2279
  %v2287 = vmul.f32 %v1360, %v2283
  %v2288 = vmul.f32 %v1361, %v2279
  %v2289 = vmul.f32 %v1362, %v2283
  %v2290 = vmul.f32 %v1363, %v2279
  %v2291 = vmul.f32 %v1364, %v2283
  %v2292 = vmul.f32 %v1365, %v2279
  %v2293 = vmul.f32 %v1366, %v2283
  %v2294 = vmul.f32 %v1367, %v2279
  %v2295 = vmul.f32 %v1368, %v2283
  %v2296 = vmul.f32 %v1369, %v2279
  %v2297 = vmul.f32 %v1370, %v2283
  %v2298 = vmul.f32 %v1371, %v2279
  %v2299 = vmul.f32 %v1372, %v2283
  %v2300 = vmul.f32 %v1373, %v2279
  %v2301 = vmul.f32 %v1374, %v2283
  %v2302 = vmul.f32 %v1375, %v2279
  %v2303 = vmul.f32 %v1376, %v2283
  %v2304 = vmul.f32 %v1377, %v2279
  %v2305 = vmul.f32 %v1378, %v2283
  %v2306 = vmul.f32 %v1379, %v2279
  %v2307 = vmul.f32 %v1380, %v2283
  %v2308 = vmul.f32 %v1381, %v2279
  %v2309 = vmul.f32 %v1382, %v2283
  %v2310 = vmul.f32 %v1383, %v2279
  %v2311 = vmul.f32 %v1384, %v2283
  %v2312 = vmul.f32 %v1385, %v2279
  %v2313 = vmul.f32 %v1386, %v2283
  %v2314 = vmul.f32 %v1387, %v2279
  %v2315 = vmul.f32 %v1388, %v2283
  %v2316 = vlaneseq
  %v2317 = vshrl.u32 %v2316, 7
  %v2318 = vsub.s32 1, %v2317
  %v2319 = vrot.slane %v1298, %v2318
  %v2320 = vlaneseq
  %v2321 = vshrl.u32 %v2320, 7
  %v2322 = vsub.s32 1, %v2321
  %v2323 = vrot.slane %v1296, %v2322
  %v2324 = vmul.f32 %v1406, %v2319
  %v2325 = vmul.f32 %v1407, %v2323
  %v2326 = vmul.f32 %v1408, %v2319
  %v2327 = vmul.f32 %v1409, %v2323
  %v2328 = vmul.f32 %v1410, %v2319
  %v2329 = vmul.f32 %v1411, %v2323
  %v2330 = vmul.f32 %v1412, %v2319
  %v2331 = vmul.f32 %v1413, %v2323
  %v2332 = vmul.f32 %v1414, %v2319
  %v2333 = vmul.f32 %v1415, %v2323
  %v2334 = vmul.f32 %v1416, %v2319
  %v2335 = vmul.f32 %v1417, %v2323
  %v2336 = vmul.f32 %v1418, %v2319
  %v2337 = vmul.f32 %v1419, %v2323
  %v2338 = vmul.f32 %v1420, %v2319
  %v2339 = vmul.f32 %v1421, %v2323
  %v2340 = vmul.f32 %v1422, %v2319
  %v2341 = vmul.f32 %v1423, %v2323
  %v2342 = vmul.f32 %v1424, %v2319
  %v2343 = vmul.f32 %v1425, %v2323
  %v2344 = vmul.f32 %v1426, %v2319
  %v2345 = vmul.f32 %v1427, %v2323
  %v2346 = vmul.f32 %v1428, %v2319
  %v2347 = vmul.f32 %v1429, %v2323
  %v2348 = vmul.f32 %v1430, %v2319
  %v2349 = vmul.f32 %v1431, %v2323
  %v2350 = vmul.f32 %v1432, %v2319
  %v2351 = vmul.f32 %v1433, %v2323
  %v2352 = vmul.f32 %v1434, %v2319
  %v2353 = vmul.f32 %v1435, %v2323
  %v2354 = vmul.f32 %v1436, %v2319
  %v2355 = vmul.f32 %v1437, %v2323
  %v2356 = vadd.f32 %v2284, %v2324
  %v2357 = vadd.f32 %v2285, %v2325
  %v2358 = vadd.f32 %v2286, %v2326
  %v2359 = vadd.f32 %v2287, %v2327
  %v2360 = vadd.f32 %v2288, %v2328
  %v2361 = vadd.f32 %v2289, %v2329
  %v2362 = vadd.f32 %v2290, %v2330
  %v2363 = vadd.f32 %v2291, %v2331
  %v2364 = vadd.f32 %v2292, %v2332
  %v2365 = vadd.f32 %v2293, %v2333
  %v2366 = vadd.f32 %v2294, %v2334
  %v2367 = vadd.f32 %v2295, %v2335
  %v2368 = vadd.f32 %v2296, %v2336
  %v2369 = vadd.f32 %v2297, %v2337
  %v2370 = vadd.f32 %v2298, %v2338
  %v2371 = vadd.f32 %v2299, %v2339
  %v2372 = vadd.f32 %v2300, %v2340
  %v2373 = vadd.f32 %v2301, %v2341
  %v2374 = vadd.f32 %v2302, %v2342
  %v2375 = vadd.f32 %v2303, %v2343
  %v2376 = vadd.f32 %v2304, %v2344
  %v2377 = vadd.f32 %v2305, %v2345
  %v2378 = vadd.f32 %v2306, %v2346
  %v2379 = vadd.f32 %v2307, %v2347
  %v2380 = vadd.f32 %v2308, %v2348
  %v2381 = vadd.f32 %v2309, %v2349
  %v2382 = vadd.f32 %v2310, %v2350
  %v2383 = vadd.f32 %v2311, %v2351
  %v2384 = vadd.f32 %v2312, %v2352
  %v2385 = vadd.f32 %v2313, %v2353
  %v2386 = vadd.f32 %v2314, %v2354
  %v2387 = vadd.f32 %v2315, %v2355
  %v2388 = vlaneseq
  %v2389 = vshrl.u32 %v2388, 7
  %v2390 = vsub.s32 1, %v2389
  %v2391 = vrot.slane %v1303, %v2390
  %v2392 = vlaneseq
  %v2393 = vshrl.u32 %v2392, 7
  %v2394 = vsub.s32 1, %v2393
  %v2395 = vrot.slane %v1282, %v2394
  %v2396 = vmul.f32 %v1455, %v2391
  %v2397 = vmul.f32 %v1456, %v2395
  %v2398 = vmul.f32 %v1457, %v2391
  %v2399 = vmul.f32 %v1458, %v2395
  %v2400 = vmul.f32 %v1459, %v2391
  %v2401 = vmul.f32 %v1460, %v2395
  %v2402 = vmul.f32 %v1461, %v2391
  %v2403 = vmul.f32 %v1462, %v2395
  %v2404 = vmul.f32 %v1463, %v2391
  %v2405 = vmul.f32 %v1464, %v2395
  %v2406 = vmul.f32 %v1465, %v2391
  %v2407 = vmul.f32 %v1466, %v2395
  %v2408 = vmul.f32 %v1467, %v2391
  %v2409 = vmul.f32 %v1468, %v2395
  %v2410 = vmul.f32 %v1469, %v2391
  %v2411 = vmul.f32 %v1470, %v2395
  %v2412 = vmul.f32 %v1471, %v2391
  %v2413 = vmul.f32 %v1472, %v2395
  %v2414 = vmul.f32 %v1473, %v2391
  %v2415 = vmul.f32 %v1474, %v2395
  %v2416 = vmul.f32 %v1475, %v2391
  %v2417 = vmul.f32 %v1476, %v2395
  %v2418 = vmul.f32 %v1477, %v2391
  %v2419 = vmul.f32 %v1478, %v2395
  %v2420 = vmul.f32 %v1479, %v2391
  %v2421 = vmul.f32 %v1480, %v2395
  %v2422 = vmul.f32 %v1481, %v2391
  %v2423 = vmul.f32 %v1482, %v2395
  %v2424 = vmul.f32 %v1483, %v2391
  %v2425 = vmul.f32 %v1484, %v2395
  %v2426 = vmul.f32 %v1485, %v2391
  %v2427 = vmul.f32 %v1486, %v2395
  %v2428 = vadd.f32 %v2356, %v2396
  %v2429 = vadd.f32 %v2357, %v2397
  %v2430 = vadd.f32 %v2358, %v2398
  %v2431 = vadd.f32 %v2359, %v2399
  %v2432 = vadd.f32 %v2360, %v2400
  %v2433 = vadd.f32 %v2361, %v2401
  %v2434 = vadd.f32 %v2362, %v2402
  %v2435 = vadd.f32 %v2363, %v2403
  %v2436 = vadd.f32 %v2364, %v2404
  %v2437 = vadd.f32 %v2365, %v2405
  %v2438 = vadd.f32 %v2366, %v2406
  %v2439 = vadd.f32 %v2367, %v2407
  %v2440 = vadd.f32 %v2368, %v2408
  %v2441 = vadd.f32 %v2369, %v2409
  %v2442 = vadd.f32 %v2370, %v2410
  %v2443 = vadd.f32 %v2371, %v2411
  %v2444 = vadd.f32 %v2372, %v2412
  %v2445 = vadd.f32 %v2373, %v2413
  %v2446 = vadd.f32 %v2374, %v2414
  %v2447 = vadd.f32 %v2375, %v2415
  %v2448 = vadd.f32 %v2376, %v2416
  %v2449 = vadd.f32 %v2377, %v2417
  %v2450 = vadd.f32 %v2378, %v2418
  %v2451 = vadd.f32 %v2379, %v2419
  %v2452 = vadd.f32 %v2380, %v2420
  %v2453 = vadd.f32 %v2381, %v2421
  %v2454 = vadd.f32 %v2382, %v2422
  %v2455 = vadd.f32 %v2383, %v2423
  %v2456 = vadd.f32 %v2384, %v2424
  %v2457 = vadd.f32 %v2385, %v2425
  %v2458 = vadd.f32 %v2386, %v2426
  %v2459 = vadd.f32 %v2387, %v2427
  %v2460 = vlaneseq
  %v2461 = vshrl.u32 %v2460, 7
  %v2462 = vsub.s32 1, %v2461
  %v2463 = vrot.slane %v1312, %v2462
  %v2464 = vlaneseq
  %v2465 = vshrl.u32 %v2464, 7
  %v2466 = vsub.s32 1, %v2465
  %v2467 = vrot.slane %v1310, %v2466
  %v2468 = vmul.f32 %v1504, %v2463
  %v2469 = vmul.f32 %v1505, %v2467
  %v2470 = vmul.f32 %v1506, %v2463
  %v2471 = vmul.f32 %v1507, %v2467
  %v2472 = vmul.f32 %v1508, %v2463
  %v2473 = vmul.f32 %v1509, %v2467
  %v2474 = vmul.f32 %v1510, %v2463
  %v2475 = vmul.f32 %v1511, %v2467
  %v2476 = vmul.f32 %v1512, %v2463
  %v2477 = vmul.f32 %v1513, %v2467
  %v2478 = vmul.f32 %v1514, %v2463
  %v2479 = vmul.f32 %v1515, %v2467
  %v2480 = vmul.f32 %v1516, %v2463
  %v2481 = vmul.f32 %v1517, %v2467
  %v2482 = vmul.f32 %v1518, %v2463
  %v2483 = vmul.f32 %v1519, %v2467
  %v2484 = vmul.f32 %v1520, %v2463
  %v2485 = vmul.f32 %v1521, %v2467
  %v2486 = vmul.f32 %v1522, %v2463
  %v2487 = vmul.f32 %v1523, %v2467
  %v2488 = vmul.f32 %v1524, %v2463
  %v2489 = vmul.f32 %v1525, %v2467
  %v2490 = vmul.f32 %v1526, %v2463
  %v2491 = vmul.f32 %v1527, %v2467
  %v2492 = vmul.f32 %v1528, %v2463
  %v2493 = vmul.f32 %v1529, %v2467
  %v2494 = vmul.f32 %v1530, %v2463
  %v2495 = vmul.f32 %v1531, %v2467
  %v2496 = vmul.f32 %v1532, %v2463
  %v2497 = vmul.f32 %v1533, %v2467
  %v2498 = vmul.f32 %v1534, %v2463
  %v2499 = vmul.f32 %v1535, %v2467
  %v2500 = vadd.f32 %v2428, %v2468
  %v2501 = vadd.f32 %v2429, %v2469
  %v2502 = vadd.f32 %v2430, %v2470
  %v2503 = vadd.f32 %v2431, %v2471
  %v2504 = vadd.f32 %v2432, %v2472
  %v2505 = vadd.f32 %v2433, %v2473
  %v2506 = vadd.f32 %v2434, %v2474
  %v2507 = vadd.f32 %v2435, %v2475
  %v2508 = vadd.f32 %v2436, %v2476
  %v2509 = vadd.f32 %v2437, %v2477
  %v2510 = vadd.f32 %v2438, %v2478
  %v2511 = vadd.f32 %v2439, %v2479
  %v2512 = vadd.f32 %v2440, %v2480
  %v2513 = vadd.f32 %v2441, %v2481
  %v2514 = vadd.f32 %v2442, %v2482
  %v2515 = vadd.f32 %v2443, %v2483
  %v2516 = vadd.f32 %v2444, %v2484
  %v2517 = vadd.f32 %v2445, %v2485
  %v2518 = vadd.f32 %v2446, %v2486
  %v2519 = vadd.f32 %v2447, %v2487
  %v2520 = vadd.f32 %v2448, %v2488
  %v2521 = vadd.f32 %v2449, %v2489
  %v2522 = vadd.f32 %v2450, %v2490
  %v2523 = vadd.f32 %v2451, %v2491
  %v2524 = vadd.f32 %v2452, %v2492
  %v2525 = vadd.f32 %v2453, %v2493
  %v2526 = vadd.f32 %v2454, %v2494
  %v2527 = vadd.f32 %v2455, %v2495
  %v2528 = vadd.f32 %v2456, %v2496
  %v2529 = vadd.f32 %v2457, %v2497
  %v2530 = vadd.f32 %v2458, %v2498
  %v2531 = vadd.f32 %v2459, %v2499
  %v2532 = vlaneseq
  %v2533 = vshrl.u32 %v2532, 7
  %v2534 = vsub.s32 1, %v2533
  %v2535 = vrot.slane %v1317, %v2534
  %v2536 = vlaneseq
  %v2537 = vshrl.u32 %v2536, 7
  %v2538 = vsub.s32 1, %v2537
  %v2539 = vrot.slane %v1283, %v2538
  %v2540 = vmul.f32 %v1553, %v2535
  %v2541 = vmul.f32 %v1554, %v2539
  %v2542 = vmul.f32 %v1555, %v2535
  %v2543 = vmul.f32 %v1556, %v2539
  %v2544 = vmul.f32 %v1557, %v2535
  %v2545 = vmul.f32 %v1558, %v2539
  %v2546 = vmul.f32 %v1559, %v2535
  %v2547 = vmul.f32 %v1560, %v2539
  %v2548 = vmul.f32 %v1561, %v2535
  %v2549 = vmul.f32 %v1562, %v2539
  %v2550 = vmul.f32 %v1563, %v2535
  %v2551 = vmul.f32 %v1564, %v2539
  %v2552 = vmul.f32 %v1565, %v2535
  %v2553 = vmul.f32 %v1566, %v2539
  %v2554 = vmul.f32 %v1567, %v2535
  %v2555 = vmul.f32 %v1568, %v2539
  %v2556 = vmul.f32 %v1569, %v2535
  %v2557 = vmul.f32 %v1570, %v2539
  %v2558 = vmul.f32 %v1571, %v2535
  %v2559 = vmul.f32 %v1572, %v2539
  %v2560 = vmul.f32 %v1573, %v2535
  %v2561 = vmul.f32 %v1574, %v2539
  %v2562 = vmul.f32 %v1575, %v2535
  %v2563 = vmul.f32 %v1576, %v2539
  %v2564 = vmul.f32 %v1577, %v2535
  %v2565 = vmul.f32 %v1578, %v2539
  %v2566 = vmul.f32 %v1579, %v2535
  %v2567 = vmul.f32 %v1580, %v2539
  %v2568 = vmul.f32 %v1581, %v2535
  %v2569 = vmul.f32 %v1582, %v2539
  %v2570 = vmul.f32 %v1583, %v2535
  %v2571 = vmul.f32 %v1584, %v2539
  %v2572 = vadd.f32 %v2500, %v2540
  %v2573 = vadd.f32 %v2501, %v2541
  %v2574 = vadd.f32 %v2502, %v2542
  %v2575 = vadd.f32 %v2503, %v2543
  %v2576 = vadd.f32 %v2504, %v2544
  %v2577 = vadd.f32 %v2505, %v2545
  %v2578 = vadd.f32 %v2506, %v2546
  %v2579 = vadd.f32 %v2507, %v2547
  %v2580 = vadd.f32 %v2508, %v2548
  %v2581 = vadd.f32 %v2509, %v2549
  %v2582 = vadd.f32 %v2510, %v2550
  %v2583 = vadd.f32 %v2511, %v2551
  %v2584 = vadd.f32 %v2512, %v2552
  %v2585 = vadd.f32 %v2513, %v2553
  %v2586 = vadd.f32 %v2514, %v2554
  %v2587 = vadd.f32 %v2515, %v2555
  %v2588 = vadd.f32 %v2516, %v2556
  %v2589 = vadd.f32 %v2517, %v2557
  %v2590 = vadd.f32 %v2518, %v2558
  %v2591 = vadd.f32 %v2519, %v2559
  %v2592 = vadd.f32 %v2520, %v2560
  %v2593 = vadd.f32 %v2521, %v2561
  %v2594 = vadd.f32 %v2522, %v2562
  %v2595 = vadd.f32 %v2523, %v2563
  %v2596 = vadd.f32 %v2524, %v2564
  %v2597 = vadd.f32 %v2525, %v2565
  %v2598 = vadd.f32 %v2526, %v2566
  %v2599 = vadd.f32 %v2527, %v2567
  %v2600 = vadd.f32 %v2528, %v2568
  %v2601 = vadd.f32 %v2529, %v2569
  %v2602 = vadd.f32 %v2530, %v2570
  %v2603 = vadd.f32 %v2531, %v2571
  %v2604 = vlaneseq
  %v2605 = vshrl.u32 %v2604, 7
  %v2606 = vsub.s32 1, %v2605
  %v2607 = vrot.slane %v1326, %v2606
  %v2608 = vlaneseq
  %v2609 = vshrl.u32 %v2608, 7
  %v2610 = vsub.s32 1, %v2609
  %v2611 = vrot.slane %v1324, %v2610
  %v2612 = vmul.f32 %v1602, %v2607
  %v2613 = vmul.f32 %v1603, %v2611
  %v2614 = vmul.f32 %v1604, %v2607
  %v2615 = vmul.f32 %v1605, %v2611
  %v2616 = vmul.f32 %v1606, %v2607
  %v2617 = vmul.f32 %v1607, %v2611
  %v2618 = vmul.f32 %v1608, %v2607
  %v2619 = vmul.f32 %v1609, %v2611
  %v2620 = vmul.f32 %v1610, %v2607
  %v2621 = vmul.f32 %v1611, %v2611
  %v2622 = vmul.f32 %v1612, %v2607
  %v2623 = vmul.f32 %v1613, %v2611
  %v2624 = vmul.f32 %v1614, %v2607
  %v2625 = vmul.f32 %v1615, %v2611
  %v2626 = vmul.f32 %v1616, %v2607
  %v2627 = vmul.f32 %v1617, %v2611
  %v2628 = vmul.f32 %v1618, %v2607
  %v2629 = vmul.f32 %v1619, %v2611
  %v2630 = vmul.f32 %v1620, %v2607
  %v2631 = vmul.f32 %v1621, %v2611
  %v2632 = vmul.f32 %v1622, %v2607
  %v2633 = vmul.f32 %v1623, %v2611
  %v2634 = vmul.f32 %v1624, %v2607
  %v2635 = vmul.f32 %v1625, %v2611
  %v2636 = vmul.f32 %v1626, %v2607
  %v2637 = vmul.f32 %v1627, %v2611
  %v2638 = vmul.f32 %v1628, %v2607
  %v2639 = vmul.f32 %v1629, %v2611
  %v2640 = vmul.f32 %v1630, %v2607
  %v2641 = vmul.f32 %v1631, %v2611
  %v2642 = vmul.f32 %v1632, %v2607
  %v2643 = vmul.f32 %v1633, %v2611
  %v2644 = vadd.f32 %v2572, %v2612
  %v2645 = vadd.f32 %v2573, %v2613
  %v2646 = vadd.f32 %v2574, %v2614
  %v2647 = vadd.f32 %v2575, %v2615
  %v2648 = vadd.f32 %v2576, %v2616
  %v2649 = vadd.f32 %v2577, %v2617
  %v2650 = vadd.f32 %v2578, %v2618
  %v2651 = vadd.f32 %v2579, %v2619
  %v2652 = vadd.f32 %v2580, %v2620
  %v2653 = vadd.f32 %v2581, %v2621
  %v2654 = vadd.f32 %v2582, %v2622
  %v2655 = vadd.f32 %v2583, %v2623
  %v2656 = vadd.f32 %v2584, %v2624
  %v2657 = vadd.f32 %v2585, %v2625
  %v2658 = vadd.f32 %v2586, %v2626
  %v2659 = vadd.f32 %v2587, %v2627
  %v2660 = vadd.f32 %v2588, %v2628
  %v2661 = vadd.f32 %v2589, %v2629
  %v2662 = vadd.f32 %v2590, %v2630
  %v2663 = vadd.f32 %v2591, %v2631
  %v2664 = vadd.f32 %v2592, %v2632
  %v2665 = vadd.f32 %v2593, %v2633
  %v2666 = vadd.f32 %v2594, %v2634
  %v2667 = vadd.f32 %v2595, %v2635
  %v2668 = vadd.f32 %v2596, %v2636
  %v2669 = vadd.f32 %v2597, %v2637
  %v2670 = vadd.f32 %v2598, %v2638
  %v2671 = vadd.f32 %v2599, %v2639
  %v2672 = vadd.f32 %v2600, %v2640
  %v2673 = vadd.f32 %v2601, %v2641
  %v2674 = vadd.f32 %v2602, %v2642
  %v2675 = vadd.f32 %v2603, %v2643
  %v2676 = vlaneseq
  %v2677 = vshrl.u32 %v2676, 7
  %v2678 = vsub.s32 1, %v2677
  %v2679 = vrot.slane %v1331, %v2678
  %v2680 = vlaneseq
  %v2681 = vshrl.u32 %v2680, 7
  %v2682 = vsub.s32 1, %v2681
  %v2683 = vrot.slane %v1284, %v2682
  %v2684 = vmul.f32 %v1651, %v2679
  %v2685 = vmul.f32 %v1652, %v2683
  %v2686 = vmul.f32 %v1653, %v2679
  %v2687 = vmul.f32 %v1654, %v2683
  %v2688 = vmul.f32 %v1655, %v2679
  %v2689 = vmul.f32 %v1656, %v2683
  %v2690 = vmul.f32 %v1657, %v2679
  %v2691 = vmul.f32 %v1658, %v2683
  %v2692 = vmul.f32 %v1659, %v2679
  %v2693 = vmul.f32 %v1660, %v2683
  %v2694 = vmul.f32 %v1661, %v2679
  %v2695 = vmul.f32 %v1662, %v2683
  %v2696 = vmul.f32 %v1663, %v2679
  %v2697 = vmul.f32 %v1664, %v2683
  %v2698 = vmul.f32 %v1665, %v2679
  %v2699 = vmul.f32 %v1666, %v2683
  %v2700 = vmul.f32 %v1667, %v2679
  %v2701 = vmul.f32 %v1668, %v2683
  %v2702 = vmul.f32 %v1669, %v2679
  %v2703 = vmul.f32 %v1670, %v2683
  %v2704 = vmul.f32 %v1671, %v2679
  %v2705 = vmul.f32 %v1672, %v2683
  %v2706 = vmul.f32 %v1673, %v2679
  %v2707 = vmul.f32 %v1674, %v2683
  %v2708 = vmul.f32 %v1675, %v2679
  %v2709 = vmul.f32 %v1676, %v2683
  %v2710 = vmul.f32 %v1677, %v2679
  %v2711 = vmul.f32 %v1678, %v2683
  %v2712 = vmul.f32 %v1679, %v2679
  %v2713 = vmul.f32 %v1680, %v2683
  %v2714 = vmul.f32 %v1681, %v2679
  %v2715 = vmul.f32 %v1682, %v2683
  %v2716 = vadd.f32 %v2644, %v2684
  %v2717 = vadd.f32 %v2645, %v2685
  %v2718 = vadd.f32 %v2646, %v2686
  %v2719 = vadd.f32 %v2647, %v2687
  %v2720 = vadd.f32 %v2648, %v2688
  %v2721 = vadd.f32 %v2649, %v2689
  %v2722 = vadd.f32 %v2650, %v2690
  %v2723 = vadd.f32 %v2651, %v2691
  %v2724 = vadd.f32 %v2652, %v2692
  %v2725 = vadd.f32 %v2653, %v2693
  %v2726 = vadd.f32 %v2654, %v2694
  %v2727 = vadd.f32 %v2655, %v2695
  %v2728 = vadd.f32 %v2656, %v2696
  %v2729 = vadd.f32 %v2657, %v2697
  %v2730 = vadd.f32 %v2658, %v2698
  %v2731 = vadd.f32 %v2659, %v2699
  %v2732 = vadd.f32 %v2660, %v2700
  %v2733 = vadd.f32 %v2661, %v2701
  %v2734 = vadd.f32 %v2662, %v2702
  %v2735 = vadd.f32 %v2663, %v2703
  %v2736 = vadd.f32 %v2664, %v2704
  %v2737 = vadd.f32 %v2665, %v2705
  %v2738 = vadd.f32 %v2666, %v2706
  %v2739 = vadd.f32 %v2667, %v2707
  %v2740 = vadd.f32 %v2668, %v2708
  %v2741 = vadd.f32 %v2669, %v2709
  %v2742 = vadd.f32 %v2670, %v2710
  %v2743 = vadd.f32 %v2671, %v2711
  %v2744 = vadd.f32 %v2672, %v2712
  %v2745 = vadd.f32 %v2673, %v2713
  %v2746 = vadd.f32 %v2674, %v2714
  %v2747 = vadd.f32 %v2675, %v2715
  %v2748 = vlaneseq
  %v2749 = vshrl.u32 %v2748, 7
  %v2750 = vsub.s32 1, %v2749
  %v2751 = vrot.slane %v1340, %v2750
  %v2752 = vlaneseq
  %v2753 = vshrl.u32 %v2752, 7
  %v2754 = vsub.s32 1, %v2753
  %v2755 = vrot.slane %v1338, %v2754
  %v2756 = vmul.f32 %v1700, %v2751
  %v2757 = vmul.f32 %v1701, %v2755
  %v2758 = vmul.f32 %v1702, %v2751
  %v2759 = vmul.f32 %v1703, %v2755
  %v2760 = vmul.f32 %v1704, %v2751
  %v2761 = vmul.f32 %v1705, %v2755
  %v2762 = vmul.f32 %v1706, %v2751
  %v2763 = vmul.f32 %v1707, %v2755
  %v2764 = vmul.f32 %v1708, %v2751
  %v2765 = vmul.f32 %v1709, %v2755
  %v2766 = vmul.f32 %v1710, %v2751
  %v2767 = vmul.f32 %v1711, %v2755
  %v2768 = vmul.f32 %v1712, %v2751
  %v2769 = vmul.f32 %v1713, %v2755
  %v2770 = vmul.f32 %v1714, %v2751
  %v2771 = vmul.f32 %v1715, %v2755
  %v2772 = vmul.f32 %v1716, %v2751
  %v2773 = vmul.f32 %v1717, %v2755
  %v2774 = vmul.f32 %v1718, %v2751
  %v2775 = vmul.f32 %v1719, %v2755
  %v2776 = vmul.f32 %v1720, %v2751
  %v2777 = vmul.f32 %v1721, %v2755
  %v2778 = vmul.f32 %v1722, %v2751
  %v2779 = vmul.f32 %v1723, %v2755
  %v2780 = vmul.f32 %v1724, %v2751
  %v2781 = vmul.f32 %v1725, %v2755
  %v2782 = vmul.f32 %v1726, %v2751
  %v2783 = vmul.f32 %v1727, %v2755
  %v2784 = vmul.f32 %v1728, %v2751
  %v2785 = vmul.f32 %v1729, %v2755
  %v2786 = vmul.f32 %v1730, %v2751
  %v2787 = vmul.f32 %v1731, %v2755
  %v2788 = vadd.f32 %v2716, %v2756
  %v2789 = vadd.f32 %v2717, %v2757
  %v2790 = vadd.f32 %v2718, %v2758
  %v2791 = vadd.f32 %v2719, %v2759
  %v2792 = vadd.f32 %v2720, %v2760
  %v2793 = vadd.f32 %v2721, %v2761
  %v2794 = vadd.f32 %v2722, %v2762
  %v2795 = vadd.f32 %v2723, %v2763
  %v2796 = vadd.f32 %v2724, %v2764
  %v2797 = vadd.f32 %v2725, %v2765
  %v2798 = vadd.f32 %v2726, %v2766
  %v2799 = vadd.f32 %v2727, %v2767
  %v2800 = vadd.f32 %v2728, %v2768
  %v2801 = vadd.f32 %v2729, %v2769
  %v2802 = vadd.f32 %v2730, %v2770
  %v2803 = vadd.f32 %v2731, %v2771
  %v2804 = vadd.f32 %v2732, %v2772
  %v2805 = vadd.f32 %v2733, %v2773
  %v2806 = vadd.f32 %v2734, %v2774
  %v2807 = vadd.f32 %v2735, %v2775
  %v2808 = vadd.f32 %v2736, %v2776
  %v2809 = vadd.f32 %v2737, %v2777
  %v2810 = vadd.f32 %v2738, %v2778
  %v2811 = vadd.f32 %v2739, %v2779
  %v2812 = vadd.f32 %v2740, %v2780
  %v2813 = vadd.f32 %v2741, %v2781
  %v2814 = vadd.f32 %v2742, %v2782
  %v2815 = vadd.f32 %v2743, %v2783
  %v2816 = vadd.f32 %v2744, %v2784
  %v2817 = vadd.f32 %v2745, %v2785
  %v2818 = vadd.f32 %v2746, %v2786
  %v2819 = vadd.f32 %v2747, %v2787
  %v2820 = vlaneseq
  %v2821 = vshrl.u32 %v2820, 7
  %v2822 = vsub.s32 2, %v2821
  %v2823 = vrot.slane %v1289, %v2822
  %v2824 = vlaneseq
  %v2825 = vshrl.u32 %v2824, 7
  %v2826 = vsub.s32 2, %v2825
  %v2827 = vrot.slane %v1281, %v2826
  %v2828 = vmul.f32 %v1357, %v2823
  %v2829 = vmul.f32 %v1358, %v2827
  %v2830 = vmul.f32 %v1359, %v2823
  %v2831 = vmul.f32 %v1360, %v2827
  %v2832 = vmul.f32 %v1361, %v2823
  %v2833 = vmul.f32 %v1362, %v2827
  %v2834 = vmul.f32 %v1363, %v2823
  %v2835 = vmul.f32 %v1364, %v2827
  %v2836 = vmul.f32 %v1365, %v2823
  %v2837 = vmul.f32 %v1366, %v2827
  %v2838 = vmul.f32 %v1367, %v2823
  %v2839 = vmul.f32 %v1368, %v2827
  %v2840 = vmul.f32 %v1369, %v2823
  %v2841 = vmul.f32 %v1370, %v2827
  %v2842 = vmul.f32 %v1371, %v2823
  %v2843 = vmul.f32 %v1372, %v2827
  %v2844 = vmul.f32 %v1373, %v2823
  %v2845 = vmul.f32 %v1374, %v2827
  %v2846 = vmul.f32 %v1375, %v2823
  %v2847 = vmul.f32 %v1376, %v2827
  %v2848 = vmul.f32 %v1377, %v2823
  %v2849 = vmul.f32 %v1378, %v2827
  %v2850 = vmul.f32 %v1379, %v2823
  %v2851 = vmul.f32 %v1380, %v2827
  %v2852 = vmul.f32 %v1381, %v2823
  %v2853 = vmul.f32 %v1382, %v2827
  %v2854 = vmul.f32 %v1383, %v2823
  %v2855 = vmul.f32 %v1384, %v2827
  %v2856 = vmul.f32 %v1385, %v2823
  %v2857 = vmul.f32 %v1386, %v2827
  %v2858 = vmul.f32 %v1387, %v2823
  %v2859 = vmul.f32 %v1388, %v2827
  %v2860 = vlaneseq
  %v2861 = vshrl.u32 %v2860, 7
  %v2862 = vsub.s32 2, %v2861
  %v2863 = vrot.slane %v1298, %v2862
  %v2864 = vlaneseq
  %v2865 = vshrl.u32 %v2864, 7
  %v2866 = vsub.s32 2, %v2865
  %v2867 = vrot.slane %v1296, %v2866
  %v2868 = vmul.f32 %v1406, %v2863
  %v2869 = vmul.f32 %v1407, %v2867
  %v2870 = vmul.f32 %v1408, %v2863
  %v2871 = vmul.f32 %v1409, %v2867
  %v2872 = vmul.f32 %v1410, %v2863
  %v2873 = vmul.f32 %v1411, %v2867
  %v2874 = vmul.f32 %v1412, %v2863
  %v2875 = vmul.f32 %v1413, %v2867
  %v2876 = vmul.f32 %v1414, %v2863
  %v2877 = vmul.f32 %v1415, %v2867
  %v2878 = vmul.f32 %v1416, %v2863
  %v2879 = vmul.f32 %v1417, %v2867
  %v2880 = vmul.f32 %v1418, %v2863
  %v2881 = vmul.f32 %v1419, %v2867
  %v2882 = vmul.f32 %v1420, %v2863
  %v2883 = vmul.f32 %v1421, %v2867
  %v2884 = vmul.f32 %v1422, %v2863
  %v2885 = vmul.f32 %v1423, %v2867
  %v2886 = vmul.f32 %v1424, %v2863
  %v2887 = vmul.f32 %v1425, %v2867
  %v2888 = vmul.f32 %v1426, %v2863
  %v2889 = vmul.f32 %v1427, %v2867
  %v2890 = vmul.f32 %v1428, %v2863
  %v2891 = vmul.f32 %v1429, %v2867
  %v2892 = vmul.f32 %v1430, %v2863
  %v2893 = vmul.f32 %v1431, %v2867
  %v2894 = vmul.f32 %v1432, %v2863
  %v2895 = vmul.f32 %v1433, %v2867
  %v2896 = vmul.f32 %v1434, %v2863
  %v2897 = vmul.f32 %v1435, %v2867
  %v2898 = vmul.f32 %v1436, %v2863
  %v2899 = vmul.f32 %v1437, %v2867
  %v2900 = vadd.f32 %v2828, %v2868
  %v2901 = vadd.f32 %v2829, %v2869
  %v2902 = vadd.f32 %v2830, %v2870
  %v2903 = vadd.f32 %v2831, %v2871
  %v2904 = vadd.f32 %v2832, %v2872
  %v2905 = vadd.f32 %v2833, %v2873
  %v2906 = vadd.f32 %v2834, %v2874
  %v2907 = vadd.f32 %v2835, %v2875
  %v2908 = vadd.f32 %v2836, %v2876
  %v2909 = vadd.f32 %v2837, %v2877
  %v2910 = vadd.f32 %v2838, %v2878
  %v2911 = vadd.f32 %v2839, %v2879
  %v2912 = vadd.f32 %v2840, %v2880
  %v2913 = vadd.f32 %v2841, %v2881
  %v2914 = vadd.f32 %v2842, %v2882
  %v2915 = vadd.f32 %v2843, %v2883
  %v2916 = vadd.f32 %v2844, %v2884
  %v2917 = vadd.f32 %v2845, %v2885
  %v2918 = vadd.f32 %v2846, %v2886
  %v2919 = vadd.f32 %v2847, %v2887
  %v2920 = vadd.f32 %v2848, %v2888
  %v2921 = vadd.f32 %v2849, %v2889
  %v2922 = vadd.f32 %v2850, %v2890
  %v2923 = vadd.f32 %v2851, %v2891
  %v2924 = vadd.f32 %v2852, %v2892
  %v2925 = vadd.f32 %v2853, %v2893
  %v2926 = vadd.f32 %v2854, %v2894
  %v2927 = vadd.f32 %v2855, %v2895
  %v2928 = vadd.f32 %v2856, %v2896
  %v2929 = vadd.f32 %v2857, %v2897
  %v2930 = vadd.f32 %v2858, %v2898
  %v2931 = vadd.f32 %v2859, %v2899
  %v2932 = vlaneseq
  %v2933 = vshrl.u32 %v2932, 7
  %v2934 = vsub.s32 2, %v2933
  %v2935 = vrot.slane %v1303, %v2934
  %v2936 = vlaneseq
  %v2937 = vshrl.u32 %v2936, 7
  %v2938 = vsub.s32 2, %v2937
  %v2939 = vrot.slane %v1282, %v2938
  %v2940 = vmul.f32 %v1455, %v2935
  %v2941 = vmul.f32 %v1456, %v2939
  %v2942 = vmul.f32 %v1457, %v2935
  %v2943 = vmul.f32 %v1458, %v2939
  %v2944 = vmul.f32 %v1459, %v2935
  %v2945 = vmul.f32 %v1460, %v2939
  %v2946 = vmul.f32 %v1461, %v2935
  %v2947 = vmul.f32 %v1462, %v2939
  %v2948 = vmul.f32 %v1463, %v2935
  %v2949 = vmul.f32 %v1464, %v2939
  %v2950 = vmul.f32 %v1465, %v2935
  %v2951 = vmul.f32 %v1466, %v2939
  %v2952 = vmul.f32 %v1467, %v2935
  %v2953 = vmul.f32 %v1468, %v2939
  %v2954 = vmul.f32 %v1469, %v2935
  %v2955 = vmul.f32 %v1470, %v2939
  %v2956 = vmul.f32 %v1471, %v2935
  %v2957 = vmul.f32 %v1472, %v2939
  %v2958 = vmul.f32 %v1473, %v2935
  %v2959 = vmul.f32 %v1474, %v2939
  %v2960 = vmul.f32 %v1475, %v2935
  %v2961 = vmul.f32 %v1476, %v2939
  %v2962 = vmul.f32 %v1477, %v2935
  %v2963 = vmul.f32 %v1478, %v2939
  %v2964 = vmul.f32 %v1479, %v2935
  %v2965 = vmul.f32 %v1480, %v2939
  %v2966 = vmul.f32 %v1481, %v2935
  %v2967 = vmul.f32 %v1482, %v2939
  %v2968 = vmul.f32 %v1483, %v2935
  %v2969 = vmul.f32 %v1484, %v2939
  %v2970 = vmul.f32 %v1485, %v2935
  %v2971 = vmul.f32 %v1486, %v2939
  %v2972 = vadd.f32 %v2900, %v2940
  %v2973 = vadd.f32 %v2901, %v2941
  %v2974 = vadd.f32 %v2902, %v2942
  %v2975 = vadd.f32 %v2903, %v2943
  %v2976 = vadd.f32 %v2904, %v2944
  %v2977 = vadd.f32 %v2905, %v2945
  %v2978 = vadd.f32 %v2906, %v2946
  %v2979 = vadd.f32 %v2907, %v2947
  %v2980 = vadd.f32 %v2908, %v2948
  %v2981 = vadd.f32 %v2909, %v2949
  %v2982 = vadd.f32 %v2910, %v2950
  %v2983 = vadd.f32 %v2911, %v2951
  %v2984 = vadd.f32 %v2912, %v2952
  %v2985 = vadd.f32 %v2913, %v2953
  %v2986 = vadd.f32 %v2914, %v2954
  %v2987 = vadd.f32 %v2915, %v2955
  %v2988 = vadd.f32 %v2916, %v2956
  %v2989 = vadd.f32 %v2917, %v2957
  %v2990 = vadd.f32 %v2918, %v2958
  %v2991 = vadd.f32 %v2919, %v2959
  %v2992 = vadd.f32 %v2920, %v2960
  %v2993 = vadd.f32 %v2921, %v2961
  %v2994 = vadd.f32 %v2922, %v2962
  %v2995 = vadd.f32 %v2923, %v2963
  %v2996 = vadd.f32 %v2924, %v2964
  %v2997 = vadd.f32 %v2925, %v2965
  %v2998 = vadd.f32 %v2926, %v2966
  %v2999 = vadd.f32 %v2927, %v2967
  %v3000 = vadd.f32 %v2928, %v2968
  %v3001 = vadd.f32 %v2929, %v2969
  %v3002 = vadd.f32 %v2930, %v2970
  %v3003 = vadd.f32 %v2931, %v2971
  %v3004 = vlaneseq
  %v3005 = vshrl.u32 %v3004, 7
  %v3006 = vsub.s32 2, %v3005
  %v3007 = vrot.slane %v1312, %v3006
  %v3008 = vlaneseq
  %v3009 = vshrl.u32 %v3008, 7
  %v3010 = vsub.s32 2, %v3009
  %v3011 = vrot.slane %v1310, %v3010
  %v3012 = vmul.f32 %v1504, %v3007
  %v3013 = vmul.f32 %v1505, %v3011
  %v3014 = vmul.f32 %v1506, %v3007
  %v3015 = vmul.f32 %v1507, %v3011
  %v3016 = vmul.f32 %v1508, %v3007
  %v3017 = vmul.f32 %v1509, %v3011
  %v3018 = vmul.f32 %v1510, %v3007
  %v3019 = vmul.f32 %v1511, %v3011
  %v3020 = vmul.f32 %v1512, %v3007
  %v3021 = vmul.f32 %v1513, %v3011
  %v3022 = vmul.f32 %v1514, %v3007
  %v3023 = vmul.f32 %v1515, %v3011
  %v3024 = vmul.f32 %v1516, %v3007
  %v3025 = vmul.f32 %v1517, %v3011
  %v3026 = vmul.f32 %v1518, %v3007
  %v3027 = vmul.f32 %v1519, %v3011
  %v3028 = vmul.f32 %v1520, %v3007
  %v3029 = vmul.f32 %v1521, %v3011
  %v3030 = vmul.f32 %v1522, %v3007
  %v3031 = vmul.f32 %v1523, %v3011
  %v3032 = vmul.f32 %v1524, %v3007
  %v3033 = vmul.f32 %v1525, %v3011
  %v3034 = vmul.f32 %v1526, %v3007
  %v3035 = vmul.f32 %v1527, %v3011
  %v3036 = vmul.f32 %v1528, %v3007
  %v3037 = vmul.f32 %v1529, %v3011
  %v3038 = vmul.f32 %v1530, %v3007
  %v3039 = vmul.f32 %v1531, %v3011
  %v3040 = vmul.f32 %v1532, %v3007
  %v3041 = vmul.f32 %v1533, %v3011
  %v3042 = vmul.f32 %v1534, %v3007
  %v3043 = vmul.f32 %v1535, %v3011
  %v3044 = vadd.f32 %v2972, %v3012
  %v3045 = vadd.f32 %v2973, %v3013
  %v3046 = vadd.f32 %v2974, %v3014
  %v3047 = vadd.f32 %v2975, %v3015
  %v3048 = vadd.f32 %v2976, %v3016
  %v3049 = vadd.f32 %v2977, %v3017
  %v3050 = vadd.f32 %v2978, %v3018
  %v3051 = vadd.f32 %v2979, %v3019
  %v3052 = vadd.f32 %v2980, %v3020
  %v3053 = vadd.f32 %v2981, %v3021
  %v3054 = vadd.f32 %v2982, %v3022
  %v3055 = vadd.f32 %v2983, %v3023
  %v3056 = vadd.f32 %v2984, %v3024
  %v3057 = vadd.f32 %v2985, %v3025
  %v3058 = vadd.f32 %v2986, %v3026
  %v3059 = vadd.f32 %v2987, %v3027
  %v3060 = vadd.f32 %v2988, %v3028
  %v3061 = vadd.f32 %v2989, %v3029
  %v3062 = vadd.f32 %v2990, %v3030
  %v3063 = vadd.f32 %v2991, %v3031
  %v3064 = vadd.f32 %v2992, %v3032
  %v3065 = vadd.f32 %v2993, %v3033
  %v3066 = vadd.f32 %v2994, %v3034
  %v3067 = vadd.f32 %v2995, %v3035
  %v3068 = vadd.f32 %v2996, %v3036
  %v3069 = vadd.f32 %v2997, %v3037
  %v3070 = vadd.f32 %v2998, %v3038
  %v3071 = vadd.f32 %v2999, %v3039
  %v3072 = vadd.f32 %v3000, %v3040
  %v3073 = vadd.f32 %v3001, %v3041
  %v3074 = vadd.f32 %v3002, %v3042
  %v3075 = vadd.f32 %v3003, %v3043
  %v3076 = vlaneseq
  %v3077 = vshrl.u32 %v3076, 7
  %v3078 = vsub.s32 2, %v3077
  %v3079 = vrot.slane %v1317, %v3078
  %v3080 = vlaneseq
  %v3081 = vshrl.u32 %v3080, 7
  %v3082 = vsub.s32 2, %v3081
  %v3083 = vrot.slane %v1283, %v3082
  %v3084 = vmul.f32 %v1553, %v3079
  %v3085 = vmul.f32 %v1554, %v3083
  %v3086 = vmul.f32 %v1555, %v3079
  %v3087 = vmul.f32 %v1556, %v3083
  %v3088 = vmul.f32 %v1557, %v3079
  %v3089 = vmul.f32 %v1558, %v3083
  %v3090 = vmul.f32 %v1559, %v3079
  %v3091 = vmul.f32 %v1560, %v3083
  %v3092 = vmul.f32 %v1561, %v3079
  %v3093 = vmul.f32 %v1562, %v3083
  %v3094 = vmul.f32 %v1563, %v3079
  %v3095 = vmul.f32 %v1564, %v3083
  %v3096 = vmul.f32 %v1565, %v3079
  %v3097 = vmul.f32 %v1566, %v3083
  %v3098 = vmul.f32 %v1567, %v3079
  %v3099 = vmul.f32 %v1568, %v3083
  %v3100 = vmul.f32 %v1569, %v3079
  %v3101 = vmul.f32 %v1570, %v3083
  %v3102 = vmul.f32 %v1571, %v3079
  %v3103 = vmul.f32 %v1572, %v3083
  %v3104 = vmul.f32 %v1573, %v3079
  %v3105 = vmul.f32 %v1574, %v3083
  %v3106 = vmul.f32 %v1575, %v3079
  %v3107 = vmul.f32 %v1576, %v3083
  %v3108 = vmul.f32 %v1577, %v3079
  %v3109 = vmul.f32 %v1578, %v3083
  %v3110 = vmul.f32 %v1579, %v3079
  %v3111 = vmul.f32 %v1580, %v3083
  %v3112 = vmul.f32 %v1581, %v3079
  %v3113 = vmul.f32 %v1582, %v3083
  %v3114 = vmul.f32 %v1583, %v3079
  %v3115 = vmul.f32 %v1584, %v3083
  %v3116 = vadd.f32 %v3044, %v3084
  %v3117 = vadd.f32 %v3045, %v3085
  %v3118 = vadd.f32 %v3046, %v3086
  %v3119 = vadd.f32 %v3047, %v3087
  %v3120 = vadd.f32 %v3048, %v3088
  %v3121 = vadd.f32 %v3049, %v3089
  %v3122 = vadd.f32 %v3050, %v3090
  %v3123 = vadd.f32 %v3051, %v3091
  %v3124 = vadd.f32 %v3052, %v3092
  %v3125 = vadd.f32 %v3053, %v3093
  %v3126 = vadd.f32 %v3054, %v3094
  %v3127 = vadd.f32 %v3055, %v3095
  %v3128 = vadd.f32 %v3056, %v3096
  %v3129 = vadd.f32 %v3057, %v3097
  %v3130 = vadd.f32 %v3058, %v3098
  %v3131 = vadd.f32 %v3059, %v3099
  %v3132 = vadd.f32 %v3060, %v3100
  %v3133 = vadd.f32 %v3061, %v3101
  %v3134 = vadd.f32 %v3062, %v3102
  %v3135 = vadd.f32 %v3063, %v3103
  %v3136 = vadd.f32 %v3064, %v3104
  %v3137 = vadd.f32 %v3065, %v3105
  %v3138 = vadd.f32 %v3066, %v3106
  %v3139 = vadd.f32 %v3067, %v3107
  %v3140 = vadd.f32 %v3068, %v3108
  %v3141 = vadd.f32 %v3069, %v3109
  %v3142 = vadd.f32 %v3070, %v3110
  %v3143 = vadd.f32 %v3071, %v3111
  %v3144 = vadd.f32 %v3072, %v3112
  %v3145 = vadd.f32 %v3073, %v3113
  %v3146 = vadd.f32 %v3074, %v3114
  %v3147 = vadd.f32 %v3075, %v3115
  %v3148 = vlaneseq
  %v3149 = vshrl.u32 %v3148, 7
  %v3150 = vsub.s32 2, %v3149
  %v3151 = vrot.slane %v1326, %v3150
  %v3152 = vlaneseq
  %v3153 = vshrl.u32 %v3152, 7
  %v3154 = vsub.s32 2, %v3153
  %v3155 = vrot.slane %v1324, %v3154
  %v3156 = vmul.f32 %v1602, %v3151
  %v3157 = vmul.f32 %v1603, %v3155
  %v3158 = vmul.f32 %v1604, %v3151
  %v3159 = vmul.f32 %v1605, %v3155
  %v3160 = vmul.f32 %v1606, %v3151
  %v3161 = vmul.f32 %v1607, %v3155
  %v3162 = vmul.f32 %v1608, %v3151
  %v3163 = vmul.f32 %v1609, %v3155
  %v3164 = vmul.f32 %v1610, %v3151
  %v3165 = vmul.f32 %v1611, %v3155
  %v3166 = vmul.f32 %v1612, %v3151
  %v3167 = vmul.f32 %v1613, %v3155
  %v3168 = vmul.f32 %v1614, %v3151
  %v3169 = vmul.f32 %v1615, %v3155
  %v3170 = vmul.f32 %v1616, %v3151
  %v3171 = vmul.f32 %v1617, %v3155
  %v3172 = vmul.f32 %v1618, %v3151
  %v3173 = vmul.f32 %v1619, %v3155
  %v3174 = vmul.f32 %v1620, %v3151
  %v3175 = vmul.f32 %v1621, %v3155
  %v3176 = vmul.f32 %v1622, %v3151
  %v3177 = vmul.f32 %v1623, %v3155
  %v3178 = vmul.f32 %v1624, %v3151
  %v3179 = vmul.f32 %v1625, %v3155
  %v3180 = vmul.f32 %v1626, %v3151
  %v3181 = vmul.f32 %v1627, %v3155
  %v3182 = vmul.f32 %v1628, %v3151
  %v3183 = vmul.f32 %v1629, %v3155
  %v3184 = vmul.f32 %v1630, %v3151
  %v3185 = vmul.f32 %v1631, %v3155
  %v3186 = vmul.f32 %v1632, %v3151
  %v3187 = vmul.f32 %v1633, %v3155
  %v3188 = vadd.f32 %v3116, %v3156
  %v3189 = vadd.f32 %v3117, %v3157
  %v3190 = vadd.f32 %v3118, %v3158
  %v3191 = vadd.f32 %v3119, %v3159
  %v3192 = vadd.f32 %v3120, %v3160
  %v3193 = vadd.f32 %v3121, %v3161
  %v3194 = vadd.f32 %v3122, %v3162
  %v3195 = vadd.f32 %v3123, %v3163
  %v3196 = vadd.f32 %v3124, %v3164
  %v3197 = vadd.f32 %v3125, %v3165
  %v3198 = vadd.f32 %v3126, %v3166
  %v3199 = vadd.f32 %v3127, %v3167
  %v3200 = vadd.f32 %v3128, %v3168
  %v3201 = vadd.f32 %v3129, %v3169
  %v3202 = vadd.f32 %v3130, %v3170
  %v3203 = vadd.f32 %v3131, %v3171
  %v3204 = vadd.f32 %v3132, %v3172
  %v3205 = vadd.f32 %v3133, %v3173
  %v3206 = vadd.f32 %v3134, %v3174
  %v3207 = vadd.f32 %v3135, %v3175
  %v3208 = vadd.f32 %v3136, %v3176
  %v3209 = vadd.f32 %v3137, %v3177
  %v3210 = vadd.f32 %v3138, %v3178
  %v3211 = vadd.f32 %v3139, %v3179
  %v3212 = vadd.f32 %v3140, %v3180
  %v3213 = vadd.f32 %v3141, %v3181
  %v3214 = vadd.f32 %v3142, %v3182
  %v3215 = vadd.f32 %v3143, %v3183
  %v3216 = vadd.f32 %v3144, %v3184
  %v3217 = vadd.f32 %v3145, %v3185
  %v3218 = vadd.f32 %v3146, %v3186
  %v3219 = vadd.f32 %v3147, %v3187
  %v3220 = vlaneseq
  %v3221 = vshrl.u32 %v3220, 7
  %v3222 = vsub.s32 2, %v3221
  %v3223 = vrot.slane %v1331, %v3222
  %v3224 = vlaneseq
  %v3225 = vshrl.u32 %v3224, 7
  %v3226 = vsub.s32 2, %v3225
  %v3227 = vrot.slane %v1284, %v3226
  %v3228 = vmul.f32 %v1651, %v3223
  %v3229 = vmul.f32 %v1652, %v3227
  %v3230 = vmul.f32 %v1653, %v3223
  %v3231 = vmul.f32 %v1654, %v3227
  %v3232 = vmul.f32 %v1655, %v3223
  %v3233 = vmul.f32 %v1656, %v3227
  %v3234 = vmul.f32 %v1657, %v3223
  %v3235 = vmul.f32 %v1658, %v3227
  %v3236 = vmul.f32 %v1659, %v3223
  %v3237 = vmul.f32 %v1660, %v3227
  %v3238 = vmul.f32 %v1661, %v3223
  %v3239 = vmul.f32 %v1662, %v3227
  %v3240 = vmul.f32 %v1663, %v3223
  %v3241 = vmul.f32 %v1664, %v3227
  %v3242 = vmul.f32 %v1665, %v3223
  %v3243 = vmul.f32 %v1666, %v3227
  %v3244 = vmul.f32 %v1667, %v3223
  %v3245 = vmul.f32 %v1668, %v3227
  %v3246 = vmul.f32 %v1669, %v3223
  %v3247 = vmul.f32 %v1670, %v3227
  %v3248 = vmul.f32 %v1671, %v3223
  %v3249 = vmul.f32 %v1672, %v3227
  %v3250 = vmul.f32 %v1673, %v3223
  %v3251 = vmul.f32 %v1674, %v3227
  %v3252 = vmul.f32 %v1675, %v3223
  %v3253 = vmul.f32 %v1676, %v3227
  %v3254 = vmul.f32 %v1677, %v3223
  %v3255 = vmul.f32 %v1678, %v3227
  %v3256 = vmul.f32 %v1679, %v3223
  %v3257 = vmul.f32 %v1680, %v3227
  %v3258 = vmul.f32 %v1681, %v3223
  %v3259 = vmul.f32 %v1682, %v3227
  %v3260 = vadd.f32 %v3188, %v3228
  %v3261 = vadd.f32 %v3189, %v3229
  %v3262 = vadd.f32 %v3190, %v3230
  %v3263 = vadd.f32 %v3191, %v3231
  %v3264 = vadd.f32 %v3192, %v3232
  %v3265 = vadd.f32 %v3193, %v3233
  %v3266 = vadd.f32 %v3194, %v3234
  %v3267 = vadd.f32 %v3195, %v3235
  %v3268 = vadd.f32 %v3196, %v3236
  %v3269 = vadd.f32 %v3197, %v3237
  %v3270 = vadd.f32 %v3198, %v3238
  %v3271 = vadd.f32 %v3199, %v3239
  %v3272 = vadd.f32 %v3200, %v3240
  %v3273 = vadd.f32 %v3201, %v3241
  %v3274 = vadd.f32 %v3202, %v3242
  %v3275 = vadd.f32 %v3203, %v3243
  %v3276 = vadd.f32 %v3204, %v3244
  %v3277 = vadd.f32 %v3205, %v3245
  %v3278 = vadd.f32 %v3206, %v3246
  %v3279 = vadd.f32 %v3207, %v3247
  %v3280 = vadd.f32 %v3208, %v3248
  %v3281 = vadd.f32 %v3209, %v3249
  %v3282 = vadd.f32 %v3210, %v3250
  %v3283 = vadd.f32 %v3211, %v3251
  %v3284 = vadd.f32 %v3212, %v3252
  %v3285 = vadd.f32 %v3213, %v3253
  %v3286 = vadd.f32 %v3214, %v3254
  %v3287 = vadd.f32 %v3215, %v3255
  %v3288 = vadd.f32 %v3216, %v3256
  %v3289 = vadd.f32 %v3217, %v3257
  %v3290 = vadd.f32 %v3218, %v3258
  %v3291 = vadd.f32 %v3219, %v3259
  %v3292 = vlaneseq
  %v3293 = vshrl.u32 %v3292, 7
  %v3294 = vsub.s32 2, %v3293
  %v3295 = vrot.slane %v1340, %v3294
  %v3296 = vlaneseq
  %v3297 = vshrl.u32 %v3296, 7
  %v3298 = vsub.s32 2, %v3297
  %v3299 = vrot.slane %v1338, %v3298
  %v3300 = vmul.f32 %v1700, %v3295
  %v3301 = vmul.f32 %v1701, %v3299
  %v3302 = vmul.f32 %v1702, %v3295
  %v3303 = vmul.f32 %v1703, %v3299
  %v3304 = vmul.f32 %v1704, %v3295
  %v3305 = vmul.f32 %v1705, %v3299
  %v3306 = vmul.f32 %v1706, %v3295
  %v3307 = vmul.f32 %v1707, %v3299
  %v3308 = vmul.f32 %v1708, %v3295
  %v3309 = vmul.f32 %v1709, %v3299
  %v3310 = vmul.f32 %v1710, %v3295
  %v3311 = vmul.f32 %v1711, %v3299
  %v3312 = vmul.f32 %v1712, %v3295
  %v3313 = vmul.f32 %v1713, %v3299
  %v3314 = vmul.f32 %v1714, %v3295
  %v3315 = vmul.f32 %v1715, %v3299
  %v3316 = vmul.f32 %v1716, %v3295
  %v3317 = vmul.f32 %v1717, %v3299
  %v3318 = vmul.f32 %v1718, %v3295
  %v3319 = vmul.f32 %v1719, %v3299
  %v3320 = vmul.f32 %v1720, %v3295
  %v3321 = vmul.f32 %v1721, %v3299
  %v3322 = vmul.f32 %v1722, %v3295
  %v3323 = vmul.f32 %v1723, %v3299
  %v3324 = vmul.f32 %v1724, %v3295
  %v3325 = vmul.f32 %v1725, %v3299
  %v3326 = vmul.f32 %v1726, %v3295
  %v3327 = vmul.f32 %v1727, %v3299
  %v3328 = vmul.f32 %v1728, %v3295
  %v3329 = vmul.f32 %v1729, %v3299
  %v3330 = vmul.f32 %v1730, %v3295
  %v3331 = vmul.f32 %v1731, %v3299
  %v3332 = vadd.f32 %v3260, %v3300
  %v3333 = vadd.f32 %v3261, %v3301
  %v3334 = vadd.f32 %v3262, %v3302
  %v3335 = vadd.f32 %v3263, %v3303
  %v3336 = vadd.f32 %v3264, %v3304
  %v3337 = vadd.f32 %v3265, %v3305
  %v3338 = vadd.f32 %v3266, %v3306
  %v3339 = vadd.f32 %v3267, %v3307
  %v3340 = vadd.f32 %v3268, %v3308
  %v3341 = vadd.f32 %v3269, %v3309
  %v3342 = vadd.f32 %v3270, %v3310
  %v3343 = vadd.f32 %v3271, %v3311
  %v3344 = vadd.f32 %v3272, %v3312
  %v3345 = vadd.f32 %v3273, %v3313
  %v3346 = vadd.f32 %v3274, %v3314
  %v3347 = vadd.f32 %v3275, %v3315
  %v3348 = vadd.f32 %v3276, %v3316
  %v3349 = vadd.f32 %v3277, %v3317
  %v3350 = vadd.f32 %v3278, %v3318
  %v3351 = vadd.f32 %v3279, %v3319
  %v3352 = vadd.f32 %v3280, %v3320
  %v3353 = vadd.f32 %v3281, %v3321
  %v3354 = vadd.f32 %v3282, %v3322
  %v3355 = vadd.f32 %v3283, %v3323
  %v3356 = vadd.f32 %v3284, %v3324
  %v3357 = vadd.f32 %v3285, %v3325
  %v3358 = vadd.f32 %v3286, %v3326
  %v3359 = vadd.f32 %v3287, %v3327
  %v3360 = vadd.f32 %v3288, %v3328
  %v3361 = vadd.f32 %v3289, %v3329
  %v3362 = vadd.f32 %v3290, %v3330
  %v3363 = vadd.f32 %v3291, %v3331
  %v3364 = vlaneseq
  %v3365 = vshrl.u32 %v3364, 7
  %v3366 = vsub.s32 3, %v3365
  %v3367 = vrot.slane %v1289, %v3366
  %v3368 = vlaneseq
  %v3369 = vshrl.u32 %v3368, 7
  %v3370 = vsub.s32 3, %v3369
  %v3371 = vrot.slane %v1281, %v3370
  %v3372 = vmul.f32 %v1357, %v3367
  %v3373 = vmul.f32 %v1358, %v3371
  %v3374 = vmul.f32 %v1359, %v3367
  %v3375 = vmul.f32 %v1360, %v3371
  %v3376 = vmul.f32 %v1361, %v3367
  %v3377 = vmul.f32 %v1362, %v3371
  %v3378 = vmul.f32 %v1363, %v3367
  %v3379 = vmul.f32 %v1364, %v3371
  %v3380 = vmul.f32 %v1365, %v3367
  %v3381 = vmul.f32 %v1366, %v3371
  %v3382 = vmul.f32 %v1367, %v3367
  %v3383 = vmul.f32 %v1368, %v3371
  %v3384 = vmul.f32 %v1369, %v3367
  %v3385 = vmul.f32 %v1370, %v3371
  %v3386 = vmul.f32 %v1371, %v3367
  %v3387 = vmul.f32 %v1372, %v3371
  %v3388 = vmul.f32 %v1373, %v3367
  %v3389 = vmul.f32 %v1374, %v3371
  %v3390 = vmul.f32 %v1375, %v3367
  %v3391 = vmul.f32 %v1376, %v3371
  %v3392 = vmul.f32 %v1377, %v3367
  %v3393 = vmul.f32 %v1378, %v3371
  %v3394 = vmul.f32 %v1379, %v3367
  %v3395 = vmul.f32 %v1380, %v3371
  %v3396 = vmul.f32 %v1381, %v3367
  %v3397 = vmul.f32 %v1382, %v3371
  %v3398 = vmul.f32 %v1383, %v3367
  %v3399 = vmul.f32 %v1384, %v3371
  %v3400 = vmul.f32 %v1385, %v3367
  %v3401 = vmul.f32 %v1386, %v3371
  %v3402 = vmul.f32 %v1387, %v3367
  %v3403 = vmul.f32 %v1388, %v3371
  %v3404 = vlaneseq
  %v3405 = vshrl.u32 %v3404, 7
  %v3406 = vsub.s32 3, %v3405
  %v3407 = vrot.slane %v1298, %v3406
  %v3408 = vlaneseq
  %v3409 = vshrl.u32 %v3408, 7
  %v3410 = vsub.s32 3, %v3409
  %v3411 = vrot.slane %v1296, %v3410
  %v3412 = vmul.f32 %v1406, %v3407
  %v3413 = vmul.f32 %v1407, %v3411
  %v3414 = vmul.f32 %v1408, %v3407
  %v3415 = vmul.f32 %v1409, %v3411
  %v3416 = vmul.f32 %v1410, %v3407
  %v3417 = vmul.f32 %v1411, %v3411
  %v3418 = vmul.f32 %v1412, %v3407
  %v3419 = vmul.f32 %v1413, %v3411
  %v3420 = vmul.f32 %v1414, %v3407
  %v3421 = vmul.f32 %v1415, %v3411
  %v3422 = vmul.f32 %v1416, %v3407
  %v3423 = vmul.f32 %v1417, %v3411
  %v3424 = vmul.f32 %v1418, %v3407
  %v3425 = vmul.f32 %v1419, %v3411
  %v3426 = vmul.f32 %v1420, %v3407
  %v3427 = vmul.f32 %v1421, %v3411
  %v3428 = vmul.f32 %v1422, %v3407
  %v3429 = vmul.f32 %v1423, %v3411
  %v3430 = vmul.f32 %v1424, %v3407
  %v3431 = vmul.f32 %v1425, %v3411
  %v3432 = vmul.f32 %v1426, %v3407
  %v3433 = vmul.f32 %v1427, %v3411
  %v3434 = vmul.f32 %v1428, %v3407
  %v3435 = vmul.f32 %v1429, %v3411
  %v3436 = vmul.f32 %v1430, %v3407
  %v3437 = vmul.f32 %v1431, %v3411
  %v3438 = vmul.f32 %v1432, %v3407
  %v3439 = vmul.f32 %v1433, %v3411
  %v3440 = vmul.f32 %v1434, %v3407
  %v3441 = vmul.f32 %v1435, %v3411
  %v3442 = vmul.f32 %v1436, %v3407
  %v3443 = vmul.f32 %v1437, %v3411
  %v3444 = vadd.f32 %v3372, %v3412
  %v3445 = vadd.f32 %v3373, %v3413
  %v3446 = vadd.f32 %v3374, %v3414
  %v3447 = vadd.f32 %v3375, %v3415
  %v3448 = vadd.f32 %v3376, %v3416
  %v3449 = vadd.f32 %v3377, %v3417
  %v3450 = vadd.f32 %v3378, %v3418
  %v3451 = vadd.f32 %v3379, %v3419
  %v3452 = vadd.f32 %v3380, %v3420
  %v3453 = vadd.f32 %v3381, %v3421
  %v3454 = vadd.f32 %v3382, %v3422
  %v3455 = vadd.f32 %v3383, %v3423
  %v3456 = vadd.f32 %v3384, %v3424
  %v3457 = vadd.f32 %v3385, %v3425
  %v3458 = vadd.f32 %v3386, %v3426
  %v3459 = vadd.f32 %v3387, %v3427
  %v3460 = vadd.f32 %v3388, %v3428
  %v3461 = vadd.f32 %v3389, %v3429
  %v3462 = vadd.f32 %v3390, %v3430
  %v3463 = vadd.f32 %v3391, %v3431
  %v3464 = vadd.f32 %v3392, %v3432
  %v3465 = vadd.f32 %v3393, %v3433
  %v3466 = vadd.f32 %v3394, %v3434
  %v3467 = vadd.f32 %v3395, %v3435
  %v3468 = vadd.f32 %v3396, %v3436
  %v3469 = vadd.f32 %v3397, %v3437
  %v3470 = vadd.f32 %v3398, %v3438
  %v3471 = vadd.f32 %v3399, %v3439
  %v3472 = vadd.f32 %v3400, %v3440
  %v3473 = vadd.f32 %v3401, %v3441
  %v3474 = vadd.f32 %v3402, %v3442
  %v3475 = vadd.f32 %v3403, %v3443
  %v3476 = vlaneseq
  %v3477 = vshrl.u32 %v3476, 7
  %v3478 = vsub.s32 3, %v3477
  %v3479 = vrot.slane %v1303, %v3478
  %v3480 = vlaneseq
  %v3481 = vshrl.u32 %v3480, 7
  %v3482 = vsub.s32 3, %v3481
  %v3483 = vrot.slane %v1282, %v3482
  %v3484 = vmul.f32 %v1455, %v3479
  %v3485 = vmul.f32 %v1456, %v3483
  %v3486 = vmul.f32 %v1457, %v3479
  %v3487 = vmul.f32 %v1458, %v3483
  %v3488 = vmul.f32 %v1459, %v3479
  %v3489 = vmul.f32 %v1460, %v3483
  %v3490 = vmul.f32 %v1461, %v3479
  %v3491 = vmul.f32 %v1462, %v3483
  %v3492 = vmul.f32 %v1463, %v3479
  %v3493 = vmul.f32 %v1464, %v3483
  %v3494 = vmul.f32 %v1465, %v3479
  %v3495 = vmul.f32 %v1466, %v3483
  %v3496 = vmul.f32 %v1467, %v3479
  %v3497 = vmul.f32 %v1468, %v3483
  %v3498 = vmul.f32 %v1469, %v3479
  %v3499 = vmul.f32 %v1470, %v3483
  %v3500 = vmul.f32 %v1471, %v3479
  %v3501 = vmul.f32 %v1472, %v3483
  %v3502 = vmul.f32 %v1473, %v3479
  %v3503 = vmul.f32 %v1474, %v3483
  %v3504 = vmul.f32 %v1475, %v3479
  %v3505 = vmul.f32 %v1476, %v3483
  %v3506 = vmul.f32 %v1477, %v3479
  %v3507 = vmul.f32 %v1478, %v3483
  %v3508 = vmul.f32 %v1479, %v3479
  %v3509 = vmul.f32 %v1480, %v3483
  %v3510 = vmul.f32 %v1481, %v3479
  %v3511 = vmul.f32 %v1482, %v3483
  %v3512 = vmul.f32 %v1483, %v3479
  %v3513 = vmul.f32 %v1484, %v3483
  %v3514 = vmul.f32 %v1485, %v3479
  %v3515 = vmul.f32 %v1486, %v3483
  %v3516 = vadd.f32 %v3444, %v3484
  %v3517 = vadd.f32 %v3445, %v3485
  %v3518 = vadd.f32 %v3446, %v3486
  %v3519 = vadd.f32 %v3447, %v3487
  %v3520 = vadd.f32 %v3448, %v3488
  %v3521 = vadd.f32 %v3449, %v3489
  %v3522 = vadd.f32 %v3450, %v3490
  %v3523 = vadd.f32 %v3451, %v3491
  %v3524 = vadd.f32 %v3452, %v3492
  %v3525 = vadd.f32 %v3453, %v3493
  %v3526 = vadd.f32 %v3454, %v3494
  %v3527 = vadd.f32 %v3455, %v3495
  %v3528 = vadd.f32 %v3456, %v3496
  %v3529 = vadd.f32 %v3457, %v3497
  %v3530 = vadd.f32 %v3458, %v3498
  %v3531 = vadd.f32 %v3459, %v3499
  %v3532 = vadd.f32 %v3460, %v3500
  %v3533 = vadd.f32 %v3461, %v3501
  %v3534 = vadd.f32 %v3462, %v3502
  %v3535 = vadd.f32 %v3463, %v3503
  %v3536 = vadd.f32 %v3464, %v3504
  %v3537 = vadd.f32 %v3465, %v3505
  %v3538 = vadd.f32 %v3466, %v3506
  %v3539 = vadd.f32 %v3467, %v3507
  %v3540 = vadd.f32 %v3468, %v3508
  %v3541 = vadd.f32 %v3469, %v3509
  %v3542 = vadd.f32 %v3470, %v3510
  %v3543 = vadd.f32 %v3471, %v3511
  %v3544 = vadd.f32 %v3472, %v3512
  %v3545 = vadd.f32 %v3473, %v3513
  %v3546 = vadd.f32 %v3474, %v3514
  %v3547 = vadd.f32 %v3475, %v3515
  %v3548 = vlaneseq
  %v3549 = vshrl.u32 %v3548, 7
  %v3550 = vsub.s32 3, %v3549
  %v3551 = vrot.slane %v1312, %v3550
  %v3552 = vlaneseq
  %v3553 = vshrl.u32 %v3552, 7
  %v3554 = vsub.s32 3, %v3553
  %v3555 = vrot.slane %v1310, %v3554
  %v3556 = vmul.f32 %v1504, %v3551
  %v3557 = vmul.f32 %v1505, %v3555
  %v3558 = vmul.f32 %v1506, %v3551
  %v3559 = vmul.f32 %v1507, %v3555
  %v3560 = vmul.f32 %v1508, %v3551
  %v3561 = vmul.f32 %v1509, %v3555
  %v3562 = vmul.f32 %v1510, %v3551
  %v3563 = vmul.f32 %v1511, %v3555
  %v3564 = vmul.f32 %v1512, %v3551
  %v3565 = vmul.f32 %v1513, %v3555
  %v3566 = vmul.f32 %v1514, %v3551
  %v3567 = vmul.f32 %v1515, %v3555
  %v3568 = vmul.f32 %v1516, %v3551
  %v3569 = vmul.f32 %v1517, %v3555
  %v3570 = vmul.f32 %v1518, %v3551
  %v3571 = vmul.f32 %v1519, %v3555
  %v3572 = vmul.f32 %v1520, %v3551
  %v3573 = vmul.f32 %v1521, %v3555
  %v3574 = vmul.f32 %v1522, %v3551
  %v3575 = vmul.f32 %v1523, %v3555
  %v3576 = vmul.f32 %v1524, %v3551
  %v3577 = vmul.f32 %v1525, %v3555
  %v3578 = vmul.f32 %v1526, %v3551
  %v3579 = vmul.f32 %v1527, %v3555
  %v3580 = vmul.f32 %v1528, %v3551
  %v3581 = vmul.f32 %v1529, %v3555
  %v3582 = vmul.f32 %v1530, %v3551
  %v3583 = vmul.f32 %v1531, %v3555
  %v3584 = vmul.f32 %v1532, %v3551
  %v3585 = vmul.f32 %v1533, %v3555
  %v3586 = vmul.f32 %v1534, %v3551
  %v3587 = vmul.f32 %v1535, %v3555
  %v3588 = vadd.f32 %v3516, %v3556
  %v3589 = vadd.f32 %v3517, %v3557
  %v3590 = vadd.f32 %v3518, %v3558
  %v3591 = vadd.f32 %v3519, %v3559
  %v3592 = vadd.f32 %v3520, %v3560
  %v3593 = vadd.f32 %v3521, %v3561
  %v3594 = vadd.f32 %v3522, %v3562
  %v3595 = vadd.f32 %v3523, %v3563
  %v3596 = vadd.f32 %v3524, %v3564
  %v3597 = vadd.f32 %v3525, %v3565
  %v3598 = vadd.f32 %v3526, %v3566
  %v3599 = vadd.f32 %v3527, %v3567
  %v3600 = vadd.f32 %v3528, %v3568
  %v3601 = vadd.f32 %v3529, %v3569
  %v3602 = vadd.f32 %v3530, %v3570
  %v3603 = vadd.f32 %v3531, %v3571
  %v3604 = vadd.f32 %v3532, %v3572
  %v3605 = vadd.f32 %v3533, %v3573
  %v3606 = vadd.f32 %v3534, %v3574
  %v3607 = vadd.f32 %v3535, %v3575
  %v3608 = vadd.f32 %v3536, %v3576
  %v3609 = vadd.f32 %v3537, %v3577
  %v3610 = vadd.f32 %v3538, %v3578
  %v3611 = vadd.f32 %v3539, %v3579
  %v3612 = vadd.f32 %v3540, %v3580
  %v3613 = vadd.f32 %v3541, %v3581
  %v3614 = vadd.f32 %v3542, %v3582
  %v3615 = vadd.f32 %v3543, %v3583
  %v3616 = vadd.f32 %v3544, %v3584
  %v3617 = vadd.f32 %v3545, %v3585
  %v3618 = vadd.f32 %v3546, %v3586
  %v3619 = vadd.f32 %v3547, %v3587
  %v3620 = vlaneseq
  %v3621 = vshrl.u32 %v3620, 7
  %v3622 = vsub.s32 3, %v3621
  %v3623 = vrot.slane %v1317, %v3622
  %v3624 = vlaneseq
  %v3625 = vshrl.u32 %v3624, 7
  %v3626 = vsub.s32 3, %v3625
  %v3627 = vrot.slane %v1283, %v3626
  %v3628 = vmul.f32 %v1553, %v3623
  %v3629 = vmul.f32 %v1554, %v3627
  %v3630 = vmul.f32 %v1555, %v3623
  %v3631 = vmul.f32 %v1556, %v3627
  %v3632 = vmul.f32 %v1557, %v3623
  %v3633 = vmul.f32 %v1558, %v3627
  %v3634 = vmul.f32 %v1559, %v3623
  %v3635 = vmul.f32 %v1560, %v3627
  %v3636 = vmul.f32 %v1561, %v3623
  %v3637 = vmul.f32 %v1562, %v3627
  %v3638 = vmul.f32 %v1563, %v3623
  %v3639 = vmul.f32 %v1564, %v3627
  %v3640 = vmul.f32 %v1565, %v3623
  %v3641 = vmul.f32 %v1566, %v3627
  %v3642 = vmul.f32 %v1567, %v3623
  %v3643 = vmul.f32 %v1568, %v3627
  %v3644 = vmul.f32 %v1569, %v3623
  %v3645 = vmul.f32 %v1570, %v3627
  %v3646 = vmul.f32 %v1571, %v3623
  %v3647 = vmul.f32 %v1572, %v3627
  %v3648 = vmul.f32 %v1573, %v3623
  %v3649 = vmul.f32 %v1574, %v3627
  %v3650 = vmul.f32 %v1575, %v3623
  %v3651 = vmul.f32 %v1576, %v3627
  %v3652 = vmul.f32 %v1577, %v3623
  %v3653 = vmul.f32 %v1578, %v3627
  %v3654 = vmul.f32 %v1579, %v3623
  %v3655 = vmul.f32 %v1580, %v3627
  %v3656 = vmul.f32 %v1581, %v3623
  %v3657 = vmul.f32 %v1582, %v3627
  %v3658 = vmul.f32 %v1583, %v3623
  %v3659 = vmul.f32 %v1584, %v3627
  %v3660 = vadd.f32 %v3588, %v3628
  %v3661 = vadd.f32 %v3589, %v3629
  %v3662 = vadd.f32 %v3590, %v3630
  %v3663 = vadd.f32 %v3591, %v3631
  %v3664 = vadd.f32 %v3592, %v3632
  %v3665 = vadd.f32 %v3593, %v3633
  %v3666 = vadd.f32 %v3594, %v3634
  %v3667 = vadd.f32 %v3595, %v3635
  %v3668 = vadd.f32 %v3596, %v3636
  %v3669 = vadd.f32 %v3597, %v3637
  %v3670 = vadd.f32 %v3598, %v3638
  %v3671 = vadd.f32 %v3599, %v3639
  %v3672 = vadd.f32 %v3600, %v3640
  %v3673 = vadd.f32 %v3601, %v3641
  %v3674 = vadd.f32 %v3602, %v3642
  %v3675 = vadd.f32 %v3603, %v3643
  %v3676 = vadd.f32 %v3604, %v3644
  %v3677 = vadd.f32 %v3605, %v3645
  %v3678 = vadd.f32 %v3606, %v3646
  %v3679 = vadd.f32 %v3607, %v3647
  %v3680 = vadd.f32 %v3608, %v3648
  %v3681 = vadd.f32 %v3609, %v3649
  %v3682 = vadd.f32 %v3610, %v3650
  %v3683 = vadd.f32 %v3611, %v3651
  %v3684 = vadd.f32 %v3612, %v3652
  %v3685 = vadd.f32 %v3613, %v3653
  %v3686 = vadd.f32 %v3614, %v3654
  %v3687 = vadd.f32 %v3615, %v3655
  %v3688 = vadd.f32 %v3616, %v3656
  %v3689 = vadd.f32 %v3617, %v3657
  %v3690 = vadd.f32 %v3618, %v3658
  %v3691 = vadd.f32 %v3619, %v3659
  %v3692 = vlaneseq
  %v3693 = vshrl.u32 %v3692, 7
  %v3694 = vsub.s32 3, %v3693
  %v3695 = vrot.slane %v1326, %v3694
  %v3696 = vlaneseq
  %v3697 = vshrl.u32 %v3696, 7
  %v3698 = vsub.s32 3, %v3697
  %v3699 = vrot.slane %v1324, %v3698
  %v3700 = vmul.f32 %v1602, %v3695
  %v3701 = vmul.f32 %v1603, %v3699
  %v3702 = vmul.f32 %v1604, %v3695
  %v3703 = vmul.f32 %v1605, %v3699
  %v3704 = vmul.f32 %v1606, %v3695
  %v3705 = vmul.f32 %v1607, %v3699
  %v3706 = vmul.f32 %v1608, %v3695
  %v3707 = vmul.f32 %v1609, %v3699
  %v3708 = vmul.f32 %v1610, %v3695
  %v3709 = vmul.f32 %v1611, %v3699
  %v3710 = vmul.f32 %v1612, %v3695
  %v3711 = vmul.f32 %v1613, %v3699
  %v3712 = vmul.f32 %v1614, %v3695
  %v3713 = vmul.f32 %v1615, %v3699
  %v3714 = vmul.f32 %v1616, %v3695
  %v3715 = vmul.f32 %v1617, %v3699
  %v3716 = vmul.f32 %v1618, %v3695
  %v3717 = vmul.f32 %v1619, %v3699
  %v3718 = vmul.f32 %v1620, %v3695
  %v3719 = vmul.f32 %v1621, %v3699
  %v3720 = vmul.f32 %v1622, %v3695
  %v3721 = vmul.f32 %v1623, %v3699
  %v3722 = vmul.f32 %v1624, %v3695
  %v3723 = vmul.f32 %v1625, %v3699
  %v3724 = vmul.f32 %v1626, %v3695
  %v3725 = vmul.f32 %v1627, %v3699
  %v3726 = vmul.f32 %v1628, %v3695
  %v3727 = vmul.f32 %v1629, %v3699
  %v3728 = vmul.f32 %v1630, %v3695
  %v3729 = vmul.f32 %v1631, %v3699
  %v3730 = vmul.f32 %v1632, %v3695
  %v3731 = vmul.f32 %v1633, %v3699
  %v3732 = vadd.f32 %v3660, %v3700
  %v3733 = vadd.f32 %v3661, %v3701
  %v3734 = vadd.f32 %v3662, %v3702
  %v3735 = vadd.f32 %v3663, %v3703
  %v3736 = vadd.f32 %v3664, %v3704
  %v3737 = vadd.f32 %v3665, %v3705
  %v3738 = vadd.f32 %v3666, %v3706
  %v3739 = vadd.f32 %v3667, %v3707
  %v3740 = vadd.f32 %v3668, %v3708
  %v3741 = vadd.f32 %v3669, %v3709
  %v3742 = vadd.f32 %v3670, %v3710
  %v3743 = vadd.f32 %v3671, %v3711
  %v3744 = vadd.f32 %v3672, %v3712
  %v3745 = vadd.f32 %v3673, %v3713
  %v3746 = vadd.f32 %v3674, %v3714
  %v3747 = vadd.f32 %v3675, %v3715
  %v3748 = vadd.f32 %v3676, %v3716
  %v3749 = vadd.f32 %v3677, %v3717
  %v3750 = vadd.f32 %v3678, %v3718
  %v3751 = vadd.f32 %v3679, %v3719
  %v3752 = vadd.f32 %v3680, %v3720
  %v3753 = vadd.f32 %v3681, %v3721
  %v3754 = vadd.f32 %v3682, %v3722
  %v3755 = vadd.f32 %v3683, %v3723
  %v3756 = vadd.f32 %v3684, %v3724
  %v3757 = vadd.f32 %v3685, %v3725
  %v3758 = vadd.f32 %v3686, %v3726
  %v3759 = vadd.f32 %v3687, %v3727
  %v3760 = vadd.f32 %v3688, %v3728
  %v3761 = vadd.f32 %v3689, %v3729
  %v3762 = vadd.f32 %v3690, %v3730
  %v3763 = vadd.f32 %v3691, %v3731
  %v3764 = vlaneseq
  %v3765 = vshrl.u32 %v3764, 7
  %v3766 = vsub.s32 3, %v3765
  %v3767 = vrot.slane %v1331, %v3766
  %v3768 = vlaneseq
  %v3769 = vshrl.u32 %v3768, 7
  %v3770 = vsub.s32 3, %v3769
  %v3771 = vrot.slane %v1284, %v3770
  %v3772 = vmul.f32 %v1651, %v3767
  %v3773 = vmul.f32 %v1652, %v3771
  %v3774 = vmul.f32 %v1653, %v3767
  %v3775 = vmul.f32 %v1654, %v3771
  %v3776 = vmul.f32 %v1655, %v3767
  %v3777 = vmul.f32 %v1656, %v3771
  %v3778 = vmul.f32 %v1657, %v3767
  %v3779 = vmul.f32 %v1658, %v3771
  %v3780 = vmul.f32 %v1659, %v3767
  %v3781 = vmul.f32 %v1660, %v3771
  %v3782 = vmul.f32 %v1661, %v3767
  %v3783 = vmul.f32 %v1662, %v3771
  %v3784 = vmul.f32 %v1663, %v3767
  %v3785 = vmul.f32 %v1664, %v3771
  %v3786 = vmul.f32 %v1665, %v3767
  %v3787 = vmul.f32 %v1666, %v3771
  %v3788 = vmul.f32 %v1667, %v3767
  %v3789 = vmul.f32 %v1668, %v3771
  %v3790 = vmul.f32 %v1669, %v3767
  %v3791 = vmul.f32 %v1670, %v3771
  %v3792 = vmul.f32 %v1671, %v3767
  %v3793 = vmul.f32 %v1672, %v3771
  %v3794 = vmul.f32 %v1673, %v3767
  %v3795 = vmul.f32 %v1674, %v3771
  %v3796 = vmul.f32 %v1675, %v3767
  %v3797 = vmul.f32 %v1676, %v3771
  %v3798 = vmul.f32 %v1677, %v3767
  %v3799 = vmul.f32 %v1678, %v3771
  %v3800 = vmul.f32 %v1679, %v3767
  %v3801 = vmul.f32 %v1680, %v3771
  %v3802 = vmul.f32 %v1681, %v3767
  %v3803 = vmul.f32 %v1682, %v3771
  %v3804 = vadd.f32 %v3732, %v3772
  %v3805 = vadd.f32 %v3733, %v3773
  %v3806 = vadd.f32 %v3734, %v3774
  %v3807 = vadd.f32 %v3735, %v3775
  %v3808 = vadd.f32 %v3736, %v3776
  %v3809 = vadd.f32 %v3737, %v3777
  %v3810 = vadd.f32 %v3738, %v3778
  %v3811 = vadd.f32 %v3739, %v3779
  %v3812 = vadd.f32 %v3740, %v3780
  %v3813 = vadd.f32 %v3741, %v3781
  %v3814 = vadd.f32 %v3742, %v3782
  %v3815 = vadd.f32 %v3743, %v3783
  %v3816 = vadd.f32 %v3744, %v3784
  %v3817 = vadd.f32 %v3745, %v3785
  %v3818 = vadd.f32 %v3746, %v3786
  %v3819 = vadd.f32 %v3747, %v3787
  %v3820 = vadd.f32 %v3748, %v3788
  %v3821 = vadd.f32 %v3749, %v3789
  %v3822 = vadd.f32 %v3750, %v3790
  %v3823 = vadd.f32 %v3751, %v3791
  %v3824 = vadd.f32 %v3752, %v3792
  %v3825 = vadd.f32 %v3753, %v3793
  %v3826 = vadd.f32 %v3754, %v3794
  %v3827 = vadd.f32 %v3755, %v3795
  %v3828 = vadd.f32 %v3756, %v3796
  %v3829 = vadd.f32 %v3757, %v3797
  %v3830 = vadd.f32 %v3758, %v3798
  %v3831 = vadd.f32 %v3759, %v3799
  %v3832 = vadd.f32 %v3760, %v3800
  %v3833 = vadd.f32 %v3761, %v3801
  %v3834 = vadd.f32 %v3762, %v3802
  %v3835 = vadd.f32 %v3763, %v3803
  %v3836 = vlaneseq
  %v3837 = vshrl.u32 %v3836, 7
  %v3838 = vsub.s32 3, %v3837
  %v3839 = vrot.slane %v1340, %v3838
  %v3840 = vlaneseq
  %v3841 = vshrl.u32 %v3840, 7
  %v3842 = vsub.s32 3, %v3841
  %v3843 = vrot.slane %v1338, %v3842
  %v3844 = vmul.f32 %v1700, %v3839
  %v3845 = vmul.f32 %v1701, %v3843
  %v3846 = vmul.f32 %v1702, %v3839
  %v3847 = vmul.f32 %v1703, %v3843
  %v3848 = vmul.f32 %v1704, %v3839
  %v3849 = vmul.f32 %v1705, %v3843
  %v3850 = vmul.f32 %v1706, %v3839
  %v3851 = vmul.f32 %v1707, %v3843
  %v3852 = vmul.f32 %v1708, %v3839
  %v3853 = vmul.f32 %v1709, %v3843
  %v3854 = vmul.f32 %v1710, %v3839
  %v3855 = vmul.f32 %v1711, %v3843
  %v3856 = vmul.f32 %v1712, %v3839
  %v3857 = vmul.f32 %v1713, %v3843
  %v3858 = vmul.f32 %v1714, %v3839
  %v3859 = vmul.f32 %v1715, %v3843
  %v3860 = vmul.f32 %v1716, %v3839
  %v3861 = vmul.f32 %v1717, %v3843
  %v3862 = vmul.f32 %v1718, %v3839
  %v3863 = vmul.f32 %v1719, %v3843
  %v3864 = vmul.f32 %v1720, %v3839
  %v3865 = vmul.f32 %v1721, %v3843
  %v3866 = vmul.f32 %v1722, %v3839
  %v3867 = vmul.f32 %v1723, %v3843
  %v3868 = vmul.f32 %v1724, %v3839
  %v3869 = vmul.f32 %v1725, %v3843
  %v3870 = vmul.f32 %v1726, %v3839
  %v3871 = vmul.f32 %v1727, %v3843
  %v3872 = vmul.f32 %v1728, %v3839
  %v3873 = vmul.f32 %v1729, %v3843
  %v3874 = vmul.f32 %v1730, %v3839
  %v3875 = vmul.f32 %v1731, %v3843
  %v3876 = vadd.f32 %v3804, %v3844
  %v3877 = vadd.f32 %v3805, %v3845
  %v3878 = vadd.f32 %v3806, %v3846
  %v3879 = vadd.f32 %v3807, %v3847
  %v3880 = vadd.f32 %v3808, %v3848
  %v3881 = vadd.f32 %v3809, %v3849
  %v3882 = vadd.f32 %v3810, %v3850
  %v3883 = vadd.f32 %v3811, %v3851
  %v3884 = vadd.f32 %v3812, %v3852
  %v3885 = vadd.f32 %v3813, %v3853
  %v3886 = vadd.f32 %v3814, %v3854
  %v3887 = vadd.f32 %v3815, %v3855
  %v3888 = vadd.f32 %v3816, %v3856
  %v3889 = vadd.f32 %v3817, %v3857
  %v3890 = vadd.f32 %v3818, %v3858
  %v3891 = vadd.f32 %v3819, %v3859
  %v3892 = vadd.f32 %v3820, %v3860
  %v3893 = vadd.f32 %v3821, %v3861
  %v3894 = vadd.f32 %v3822, %v3862
  %v3895 = vadd.f32 %v3823, %v3863
  %v3896 = vadd.f32 %v3824, %v3864
  %v3897 = vadd.f32 %v3825, %v3865
  %v3898 = vadd.f32 %v3826, %v3866
  %v3899 = vadd.f32 %v3827, %v3867
  %v3900 = vadd.f32 %v3828, %v3868
  %v3901 = vadd.f32 %v3829, %v3869
  %v3902 = vadd.f32 %v3830, %v3870
  %v3903 = vadd.f32 %v3831, %v3871
  %v3904 = vadd.f32 %v3832, %v3872
  %v3905 = vadd.f32 %v3833, %v3873
  %v3906 = vadd.f32 %v3834, %v3874
  %v3907 = vadd.f32 %v3835, %v3875
  %v3908 = vsel %vm594, 1.0, 0.0
  %v3909 = vadd.f32 %v3908, 1.0
  %3910 = vadd.xlane.f32.xlu0 %v3909
  %v3911 = vpop.xlane.xlu0 %3910
  %v3912 = vrcp.pop %v3911
  %v3913 = vmul.f32 1.0, %v3912
  %v3914 = vmul.f32 %v3913, %v2244
  %v3915 = vmul.f32 %v3913, %v2245
  %v3916 = vmul.f32 %v3913, %v2246
  %v3917 = vmul.f32 %v3913, %v2247
  %v3918 = vmul.f32 %v3913, %v2248
  %v3919 = vmul.f32 %v3913, %v2249
  %v3920 = vmul.f32 %v3913, %v2250
  %v3921 = vmul.f32 %v3913, %v2251
  %v3922 = vmul.f32 %v3913, %v2252
  %v3923 = vmul.f32 %v3913, %v2253
  %v3924 = vmul.f32 %v3913, %v2254
  %v3925 = vmul.f32 %v3913, %v2255
  %v3926 = vmul.f32 %v3913, %v2256
  %v3927 = vmul.f32 %v3913, %v2257
  %v3928 = vmul.f32 %v3913, %v2258
  %v3929 = vmul.f32 %v3913, %v2259
  %v3930 = vmul.f32 %v3913, %v2260
  %v3931 = vmul.f32 %v3913, %v2261
  %v3932 = vmul.f32 %v3913, %v2262
  %v3933 = vmul.f32 %v3913, %v2263
  %v3934 = vmul.f32 %v3913, %v2264
  %v3935 = vmul.f32 %v3913, %v2265
  %v3936 = vmul.f32 %v3913, %v2266
  %v3937 = vmul.f32 %v3913, %v2267
  %v3938 = vmul.f32 %v3913, %v2268
  %v3939 = vmul.f32 %v3913, %v2269
  %v3940 = vmul.f32 %v3913, %v2270
  %v3941 = vmul.f32 %v3913, %v2271
  %v3942 = vmul.f32 %v3913, %v2272
  %v3943 = vmul.f32 %v3913, %v2273
  %v3944 = vmul.f32 %v3913, %v2274
  %v3945 = vmul.f32 %v3913, %v2275
  %v3946 = vsel %vm594, %v3915, 0.0
  %v3947 = vadd.f32 %v3914, %v3946
  %3948 = vadd.xlane.f32.xlu0 %v3947
  %v3949 = vpop.xlane.xlu0 %3948
  %v3950 = vsel %vm594, %v3917, 0.0
  %v3951 = vadd.f32 %v3916, %v3950
  %3952 = vadd.xlane.f32.xlu0 %v3951
  %v3953 = vpop.xlane.xlu0 %3952
  %v3954 = vsel %vm594, %v3919, 0.0
  %v3955 = vadd.f32 %v3918, %v3954
  %3956 = vadd.xlane.f32.xlu0 %v3955
  %v3957 = vpop.xlane.xlu0 %3956
  %v3958 = vsel %vm594, %v3921, 0.0
  %v3959 = vadd.f32 %v3920, %v3958
  %3960 = vadd.xlane.f32.xlu0 %v3959
  %v3961 = vpop.xlane.xlu0 %3960
  %v3962 = vsel %vm594, %v3923, 0.0
  %v3963 = vadd.f32 %v3922, %v3962
  %3964 = vadd.xlane.f32.xlu0 %v3963
  %v3965 = vpop.xlane.xlu0 %3964
  %v3966 = vsel %vm594, %v3925, 0.0
  %v3967 = vadd.f32 %v3924, %v3966
  %3968 = vadd.xlane.f32.xlu0 %v3967
  %v3969 = vpop.xlane.xlu0 %3968
  %v3970 = vsel %vm594, %v3927, 0.0
  %v3971 = vadd.f32 %v3926, %v3970
  %3972 = vadd.xlane.f32.xlu0 %v3971
  %v3973 = vpop.xlane.xlu0 %3972
  %v3974 = vsel %vm594, %v3929, 0.0
  %v3975 = vadd.f32 %v3928, %v3974
  %3976 = vadd.xlane.f32.xlu0 %v3975
  %v3977 = vpop.xlane.xlu0 %3976
  %v3978 = vsel %vm594, %v3931, 0.0
  %v3979 = vadd.f32 %v3930, %v3978
  %3980 = vadd.xlane.f32.xlu0 %v3979
  %v3981 = vpop.xlane.xlu0 %3980
  %v3982 = vsel %vm594, %v3933, 0.0
  %v3983 = vadd.f32 %v3932, %v3982
  %3984 = vadd.xlane.f32.xlu0 %v3983
  %v3985 = vpop.xlane.xlu0 %3984
  %v3986 = vsel %vm594, %v3935, 0.0
  %v3987 = vadd.f32 %v3934, %v3986
  %3988 = vadd.xlane.f32.xlu0 %v3987
  %v3989 = vpop.xlane.xlu0 %3988
  %v3990 = vsel %vm594, %v3937, 0.0
  %v3991 = vadd.f32 %v3936, %v3990
  %3992 = vadd.xlane.f32.xlu0 %v3991
  %v3993 = vpop.xlane.xlu0 %3992
  %v3994 = vsel %vm594, %v3939, 0.0
  %v3995 = vadd.f32 %v3938, %v3994
  %3996 = vadd.xlane.f32.xlu0 %v3995
  %v3997 = vpop.xlane.xlu0 %3996
  %v3998 = vsel %vm594, %v3941, 0.0
  %v3999 = vadd.f32 %v3940, %v3998
  %4000 = vadd.xlane.f32.xlu0 %v3999
  %v4001 = vpop.xlane.xlu0 %4000
  %v4002 = vsel %vm594, %v3943, 0.0
  %v4003 = vadd.f32 %v3942, %v4002
  %4004 = vadd.xlane.f32.xlu0 %v4003
  %v4005 = vpop.xlane.xlu0 %4004
  %v4006 = vsel %vm594, %v3945, 0.0
  %v4007 = vadd.f32 %v3944, %v4006
  %4008 = vadd.xlane.f32.xlu0 %v4007
  %v4009 = vpop.xlane.xlu0 %4008
  %v4010 = vmul.f32 %v3949, %v3949
  %v4011 = vmul.f32 %v3953, %v3953
  %v4012 = vmul.f32 %v3957, %v3957
  %v4013 = vmul.f32 %v3961, %v3961
  %v4014 = vmul.f32 %v3965, %v3965
  %v4015 = vmul.f32 %v3969, %v3969
  %v4016 = vmul.f32 %v3973, %v3973
  %v4017 = vmul.f32 %v3977, %v3977
  %v4018 = vmul.f32 %v3981, %v3981
  %v4019 = vmul.f32 %v3985, %v3985
  %v4020 = vmul.f32 %v3989, %v3989
  %v4021 = vmul.f32 %v3993, %v3993
  %v4022 = vmul.f32 %v3997, %v3997
  %v4023 = vmul.f32 %v4001, %v4001
  %v4024 = vmul.f32 %v4005, %v4005
  %v4025 = vmul.f32 %v4009, %v4009
  %v4026 = vmul.f32 %v4010, %v3949
  %v4027 = vmul.f32 %v4011, %v3953
  %v4028 = vmul.f32 %v4012, %v3957
  %v4029 = vmul.f32 %v4013, %v3961
  %v4030 = vmul.f32 %v4014, %v3965
  %v4031 = vmul.f32 %v4015, %v3969
  %v4032 = vmul.f32 %v4016, %v3973
  %v4033 = vmul.f32 %v4017, %v3977
  %v4034 = vmul.f32 %v4018, %v3981
  %v4035 = vmul.f32 %v4019, %v3985
  %v4036 = vmul.f32 %v4020, %v3989
  %v4037 = vmul.f32 %v4021, %v3993
  %v4038 = vmul.f32 %v4022, %v3997
  %v4039 = vmul.f32 %v4023, %v4001
  %v4040 = vmul.f32 %v4024, %v4005
  %v4041 = vmul.f32 %v4025, %v4009
  %v4042 = vadd.f32 %v4010, 1e-07
  %v4043 = vadd.f32 %v4011, 1e-07
  %v4044 = vadd.f32 %v4012, 1e-07
  %v4045 = vadd.f32 %v4013, 1e-07
  %v4046 = vadd.f32 %v4014, 1e-07
  %v4047 = vadd.f32 %v4015, 1e-07
  %v4048 = vadd.f32 %v4016, 1e-07
  %v4049 = vadd.f32 %v4017, 1e-07
  %v4050 = vadd.f32 %v4018, 1e-07
  %v4051 = vadd.f32 %v4019, 1e-07
  %v4052 = vadd.f32 %v4020, 1e-07
  %v4053 = vadd.f32 %v4021, 1e-07
  %v4054 = vadd.f32 %v4022, 1e-07
  %v4055 = vadd.f32 %v4023, 1e-07
  %v4056 = vadd.f32 %v4024, 1e-07
  %v4057 = vadd.f32 %v4025, 1e-07
  %v4058 = vrsqrt.pop %v4042
  %v4059 = vrsqrt.pop %v4043
  %v4060 = vrsqrt.pop %v4044
  %v4061 = vrsqrt.pop %v4045
  %v4062 = vrsqrt.pop %v4046
  %v4063 = vrsqrt.pop %v4047
  %v4064 = vrsqrt.pop %v4048
  %v4065 = vrsqrt.pop %v4049
  %v4066 = vrsqrt.pop %v4050
  %v4067 = vrsqrt.pop %v4051
  %v4068 = vrsqrt.pop %v4052
  %v4069 = vrsqrt.pop %v4053
  %v4070 = vrsqrt.pop %v4054
  %v4071 = vrsqrt.pop %v4055
  %v4072 = vrsqrt.pop %v4056
  %v4073 = vrsqrt.pop %v4057
  %v4074 = vmul.f32 %v4026, %v4058
  %v4075 = vmul.f32 %v4027, %v4059
  %v4076 = vmul.f32 %v4028, %v4060
  %v4077 = vmul.f32 %v4029, %v4061
  %v4078 = vmul.f32 %v4030, %v4062
  %v4079 = vmul.f32 %v4031, %v4063
  %v4080 = vmul.f32 %v4032, %v4064
  %v4081 = vmul.f32 %v4033, %v4065
  %v4082 = vmul.f32 %v4034, %v4066
  %v4083 = vmul.f32 %v4035, %v4067
  %v4084 = vmul.f32 %v4036, %v4068
  %v4085 = vmul.f32 %v4037, %v4069
  %v4086 = vmul.f32 %v4038, %v4070
  %v4087 = vmul.f32 %v4039, %v4071
  %v4088 = vmul.f32 %v4040, %v4072
  %v4089 = vmul.f32 %v4041, %v4073
  %v4090 = vadd.f32 %v4010, 1.0
  %v4091 = vadd.f32 %v4011, 1.0
  %v4092 = vadd.f32 %v4012, 1.0
  %v4093 = vadd.f32 %v4013, 1.0
  %v4094 = vadd.f32 %v4014, 1.0
  %v4095 = vadd.f32 %v4015, 1.0
  %v4096 = vadd.f32 %v4016, 1.0
  %v4097 = vadd.f32 %v4017, 1.0
  %v4098 = vadd.f32 %v4018, 1.0
  %v4099 = vadd.f32 %v4019, 1.0
  %v4100 = vadd.f32 %v4020, 1.0
  %v4101 = vadd.f32 %v4021, 1.0
  %v4102 = vadd.f32 %v4022, 1.0
  %v4103 = vadd.f32 %v4023, 1.0
  %v4104 = vadd.f32 %v4024, 1.0
  %v4105 = vadd.f32 %v4025, 1.0
  %v4106 = vrcp.pop %v4090
  %v4107 = vrcp.pop %v4091
  %v4108 = vrcp.pop %v4092
  %v4109 = vrcp.pop %v4093
  %v4110 = vrcp.pop %v4094
  %v4111 = vrcp.pop %v4095
  %v4112 = vrcp.pop %v4096
  %v4113 = vrcp.pop %v4097
  %v4114 = vrcp.pop %v4098
  %v4115 = vrcp.pop %v4099
  %v4116 = vrcp.pop %v4100
  %v4117 = vrcp.pop %v4101
  %v4118 = vrcp.pop %v4102
  %v4119 = vrcp.pop %v4103
  %v4120 = vrcp.pop %v4104
  %v4121 = vrcp.pop %v4105
  %v4122 = vmul.f32 %v4074, %v4106
  %v4123 = vmul.f32 %v4075, %v4107
  %v4124 = vmul.f32 %v4076, %v4108
  %v4125 = vmul.f32 %v4077, %v4109
  %v4126 = vmul.f32 %v4078, %v4110
  %v4127 = vmul.f32 %v4079, %v4111
  %v4128 = vmul.f32 %v4080, %v4112
  %v4129 = vmul.f32 %v4081, %v4113
  %v4130 = vmul.f32 %v4082, %v4114
  %v4131 = vmul.f32 %v4083, %v4115
  %v4132 = vmul.f32 %v4084, %v4116
  %v4133 = vmul.f32 %v4085, %v4117
  %v4134 = vmul.f32 %v4086, %v4118
  %v4135 = vmul.f32 %v4087, %v4119
  %v4136 = vmul.f32 %v4088, %v4120
  %v4137 = vmul.f32 %v4089, %v4121
  %v4138 = vmul.f32 %v3913, %v2788
  %v4139 = vmul.f32 %v3913, %v2789
  %v4140 = vmul.f32 %v3913, %v2790
  %v4141 = vmul.f32 %v3913, %v2791
  %v4142 = vmul.f32 %v3913, %v2792
  %v4143 = vmul.f32 %v3913, %v2793
  %v4144 = vmul.f32 %v3913, %v2794
  %v4145 = vmul.f32 %v3913, %v2795
  %v4146 = vmul.f32 %v3913, %v2796
  %v4147 = vmul.f32 %v3913, %v2797
  %v4148 = vmul.f32 %v3913, %v2798
  %v4149 = vmul.f32 %v3913, %v2799
  %v4150 = vmul.f32 %v3913, %v2800
  %v4151 = vmul.f32 %v3913, %v2801
  %v4152 = vmul.f32 %v3913, %v2802
  %v4153 = vmul.f32 %v3913, %v2803
  %v4154 = vmul.f32 %v3913, %v2804
  %v4155 = vmul.f32 %v3913, %v2805
  %v4156 = vmul.f32 %v3913, %v2806
  %v4157 = vmul.f32 %v3913, %v2807
  %v4158 = vmul.f32 %v3913, %v2808
  %v4159 = vmul.f32 %v3913, %v2809
  %v4160 = vmul.f32 %v3913, %v2810
  %v4161 = vmul.f32 %v3913, %v2811
  %v4162 = vmul.f32 %v3913, %v2812
  %v4163 = vmul.f32 %v3913, %v2813
  %v4164 = vmul.f32 %v3913, %v2814
  %v4165 = vmul.f32 %v3913, %v2815
  %v4166 = vmul.f32 %v3913, %v2816
  %v4167 = vmul.f32 %v3913, %v2817
  %v4168 = vmul.f32 %v3913, %v2818
  %v4169 = vmul.f32 %v3913, %v2819
  %v4170 = vsel %vm594, %v4139, 0.0
  %v4171 = vadd.f32 %v4138, %v4170
  %4172 = vadd.xlane.f32.xlu0 %v4171
  %v4173 = vpop.xlane.xlu0 %4172
  %v4174 = vsel %vm594, %v4141, 0.0
  %v4175 = vadd.f32 %v4140, %v4174
  %4176 = vadd.xlane.f32.xlu0 %v4175
  %v4177 = vpop.xlane.xlu0 %4176
  %v4178 = vsel %vm594, %v4143, 0.0
  %v4179 = vadd.f32 %v4142, %v4178
  %4180 = vadd.xlane.f32.xlu0 %v4179
  %v4181 = vpop.xlane.xlu0 %4180
  %v4182 = vsel %vm594, %v4145, 0.0
  %v4183 = vadd.f32 %v4144, %v4182
  %4184 = vadd.xlane.f32.xlu0 %v4183
  %v4185 = vpop.xlane.xlu0 %4184
  %v4186 = vsel %vm594, %v4147, 0.0
  %v4187 = vadd.f32 %v4146, %v4186
  %4188 = vadd.xlane.f32.xlu0 %v4187
  %v4189 = vpop.xlane.xlu0 %4188
  %v4190 = vsel %vm594, %v4149, 0.0
  %v4191 = vadd.f32 %v4148, %v4190
  %4192 = vadd.xlane.f32.xlu0 %v4191
  %v4193 = vpop.xlane.xlu0 %4192
  %v4194 = vsel %vm594, %v4151, 0.0
  %v4195 = vadd.f32 %v4150, %v4194
  %4196 = vadd.xlane.f32.xlu0 %v4195
  %v4197 = vpop.xlane.xlu0 %4196
  %v4198 = vsel %vm594, %v4153, 0.0
  %v4199 = vadd.f32 %v4152, %v4198
  %4200 = vadd.xlane.f32.xlu0 %v4199
  %v4201 = vpop.xlane.xlu0 %4200
  %v4202 = vsel %vm594, %v4155, 0.0
  %v4203 = vadd.f32 %v4154, %v4202
  %4204 = vadd.xlane.f32.xlu0 %v4203
  %v4205 = vpop.xlane.xlu0 %4204
  %v4206 = vsel %vm594, %v4157, 0.0
  %v4207 = vadd.f32 %v4156, %v4206
  %4208 = vadd.xlane.f32.xlu0 %v4207
  %v4209 = vpop.xlane.xlu0 %4208
  %v4210 = vsel %vm594, %v4159, 0.0
  %v4211 = vadd.f32 %v4158, %v4210
  %4212 = vadd.xlane.f32.xlu0 %v4211
  %v4213 = vpop.xlane.xlu0 %4212
  %v4214 = vsel %vm594, %v4161, 0.0
  %v4215 = vadd.f32 %v4160, %v4214
  %4216 = vadd.xlane.f32.xlu0 %v4215
  %v4217 = vpop.xlane.xlu0 %4216
  %v4218 = vsel %vm594, %v4163, 0.0
  %v4219 = vadd.f32 %v4162, %v4218
  %4220 = vadd.xlane.f32.xlu0 %v4219
  %v4221 = vpop.xlane.xlu0 %4220
  %v4222 = vsel %vm594, %v4165, 0.0
  %v4223 = vadd.f32 %v4164, %v4222
  %4224 = vadd.xlane.f32.xlu0 %v4223
  %v4225 = vpop.xlane.xlu0 %4224
  %v4226 = vsel %vm594, %v4167, 0.0
  %v4227 = vadd.f32 %v4166, %v4226
  %4228 = vadd.xlane.f32.xlu0 %v4227
  %v4229 = vpop.xlane.xlu0 %4228
  %v4230 = vsel %vm594, %v4169, 0.0
  %v4231 = vadd.f32 %v4168, %v4230
  %4232 = vadd.xlane.f32.xlu0 %v4231
  %v4233 = vpop.xlane.xlu0 %4232
  %v4234 = vmul.f32 %v4173, %v4173
  %v4235 = vmul.f32 %v4177, %v4177
  %v4236 = vmul.f32 %v4181, %v4181
  %v4237 = vmul.f32 %v4185, %v4185
  %v4238 = vmul.f32 %v4189, %v4189
  %v4239 = vmul.f32 %v4193, %v4193
  %v4240 = vmul.f32 %v4197, %v4197
  %v4241 = vmul.f32 %v4201, %v4201
  %v4242 = vmul.f32 %v4205, %v4205
  %v4243 = vmul.f32 %v4209, %v4209
  %v4244 = vmul.f32 %v4213, %v4213
  %v4245 = vmul.f32 %v4217, %v4217
  %v4246 = vmul.f32 %v4221, %v4221
  %v4247 = vmul.f32 %v4225, %v4225
  %v4248 = vmul.f32 %v4229, %v4229
  %v4249 = vmul.f32 %v4233, %v4233
  %v4250 = vmul.f32 %v4234, %v4173
  %v4251 = vmul.f32 %v4235, %v4177
  %v4252 = vmul.f32 %v4236, %v4181
  %v4253 = vmul.f32 %v4237, %v4185
  %v4254 = vmul.f32 %v4238, %v4189
  %v4255 = vmul.f32 %v4239, %v4193
  %v4256 = vmul.f32 %v4240, %v4197
  %v4257 = vmul.f32 %v4241, %v4201
  %v4258 = vmul.f32 %v4242, %v4205
  %v4259 = vmul.f32 %v4243, %v4209
  %v4260 = vmul.f32 %v4244, %v4213
  %v4261 = vmul.f32 %v4245, %v4217
  %v4262 = vmul.f32 %v4246, %v4221
  %v4263 = vmul.f32 %v4247, %v4225
  %v4264 = vmul.f32 %v4248, %v4229
  %v4265 = vmul.f32 %v4249, %v4233
  %v4266 = vadd.f32 %v4234, 1e-07
  %v4267 = vadd.f32 %v4235, 1e-07
  %v4268 = vadd.f32 %v4236, 1e-07
  %v4269 = vadd.f32 %v4237, 1e-07
  %v4270 = vadd.f32 %v4238, 1e-07
  %v4271 = vadd.f32 %v4239, 1e-07
  %v4272 = vadd.f32 %v4240, 1e-07
  %v4273 = vadd.f32 %v4241, 1e-07
  %v4274 = vadd.f32 %v4242, 1e-07
  %v4275 = vadd.f32 %v4243, 1e-07
  %v4276 = vadd.f32 %v4244, 1e-07
  %v4277 = vadd.f32 %v4245, 1e-07
  %v4278 = vadd.f32 %v4246, 1e-07
  %v4279 = vadd.f32 %v4247, 1e-07
  %v4280 = vadd.f32 %v4248, 1e-07
  %v4281 = vadd.f32 %v4249, 1e-07
  %v4282 = vrsqrt.pop %v4266
  %v4283 = vrsqrt.pop %v4267
  %v4284 = vrsqrt.pop %v4268
  %v4285 = vrsqrt.pop %v4269
  %v4286 = vrsqrt.pop %v4270
  %v4287 = vrsqrt.pop %v4271
  %v4288 = vrsqrt.pop %v4272
  %v4289 = vrsqrt.pop %v4273
  %v4290 = vrsqrt.pop %v4274
  %v4291 = vrsqrt.pop %v4275
  %v4292 = vrsqrt.pop %v4276
  %v4293 = vrsqrt.pop %v4277
  %v4294 = vrsqrt.pop %v4278
  %v4295 = vrsqrt.pop %v4279
  %v4296 = vrsqrt.pop %v4280
  %v4297 = vrsqrt.pop %v4281
  %v4298 = vmul.f32 %v4250, %v4282
  %v4299 = vmul.f32 %v4251, %v4283
  %v4300 = vmul.f32 %v4252, %v4284
  %v4301 = vmul.f32 %v4253, %v4285
  %v4302 = vmul.f32 %v4254, %v4286
  %v4303 = vmul.f32 %v4255, %v4287
  %v4304 = vmul.f32 %v4256, %v4288
  %v4305 = vmul.f32 %v4257, %v4289
  %v4306 = vmul.f32 %v4258, %v4290
  %v4307 = vmul.f32 %v4259, %v4291
  %v4308 = vmul.f32 %v4260, %v4292
  %v4309 = vmul.f32 %v4261, %v4293
  %v4310 = vmul.f32 %v4262, %v4294
  %v4311 = vmul.f32 %v4263, %v4295
  %v4312 = vmul.f32 %v4264, %v4296
  %v4313 = vmul.f32 %v4265, %v4297
  %v4314 = vadd.f32 %v4234, 1.0
  %v4315 = vadd.f32 %v4235, 1.0
  %v4316 = vadd.f32 %v4236, 1.0
  %v4317 = vadd.f32 %v4237, 1.0
  %v4318 = vadd.f32 %v4238, 1.0
  %v4319 = vadd.f32 %v4239, 1.0
  %v4320 = vadd.f32 %v4240, 1.0
  %v4321 = vadd.f32 %v4241, 1.0
  %v4322 = vadd.f32 %v4242, 1.0
  %v4323 = vadd.f32 %v4243, 1.0
  %v4324 = vadd.f32 %v4244, 1.0
  %v4325 = vadd.f32 %v4245, 1.0
  %v4326 = vadd.f32 %v4246, 1.0
  %v4327 = vadd.f32 %v4247, 1.0
  %v4328 = vadd.f32 %v4248, 1.0
  %v4329 = vadd.f32 %v4249, 1.0
  %v4330 = vrcp.pop %v4314
  %v4331 = vrcp.pop %v4315
  %v4332 = vrcp.pop %v4316
  %v4333 = vrcp.pop %v4317
  %v4334 = vrcp.pop %v4318
  %v4335 = vrcp.pop %v4319
  %v4336 = vrcp.pop %v4320
  %v4337 = vrcp.pop %v4321
  %v4338 = vrcp.pop %v4322
  %v4339 = vrcp.pop %v4323
  %v4340 = vrcp.pop %v4324
  %v4341 = vrcp.pop %v4325
  %v4342 = vrcp.pop %v4326
  %v4343 = vrcp.pop %v4327
  %v4344 = vrcp.pop %v4328
  %v4345 = vrcp.pop %v4329
  %v4346 = vmul.f32 %v4298, %v4330
  %v4347 = vmul.f32 %v4299, %v4331
  %v4348 = vmul.f32 %v4300, %v4332
  %v4349 = vmul.f32 %v4301, %v4333
  %v4350 = vmul.f32 %v4302, %v4334
  %v4351 = vmul.f32 %v4303, %v4335
  %v4352 = vmul.f32 %v4304, %v4336
  %v4353 = vmul.f32 %v4305, %v4337
  %v4354 = vmul.f32 %v4306, %v4338
  %v4355 = vmul.f32 %v4307, %v4339
  %v4356 = vmul.f32 %v4308, %v4340
  %v4357 = vmul.f32 %v4309, %v4341
  %v4358 = vmul.f32 %v4310, %v4342
  %v4359 = vmul.f32 %v4311, %v4343
  %v4360 = vmul.f32 %v4312, %v4344
  %v4361 = vmul.f32 %v4313, %v4345
  %v4362 = vmul.f32 %v3913, %v3332
  %v4363 = vmul.f32 %v3913, %v3333
  %v4364 = vmul.f32 %v3913, %v3334
  %v4365 = vmul.f32 %v3913, %v3335
  %v4366 = vmul.f32 %v3913, %v3336
  %v4367 = vmul.f32 %v3913, %v3337
  %v4368 = vmul.f32 %v3913, %v3338
  %v4369 = vmul.f32 %v3913, %v3339
  %v4370 = vmul.f32 %v3913, %v3340
  %v4371 = vmul.f32 %v3913, %v3341
  %v4372 = vmul.f32 %v3913, %v3342
  %v4373 = vmul.f32 %v3913, %v3343
  %v4374 = vmul.f32 %v3913, %v3344
  %v4375 = vmul.f32 %v3913, %v3345
  %v4376 = vmul.f32 %v3913, %v3346
  %v4377 = vmul.f32 %v3913, %v3347
  %v4378 = vmul.f32 %v3913, %v3348
  %v4379 = vmul.f32 %v3913, %v3349
  %v4380 = vmul.f32 %v3913, %v3350
  %v4381 = vmul.f32 %v3913, %v3351
  %v4382 = vmul.f32 %v3913, %v3352
  %v4383 = vmul.f32 %v3913, %v3353
  %v4384 = vmul.f32 %v3913, %v3354
  %v4385 = vmul.f32 %v3913, %v3355
  %v4386 = vmul.f32 %v3913, %v3356
  %v4387 = vmul.f32 %v3913, %v3357
  %v4388 = vmul.f32 %v3913, %v3358
  %v4389 = vmul.f32 %v3913, %v3359
  %v4390 = vmul.f32 %v3913, %v3360
  %v4391 = vmul.f32 %v3913, %v3361
  %v4392 = vmul.f32 %v3913, %v3362
  %v4393 = vmul.f32 %v3913, %v3363
  %v4394 = vsel %vm594, %v4363, 0.0
  %v4395 = vadd.f32 %v4362, %v4394
  %4396 = vadd.xlane.f32.xlu0 %v4395
  %v4397 = vpop.xlane.xlu0 %4396
  %v4398 = vsel %vm594, %v4365, 0.0
  %v4399 = vadd.f32 %v4364, %v4398
  %4400 = vadd.xlane.f32.xlu0 %v4399
  %v4401 = vpop.xlane.xlu0 %4400
  %v4402 = vsel %vm594, %v4367, 0.0
  %v4403 = vadd.f32 %v4366, %v4402
  %4404 = vadd.xlane.f32.xlu0 %v4403
  %v4405 = vpop.xlane.xlu0 %4404
  %v4406 = vsel %vm594, %v4369, 0.0
  %v4407 = vadd.f32 %v4368, %v4406
  %4408 = vadd.xlane.f32.xlu0 %v4407
  %v4409 = vpop.xlane.xlu0 %4408
  %v4410 = vsel %vm594, %v4371, 0.0
  %v4411 = vadd.f32 %v4370, %v4410
  %4412 = vadd.xlane.f32.xlu0 %v4411
  %v4413 = vpop.xlane.xlu0 %4412
  %v4414 = vsel %vm594, %v4373, 0.0
  %v4415 = vadd.f32 %v4372, %v4414
  %4416 = vadd.xlane.f32.xlu0 %v4415
  %v4417 = vpop.xlane.xlu0 %4416
  %v4418 = vsel %vm594, %v4375, 0.0
  %v4419 = vadd.f32 %v4374, %v4418
  %4420 = vadd.xlane.f32.xlu0 %v4419
  %v4421 = vpop.xlane.xlu0 %4420
  %v4422 = vsel %vm594, %v4377, 0.0
  %v4423 = vadd.f32 %v4376, %v4422
  %4424 = vadd.xlane.f32.xlu0 %v4423
  %v4425 = vpop.xlane.xlu0 %4424
  %v4426 = vsel %vm594, %v4379, 0.0
  %v4427 = vadd.f32 %v4378, %v4426
  %4428 = vadd.xlane.f32.xlu0 %v4427
  %v4429 = vpop.xlane.xlu0 %4428
  %v4430 = vsel %vm594, %v4381, 0.0
  %v4431 = vadd.f32 %v4380, %v4430
  %4432 = vadd.xlane.f32.xlu0 %v4431
  %v4433 = vpop.xlane.xlu0 %4432
  %v4434 = vsel %vm594, %v4383, 0.0
  %v4435 = vadd.f32 %v4382, %v4434
  %4436 = vadd.xlane.f32.xlu0 %v4435
  %v4437 = vpop.xlane.xlu0 %4436
  %v4438 = vsel %vm594, %v4385, 0.0
  %v4439 = vadd.f32 %v4384, %v4438
  %4440 = vadd.xlane.f32.xlu0 %v4439
  %v4441 = vpop.xlane.xlu0 %4440
  %v4442 = vsel %vm594, %v4387, 0.0
  %v4443 = vadd.f32 %v4386, %v4442
  %4444 = vadd.xlane.f32.xlu0 %v4443
  %v4445 = vpop.xlane.xlu0 %4444
  %v4446 = vsel %vm594, %v4389, 0.0
  %v4447 = vadd.f32 %v4388, %v4446
  %4448 = vadd.xlane.f32.xlu0 %v4447
  %v4449 = vpop.xlane.xlu0 %4448
  %v4450 = vsel %vm594, %v4391, 0.0
  %v4451 = vadd.f32 %v4390, %v4450
  %4452 = vadd.xlane.f32.xlu0 %v4451
  %v4453 = vpop.xlane.xlu0 %4452
  %v4454 = vsel %vm594, %v4393, 0.0
  %v4455 = vadd.f32 %v4392, %v4454
  %4456 = vadd.xlane.f32.xlu0 %v4455
  %v4457 = vpop.xlane.xlu0 %4456
  %v4458 = vmul.f32 %v4397, %v4397
  %v4459 = vmul.f32 %v4401, %v4401
  %v4460 = vmul.f32 %v4405, %v4405
  %v4461 = vmul.f32 %v4409, %v4409
  %v4462 = vmul.f32 %v4413, %v4413
  %v4463 = vmul.f32 %v4417, %v4417
  %v4464 = vmul.f32 %v4421, %v4421
  %v4465 = vmul.f32 %v4425, %v4425
  %v4466 = vmul.f32 %v4429, %v4429
  %v4467 = vmul.f32 %v4433, %v4433
  %v4468 = vmul.f32 %v4437, %v4437
  %v4469 = vmul.f32 %v4441, %v4441
  %v4470 = vmul.f32 %v4445, %v4445
  %v4471 = vmul.f32 %v4449, %v4449
  %v4472 = vmul.f32 %v4453, %v4453
  %v4473 = vmul.f32 %v4457, %v4457
  %v4474 = vmul.f32 %v4458, %v4397
  %v4475 = vmul.f32 %v4459, %v4401
  %v4476 = vmul.f32 %v4460, %v4405
  %v4477 = vmul.f32 %v4461, %v4409
  %v4478 = vmul.f32 %v4462, %v4413
  %v4479 = vmul.f32 %v4463, %v4417
  %v4480 = vmul.f32 %v4464, %v4421
  %v4481 = vmul.f32 %v4465, %v4425
  %v4482 = vmul.f32 %v4466, %v4429
  %v4483 = vmul.f32 %v4467, %v4433
  %v4484 = vmul.f32 %v4468, %v4437
  %v4485 = vmul.f32 %v4469, %v4441
  %v4486 = vmul.f32 %v4470, %v4445
  %v4487 = vmul.f32 %v4471, %v4449
  %v4488 = vmul.f32 %v4472, %v4453
  %v4489 = vmul.f32 %v4473, %v4457
  %v4490 = vadd.f32 %v4458, 1e-07
  %v4491 = vadd.f32 %v4459, 1e-07
  %v4492 = vadd.f32 %v4460, 1e-07
  %v4493 = vadd.f32 %v4461, 1e-07
  %v4494 = vadd.f32 %v4462, 1e-07
  %v4495 = vadd.f32 %v4463, 1e-07
  %v4496 = vadd.f32 %v4464, 1e-07
  %v4497 = vadd.f32 %v4465, 1e-07
  %v4498 = vadd.f32 %v4466, 1e-07
  %v4499 = vadd.f32 %v4467, 1e-07
  %v4500 = vadd.f32 %v4468, 1e-07
  %v4501 = vadd.f32 %v4469, 1e-07
  %v4502 = vadd.f32 %v4470, 1e-07
  %v4503 = vadd.f32 %v4471, 1e-07
  %v4504 = vadd.f32 %v4472, 1e-07
  %v4505 = vadd.f32 %v4473, 1e-07
  %v4506 = vrsqrt.pop %v4490
  %v4507 = vrsqrt.pop %v4491
  %v4508 = vrsqrt.pop %v4492
  %v4509 = vrsqrt.pop %v4493
  %v4510 = vrsqrt.pop %v4494
  %v4511 = vrsqrt.pop %v4495
  %v4512 = vrsqrt.pop %v4496
  %v4513 = vrsqrt.pop %v4497
  %v4514 = vrsqrt.pop %v4498
  %v4515 = vrsqrt.pop %v4499
  %v4516 = vrsqrt.pop %v4500
  %v4517 = vrsqrt.pop %v4501
  %v4518 = vrsqrt.pop %v4502
  %v4519 = vrsqrt.pop %v4503
  %v4520 = vrsqrt.pop %v4504
  %v4521 = vrsqrt.pop %v4505
  %v4522 = vmul.f32 %v4474, %v4506
  %v4523 = vmul.f32 %v4475, %v4507
  %v4524 = vmul.f32 %v4476, %v4508
  %v4525 = vmul.f32 %v4477, %v4509
  %v4526 = vmul.f32 %v4478, %v4510
  %v4527 = vmul.f32 %v4479, %v4511
  %v4528 = vmul.f32 %v4480, %v4512
  %v4529 = vmul.f32 %v4481, %v4513
  %v4530 = vmul.f32 %v4482, %v4514
  %v4531 = vmul.f32 %v4483, %v4515
  %v4532 = vmul.f32 %v4484, %v4516
  %v4533 = vmul.f32 %v4485, %v4517
  %v4534 = vmul.f32 %v4486, %v4518
  %v4535 = vmul.f32 %v4487, %v4519
  %v4536 = vmul.f32 %v4488, %v4520
  %v4537 = vmul.f32 %v4489, %v4521
  %v4538 = vadd.f32 %v4458, 1.0
  %v4539 = vadd.f32 %v4459, 1.0
  %v4540 = vadd.f32 %v4460, 1.0
  %v4541 = vadd.f32 %v4461, 1.0
  %v4542 = vadd.f32 %v4462, 1.0
  %v4543 = vadd.f32 %v4463, 1.0
  %v4544 = vadd.f32 %v4464, 1.0
  %v4545 = vadd.f32 %v4465, 1.0
  %v4546 = vadd.f32 %v4466, 1.0
  %v4547 = vadd.f32 %v4467, 1.0
  %v4548 = vadd.f32 %v4468, 1.0
  %v4549 = vadd.f32 %v4469, 1.0
  %v4550 = vadd.f32 %v4470, 1.0
  %v4551 = vadd.f32 %v4471, 1.0
  %v4552 = vadd.f32 %v4472, 1.0
  %v4553 = vadd.f32 %v4473, 1.0
  %v4554 = vrcp.pop %v4538
  %v4555 = vrcp.pop %v4539
  %v4556 = vrcp.pop %v4540
  %v4557 = vrcp.pop %v4541
  %v4558 = vrcp.pop %v4542
  %v4559 = vrcp.pop %v4543
  %v4560 = vrcp.pop %v4544
  %v4561 = vrcp.pop %v4545
  %v4562 = vrcp.pop %v4546
  %v4563 = vrcp.pop %v4547
  %v4564 = vrcp.pop %v4548
  %v4565 = vrcp.pop %v4549
  %v4566 = vrcp.pop %v4550
  %v4567 = vrcp.pop %v4551
  %v4568 = vrcp.pop %v4552
  %v4569 = vrcp.pop %v4553
  %v4570 = vmul.f32 %v4522, %v4554
  %v4571 = vmul.f32 %v4523, %v4555
  %v4572 = vmul.f32 %v4524, %v4556
  %v4573 = vmul.f32 %v4525, %v4557
  %v4574 = vmul.f32 %v4526, %v4558
  %v4575 = vmul.f32 %v4527, %v4559
  %v4576 = vmul.f32 %v4528, %v4560
  %v4577 = vmul.f32 %v4529, %v4561
  %v4578 = vmul.f32 %v4530, %v4562
  %v4579 = vmul.f32 %v4531, %v4563
  %v4580 = vmul.f32 %v4532, %v4564
  %v4581 = vmul.f32 %v4533, %v4565
  %v4582 = vmul.f32 %v4534, %v4566
  %v4583 = vmul.f32 %v4535, %v4567
  %v4584 = vmul.f32 %v4536, %v4568
  %v4585 = vmul.f32 %v4537, %v4569
  %v4586 = vmul.f32 %v3913, %v3876
  %v4587 = vmul.f32 %v3913, %v3877
  %v4588 = vmul.f32 %v3913, %v3878
  %v4589 = vmul.f32 %v3913, %v3879
  %v4590 = vmul.f32 %v3913, %v3880
  %v4591 = vmul.f32 %v3913, %v3881
  %v4592 = vmul.f32 %v3913, %v3882
  %v4593 = vmul.f32 %v3913, %v3883
  %v4594 = vmul.f32 %v3913, %v3884
  %v4595 = vmul.f32 %v3913, %v3885
  %v4596 = vmul.f32 %v3913, %v3886
  %v4597 = vmul.f32 %v3913, %v3887
  %v4598 = vmul.f32 %v3913, %v3888
  %v4599 = vmul.f32 %v3913, %v3889
  %v4600 = vmul.f32 %v3913, %v3890
  %v4601 = vmul.f32 %v3913, %v3891
  %v4602 = vmul.f32 %v3913, %v3892
  %v4603 = vmul.f32 %v3913, %v3893
  %v4604 = vmul.f32 %v3913, %v3894
  %v4605 = vmul.f32 %v3913, %v3895
  %v4606 = vmul.f32 %v3913, %v3896
  %v4607 = vmul.f32 %v3913, %v3897
  %v4608 = vmul.f32 %v3913, %v3898
  %v4609 = vmul.f32 %v3913, %v3899
  %v4610 = vmul.f32 %v3913, %v3900
  %v4611 = vmul.f32 %v3913, %v3901
  %v4612 = vmul.f32 %v3913, %v3902
  %v4613 = vmul.f32 %v3913, %v3903
  %v4614 = vmul.f32 %v3913, %v3904
  %v4615 = vmul.f32 %v3913, %v3905
  %v4616 = vmul.f32 %v3913, %v3906
  %v4617 = vmul.f32 %v3913, %v3907
  %v4618 = vsel %vm594, %v4587, 0.0
  %v4619 = vadd.f32 %v4586, %v4618
  %4620 = vadd.xlane.f32.xlu0 %v4619
  %v4621 = vpop.xlane.xlu0 %4620
  %v4622 = vsel %vm594, %v4589, 0.0
  %v4623 = vadd.f32 %v4588, %v4622
  %4624 = vadd.xlane.f32.xlu0 %v4623
  %v4625 = vpop.xlane.xlu0 %4624
  %v4626 = vsel %vm594, %v4591, 0.0
  %v4627 = vadd.f32 %v4590, %v4626
  %4628 = vadd.xlane.f32.xlu0 %v4627
  %v4629 = vpop.xlane.xlu0 %4628
  %v4630 = vsel %vm594, %v4593, 0.0
  %v4631 = vadd.f32 %v4592, %v4630
  %4632 = vadd.xlane.f32.xlu0 %v4631
  %v4633 = vpop.xlane.xlu0 %4632
  %v4634 = vsel %vm594, %v4595, 0.0
  %v4635 = vadd.f32 %v4594, %v4634
  %4636 = vadd.xlane.f32.xlu0 %v4635
  %v4637 = vpop.xlane.xlu0 %4636
  %v4638 = vsel %vm594, %v4597, 0.0
  %v4639 = vadd.f32 %v4596, %v4638
  %4640 = vadd.xlane.f32.xlu0 %v4639
  %v4641 = vpop.xlane.xlu0 %4640
  %v4642 = vsel %vm594, %v4599, 0.0
  %v4643 = vadd.f32 %v4598, %v4642
  %4644 = vadd.xlane.f32.xlu0 %v4643
  %v4645 = vpop.xlane.xlu0 %4644
  %v4646 = vsel %vm594, %v4601, 0.0
  %v4647 = vadd.f32 %v4600, %v4646
  %4648 = vadd.xlane.f32.xlu0 %v4647
  %v4649 = vpop.xlane.xlu0 %4648
  %v4650 = vsel %vm594, %v4603, 0.0
  %v4651 = vadd.f32 %v4602, %v4650
  %4652 = vadd.xlane.f32.xlu0 %v4651
  %v4653 = vpop.xlane.xlu0 %4652
  %v4654 = vsel %vm594, %v4605, 0.0
  %v4655 = vadd.f32 %v4604, %v4654
  %4656 = vadd.xlane.f32.xlu0 %v4655
  %v4657 = vpop.xlane.xlu0 %4656
  %v4658 = vsel %vm594, %v4607, 0.0
  %v4659 = vadd.f32 %v4606, %v4658
  %4660 = vadd.xlane.f32.xlu0 %v4659
  %v4661 = vpop.xlane.xlu0 %4660
  %v4662 = vsel %vm594, %v4609, 0.0
  %v4663 = vadd.f32 %v4608, %v4662
  %4664 = vadd.xlane.f32.xlu0 %v4663
  %v4665 = vpop.xlane.xlu0 %4664
  %v4666 = vsel %vm594, %v4611, 0.0
  %v4667 = vadd.f32 %v4610, %v4666
  %4668 = vadd.xlane.f32.xlu0 %v4667
  %v4669 = vpop.xlane.xlu0 %4668
  %v4670 = vsel %vm594, %v4613, 0.0
  %v4671 = vadd.f32 %v4612, %v4670
  %4672 = vadd.xlane.f32.xlu0 %v4671
  %v4673 = vpop.xlane.xlu0 %4672
  %v4674 = vsel %vm594, %v4615, 0.0
  %v4675 = vadd.f32 %v4614, %v4674
  %4676 = vadd.xlane.f32.xlu0 %v4675
  %v4677 = vpop.xlane.xlu0 %4676
  %v4678 = vsel %vm594, %v4617, 0.0
  %v4679 = vadd.f32 %v4616, %v4678
  %4680 = vadd.xlane.f32.xlu0 %v4679
  %v4681 = vpop.xlane.xlu0 %4680
  %v4682 = vmul.f32 %v4621, %v4621
  %v4683 = vmul.f32 %v4625, %v4625
  %v4684 = vmul.f32 %v4629, %v4629
  %v4685 = vmul.f32 %v4633, %v4633
  %v4686 = vmul.f32 %v4637, %v4637
  %v4687 = vmul.f32 %v4641, %v4641
  %v4688 = vmul.f32 %v4645, %v4645
  %v4689 = vmul.f32 %v4649, %v4649
  %v4690 = vmul.f32 %v4653, %v4653
  %v4691 = vmul.f32 %v4657, %v4657
  %v4692 = vmul.f32 %v4661, %v4661
  %v4693 = vmul.f32 %v4665, %v4665
  %v4694 = vmul.f32 %v4669, %v4669
  %v4695 = vmul.f32 %v4673, %v4673
  %v4696 = vmul.f32 %v4677, %v4677
  %v4697 = vmul.f32 %v4681, %v4681
  %v4698 = vmul.f32 %v4682, %v4621
  %v4699 = vmul.f32 %v4683, %v4625
  %v4700 = vmul.f32 %v4684, %v4629
  %v4701 = vmul.f32 %v4685, %v4633
  %v4702 = vmul.f32 %v4686, %v4637
  %v4703 = vmul.f32 %v4687, %v4641
  %v4704 = vmul.f32 %v4688, %v4645
  %v4705 = vmul.f32 %v4689, %v4649
  %v4706 = vmul.f32 %v4690, %v4653
  %v4707 = vmul.f32 %v4691, %v4657
  %v4708 = vmul.f32 %v4692, %v4661
  %v4709 = vmul.f32 %v4693, %v4665
  %v4710 = vmul.f32 %v4694, %v4669
  %v4711 = vmul.f32 %v4695, %v4673
  %v4712 = vmul.f32 %v4696, %v4677
  %v4713 = vmul.f32 %v4697, %v4681
  %v4714 = vadd.f32 %v4682, 1e-07
  %v4715 = vadd.f32 %v4683, 1e-07
  %v4716 = vadd.f32 %v4684, 1e-07
  %v4717 = vadd.f32 %v4685, 1e-07
  %v4718 = vadd.f32 %v4686, 1e-07
  %v4719 = vadd.f32 %v4687, 1e-07
  %v4720 = vadd.f32 %v4688, 1e-07
  %v4721 = vadd.f32 %v4689, 1e-07
  %v4722 = vadd.f32 %v4690, 1e-07
  %v4723 = vadd.f32 %v4691, 1e-07
  %v4724 = vadd.f32 %v4692, 1e-07
  %v4725 = vadd.f32 %v4693, 1e-07
  %v4726 = vadd.f32 %v4694, 1e-07
  %v4727 = vadd.f32 %v4695, 1e-07
  %v4728 = vadd.f32 %v4696, 1e-07
  %v4729 = vadd.f32 %v4697, 1e-07
  %v4730 = vrsqrt.pop %v4714
  %v4731 = vrsqrt.pop %v4715
  %v4732 = vrsqrt.pop %v4716
  %v4733 = vrsqrt.pop %v4717
  %v4734 = vrsqrt.pop %v4718
  %v4735 = vrsqrt.pop %v4719
  %v4736 = vrsqrt.pop %v4720
  %v4737 = vrsqrt.pop %v4721
  %v4738 = vrsqrt.pop %v4722
  %v4739 = vrsqrt.pop %v4723
  %v4740 = vrsqrt.pop %v4724
  %v4741 = vrsqrt.pop %v4725
  %v4742 = vrsqrt.pop %v4726
  %v4743 = vrsqrt.pop %v4727
  %v4744 = vrsqrt.pop %v4728
  %v4745 = vrsqrt.pop %v4729
  %v4746 = vmul.f32 %v4698, %v4730
  %v4747 = vmul.f32 %v4699, %v4731
  %v4748 = vmul.f32 %v4700, %v4732
  %v4749 = vmul.f32 %v4701, %v4733
  %v4750 = vmul.f32 %v4702, %v4734
  %v4751 = vmul.f32 %v4703, %v4735
  %v4752 = vmul.f32 %v4704, %v4736
  %v4753 = vmul.f32 %v4705, %v4737
  %v4754 = vmul.f32 %v4706, %v4738
  %v4755 = vmul.f32 %v4707, %v4739
  %v4756 = vmul.f32 %v4708, %v4740
  %v4757 = vmul.f32 %v4709, %v4741
  %v4758 = vmul.f32 %v4710, %v4742
  %v4759 = vmul.f32 %v4711, %v4743
  %v4760 = vmul.f32 %v4712, %v4744
  %v4761 = vmul.f32 %v4713, %v4745
  %v4762 = vadd.f32 %v4682, 1.0
  %v4763 = vadd.f32 %v4683, 1.0
  %v4764 = vadd.f32 %v4684, 1.0
  %v4765 = vadd.f32 %v4685, 1.0
  %v4766 = vadd.f32 %v4686, 1.0
  %v4767 = vadd.f32 %v4687, 1.0
  %v4768 = vadd.f32 %v4688, 1.0
  %v4769 = vadd.f32 %v4689, 1.0
  %v4770 = vadd.f32 %v4690, 1.0
  %v4771 = vadd.f32 %v4691, 1.0
  %v4772 = vadd.f32 %v4692, 1.0
  %v4773 = vadd.f32 %v4693, 1.0
  %v4774 = vadd.f32 %v4694, 1.0
  %v4775 = vadd.f32 %v4695, 1.0
  %v4776 = vadd.f32 %v4696, 1.0
  %v4777 = vadd.f32 %v4697, 1.0
  %v4778 = vrcp.pop %v4762
  %v4779 = vrcp.pop %v4763
  %v4780 = vrcp.pop %v4764
  %v4781 = vrcp.pop %v4765
  %v4782 = vrcp.pop %v4766
  %v4783 = vrcp.pop %v4767
  %v4784 = vrcp.pop %v4768
  %v4785 = vrcp.pop %v4769
  %v4786 = vrcp.pop %v4770
  %v4787 = vrcp.pop %v4771
  %v4788 = vrcp.pop %v4772
  %v4789 = vrcp.pop %v4773
  %v4790 = vrcp.pop %v4774
  %v4791 = vrcp.pop %v4775
  %v4792 = vrcp.pop %v4776
  %v4793 = vrcp.pop %v4777
  %v4794 = vmul.f32 %v4746, %v4778
  %v4795 = vmul.f32 %v4747, %v4779
  %v4796 = vmul.f32 %v4748, %v4780
  %v4797 = vmul.f32 %v4749, %v4781
  %v4798 = vmul.f32 %v4750, %v4782
  %v4799 = vmul.f32 %v4751, %v4783
  %v4800 = vmul.f32 %v4752, %v4784
  %v4801 = vmul.f32 %v4753, %v4785
  %v4802 = vmul.f32 %v4754, %v4786
  %v4803 = vmul.f32 %v4755, %v4787
  %v4804 = vmul.f32 %v4756, %v4788
  %v4805 = vmul.f32 %v4757, %v4789
  %v4806 = vmul.f32 %v4758, %v4790
  %v4807 = vmul.f32 %v4759, %v4791
  %v4808 = vmul.f32 %v4760, %v4792
  %v4809 = vmul.f32 %v4761, %v4793
  %v4810 = vmul.f32 %v2244, %v4122
  %v4811 = vmul.f32 %v2245, %v4122
  %v4812 = vmul.f32 %v2246, %v4123
  %v4813 = vmul.f32 %v2247, %v4123
  %v4814 = vmul.f32 %v2248, %v4124
  %v4815 = vmul.f32 %v2249, %v4124
  %v4816 = vmul.f32 %v2250, %v4125
  %v4817 = vmul.f32 %v2251, %v4125
  %v4818 = vmul.f32 %v2252, %v4126
  %v4819 = vmul.f32 %v2253, %v4126
  %v4820 = vmul.f32 %v2254, %v4127
  %v4821 = vmul.f32 %v2255, %v4127
  %v4822 = vmul.f32 %v2256, %v4128
  %v4823 = vmul.f32 %v2257, %v4128
  %v4824 = vmul.f32 %v2258, %v4129
  %v4825 = vmul.f32 %v2259, %v4129
  %v4826 = vmul.f32 %v2260, %v4130
  %v4827 = vmul.f32 %v2261, %v4130
  %v4828 = vmul.f32 %v2262, %v4131
  %v4829 = vmul.f32 %v2263, %v4131
  %v4830 = vmul.f32 %v2264, %v4132
  %v4831 = vmul.f32 %v2265, %v4132
  %v4832 = vmul.f32 %v2266, %v4133
  %v4833 = vmul.f32 %v2267, %v4133
  %v4834 = vmul.f32 %v2268, %v4134
  %v4835 = vmul.f32 %v2269, %v4134
  %v4836 = vmul.f32 %v2270, %v4135
  %v4837 = vmul.f32 %v2271, %v4135
  %v4838 = vmul.f32 %v2272, %v4136
  %v4839 = vmul.f32 %v2273, %v4136
  %v4840 = vmul.f32 %v2274, %v4137
  %v4841 = vmul.f32 %v2275, %v4137
  %v4842 = vmul.f32 %v2788, %v4346
  %v4843 = vmul.f32 %v2789, %v4346
  %v4844 = vmul.f32 %v2790, %v4347
  %v4845 = vmul.f32 %v2791, %v4347
  %v4846 = vmul.f32 %v2792, %v4348
  %v4847 = vmul.f32 %v2793, %v4348
  %v4848 = vmul.f32 %v2794, %v4349
  %v4849 = vmul.f32 %v2795, %v4349
  %v4850 = vmul.f32 %v2796, %v4350
  %v4851 = vmul.f32 %v2797, %v4350
  %v4852 = vmul.f32 %v2798, %v4351
  %v4853 = vmul.f32 %v2799, %v4351
  %v4854 = vmul.f32 %v2800, %v4352
  %v4855 = vmul.f32 %v2801, %v4352
  %v4856 = vmul.f32 %v2802, %v4353
  %v4857 = vmul.f32 %v2803, %v4353
  %v4858 = vmul.f32 %v2804, %v4354
  %v4859 = vmul.f32 %v2805, %v4354
  %v4860 = vmul.f32 %v2806, %v4355
  %v4861 = vmul.f32 %v2807, %v4355
  %v4862 = vmul.f32 %v2808, %v4356
  %v4863 = vmul.f32 %v2809, %v4356
  %v4864 = vmul.f32 %v2810, %v4357
  %v4865 = vmul.f32 %v2811, %v4357
  %v4866 = vmul.f32 %v2812, %v4358
  %v4867 = vmul.f32 %v2813, %v4358
  %v4868 = vmul.f32 %v2814, %v4359
  %v4869 = vmul.f32 %v2815, %v4359
  %v4870 = vmul.f32 %v2816, %v4360
  %v4871 = vmul.f32 %v2817, %v4360
  %v4872 = vmul.f32 %v2818, %v4361
  %v4873 = vmul.f32 %v2819, %v4361
  %v4874 = vadd.f32 %v4810, %v4842
  %v4875 = vadd.f32 %v4811, %v4843
  %v4876 = vadd.f32 %v4812, %v4844
  %v4877 = vadd.f32 %v4813, %v4845
  %v4878 = vadd.f32 %v4814, %v4846
  %v4879 = vadd.f32 %v4815, %v4847
  %v4880 = vadd.f32 %v4816, %v4848
  %v4881 = vadd.f32 %v4817, %v4849
  %v4882 = vadd.f32 %v4818, %v4850
  %v4883 = vadd.f32 %v4819, %v4851
  %v4884 = vadd.f32 %v4820, %v4852
  %v4885 = vadd.f32 %v4821, %v4853
  %v4886 = vadd.f32 %v4822, %v4854
  %v4887 = vadd.f32 %v4823, %v4855
  %v4888 = vadd.f32 %v4824, %v4856
  %v4889 = vadd.f32 %v4825, %v4857
  %v4890 = vadd.f32 %v4826, %v4858
  %v4891 = vadd.f32 %v4827, %v4859
  %v4892 = vadd.f32 %v4828, %v4860
  %v4893 = vadd.f32 %v4829, %v4861
  %v4894 = vadd.f32 %v4830, %v4862
  %v4895 = vadd.f32 %v4831, %v4863
  %v4896 = vadd.f32 %v4832, %v4864
  %v4897 = vadd.f32 %v4833, %v4865
  %v4898 = vadd.f32 %v4834, %v4866
  %v4899 = vadd.f32 %v4835, %v4867
  %v4900 = vadd.f32 %v4836, %v4868
  %v4901 = vadd.f32 %v4837, %v4869
  %v4902 = vadd.f32 %v4838, %v4870
  %v4903 = vadd.f32 %v4839, %v4871
  %v4904 = vadd.f32 %v4840, %v4872
  %v4905 = vadd.f32 %v4841, %v4873
  %v4906 = vmul.f32 %v3332, %v4570
  %v4907 = vmul.f32 %v3333, %v4570
  %v4908 = vmul.f32 %v3334, %v4571
  %v4909 = vmul.f32 %v3335, %v4571
  %v4910 = vmul.f32 %v3336, %v4572
  %v4911 = vmul.f32 %v3337, %v4572
  %v4912 = vmul.f32 %v3338, %v4573
  %v4913 = vmul.f32 %v3339, %v4573
  %v4914 = vmul.f32 %v3340, %v4574
  %v4915 = vmul.f32 %v3341, %v4574
  %v4916 = vmul.f32 %v3342, %v4575
  %v4917 = vmul.f32 %v3343, %v4575
  %v4918 = vmul.f32 %v3344, %v4576
  %v4919 = vmul.f32 %v3345, %v4576
  %v4920 = vmul.f32 %v3346, %v4577
  %v4921 = vmul.f32 %v3347, %v4577
  %v4922 = vmul.f32 %v3348, %v4578
  %v4923 = vmul.f32 %v3349, %v4578
  %v4924 = vmul.f32 %v3350, %v4579
  %v4925 = vmul.f32 %v3351, %v4579
  %v4926 = vmul.f32 %v3352, %v4580
  %v4927 = vmul.f32 %v3353, %v4580
  %v4928 = vmul.f32 %v3354, %v4581
  %v4929 = vmul.f32 %v3355, %v4581
  %v4930 = vmul.f32 %v3356, %v4582
  %v4931 = vmul.f32 %v3357, %v4582
  %v4932 = vmul.f32 %v3358, %v4583
  %v4933 = vmul.f32 %v3359, %v4583
  %v4934 = vmul.f32 %v3360, %v4584
  %v4935 = vmul.f32 %v3361, %v4584
  %v4936 = vmul.f32 %v3362, %v4585
  %v4937 = vmul.f32 %v3363, %v4585
  %v4938 = vadd.f32 %v4874, %v4906
  %v4939 = vadd.f32 %v4875, %v4907
  %v4940 = vadd.f32 %v4876, %v4908
  %v4941 = vadd.f32 %v4877, %v4909
  %v4942 = vadd.f32 %v4878, %v4910
  %v4943 = vadd.f32 %v4879, %v4911
  %v4944 = vadd.f32 %v4880, %v4912
  %v4945 = vadd.f32 %v4881, %v4913
  %v4946 = vadd.f32 %v4882, %v4914
  %v4947 = vadd.f32 %v4883, %v4915
  %v4948 = vadd.f32 %v4884, %v4916
  %v4949 = vadd.f32 %v4885, %v4917
  %v4950 = vadd.f32 %v4886, %v4918
  %v4951 = vadd.f32 %v4887, %v4919
  %v4952 = vadd.f32 %v4888, %v4920
  %v4953 = vadd.f32 %v4889, %v4921
  %v4954 = vadd.f32 %v4890, %v4922
  %v4955 = vadd.f32 %v4891, %v4923
  %v4956 = vadd.f32 %v4892, %v4924
  %v4957 = vadd.f32 %v4893, %v4925
  %v4958 = vadd.f32 %v4894, %v4926
  %v4959 = vadd.f32 %v4895, %v4927
  %v4960 = vadd.f32 %v4896, %v4928
  %v4961 = vadd.f32 %v4897, %v4929
  %v4962 = vadd.f32 %v4898, %v4930
  %v4963 = vadd.f32 %v4899, %v4931
  %v4964 = vadd.f32 %v4900, %v4932
  %v4965 = vadd.f32 %v4901, %v4933
  %v4966 = vadd.f32 %v4902, %v4934
  %v4967 = vadd.f32 %v4903, %v4935
  %v4968 = vadd.f32 %v4904, %v4936
  %v4969 = vadd.f32 %v4905, %v4937
  %v4970 = vmul.f32 %v3876, %v4794
  %v4971 = vmul.f32 %v3877, %v4794
  %v4972 = vmul.f32 %v3878, %v4795
  %v4973 = vmul.f32 %v3879, %v4795
  %v4974 = vmul.f32 %v3880, %v4796
  %v4975 = vmul.f32 %v3881, %v4796
  %v4976 = vmul.f32 %v3882, %v4797
  %v4977 = vmul.f32 %v3883, %v4797
  %v4978 = vmul.f32 %v3884, %v4798
  %v4979 = vmul.f32 %v3885, %v4798
  %v4980 = vmul.f32 %v3886, %v4799
  %v4981 = vmul.f32 %v3887, %v4799
  %v4982 = vmul.f32 %v3888, %v4800
  %v4983 = vmul.f32 %v3889, %v4800
  %v4984 = vmul.f32 %v3890, %v4801
  %v4985 = vmul.f32 %v3891, %v4801
  %v4986 = vmul.f32 %v3892, %v4802
  %v4987 = vmul.f32 %v3893, %v4802
  %v4988 = vmul.f32 %v3894, %v4803
  %v4989 = vmul.f32 %v3895, %v4803
  %v4990 = vmul.f32 %v3896, %v4804
  %v4991 = vmul.f32 %v3897, %v4804
  %v4992 = vmul.f32 %v3898, %v4805
  %v4993 = vmul.f32 %v3899, %v4805
  %v4994 = vmul.f32 %v3900, %v4806
  %v4995 = vmul.f32 %v3901, %v4806
  %v4996 = vmul.f32 %v3902, %v4807
  %v4997 = vmul.f32 %v3903, %v4807
  %v4998 = vmul.f32 %v3904, %v4808
  %v4999 = vmul.f32 %v3905, %v4808
  %v5000 = vmul.f32 %v3906, %v4809
  %v5001 = vmul.f32 %v3907, %v4809
  %v5002 = vadd.f32 %v4938, %v4970
  %v5003 = vadd.f32 %v4939, %v4971
  %v5004 = vadd.f32 %v4940, %v4972
  %v5005 = vadd.f32 %v4941, %v4973
  %v5006 = vadd.f32 %v4942, %v4974
  %v5007 = vadd.f32 %v4943, %v4975
  %v5008 = vadd.f32 %v4944, %v4976
  %v5009 = vadd.f32 %v4945, %v4977
  %v5010 = vadd.f32 %v4946, %v4978
  %v5011 = vadd.f32 %v4947, %v4979
  %v5012 = vadd.f32 %v4948, %v4980
  %v5013 = vadd.f32 %v4949, %v4981
  %v5014 = vadd.f32 %v4950, %v4982
  %v5015 = vadd.f32 %v4951, %v4983
  %v5016 = vadd.f32 %v4952, %v4984
  %v5017 = vadd.f32 %v4953, %v4985
  %v5018 = vadd.f32 %v4954, %v4986
  %v5019 = vadd.f32 %v4955, %v4987
  %v5020 = vadd.f32 %v4956, %v4988
  %v5021 = vadd.f32 %v4957, %v4989
  %v5022 = vadd.f32 %v4958, %v4990
  %v5023 = vadd.f32 %v4959, %v4991
  %v5024 = vadd.f32 %v4960, %v4992
  %v5025 = vadd.f32 %v4961, %v4993
  %v5026 = vadd.f32 %v4962, %v4994
  %v5027 = vadd.f32 %v4963, %v4995
  %v5028 = vadd.f32 %v4964, %v4996
  %v5029 = vadd.f32 %v4965, %v4997
  %v5030 = vadd.f32 %v4966, %v4998
  %v5031 = vadd.f32 %v4967, %v4999
  %v5032 = vadd.f32 %v4968, %v5000
  %v5033 = vadd.f32 %v4969, %v5001
  %v5034 = vadd.f32 %v5002, %v5004
  %v5035 = vadd.f32 %v5034, %v5006
  %v5036 = vadd.f32 %v5035, %v5008
  %v5037 = vadd.f32 %v5036, %v5010
  %v5038 = vadd.f32 %v5037, %v5012
  %v5039 = vadd.f32 %v5038, %v5014
  %v5040 = vadd.f32 %v5039, %v5016
  %v5041 = vrot.slane %v5040, 4
  %v5042 = vadd.f32 %v5040, %v5041
  %v5043 = vrot.slane %v5042, 2
  %v5044 = vadd.f32 %v5042, %v5043
  %v5045 = vrot.slane %v5044, 1
  %v5046 = vadd.f32 %v5044, %v5045
  %v5047 = vsel %vm594, %v5003, 0.0
  %v5048 = vsel %vm594, %v5005, 0.0
  %v5049 = vadd.f32 %v5047, %v5048
  %v5050 = vsel %vm594, %v5007, 0.0
  %v5051 = vadd.f32 %v5049, %v5050
  %v5052 = vsel %vm594, %v5009, 0.0
  %v5053 = vadd.f32 %v5051, %v5052
  %v5054 = vsel %vm594, %v5011, 0.0
  %v5055 = vadd.f32 %v5053, %v5054
  %v5056 = vsel %vm594, %v5013, 0.0
  %v5057 = vadd.f32 %v5055, %v5056
  %v5058 = vsel %vm594, %v5015, 0.0
  %v5059 = vadd.f32 %v5057, %v5058
  %v5060 = vsel %vm594, %v5017, 0.0
  %v5061 = vadd.f32 %v5059, %v5060
  %v5062 = vrot.slane %v5061, 4
  %v5063 = vadd.f32 %v5061, %v5062
  %v5064 = vrot.slane %v5063, 2
  %v5065 = vadd.f32 %v5063, %v5064
  %v5066 = vrot.slane %v5065, 1
  %v5067 = vadd.f32 %v5065, %v5066
  %v5068 = vmul.f32 %v5046, 0.25
  %v5069 = vmul.f32 %v5067, 0.25
  %v5070 = vadd.f32 %v5068, 0.0
  %v5071 = vadd.f32 %v5069, 0.0
  %v5072 = vadd.f32 %v5018, %v5020
  %v5073 = vadd.f32 %v5072, %v5022
  %v5074 = vadd.f32 %v5073, %v5024
  %v5075 = vadd.f32 %v5074, %v5026
  %v5076 = vadd.f32 %v5075, %v5028
  %v5077 = vadd.f32 %v5076, %v5030
  %v5078 = vadd.f32 %v5077, %v5032
  %v5079 = vrot.slane %v5078, 4
  %v5080 = vadd.f32 %v5078, %v5079
  %v5081 = vrot.slane %v5080, 2
  %v5082 = vadd.f32 %v5080, %v5081
  %v5083 = vrot.slane %v5082, 1
  %v5084 = vadd.f32 %v5082, %v5083
  %v5085 = vsel %vm594, %v5019, 0.0
  %v5086 = vsel %vm594, %v5021, 0.0
  %v5087 = vadd.f32 %v5085, %v5086
  %v5088 = vsel %vm594, %v5023, 0.0
  %v5089 = vadd.f32 %v5087, %v5088
  %v5090 = vsel %vm594, %v5025, 0.0
  %v5091 = vadd.f32 %v5089, %v5090
  %v5092 = vsel %vm594, %v5027, 0.0
  %v5093 = vadd.f32 %v5091, %v5092
  %v5094 = vsel %vm594, %v5029, 0.0
  %v5095 = vadd.f32 %v5093, %v5094
  %v5096 = vsel %vm594, %v5031, 0.0
  %v5097 = vadd.f32 %v5095, %v5096
  %v5098 = vsel %vm594, %v5033, 0.0
  %v5099 = vadd.f32 %v5097, %v5098
  %v5100 = vrot.slane %v5099, 4
  %v5101 = vadd.f32 %v5099, %v5100
  %v5102 = vrot.slane %v5101, 2
  %v5103 = vadd.f32 %v5101, %v5102
  %v5104 = vrot.slane %v5103, 1
  %v5105 = vadd.f32 %v5103, %v5104
  %v5106 = vmul.f32 %v5084, 0.25
  %v5107 = vmul.f32 %v5105, 0.25
  %v5108 = vadd.f32 %v5106, 0.0
  %v5109 = vadd.f32 %v5107, 0.0
  %v5110 = vsel %vm594, %v5071, -inf
  %v5111 = vmax.f32 %v5070, %v5110
  %5112 = vmax.xlane.f32.xlu0 %v5111
  %v5113 = vpop.xlane.xlu0 %5112
  %v5114 = vsel %vm594, %v5109, -inf
  %v5115 = vmax.f32 %v5108, %v5114
  %5116 = vmax.xlane.f32.xlu0 %v5115
  %v5117 = vpop.xlane.xlu0 %5116
  %v5118 = vsub.f32 %v5070, %v5113
  %v5119 = vsub.f32 %v5071, %v5113
  %v5120 = vsub.f32 %v5108, %v5117
  %v5121 = vsub.f32 %v5109, %v5117
  %v5122 = vmul.f32 %v5118, 1.442695
  %v5123 = vpow.pop %v5122
  %v5124 = vmul.f32 %v5119, 1.442695
  %v5125 = vpow.pop %v5124
  %v5126 = vmul.f32 %v5120, 1.442695
  %v5127 = vpow.pop %v5126
  %v5128 = vmul.f32 %v5121, 1.442695
  %v5129 = vpow.pop %v5128
  %v5130 = vsel %vm594, %v5125, 0.0
  %v5131 = vadd.f32 %v5123, %v5130
  %5132 = vadd.xlane.f32.xlu0 %v5131
  %v5133 = vpop.xlane.xlu0 %5132
  %v5134 = vsel %vm594, %v5129, 0.0
  %v5135 = vadd.f32 %v5127, %v5134
  %5136 = vadd.xlane.f32.xlu0 %v5135
  %v5137 = vpop.xlane.xlu0 %5136
  %v5138 = vrcp.pop %v5133
  %v5139 = vmul.f32 %v5123, %v5138
  %v5140 = vmul.f32 %v5125, %v5138
  %v5141 = vrcp.pop %v5137
  %v5142 = vmul.f32 %v5127, %v5141
  %v5143 = vmul.f32 %v5129, %v5141
  %v5144 = vmul.f32 %v5139, %v2244
  %v5145 = vmul.f32 %v5140, %v2245
  %v5146 = vmul.f32 %v5139, %v2246
  %v5147 = vmul.f32 %v5140, %v2247
  %v5148 = vmul.f32 %v5139, %v2248
  %v5149 = vmul.f32 %v5140, %v2249
  %v5150 = vmul.f32 %v5139, %v2250
  %v5151 = vmul.f32 %v5140, %v2251
  %v5152 = vmul.f32 %v5139, %v2252
  %v5153 = vmul.f32 %v5140, %v2253
  %v5154 = vmul.f32 %v5139, %v2254
  %v5155 = vmul.f32 %v5140, %v2255
  %v5156 = vmul.f32 %v5139, %v2256
  %v5157 = vmul.f32 %v5140, %v2257
  %v5158 = vmul.f32 %v5139, %v2258
  %v5159 = vmul.f32 %v5140, %v2259
  %v5160 = vmul.f32 %v5142, %v2260
  %v5161 = vmul.f32 %v5143, %v2261
  %v5162 = vmul.f32 %v5142, %v2262
  %v5163 = vmul.f32 %v5143, %v2263
  %v5164 = vmul.f32 %v5142, %v2264
  %v5165 = vmul.f32 %v5143, %v2265
  %v5166 = vmul.f32 %v5142, %v2266
  %v5167 = vmul.f32 %v5143, %v2267
  %v5168 = vmul.f32 %v5142, %v2268
  %v5169 = vmul.f32 %v5143, %v2269
  %v5170 = vmul.f32 %v5142, %v2270
  %v5171 = vmul.f32 %v5143, %v2271
  %v5172 = vmul.f32 %v5142, %v2272
  %v5173 = vmul.f32 %v5143, %v2273
  %v5174 = vmul.f32 %v5142, %v2274
  %v5175 = vmul.f32 %v5143, %v2275
  %v5176 = vsel %vm594, %v5145, 0.0
  %v5177 = vadd.f32 %v5144, %v5176
  %5178 = vadd.xlane.f32.xlu0 %v5177
  %v5179 = vpop.xlane.xlu0 %5178
  %v5180 = vsel %vm594, %v5147, 0.0
  %v5181 = vadd.f32 %v5146, %v5180
  %5182 = vadd.xlane.f32.xlu0 %v5181
  %v5183 = vpop.xlane.xlu0 %5182
  %v5184 = vsel %vm594, %v5149, 0.0
  %v5185 = vadd.f32 %v5148, %v5184
  %5186 = vadd.xlane.f32.xlu0 %v5185
  %v5187 = vpop.xlane.xlu0 %5186
  %v5188 = vsel %vm594, %v5151, 0.0
  %v5189 = vadd.f32 %v5150, %v5188
  %5190 = vadd.xlane.f32.xlu0 %v5189
  %v5191 = vpop.xlane.xlu0 %5190
  %v5192 = vsel %vm594, %v5153, 0.0
  %v5193 = vadd.f32 %v5152, %v5192
  %5194 = vadd.xlane.f32.xlu0 %v5193
  %v5195 = vpop.xlane.xlu0 %5194
  %v5196 = vsel %vm594, %v5155, 0.0
  %v5197 = vadd.f32 %v5154, %v5196
  %5198 = vadd.xlane.f32.xlu0 %v5197
  %v5199 = vpop.xlane.xlu0 %5198
  %v5200 = vsel %vm594, %v5157, 0.0
  %v5201 = vadd.f32 %v5156, %v5200
  %5202 = vadd.xlane.f32.xlu0 %v5201
  %v5203 = vpop.xlane.xlu0 %5202
  %v5204 = vsel %vm594, %v5159, 0.0
  %v5205 = vadd.f32 %v5158, %v5204
  %5206 = vadd.xlane.f32.xlu0 %v5205
  %v5207 = vpop.xlane.xlu0 %5206
  %v5208 = vsel %vm594, %v5161, 0.0
  %v5209 = vadd.f32 %v5160, %v5208
  %5210 = vadd.xlane.f32.xlu0 %v5209
  %v5211 = vpop.xlane.xlu0 %5210
  %v5212 = vsel %vm594, %v5163, 0.0
  %v5213 = vadd.f32 %v5162, %v5212
  %5214 = vadd.xlane.f32.xlu0 %v5213
  %v5215 = vpop.xlane.xlu0 %5214
  %v5216 = vsel %vm594, %v5165, 0.0
  %v5217 = vadd.f32 %v5164, %v5216
  %5218 = vadd.xlane.f32.xlu0 %v5217
  %v5219 = vpop.xlane.xlu0 %5218
  %v5220 = vsel %vm594, %v5167, 0.0
  %v5221 = vadd.f32 %v5166, %v5220
  %5222 = vadd.xlane.f32.xlu0 %v5221
  %v5223 = vpop.xlane.xlu0 %5222
  %v5224 = vsel %vm594, %v5169, 0.0
  %v5225 = vadd.f32 %v5168, %v5224
  %5226 = vadd.xlane.f32.xlu0 %v5225
  %v5227 = vpop.xlane.xlu0 %5226
  %v5228 = vsel %vm594, %v5171, 0.0
  %v5229 = vadd.f32 %v5170, %v5228
  %5230 = vadd.xlane.f32.xlu0 %v5229
  %v5231 = vpop.xlane.xlu0 %5230
  %v5232 = vsel %vm594, %v5173, 0.0
  %v5233 = vadd.f32 %v5172, %v5232
  %5234 = vadd.xlane.f32.xlu0 %v5233
  %v5235 = vpop.xlane.xlu0 %5234
  %v5236 = vsel %vm594, %v5175, 0.0
  %v5237 = vadd.f32 %v5174, %v5236
  %5238 = vadd.xlane.f32.xlu0 %v5237
  %v5239 = vpop.xlane.xlu0 %5238
  %v5240 = vmul.f32 %v5179, %v5179
  %v5241 = vmul.f32 %v5183, %v5183
  %v5242 = vmul.f32 %v5187, %v5187
  %v5243 = vmul.f32 %v5191, %v5191
  %v5244 = vmul.f32 %v5195, %v5195
  %v5245 = vmul.f32 %v5199, %v5199
  %v5246 = vmul.f32 %v5203, %v5203
  %v5247 = vmul.f32 %v5207, %v5207
  %v5248 = vmul.f32 %v5211, %v5211
  %v5249 = vmul.f32 %v5215, %v5215
  %v5250 = vmul.f32 %v5219, %v5219
  %v5251 = vmul.f32 %v5223, %v5223
  %v5252 = vmul.f32 %v5227, %v5227
  %v5253 = vmul.f32 %v5231, %v5231
  %v5254 = vmul.f32 %v5235, %v5235
  %v5255 = vmul.f32 %v5239, %v5239
  %v5256 = vmul.f32 %v5240, %v5179
  %v5257 = vmul.f32 %v5241, %v5183
  %v5258 = vmul.f32 %v5242, %v5187
  %v5259 = vmul.f32 %v5243, %v5191
  %v5260 = vmul.f32 %v5244, %v5195
  %v5261 = vmul.f32 %v5245, %v5199
  %v5262 = vmul.f32 %v5246, %v5203
  %v5263 = vmul.f32 %v5247, %v5207
  %v5264 = vmul.f32 %v5248, %v5211
  %v5265 = vmul.f32 %v5249, %v5215
  %v5266 = vmul.f32 %v5250, %v5219
  %v5267 = vmul.f32 %v5251, %v5223
  %v5268 = vmul.f32 %v5252, %v5227
  %v5269 = vmul.f32 %v5253, %v5231
  %v5270 = vmul.f32 %v5254, %v5235
  %v5271 = vmul.f32 %v5255, %v5239
  %v5272 = vadd.f32 %v5240, 1e-07
  %v5273 = vadd.f32 %v5241, 1e-07
  %v5274 = vadd.f32 %v5242, 1e-07
  %v5275 = vadd.f32 %v5243, 1e-07
  %v5276 = vadd.f32 %v5244, 1e-07
  %v5277 = vadd.f32 %v5245, 1e-07
  %v5278 = vadd.f32 %v5246, 1e-07
  %v5279 = vadd.f32 %v5247, 1e-07
  %v5280 = vadd.f32 %v5248, 1e-07
  %v5281 = vadd.f32 %v5249, 1e-07
  %v5282 = vadd.f32 %v5250, 1e-07
  %v5283 = vadd.f32 %v5251, 1e-07
  %v5284 = vadd.f32 %v5252, 1e-07
  %v5285 = vadd.f32 %v5253, 1e-07
  %v5286 = vadd.f32 %v5254, 1e-07
  %v5287 = vadd.f32 %v5255, 1e-07
  %v5288 = vrsqrt.pop %v5272
  %v5289 = vrsqrt.pop %v5273
  %v5290 = vrsqrt.pop %v5274
  %v5291 = vrsqrt.pop %v5275
  %v5292 = vrsqrt.pop %v5276
  %v5293 = vrsqrt.pop %v5277
  %v5294 = vrsqrt.pop %v5278
  %v5295 = vrsqrt.pop %v5279
  %v5296 = vrsqrt.pop %v5280
  %v5297 = vrsqrt.pop %v5281
  %v5298 = vrsqrt.pop %v5282
  %v5299 = vrsqrt.pop %v5283
  %v5300 = vrsqrt.pop %v5284
  %v5301 = vrsqrt.pop %v5285
  %v5302 = vrsqrt.pop %v5286
  %v5303 = vrsqrt.pop %v5287
  %v5304 = vmul.f32 %v5256, %v5288
  %v5305 = vmul.f32 %v5257, %v5289
  %v5306 = vmul.f32 %v5258, %v5290
  %v5307 = vmul.f32 %v5259, %v5291
  %v5308 = vmul.f32 %v5260, %v5292
  %v5309 = vmul.f32 %v5261, %v5293
  %v5310 = vmul.f32 %v5262, %v5294
  %v5311 = vmul.f32 %v5263, %v5295
  %v5312 = vmul.f32 %v5264, %v5296
  %v5313 = vmul.f32 %v5265, %v5297
  %v5314 = vmul.f32 %v5266, %v5298
  %v5315 = vmul.f32 %v5267, %v5299
  %v5316 = vmul.f32 %v5268, %v5300
  %v5317 = vmul.f32 %v5269, %v5301
  %v5318 = vmul.f32 %v5270, %v5302
  %v5319 = vmul.f32 %v5271, %v5303
  %v5320 = vadd.f32 %v5240, 1.0
  %v5321 = vadd.f32 %v5241, 1.0
  %v5322 = vadd.f32 %v5242, 1.0
  %v5323 = vadd.f32 %v5243, 1.0
  %v5324 = vadd.f32 %v5244, 1.0
  %v5325 = vadd.f32 %v5245, 1.0
  %v5326 = vadd.f32 %v5246, 1.0
  %v5327 = vadd.f32 %v5247, 1.0
  %v5328 = vadd.f32 %v5248, 1.0
  %v5329 = vadd.f32 %v5249, 1.0
  %v5330 = vadd.f32 %v5250, 1.0
  %v5331 = vadd.f32 %v5251, 1.0
  %v5332 = vadd.f32 %v5252, 1.0
  %v5333 = vadd.f32 %v5253, 1.0
  %v5334 = vadd.f32 %v5254, 1.0
  %v5335 = vadd.f32 %v5255, 1.0
  %v5336 = vrcp.pop %v5320
  %v5337 = vrcp.pop %v5321
  %v5338 = vrcp.pop %v5322
  %v5339 = vrcp.pop %v5323
  %v5340 = vrcp.pop %v5324
  %v5341 = vrcp.pop %v5325
  %v5342 = vrcp.pop %v5326
  %v5343 = vrcp.pop %v5327
  %v5344 = vrcp.pop %v5328
  %v5345 = vrcp.pop %v5329
  %v5346 = vrcp.pop %v5330
  %v5347 = vrcp.pop %v5331
  %v5348 = vrcp.pop %v5332
  %v5349 = vrcp.pop %v5333
  %v5350 = vrcp.pop %v5334
  %v5351 = vrcp.pop %v5335
  %v5352 = vmul.f32 %v5304, %v5336
  %v5353 = vmul.f32 %v5305, %v5337
  %v5354 = vmul.f32 %v5306, %v5338
  %v5355 = vmul.f32 %v5307, %v5339
  %v5356 = vmul.f32 %v5308, %v5340
  %v5357 = vmul.f32 %v5309, %v5341
  %v5358 = vmul.f32 %v5310, %v5342
  %v5359 = vmul.f32 %v5311, %v5343
  %v5360 = vmul.f32 %v5312, %v5344
  %v5361 = vmul.f32 %v5313, %v5345
  %v5362 = vmul.f32 %v5314, %v5346
  %v5363 = vmul.f32 %v5315, %v5347
  %v5364 = vmul.f32 %v5316, %v5348
  %v5365 = vmul.f32 %v5317, %v5349
  %v5366 = vmul.f32 %v5318, %v5350
  %v5367 = vmul.f32 %v5319, %v5351
  %v5368 = vmul.f32 %v5139, %v2788
  %v5369 = vmul.f32 %v5140, %v2789
  %v5370 = vmul.f32 %v5139, %v2790
  %v5371 = vmul.f32 %v5140, %v2791
  %v5372 = vmul.f32 %v5139, %v2792
  %v5373 = vmul.f32 %v5140, %v2793
  %v5374 = vmul.f32 %v5139, %v2794
  %v5375 = vmul.f32 %v5140, %v2795
  %v5376 = vmul.f32 %v5139, %v2796
  %v5377 = vmul.f32 %v5140, %v2797
  %v5378 = vmul.f32 %v5139, %v2798
  %v5379 = vmul.f32 %v5140, %v2799
  %v5380 = vmul.f32 %v5139, %v2800
  %v5381 = vmul.f32 %v5140, %v2801
  %v5382 = vmul.f32 %v5139, %v2802
  %v5383 = vmul.f32 %v5140, %v2803
  %v5384 = vmul.f32 %v5142, %v2804
  %v5385 = vmul.f32 %v5143, %v2805
  %v5386 = vmul.f32 %v5142, %v2806
  %v5387 = vmul.f32 %v5143, %v2807
  %v5388 = vmul.f32 %v5142, %v2808
  %v5389 = vmul.f32 %v5143, %v2809
  %v5390 = vmul.f32 %v5142, %v2810
  %v5391 = vmul.f32 %v5143, %v2811
  %v5392 = vmul.f32 %v5142, %v2812
  %v5393 = vmul.f32 %v5143, %v2813
  %v5394 = vmul.f32 %v5142, %v2814
  %v5395 = vmul.f32 %v5143, %v2815
  %v5396 = vmul.f32 %v5142, %v2816
  %v5397 = vmul.f32 %v5143, %v2817
  %v5398 = vmul.f32 %v5142, %v2818
  %v5399 = vmul.f32 %v5143, %v2819
  %v5400 = vsel %vm594, %v5369, 0.0
  %v5401 = vadd.f32 %v5368, %v5400
  %5402 = vadd.xlane.f32.xlu0 %v5401
  %v5403 = vpop.xlane.xlu0 %5402
  %v5404 = vsel %vm594, %v5371, 0.0
  %v5405 = vadd.f32 %v5370, %v5404
  %5406 = vadd.xlane.f32.xlu0 %v5405
  %v5407 = vpop.xlane.xlu0 %5406
  %v5408 = vsel %vm594, %v5373, 0.0
  %v5409 = vadd.f32 %v5372, %v5408
  %5410 = vadd.xlane.f32.xlu0 %v5409
  %v5411 = vpop.xlane.xlu0 %5410
  %v5412 = vsel %vm594, %v5375, 0.0
  %v5413 = vadd.f32 %v5374, %v5412
  %5414 = vadd.xlane.f32.xlu0 %v5413
  %v5415 = vpop.xlane.xlu0 %5414
  %v5416 = vsel %vm594, %v5377, 0.0
  %v5417 = vadd.f32 %v5376, %v5416
  %5418 = vadd.xlane.f32.xlu0 %v5417
  %v5419 = vpop.xlane.xlu0 %5418
  %v5420 = vsel %vm594, %v5379, 0.0
  %v5421 = vadd.f32 %v5378, %v5420
  %5422 = vadd.xlane.f32.xlu0 %v5421
  %v5423 = vpop.xlane.xlu0 %5422
  %v5424 = vsel %vm594, %v5381, 0.0
  %v5425 = vadd.f32 %v5380, %v5424
  %5426 = vadd.xlane.f32.xlu0 %v5425
  %v5427 = vpop.xlane.xlu0 %5426
  %v5428 = vsel %vm594, %v5383, 0.0
  %v5429 = vadd.f32 %v5382, %v5428
  %5430 = vadd.xlane.f32.xlu0 %v5429
  %v5431 = vpop.xlane.xlu0 %5430
  %v5432 = vsel %vm594, %v5385, 0.0
  %v5433 = vadd.f32 %v5384, %v5432
  %5434 = vadd.xlane.f32.xlu0 %v5433
  %v5435 = vpop.xlane.xlu0 %5434
  %v5436 = vsel %vm594, %v5387, 0.0
  %v5437 = vadd.f32 %v5386, %v5436
  %5438 = vadd.xlane.f32.xlu0 %v5437
  %v5439 = vpop.xlane.xlu0 %5438
  %v5440 = vsel %vm594, %v5389, 0.0
  %v5441 = vadd.f32 %v5388, %v5440
  %5442 = vadd.xlane.f32.xlu0 %v5441
  %v5443 = vpop.xlane.xlu0 %5442
  %v5444 = vsel %vm594, %v5391, 0.0
  %v5445 = vadd.f32 %v5390, %v5444
  %5446 = vadd.xlane.f32.xlu0 %v5445
  %v5447 = vpop.xlane.xlu0 %5446
  %v5448 = vsel %vm594, %v5393, 0.0
  %v5449 = vadd.f32 %v5392, %v5448
  %5450 = vadd.xlane.f32.xlu0 %v5449
  %v5451 = vpop.xlane.xlu0 %5450
  %v5452 = vsel %vm594, %v5395, 0.0
  %v5453 = vadd.f32 %v5394, %v5452
  %5454 = vadd.xlane.f32.xlu0 %v5453
  %v5455 = vpop.xlane.xlu0 %5454
  %v5456 = vsel %vm594, %v5397, 0.0
  %v5457 = vadd.f32 %v5396, %v5456
  %5458 = vadd.xlane.f32.xlu0 %v5457
  %v5459 = vpop.xlane.xlu0 %5458
  %v5460 = vsel %vm594, %v5399, 0.0
  %v5461 = vadd.f32 %v5398, %v5460
  %5462 = vadd.xlane.f32.xlu0 %v5461
  %v5463 = vpop.xlane.xlu0 %5462
  %v5464 = vmul.f32 %v5403, %v5403
  %v5465 = vmul.f32 %v5407, %v5407
  %v5466 = vmul.f32 %v5411, %v5411
  %v5467 = vmul.f32 %v5415, %v5415
  %v5468 = vmul.f32 %v5419, %v5419
  %v5469 = vmul.f32 %v5423, %v5423
  %v5470 = vmul.f32 %v5427, %v5427
  %v5471 = vmul.f32 %v5431, %v5431
  %v5472 = vmul.f32 %v5435, %v5435
  %v5473 = vmul.f32 %v5439, %v5439
  %v5474 = vmul.f32 %v5443, %v5443
  %v5475 = vmul.f32 %v5447, %v5447
  %v5476 = vmul.f32 %v5451, %v5451
  %v5477 = vmul.f32 %v5455, %v5455
  %v5478 = vmul.f32 %v5459, %v5459
  %v5479 = vmul.f32 %v5463, %v5463
  %v5480 = vmul.f32 %v5464, %v5403
  %v5481 = vmul.f32 %v5465, %v5407
  %v5482 = vmul.f32 %v5466, %v5411
  %v5483 = vmul.f32 %v5467, %v5415
  %v5484 = vmul.f32 %v5468, %v5419
  %v5485 = vmul.f32 %v5469, %v5423
  %v5486 = vmul.f32 %v5470, %v5427
  %v5487 = vmul.f32 %v5471, %v5431
  %v5488 = vmul.f32 %v5472, %v5435
  %v5489 = vmul.f32 %v5473, %v5439
  %v5490 = vmul.f32 %v5474, %v5443
  %v5491 = vmul.f32 %v5475, %v5447
  %v5492 = vmul.f32 %v5476, %v5451
  %v5493 = vmul.f32 %v5477, %v5455
  %v5494 = vmul.f32 %v5478, %v5459
  %v5495 = vmul.f32 %v5479, %v5463
  %v5496 = vadd.f32 %v5464, 1e-07
  %v5497 = vadd.f32 %v5465, 1e-07
  %v5498 = vadd.f32 %v5466, 1e-07
  %v5499 = vadd.f32 %v5467, 1e-07
  %v5500 = vadd.f32 %v5468, 1e-07
  %v5501 = vadd.f32 %v5469, 1e-07
  %v5502 = vadd.f32 %v5470, 1e-07
  %v5503 = vadd.f32 %v5471, 1e-07
  %v5504 = vadd.f32 %v5472, 1e-07
  %v5505 = vadd.f32 %v5473, 1e-07
  %v5506 = vadd.f32 %v5474, 1e-07
  %v5507 = vadd.f32 %v5475, 1e-07
  %v5508 = vadd.f32 %v5476, 1e-07
  %v5509 = vadd.f32 %v5477, 1e-07
  %v5510 = vadd.f32 %v5478, 1e-07
  %v5511 = vadd.f32 %v5479, 1e-07
  %v5512 = vrsqrt.pop %v5496
  %v5513 = vrsqrt.pop %v5497
  %v5514 = vrsqrt.pop %v5498
  %v5515 = vrsqrt.pop %v5499
  %v5516 = vrsqrt.pop %v5500
  %v5517 = vrsqrt.pop %v5501
  %v5518 = vrsqrt.pop %v5502
  %v5519 = vrsqrt.pop %v5503
  %v5520 = vrsqrt.pop %v5504
  %v5521 = vrsqrt.pop %v5505
  %v5522 = vrsqrt.pop %v5506
  %v5523 = vrsqrt.pop %v5507
  %v5524 = vrsqrt.pop %v5508
  %v5525 = vrsqrt.pop %v5509
  %v5526 = vrsqrt.pop %v5510
  %v5527 = vrsqrt.pop %v5511
  %v5528 = vmul.f32 %v5480, %v5512
  %v5529 = vmul.f32 %v5481, %v5513
  %v5530 = vmul.f32 %v5482, %v5514
  %v5531 = vmul.f32 %v5483, %v5515
  %v5532 = vmul.f32 %v5484, %v5516
  %v5533 = vmul.f32 %v5485, %v5517
  %v5534 = vmul.f32 %v5486, %v5518
  %v5535 = vmul.f32 %v5487, %v5519
  %v5536 = vmul.f32 %v5488, %v5520
  %v5537 = vmul.f32 %v5489, %v5521
  %v5538 = vmul.f32 %v5490, %v5522
  %v5539 = vmul.f32 %v5491, %v5523
  %v5540 = vmul.f32 %v5492, %v5524
  %v5541 = vmul.f32 %v5493, %v5525
  %v5542 = vmul.f32 %v5494, %v5526
  %v5543 = vmul.f32 %v5495, %v5527
  %v5544 = vadd.f32 %v5464, 1.0
  %v5545 = vadd.f32 %v5465, 1.0
  %v5546 = vadd.f32 %v5466, 1.0
  %v5547 = vadd.f32 %v5467, 1.0
  %v5548 = vadd.f32 %v5468, 1.0
  %v5549 = vadd.f32 %v5469, 1.0
  %v5550 = vadd.f32 %v5470, 1.0
  %v5551 = vadd.f32 %v5471, 1.0
  %v5552 = vadd.f32 %v5472, 1.0
  %v5553 = vadd.f32 %v5473, 1.0
  %v5554 = vadd.f32 %v5474, 1.0
  %v5555 = vadd.f32 %v5475, 1.0
  %v5556 = vadd.f32 %v5476, 1.0
  %v5557 = vadd.f32 %v5477, 1.0
  %v5558 = vadd.f32 %v5478, 1.0
  %v5559 = vadd.f32 %v5479, 1.0
  %v5560 = vrcp.pop %v5544
  %v5561 = vrcp.pop %v5545
  %v5562 = vrcp.pop %v5546
  %v5563 = vrcp.pop %v5547
  %v5564 = vrcp.pop %v5548
  %v5565 = vrcp.pop %v5549
  %v5566 = vrcp.pop %v5550
  %v5567 = vrcp.pop %v5551
  %v5568 = vrcp.pop %v5552
  %v5569 = vrcp.pop %v5553
  %v5570 = vrcp.pop %v5554
  %v5571 = vrcp.pop %v5555
  %v5572 = vrcp.pop %v5556
  %v5573 = vrcp.pop %v5557
  %v5574 = vrcp.pop %v5558
  %v5575 = vrcp.pop %v5559
  %v5576 = vmul.f32 %v5528, %v5560
  %v5577 = vmul.f32 %v5529, %v5561
  %v5578 = vmul.f32 %v5530, %v5562
  %v5579 = vmul.f32 %v5531, %v5563
  %v5580 = vmul.f32 %v5532, %v5564
  %v5581 = vmul.f32 %v5533, %v5565
  %v5582 = vmul.f32 %v5534, %v5566
  %v5583 = vmul.f32 %v5535, %v5567
  %v5584 = vmul.f32 %v5536, %v5568
  %v5585 = vmul.f32 %v5537, %v5569
  %v5586 = vmul.f32 %v5538, %v5570
  %v5587 = vmul.f32 %v5539, %v5571
  %v5588 = vmul.f32 %v5540, %v5572
  %v5589 = vmul.f32 %v5541, %v5573
  %v5590 = vmul.f32 %v5542, %v5574
  %v5591 = vmul.f32 %v5543, %v5575
  %v5592 = vmul.f32 %v5139, %v3332
  %v5593 = vmul.f32 %v5140, %v3333
  %v5594 = vmul.f32 %v5139, %v3334
  %v5595 = vmul.f32 %v5140, %v3335
  %v5596 = vmul.f32 %v5139, %v3336
  %v5597 = vmul.f32 %v5140, %v3337
  %v5598 = vmul.f32 %v5139, %v3338
  %v5599 = vmul.f32 %v5140, %v3339
  %v5600 = vmul.f32 %v5139, %v3340
  %v5601 = vmul.f32 %v5140, %v3341
  %v5602 = vmul.f32 %v5139, %v3342
  %v5603 = vmul.f32 %v5140, %v3343
  %v5604 = vmul.f32 %v5139, %v3344
  %v5605 = vmul.f32 %v5140, %v3345
  %v5606 = vmul.f32 %v5139, %v3346
  %v5607 = vmul.f32 %v5140, %v3347
  %v5608 = vmul.f32 %v5142, %v3348
  %v5609 = vmul.f32 %v5143, %v3349
  %v5610 = vmul.f32 %v5142, %v3350
  %v5611 = vmul.f32 %v5143, %v3351
  %v5612 = vmul.f32 %v5142, %v3352
  %v5613 = vmul.f32 %v5143, %v3353
  %v5614 = vmul.f32 %v5142, %v3354
  %v5615 = vmul.f32 %v5143, %v3355
  %v5616 = vmul.f32 %v5142, %v3356
  %v5617 = vmul.f32 %v5143, %v3357
  %v5618 = vmul.f32 %v5142, %v3358
  %v5619 = vmul.f32 %v5143, %v3359
  %v5620 = vmul.f32 %v5142, %v3360
  %v5621 = vmul.f32 %v5143, %v3361
  %v5622 = vmul.f32 %v5142, %v3362
  %v5623 = vmul.f32 %v5143, %v3363
  %v5624 = vsel %vm594, %v5593, 0.0
  %v5625 = vadd.f32 %v5592, %v5624
  %5626 = vadd.xlane.f32.xlu0 %v5625
  %v5627 = vpop.xlane.xlu0 %5626
  %v5628 = vsel %vm594, %v5595, 0.0
  %v5629 = vadd.f32 %v5594, %v5628
  %5630 = vadd.xlane.f32.xlu0 %v5629
  %v5631 = vpop.xlane.xlu0 %5630
  %v5632 = vsel %vm594, %v5597, 0.0
  %v5633 = vadd.f32 %v5596, %v5632
  %5634 = vadd.xlane.f32.xlu0 %v5633
  %v5635 = vpop.xlane.xlu0 %5634
  %v5636 = vsel %vm594, %v5599, 0.0
  %v5637 = vadd.f32 %v5598, %v5636
  %5638 = vadd.xlane.f32.xlu0 %v5637
  %v5639 = vpop.xlane.xlu0 %5638
  %v5640 = vsel %vm594, %v5601, 0.0
  %v5641 = vadd.f32 %v5600, %v5640
  %5642 = vadd.xlane.f32.xlu0 %v5641
  %v5643 = vpop.xlane.xlu0 %5642
  %v5644 = vsel %vm594, %v5603, 0.0
  %v5645 = vadd.f32 %v5602, %v5644
  %5646 = vadd.xlane.f32.xlu0 %v5645
  %v5647 = vpop.xlane.xlu0 %5646
  %v5648 = vsel %vm594, %v5605, 0.0
  %v5649 = vadd.f32 %v5604, %v5648
  %5650 = vadd.xlane.f32.xlu0 %v5649
  %v5651 = vpop.xlane.xlu0 %5650
  %v5652 = vsel %vm594, %v5607, 0.0
  %v5653 = vadd.f32 %v5606, %v5652
  %5654 = vadd.xlane.f32.xlu0 %v5653
  %v5655 = vpop.xlane.xlu0 %5654
  %v5656 = vsel %vm594, %v5609, 0.0
  %v5657 = vadd.f32 %v5608, %v5656
  %5658 = vadd.xlane.f32.xlu0 %v5657
  %v5659 = vpop.xlane.xlu0 %5658
  %v5660 = vsel %vm594, %v5611, 0.0
  %v5661 = vadd.f32 %v5610, %v5660
  %5662 = vadd.xlane.f32.xlu0 %v5661
  %v5663 = vpop.xlane.xlu0 %5662
  %v5664 = vsel %vm594, %v5613, 0.0
  %v5665 = vadd.f32 %v5612, %v5664
  %5666 = vadd.xlane.f32.xlu0 %v5665
  %v5667 = vpop.xlane.xlu0 %5666
  %v5668 = vsel %vm594, %v5615, 0.0
  %v5669 = vadd.f32 %v5614, %v5668
  %5670 = vadd.xlane.f32.xlu0 %v5669
  %v5671 = vpop.xlane.xlu0 %5670
  %v5672 = vsel %vm594, %v5617, 0.0
  %v5673 = vadd.f32 %v5616, %v5672
  %5674 = vadd.xlane.f32.xlu0 %v5673
  %v5675 = vpop.xlane.xlu0 %5674
  %v5676 = vsel %vm594, %v5619, 0.0
  %v5677 = vadd.f32 %v5618, %v5676
  %5678 = vadd.xlane.f32.xlu0 %v5677
  %v5679 = vpop.xlane.xlu0 %5678
  %v5680 = vsel %vm594, %v5621, 0.0
  %v5681 = vadd.f32 %v5620, %v5680
  %5682 = vadd.xlane.f32.xlu0 %v5681
  %v5683 = vpop.xlane.xlu0 %5682
  %v5684 = vsel %vm594, %v5623, 0.0
  %v5685 = vadd.f32 %v5622, %v5684
  %5686 = vadd.xlane.f32.xlu0 %v5685
  %v5687 = vpop.xlane.xlu0 %5686
  %v5688 = vmul.f32 %v5627, %v5627
  %v5689 = vmul.f32 %v5631, %v5631
  %v5690 = vmul.f32 %v5635, %v5635
  %v5691 = vmul.f32 %v5639, %v5639
  %v5692 = vmul.f32 %v5643, %v5643
  %v5693 = vmul.f32 %v5647, %v5647
  %v5694 = vmul.f32 %v5651, %v5651
  %v5695 = vmul.f32 %v5655, %v5655
  %v5696 = vmul.f32 %v5659, %v5659
  %v5697 = vmul.f32 %v5663, %v5663
  %v5698 = vmul.f32 %v5667, %v5667
  %v5699 = vmul.f32 %v5671, %v5671
  %v5700 = vmul.f32 %v5675, %v5675
  %v5701 = vmul.f32 %v5679, %v5679
  %v5702 = vmul.f32 %v5683, %v5683
  %v5703 = vmul.f32 %v5687, %v5687
  %v5704 = vmul.f32 %v5688, %v5627
  %v5705 = vmul.f32 %v5689, %v5631
  %v5706 = vmul.f32 %v5690, %v5635
  %v5707 = vmul.f32 %v5691, %v5639
  %v5708 = vmul.f32 %v5692, %v5643
  %v5709 = vmul.f32 %v5693, %v5647
  %v5710 = vmul.f32 %v5694, %v5651
  %v5711 = vmul.f32 %v5695, %v5655
  %v5712 = vmul.f32 %v5696, %v5659
  %v5713 = vmul.f32 %v5697, %v5663
  %v5714 = vmul.f32 %v5698, %v5667
  %v5715 = vmul.f32 %v5699, %v5671
  %v5716 = vmul.f32 %v5700, %v5675
  %v5717 = vmul.f32 %v5701, %v5679
  %v5718 = vmul.f32 %v5702, %v5683
  %v5719 = vmul.f32 %v5703, %v5687
  %v5720 = vadd.f32 %v5688, 1e-07
  %v5721 = vadd.f32 %v5689, 1e-07
  %v5722 = vadd.f32 %v5690, 1e-07
  %v5723 = vadd.f32 %v5691, 1e-07
  %v5724 = vadd.f32 %v5692, 1e-07
  %v5725 = vadd.f32 %v5693, 1e-07
  %v5726 = vadd.f32 %v5694, 1e-07
  %v5727 = vadd.f32 %v5695, 1e-07
  %v5728 = vadd.f32 %v5696, 1e-07
  %v5729 = vadd.f32 %v5697, 1e-07
  %v5730 = vadd.f32 %v5698, 1e-07
  %v5731 = vadd.f32 %v5699, 1e-07
  %v5732 = vadd.f32 %v5700, 1e-07
  %v5733 = vadd.f32 %v5701, 1e-07
  %v5734 = vadd.f32 %v5702, 1e-07
  %v5735 = vadd.f32 %v5703, 1e-07
  %v5736 = vrsqrt.pop %v5720
  %v5737 = vrsqrt.pop %v5721
  %v5738 = vrsqrt.pop %v5722
  %v5739 = vrsqrt.pop %v5723
  %v5740 = vrsqrt.pop %v5724
  %v5741 = vrsqrt.pop %v5725
  %v5742 = vrsqrt.pop %v5726
  %v5743 = vrsqrt.pop %v5727
  %v5744 = vrsqrt.pop %v5728
  %v5745 = vrsqrt.pop %v5729
  %v5746 = vrsqrt.pop %v5730
  %v5747 = vrsqrt.pop %v5731
  %v5748 = vrsqrt.pop %v5732
  %v5749 = vrsqrt.pop %v5733
  %v5750 = vrsqrt.pop %v5734
  %v5751 = vrsqrt.pop %v5735
  %v5752 = vmul.f32 %v5704, %v5736
  %v5753 = vmul.f32 %v5705, %v5737
  %v5754 = vmul.f32 %v5706, %v5738
  %v5755 = vmul.f32 %v5707, %v5739
  %v5756 = vmul.f32 %v5708, %v5740
  %v5757 = vmul.f32 %v5709, %v5741
  %v5758 = vmul.f32 %v5710, %v5742
  %v5759 = vmul.f32 %v5711, %v5743
  %v5760 = vmul.f32 %v5712, %v5744
  %v5761 = vmul.f32 %v5713, %v5745
  %v5762 = vmul.f32 %v5714, %v5746
  %v5763 = vmul.f32 %v5715, %v5747
  %v5764 = vmul.f32 %v5716, %v5748
  %v5765 = vmul.f32 %v5717, %v5749
  %v5766 = vmul.f32 %v5718, %v5750
  %v5767 = vmul.f32 %v5719, %v5751
  %v5768 = vadd.f32 %v5688, 1.0
  %v5769 = vadd.f32 %v5689, 1.0
  %v5770 = vadd.f32 %v5690, 1.0
  %v5771 = vadd.f32 %v5691, 1.0
  %v5772 = vadd.f32 %v5692, 1.0
  %v5773 = vadd.f32 %v5693, 1.0
  %v5774 = vadd.f32 %v5694, 1.0
  %v5775 = vadd.f32 %v5695, 1.0
  %v5776 = vadd.f32 %v5696, 1.0
  %v5777 = vadd.f32 %v5697, 1.0
  %v5778 = vadd.f32 %v5698, 1.0
  %v5779 = vadd.f32 %v5699, 1.0
  %v5780 = vadd.f32 %v5700, 1.0
  %v5781 = vadd.f32 %v5701, 1.0
  %v5782 = vadd.f32 %v5702, 1.0
  %v5783 = vadd.f32 %v5703, 1.0
  %v5784 = vrcp.pop %v5768
  %v5785 = vrcp.pop %v5769
  %v5786 = vrcp.pop %v5770
  %v5787 = vrcp.pop %v5771
  %v5788 = vrcp.pop %v5772
  %v5789 = vrcp.pop %v5773
  %v5790 = vrcp.pop %v5774
  %v5791 = vrcp.pop %v5775
  %v5792 = vrcp.pop %v5776
  %v5793 = vrcp.pop %v5777
  %v5794 = vrcp.pop %v5778
  %v5795 = vrcp.pop %v5779
  %v5796 = vrcp.pop %v5780
  %v5797 = vrcp.pop %v5781
  %v5798 = vrcp.pop %v5782
  %v5799 = vrcp.pop %v5783
  %v5800 = vmul.f32 %v5752, %v5784
  %v5801 = vmul.f32 %v5753, %v5785
  %v5802 = vmul.f32 %v5754, %v5786
  %v5803 = vmul.f32 %v5755, %v5787
  %v5804 = vmul.f32 %v5756, %v5788
  %v5805 = vmul.f32 %v5757, %v5789
  %v5806 = vmul.f32 %v5758, %v5790
  %v5807 = vmul.f32 %v5759, %v5791
  %v5808 = vmul.f32 %v5760, %v5792
  %v5809 = vmul.f32 %v5761, %v5793
  %v5810 = vmul.f32 %v5762, %v5794
  %v5811 = vmul.f32 %v5763, %v5795
  %v5812 = vmul.f32 %v5764, %v5796
  %v5813 = vmul.f32 %v5765, %v5797
  %v5814 = vmul.f32 %v5766, %v5798
  %v5815 = vmul.f32 %v5767, %v5799
  %v5816 = vmul.f32 %v5139, %v3876
  %v5817 = vmul.f32 %v5140, %v3877
  %v5818 = vmul.f32 %v5139, %v3878
  %v5819 = vmul.f32 %v5140, %v3879
  %v5820 = vmul.f32 %v5139, %v3880
  %v5821 = vmul.f32 %v5140, %v3881
  %v5822 = vmul.f32 %v5139, %v3882
  %v5823 = vmul.f32 %v5140, %v3883
  %v5824 = vmul.f32 %v5139, %v3884
  %v5825 = vmul.f32 %v5140, %v3885
  %v5826 = vmul.f32 %v5139, %v3886
  %v5827 = vmul.f32 %v5140, %v3887
  %v5828 = vmul.f32 %v5139, %v3888
  %v5829 = vmul.f32 %v5140, %v3889
  %v5830 = vmul.f32 %v5139, %v3890
  %v5831 = vmul.f32 %v5140, %v3891
  %v5832 = vmul.f32 %v5142, %v3892
  %v5833 = vmul.f32 %v5143, %v3893
  %v5834 = vmul.f32 %v5142, %v3894
  %v5835 = vmul.f32 %v5143, %v3895
  %v5836 = vmul.f32 %v5142, %v3896
  %v5837 = vmul.f32 %v5143, %v3897
  %v5838 = vmul.f32 %v5142, %v3898
  %v5839 = vmul.f32 %v5143, %v3899
  %v5840 = vmul.f32 %v5142, %v3900
  %v5841 = vmul.f32 %v5143, %v3901
  %v5842 = vmul.f32 %v5142, %v3902
  %v5843 = vmul.f32 %v5143, %v3903
  %v5844 = vmul.f32 %v5142, %v3904
  %v5845 = vmul.f32 %v5143, %v3905
  %v5846 = vmul.f32 %v5142, %v3906
  %v5847 = vmul.f32 %v5143, %v3907
  %v5848 = vsel %vm594, %v5817, 0.0
  %v5849 = vadd.f32 %v5816, %v5848
  %5850 = vadd.xlane.f32.xlu0 %v5849
  %v5851 = vpop.xlane.xlu0 %5850
  %v5852 = vsel %vm594, %v5819, 0.0
  %v5853 = vadd.f32 %v5818, %v5852
  %5854 = vadd.xlane.f32.xlu0 %v5853
  %v5855 = vpop.xlane.xlu0 %5854
  %v5856 = vsel %vm594, %v5821, 0.0
  %v5857 = vadd.f32 %v5820, %v5856
  %5858 = vadd.xlane.f32.xlu0 %v5857
  %v5859 = vpop.xlane.xlu0 %5858
  %v5860 = vsel %vm594, %v5823, 0.0
  %v5861 = vadd.f32 %v5822, %v5860
  %5862 = vadd.xlane.f32.xlu0 %v5861
  %v5863 = vpop.xlane.xlu0 %5862
  %v5864 = vsel %vm594, %v5825, 0.0
  %v5865 = vadd.f32 %v5824, %v5864
  %5866 = vadd.xlane.f32.xlu0 %v5865
  %v5867 = vpop.xlane.xlu0 %5866
  %v5868 = vsel %vm594, %v5827, 0.0
  %v5869 = vadd.f32 %v5826, %v5868
  %5870 = vadd.xlane.f32.xlu0 %v5869
  %v5871 = vpop.xlane.xlu0 %5870
  %v5872 = vsel %vm594, %v5829, 0.0
  %v5873 = vadd.f32 %v5828, %v5872
  %5874 = vadd.xlane.f32.xlu0 %v5873
  %v5875 = vpop.xlane.xlu0 %5874
  %v5876 = vsel %vm594, %v5831, 0.0
  %v5877 = vadd.f32 %v5830, %v5876
  %5878 = vadd.xlane.f32.xlu0 %v5877
  %v5879 = vpop.xlane.xlu0 %5878
  %v5880 = vsel %vm594, %v5833, 0.0
  %v5881 = vadd.f32 %v5832, %v5880
  %5882 = vadd.xlane.f32.xlu0 %v5881
  %v5883 = vpop.xlane.xlu0 %5882
  %v5884 = vsel %vm594, %v5835, 0.0
  %v5885 = vadd.f32 %v5834, %v5884
  %5886 = vadd.xlane.f32.xlu0 %v5885
  %v5887 = vpop.xlane.xlu0 %5886
  %v5888 = vsel %vm594, %v5837, 0.0
  %v5889 = vadd.f32 %v5836, %v5888
  %5890 = vadd.xlane.f32.xlu0 %v5889
  %v5891 = vpop.xlane.xlu0 %5890
  %v5892 = vsel %vm594, %v5839, 0.0
  %v5893 = vadd.f32 %v5838, %v5892
  %5894 = vadd.xlane.f32.xlu0 %v5893
  %v5895 = vpop.xlane.xlu0 %5894
  %v5896 = vsel %vm594, %v5841, 0.0
  %v5897 = vadd.f32 %v5840, %v5896
  %5898 = vadd.xlane.f32.xlu0 %v5897
  %v5899 = vpop.xlane.xlu0 %5898
  %v5900 = vsel %vm594, %v5843, 0.0
  %v5901 = vadd.f32 %v5842, %v5900
  %5902 = vadd.xlane.f32.xlu0 %v5901
  %v5903 = vpop.xlane.xlu0 %5902
  %v5904 = vsel %vm594, %v5845, 0.0
  %v5905 = vadd.f32 %v5844, %v5904
  %5906 = vadd.xlane.f32.xlu0 %v5905
  %v5907 = vpop.xlane.xlu0 %5906
  %v5908 = vsel %vm594, %v5847, 0.0
  %v5909 = vadd.f32 %v5846, %v5908
  %5910 = vadd.xlane.f32.xlu0 %v5909
  %v5911 = vpop.xlane.xlu0 %5910
  %v5912 = vmul.f32 %v5851, %v5851
  %v5913 = vmul.f32 %v5855, %v5855
  %v5914 = vmul.f32 %v5859, %v5859
  %v5915 = vmul.f32 %v5863, %v5863
  %v5916 = vmul.f32 %v5867, %v5867
  %v5917 = vmul.f32 %v5871, %v5871
  %v5918 = vmul.f32 %v5875, %v5875
  %v5919 = vmul.f32 %v5879, %v5879
  %v5920 = vmul.f32 %v5883, %v5883
  %v5921 = vmul.f32 %v5887, %v5887
  %v5922 = vmul.f32 %v5891, %v5891
  %v5923 = vmul.f32 %v5895, %v5895
  %v5924 = vmul.f32 %v5899, %v5899
  %v5925 = vmul.f32 %v5903, %v5903
  %v5926 = vmul.f32 %v5907, %v5907
  %v5927 = vmul.f32 %v5911, %v5911
  %v5928 = vmul.f32 %v5912, %v5851
  %v5929 = vmul.f32 %v5913, %v5855
  %v5930 = vmul.f32 %v5914, %v5859
  %v5931 = vmul.f32 %v5915, %v5863
  %v5932 = vmul.f32 %v5916, %v5867
  %v5933 = vmul.f32 %v5917, %v5871
  %v5934 = vmul.f32 %v5918, %v5875
  %v5935 = vmul.f32 %v5919, %v5879
  %v5936 = vmul.f32 %v5920, %v5883
  %v5937 = vmul.f32 %v5921, %v5887
  %v5938 = vmul.f32 %v5922, %v5891
  %v5939 = vmul.f32 %v5923, %v5895
  %v5940 = vmul.f32 %v5924, %v5899
  %v5941 = vmul.f32 %v5925, %v5903
  %v5942 = vmul.f32 %v5926, %v5907
  %v5943 = vmul.f32 %v5927, %v5911
  %v5944 = vadd.f32 %v5912, 1e-07
  %v5945 = vadd.f32 %v5913, 1e-07
  %v5946 = vadd.f32 %v5914, 1e-07
  %v5947 = vadd.f32 %v5915, 1e-07
  %v5948 = vadd.f32 %v5916, 1e-07
  %v5949 = vadd.f32 %v5917, 1e-07
  %v5950 = vadd.f32 %v5918, 1e-07
  %v5951 = vadd.f32 %v5919, 1e-07
  %v5952 = vadd.f32 %v5920, 1e-07
  %v5953 = vadd.f32 %v5921, 1e-07
  %v5954 = vadd.f32 %v5922, 1e-07
  %v5955 = vadd.f32 %v5923, 1e-07
  %v5956 = vadd.f32 %v5924, 1e-07
  %v5957 = vadd.f32 %v5925, 1e-07
  %v5958 = vadd.f32 %v5926, 1e-07
  %v5959 = vadd.f32 %v5927, 1e-07
  %v5960 = vrsqrt.pop %v5944
  %v5961 = vrsqrt.pop %v5945
  %v5962 = vrsqrt.pop %v5946
  %v5963 = vrsqrt.pop %v5947
  %v5964 = vrsqrt.pop %v5948
  %v5965 = vrsqrt.pop %v5949
  %v5966 = vrsqrt.pop %v5950
  %v5967 = vrsqrt.pop %v5951
  %v5968 = vrsqrt.pop %v5952
  %v5969 = vrsqrt.pop %v5953
  %v5970 = vrsqrt.pop %v5954
  %v5971 = vrsqrt.pop %v5955
  %v5972 = vrsqrt.pop %v5956
  %v5973 = vrsqrt.pop %v5957
  %v5974 = vrsqrt.pop %v5958
  %v5975 = vrsqrt.pop %v5959
  %v5976 = vmul.f32 %v5928, %v5960
  %v5977 = vmul.f32 %v5929, %v5961
  %v5978 = vmul.f32 %v5930, %v5962
  %v5979 = vmul.f32 %v5931, %v5963
  %v5980 = vmul.f32 %v5932, %v5964
  %v5981 = vmul.f32 %v5933, %v5965
  %v5982 = vmul.f32 %v5934, %v5966
  %v5983 = vmul.f32 %v5935, %v5967
  %v5984 = vmul.f32 %v5936, %v5968
  %v5985 = vmul.f32 %v5937, %v5969
  %v5986 = vmul.f32 %v5938, %v5970
  %v5987 = vmul.f32 %v5939, %v5971
  %v5988 = vmul.f32 %v5940, %v5972
  %v5989 = vmul.f32 %v5941, %v5973
  %v5990 = vmul.f32 %v5942, %v5974
  %v5991 = vmul.f32 %v5943, %v5975
  %v5992 = vadd.f32 %v5912, 1.0
  %v5993 = vadd.f32 %v5913, 1.0
  %v5994 = vadd.f32 %v5914, 1.0
  %v5995 = vadd.f32 %v5915, 1.0
  %v5996 = vadd.f32 %v5916, 1.0
  %v5997 = vadd.f32 %v5917, 1.0
  %v5998 = vadd.f32 %v5918, 1.0
  %v5999 = vadd.f32 %v5919, 1.0
  %v6000 = vadd.f32 %v5920, 1.0
  %v6001 = vadd.f32 %v5921, 1.0
  %v6002 = vadd.f32 %v5922, 1.0
  %v6003 = vadd.f32 %v5923, 1.0
  %v6004 = vadd.f32 %v5924, 1.0
  %v6005 = vadd.f32 %v5925, 1.0
  %v6006 = vadd.f32 %v5926, 1.0
  %v6007 = vadd.f32 %v5927, 1.0
  %v6008 = vrcp.pop %v5992
  %v6009 = vrcp.pop %v5993
  %v6010 = vrcp.pop %v5994
  %v6011 = vrcp.pop %v5995
  %v6012 = vrcp.pop %v5996
  %v6013 = vrcp.pop %v5997
  %v6014 = vrcp.pop %v5998
  %v6015 = vrcp.pop %v5999
  %v6016 = vrcp.pop %v6000
  %v6017 = vrcp.pop %v6001
  %v6018 = vrcp.pop %v6002
  %v6019 = vrcp.pop %v6003
  %v6020 = vrcp.pop %v6004
  %v6021 = vrcp.pop %v6005
  %v6022 = vrcp.pop %v6006
  %v6023 = vrcp.pop %v6007
  %v6024 = vmul.f32 %v5976, %v6008
  %v6025 = vmul.f32 %v5977, %v6009
  %v6026 = vmul.f32 %v5978, %v6010
  %v6027 = vmul.f32 %v5979, %v6011
  %v6028 = vmul.f32 %v5980, %v6012
  %v6029 = vmul.f32 %v5981, %v6013
  %v6030 = vmul.f32 %v5982, %v6014
  %v6031 = vmul.f32 %v5983, %v6015
  %v6032 = vmul.f32 %v5984, %v6016
  %v6033 = vmul.f32 %v5985, %v6017
  %v6034 = vmul.f32 %v5986, %v6018
  %v6035 = vmul.f32 %v5987, %v6019
  %v6036 = vmul.f32 %v5988, %v6020
  %v6037 = vmul.f32 %v5989, %v6021
  %v6038 = vmul.f32 %v5990, %v6022
  %v6039 = vmul.f32 %v5991, %v6023
  %v6040 = vmul.f32 %v2244, %v5352
  %v6041 = vmul.f32 %v2245, %v5352
  %v6042 = vmul.f32 %v2246, %v5353
  %v6043 = vmul.f32 %v2247, %v5353
  %v6044 = vmul.f32 %v2248, %v5354
  %v6045 = vmul.f32 %v2249, %v5354
  %v6046 = vmul.f32 %v2250, %v5355
  %v6047 = vmul.f32 %v2251, %v5355
  %v6048 = vmul.f32 %v2252, %v5356
  %v6049 = vmul.f32 %v2253, %v5356
  %v6050 = vmul.f32 %v2254, %v5357
  %v6051 = vmul.f32 %v2255, %v5357
  %v6052 = vmul.f32 %v2256, %v5358
  %v6053 = vmul.f32 %v2257, %v5358
  %v6054 = vmul.f32 %v2258, %v5359
  %v6055 = vmul.f32 %v2259, %v5359
  %v6056 = vmul.f32 %v2260, %v5360
  %v6057 = vmul.f32 %v2261, %v5360
  %v6058 = vmul.f32 %v2262, %v5361
  %v6059 = vmul.f32 %v2263, %v5361
  %v6060 = vmul.f32 %v2264, %v5362
  %v6061 = vmul.f32 %v2265, %v5362
  %v6062 = vmul.f32 %v2266, %v5363
  %v6063 = vmul.f32 %v2267, %v5363
  %v6064 = vmul.f32 %v2268, %v5364
  %v6065 = vmul.f32 %v2269, %v5364
  %v6066 = vmul.f32 %v2270, %v5365
  %v6067 = vmul.f32 %v2271, %v5365
  %v6068 = vmul.f32 %v2272, %v5366
  %v6069 = vmul.f32 %v2273, %v5366
  %v6070 = vmul.f32 %v2274, %v5367
  %v6071 = vmul.f32 %v2275, %v5367
  %v6072 = vmul.f32 %v2788, %v5576
  %v6073 = vmul.f32 %v2789, %v5576
  %v6074 = vmul.f32 %v2790, %v5577
  %v6075 = vmul.f32 %v2791, %v5577
  %v6076 = vmul.f32 %v2792, %v5578
  %v6077 = vmul.f32 %v2793, %v5578
  %v6078 = vmul.f32 %v2794, %v5579
  %v6079 = vmul.f32 %v2795, %v5579
  %v6080 = vmul.f32 %v2796, %v5580
  %v6081 = vmul.f32 %v2797, %v5580
  %v6082 = vmul.f32 %v2798, %v5581
  %v6083 = vmul.f32 %v2799, %v5581
  %v6084 = vmul.f32 %v2800, %v5582
  %v6085 = vmul.f32 %v2801, %v5582
  %v6086 = vmul.f32 %v2802, %v5583
  %v6087 = vmul.f32 %v2803, %v5583
  %v6088 = vmul.f32 %v2804, %v5584
  %v6089 = vmul.f32 %v2805, %v5584
  %v6090 = vmul.f32 %v2806, %v5585
  %v6091 = vmul.f32 %v2807, %v5585
  %v6092 = vmul.f32 %v2808, %v5586
  %v6093 = vmul.f32 %v2809, %v5586
  %v6094 = vmul.f32 %v2810, %v5587
  %v6095 = vmul.f32 %v2811, %v5587
  %v6096 = vmul.f32 %v2812, %v5588
  %v6097 = vmul.f32 %v2813, %v5588
  %v6098 = vmul.f32 %v2814, %v5589
  %v6099 = vmul.f32 %v2815, %v5589
  %v6100 = vmul.f32 %v2816, %v5590
  %v6101 = vmul.f32 %v2817, %v5590
  %v6102 = vmul.f32 %v2818, %v5591
  %v6103 = vmul.f32 %v2819, %v5591
  %v6104 = vadd.f32 %v6040, %v6072
  %v6105 = vadd.f32 %v6041, %v6073
  %v6106 = vadd.f32 %v6042, %v6074
  %v6107 = vadd.f32 %v6043, %v6075
  %v6108 = vadd.f32 %v6044, %v6076
  %v6109 = vadd.f32 %v6045, %v6077
  %v6110 = vadd.f32 %v6046, %v6078
  %v6111 = vadd.f32 %v6047, %v6079
  %v6112 = vadd.f32 %v6048, %v6080
  %v6113 = vadd.f32 %v6049, %v6081
  %v6114 = vadd.f32 %v6050, %v6082
  %v6115 = vadd.f32 %v6051, %v6083
  %v6116 = vadd.f32 %v6052, %v6084
  %v6117 = vadd.f32 %v6053, %v6085
  %v6118 = vadd.f32 %v6054, %v6086
  %v6119 = vadd.f32 %v6055, %v6087
  %v6120 = vadd.f32 %v6056, %v6088
  %v6121 = vadd.f32 %v6057, %v6089
  %v6122 = vadd.f32 %v6058, %v6090
  %v6123 = vadd.f32 %v6059, %v6091
  %v6124 = vadd.f32 %v6060, %v6092
  %v6125 = vadd.f32 %v6061, %v6093
  %v6126 = vadd.f32 %v6062, %v6094
  %v6127 = vadd.f32 %v6063, %v6095
  %v6128 = vadd.f32 %v6064, %v6096
  %v6129 = vadd.f32 %v6065, %v6097
  %v6130 = vadd.f32 %v6066, %v6098
  %v6131 = vadd.f32 %v6067, %v6099
  %v6132 = vadd.f32 %v6068, %v6100
  %v6133 = vadd.f32 %v6069, %v6101
  %v6134 = vadd.f32 %v6070, %v6102
  %v6135 = vadd.f32 %v6071, %v6103
  %v6136 = vmul.f32 %v3332, %v5800
  %v6137 = vmul.f32 %v3333, %v5800
  %v6138 = vmul.f32 %v3334, %v5801
  %v6139 = vmul.f32 %v3335, %v5801
  %v6140 = vmul.f32 %v3336, %v5802
  %v6141 = vmul.f32 %v3337, %v5802
  %v6142 = vmul.f32 %v3338, %v5803
  %v6143 = vmul.f32 %v3339, %v5803
  %v6144 = vmul.f32 %v3340, %v5804
  %v6145 = vmul.f32 %v3341, %v5804
  %v6146 = vmul.f32 %v3342, %v5805
  %v6147 = vmul.f32 %v3343, %v5805
  %v6148 = vmul.f32 %v3344, %v5806
  %v6149 = vmul.f32 %v3345, %v5806
  %v6150 = vmul.f32 %v3346, %v5807
  %v6151 = vmul.f32 %v3347, %v5807
  %v6152 = vmul.f32 %v3348, %v5808
  %v6153 = vmul.f32 %v3349, %v5808
  %v6154 = vmul.f32 %v3350, %v5809
  %v6155 = vmul.f32 %v3351, %v5809
  %v6156 = vmul.f32 %v3352, %v5810
  %v6157 = vmul.f32 %v3353, %v5810
  %v6158 = vmul.f32 %v3354, %v5811
  %v6159 = vmul.f32 %v3355, %v5811
  %v6160 = vmul.f32 %v3356, %v5812
  %v6161 = vmul.f32 %v3357, %v5812
  %v6162 = vmul.f32 %v3358, %v5813
  %v6163 = vmul.f32 %v3359, %v5813
  %v6164 = vmul.f32 %v3360, %v5814
  %v6165 = vmul.f32 %v3361, %v5814
  %v6166 = vmul.f32 %v3362, %v5815
  %v6167 = vmul.f32 %v3363, %v5815
  %v6168 = vadd.f32 %v6104, %v6136
  %v6169 = vadd.f32 %v6105, %v6137
  %v6170 = vadd.f32 %v6106, %v6138
  %v6171 = vadd.f32 %v6107, %v6139
  %v6172 = vadd.f32 %v6108, %v6140
  %v6173 = vadd.f32 %v6109, %v6141
  %v6174 = vadd.f32 %v6110, %v6142
  %v6175 = vadd.f32 %v6111, %v6143
  %v6176 = vadd.f32 %v6112, %v6144
  %v6177 = vadd.f32 %v6113, %v6145
  %v6178 = vadd.f32 %v6114, %v6146
  %v6179 = vadd.f32 %v6115, %v6147
  %v6180 = vadd.f32 %v6116, %v6148
  %v6181 = vadd.f32 %v6117, %v6149
  %v6182 = vadd.f32 %v6118, %v6150
  %v6183 = vadd.f32 %v6119, %v6151
  %v6184 = vadd.f32 %v6120, %v6152
  %v6185 = vadd.f32 %v6121, %v6153
  %v6186 = vadd.f32 %v6122, %v6154
  %v6187 = vadd.f32 %v6123, %v6155
  %v6188 = vadd.f32 %v6124, %v6156
  %v6189 = vadd.f32 %v6125, %v6157
  %v6190 = vadd.f32 %v6126, %v6158
  %v6191 = vadd.f32 %v6127, %v6159
  %v6192 = vadd.f32 %v6128, %v6160
  %v6193 = vadd.f32 %v6129, %v6161
  %v6194 = vadd.f32 %v6130, %v6162
  %v6195 = vadd.f32 %v6131, %v6163
  %v6196 = vadd.f32 %v6132, %v6164
  %v6197 = vadd.f32 %v6133, %v6165
  %v6198 = vadd.f32 %v6134, %v6166
  %v6199 = vadd.f32 %v6135, %v6167
  %v6200 = vmul.f32 %v3876, %v6024
  %v6201 = vmul.f32 %v3877, %v6024
  %v6202 = vmul.f32 %v3878, %v6025
  %v6203 = vmul.f32 %v3879, %v6025
  %v6204 = vmul.f32 %v3880, %v6026
  %v6205 = vmul.f32 %v3881, %v6026
  %v6206 = vmul.f32 %v3882, %v6027
  %v6207 = vmul.f32 %v3883, %v6027
  %v6208 = vmul.f32 %v3884, %v6028
  %v6209 = vmul.f32 %v3885, %v6028
  %v6210 = vmul.f32 %v3886, %v6029
  %v6211 = vmul.f32 %v3887, %v6029
  %v6212 = vmul.f32 %v3888, %v6030
  %v6213 = vmul.f32 %v3889, %v6030
  %v6214 = vmul.f32 %v3890, %v6031
  %v6215 = vmul.f32 %v3891, %v6031
  %v6216 = vmul.f32 %v3892, %v6032
  %v6217 = vmul.f32 %v3893, %v6032
  %v6218 = vmul.f32 %v3894, %v6033
  %v6219 = vmul.f32 %v3895, %v6033
  %v6220 = vmul.f32 %v3896, %v6034
  %v6221 = vmul.f32 %v3897, %v6034
  %v6222 = vmul.f32 %v3898, %v6035
  %v6223 = vmul.f32 %v3899, %v6035
  %v6224 = vmul.f32 %v3900, %v6036
  %v6225 = vmul.f32 %v3901, %v6036
  %v6226 = vmul.f32 %v3902, %v6037
  %v6227 = vmul.f32 %v3903, %v6037
  %v6228 = vmul.f32 %v3904, %v6038
  %v6229 = vmul.f32 %v3905, %v6038
  %v6230 = vmul.f32 %v3906, %v6039
  %v6231 = vmul.f32 %v3907, %v6039
  %v6232 = vadd.f32 %v6168, %v6200
  %v6233 = vadd.f32 %v6169, %v6201
  %v6234 = vadd.f32 %v6170, %v6202
  %v6235 = vadd.f32 %v6171, %v6203
  %v6236 = vadd.f32 %v6172, %v6204
  %v6237 = vadd.f32 %v6173, %v6205
  %v6238 = vadd.f32 %v6174, %v6206
  %v6239 = vadd.f32 %v6175, %v6207
  %v6240 = vadd.f32 %v6176, %v6208
  %v6241 = vadd.f32 %v6177, %v6209
  %v6242 = vadd.f32 %v6178, %v6210
  %v6243 = vadd.f32 %v6179, %v6211
  %v6244 = vadd.f32 %v6180, %v6212
  %v6245 = vadd.f32 %v6181, %v6213
  %v6246 = vadd.f32 %v6182, %v6214
  %v6247 = vadd.f32 %v6183, %v6215
  %v6248 = vadd.f32 %v6184, %v6216
  %v6249 = vadd.f32 %v6185, %v6217
  %v6250 = vadd.f32 %v6186, %v6218
  %v6251 = vadd.f32 %v6187, %v6219
  %v6252 = vadd.f32 %v6188, %v6220
  %v6253 = vadd.f32 %v6189, %v6221
  %v6254 = vadd.f32 %v6190, %v6222
  %v6255 = vadd.f32 %v6191, %v6223
  %v6256 = vadd.f32 %v6192, %v6224
  %v6257 = vadd.f32 %v6193, %v6225
  %v6258 = vadd.f32 %v6194, %v6226
  %v6259 = vadd.f32 %v6195, %v6227
  %v6260 = vadd.f32 %v6196, %v6228
  %v6261 = vadd.f32 %v6197, %v6229
  %v6262 = vadd.f32 %v6198, %v6230
  %v6263 = vadd.f32 %v6199, %v6231
  %v6264 = vadd.f32 %v6232, %v6234
  %v6265 = vadd.f32 %v6264, %v6236
  %v6266 = vadd.f32 %v6265, %v6238
  %v6267 = vadd.f32 %v6266, %v6240
  %v6268 = vadd.f32 %v6267, %v6242
  %v6269 = vadd.f32 %v6268, %v6244
  %v6270 = vadd.f32 %v6269, %v6246
  %v6271 = vrot.slane %v6270, 4
  %v6272 = vadd.f32 %v6270, %v6271
  %v6273 = vrot.slane %v6272, 2
  %v6274 = vadd.f32 %v6272, %v6273
  %v6275 = vrot.slane %v6274, 1
  %v6276 = vadd.f32 %v6274, %v6275
  %v6277 = vsel %vm594, %v6233, 0.0
  %v6278 = vsel %vm594, %v6235, 0.0
  %v6279 = vadd.f32 %v6277, %v6278
  %v6280 = vsel %vm594, %v6237, 0.0
  %v6281 = vadd.f32 %v6279, %v6280
  %v6282 = vsel %vm594, %v6239, 0.0
  %v6283 = vadd.f32 %v6281, %v6282
  %v6284 = vsel %vm594, %v6241, 0.0
  %v6285 = vadd.f32 %v6283, %v6284
  %v6286 = vsel %vm594, %v6243, 0.0
  %v6287 = vadd.f32 %v6285, %v6286
  %v6288 = vsel %vm594, %v6245, 0.0
  %v6289 = vadd.f32 %v6287, %v6288
  %v6290 = vsel %vm594, %v6247, 0.0
  %v6291 = vadd.f32 %v6289, %v6290
  %v6292 = vrot.slane %v6291, 4
  %v6293 = vadd.f32 %v6291, %v6292
  %v6294 = vrot.slane %v6293, 2
  %v6295 = vadd.f32 %v6293, %v6294
  %v6296 = vrot.slane %v6295, 1
  %v6297 = vadd.f32 %v6295, %v6296
  %v6298 = vmul.f32 %v6276, 0.25
  %v6299 = vmul.f32 %v6297, 0.25
  %v6300 = vadd.f32 %v5070, %v6298
  %v6301 = vadd.f32 %v5071, %v6299
  %v6302 = vadd.f32 %v6248, %v6250
  %v6303 = vadd.f32 %v6302, %v6252
  %v6304 = vadd.f32 %v6303, %v6254
  %v6305 = vadd.f32 %v6304, %v6256
  %v6306 = vadd.f32 %v6305, %v6258
  %v6307 = vadd.f32 %v6306, %v6260
  %v6308 = vadd.f32 %v6307, %v6262
  %v6309 = vrot.slane %v6308, 4
  %v6310 = vadd.f32 %v6308, %v6309
  %v6311 = vrot.slane %v6310, 2
  %v6312 = vadd.f32 %v6310, %v6311
  %v6313 = vrot.slane %v6312, 1
  %v6314 = vadd.f32 %v6312, %v6313
  %v6315 = vsel %vm594, %v6249, 0.0
  %v6316 = vsel %vm594, %v6251, 0.0
  %v6317 = vadd.f32 %v6315, %v6316
  %v6318 = vsel %vm594, %v6253, 0.0
  %v6319 = vadd.f32 %v6317, %v6318
  %v6320 = vsel %vm594, %v6255, 0.0
  %v6321 = vadd.f32 %v6319, %v6320
  %v6322 = vsel %vm594, %v6257, 0.0
  %v6323 = vadd.f32 %v6321, %v6322
  %v6324 = vsel %vm594, %v6259, 0.0
  %v6325 = vadd.f32 %v6323, %v6324
  %v6326 = vsel %vm594, %v6261, 0.0
  %v6327 = vadd.f32 %v6325, %v6326
  %v6328 = vsel %vm594, %v6263, 0.0
  %v6329 = vadd.f32 %v6327, %v6328
  %v6330 = vrot.slane %v6329, 4
  %v6331 = vadd.f32 %v6329, %v6330
  %v6332 = vrot.slane %v6331, 2
  %v6333 = vadd.f32 %v6331, %v6332
  %v6334 = vrot.slane %v6333, 1
  %v6335 = vadd.f32 %v6333, %v6334
  %v6336 = vmul.f32 %v6314, 0.25
  %v6337 = vmul.f32 %v6335, 0.25
  %v6338 = vadd.f32 %v5108, %v6336
  %v6339 = vadd.f32 %v5109, %v6337
  %v6340 = vsel %vm594, %v6301, -inf
  %v6341 = vmax.f32 %v6300, %v6340
  %6342 = vmax.xlane.f32.xlu0 %v6341
  %v6343 = vpop.xlane.xlu0 %6342
  %v6344 = vsel %vm594, %v6339, -inf
  %v6345 = vmax.f32 %v6338, %v6344
  %6346 = vmax.xlane.f32.xlu0 %v6345
  %v6347 = vpop.xlane.xlu0 %6346
  %v6348 = vsub.f32 %v6300, %v6343
  %v6349 = vsub.f32 %v6301, %v6343
  %v6350 = vsub.f32 %v6338, %v6347
  %v6351 = vsub.f32 %v6339, %v6347
  %v6352 = vmul.f32 %v6348, 1.442695
  %v6353 = vpow.pop %v6352
  %v6354 = vmul.f32 %v6349, 1.442695
  %v6355 = vpow.pop %v6354
  %v6356 = vmul.f32 %v6350, 1.442695
  %v6357 = vpow.pop %v6356
  %v6358 = vmul.f32 %v6351, 1.442695
  %v6359 = vpow.pop %v6358
  %v6360 = vsel %vm594, %v6355, 0.0
  %v6361 = vadd.f32 %v6353, %v6360
  %6362 = vadd.xlane.f32.xlu0 %v6361
  %v6363 = vpop.xlane.xlu0 %6362
  %v6364 = vsel %vm594, %v6359, 0.0
  %v6365 = vadd.f32 %v6357, %v6364
  %6366 = vadd.xlane.f32.xlu0 %v6365
  %v6367 = vpop.xlane.xlu0 %6366
  %v6368 = vrcp.pop %v6363
  %v6369 = vmul.f32 %v6353, %v6368
  %v6370 = vmul.f32 %v6355, %v6368
  %v6371 = vrcp.pop %v6367
  %v6372 = vmul.f32 %v6357, %v6371
  %v6373 = vmul.f32 %v6359, %v6371
  %v6374 = vmul.f32 %v6369, %v2244
  %v6375 = vmul.f32 %v6370, %v2245
  %v6376 = vmul.f32 %v6369, %v2246
  %v6377 = vmul.f32 %v6370, %v2247
  %v6378 = vmul.f32 %v6369, %v2248
  %v6379 = vmul.f32 %v6370, %v2249
  %v6380 = vmul.f32 %v6369, %v2250
  %v6381 = vmul.f32 %v6370, %v2251
  %v6382 = vmul.f32 %v6369, %v2252
  %v6383 = vmul.f32 %v6370, %v2253
  %v6384 = vmul.f32 %v6369, %v2254
  %v6385 = vmul.f32 %v6370, %v2255
  %v6386 = vmul.f32 %v6369, %v2256
  %v6387 = vmul.f32 %v6370, %v2257
  %v6388 = vmul.f32 %v6369, %v2258
  %v6389 = vmul.f32 %v6370, %v2259
  %v6390 = vmul.f32 %v6372, %v2260
  %v6391 = vmul.f32 %v6373, %v2261
  %v6392 = vmul.f32 %v6372, %v2262
  %v6393 = vmul.f32 %v6373, %v2263
  %v6394 = vmul.f32 %v6372, %v2264
  %v6395 = vmul.f32 %v6373, %v2265
  %v6396 = vmul.f32 %v6372, %v2266
  %v6397 = vmul.f32 %v6373, %v2267
  %v6398 = vmul.f32 %v6372, %v2268
  %v6399 = vmul.f32 %v6373, %v2269
  %v6400 = vmul.f32 %v6372, %v2270
  %v6401 = vmul.f32 %v6373, %v2271
  %v6402 = vmul.f32 %v6372, %v2272
  %v6403 = vmul.f32 %v6373, %v2273
  %v6404 = vmul.f32 %v6372, %v2274
  %v6405 = vmul.f32 %v6373, %v2275
  %v6406 = vsel %vm594, %v6375, 0.0
  %v6407 = vadd.f32 %v6374, %v6406
  %6408 = vadd.xlane.f32.xlu0 %v6407
  %v6409 = vpop.xlane.xlu0 %6408
  %v6410 = vsel %vm594, %v6377, 0.0
  %v6411 = vadd.f32 %v6376, %v6410
  %6412 = vadd.xlane.f32.xlu0 %v6411
  %v6413 = vpop.xlane.xlu0 %6412
  %v6414 = vsel %vm594, %v6379, 0.0
  %v6415 = vadd.f32 %v6378, %v6414
  %6416 = vadd.xlane.f32.xlu0 %v6415
  %v6417 = vpop.xlane.xlu0 %6416
  %v6418 = vsel %vm594, %v6381, 0.0
  %v6419 = vadd.f32 %v6380, %v6418
  %6420 = vadd.xlane.f32.xlu0 %v6419
  %v6421 = vpop.xlane.xlu0 %6420
  %v6422 = vsel %vm594, %v6383, 0.0
  %v6423 = vadd.f32 %v6382, %v6422
  %6424 = vadd.xlane.f32.xlu0 %v6423
  %v6425 = vpop.xlane.xlu0 %6424
  %v6426 = vsel %vm594, %v6385, 0.0
  %v6427 = vadd.f32 %v6384, %v6426
  %6428 = vadd.xlane.f32.xlu0 %v6427
  %v6429 = vpop.xlane.xlu0 %6428
  %v6430 = vsel %vm594, %v6387, 0.0
  %v6431 = vadd.f32 %v6386, %v6430
  %6432 = vadd.xlane.f32.xlu0 %v6431
  %v6433 = vpop.xlane.xlu0 %6432
  %v6434 = vsel %vm594, %v6389, 0.0
  %v6435 = vadd.f32 %v6388, %v6434
  %6436 = vadd.xlane.f32.xlu0 %v6435
  %v6437 = vpop.xlane.xlu0 %6436
  %v6438 = vsel %vm594, %v6391, 0.0
  %v6439 = vadd.f32 %v6390, %v6438
  %6440 = vadd.xlane.f32.xlu0 %v6439
  %v6441 = vpop.xlane.xlu0 %6440
  %v6442 = vsel %vm594, %v6393, 0.0
  %v6443 = vadd.f32 %v6392, %v6442
  %6444 = vadd.xlane.f32.xlu0 %v6443
  %v6445 = vpop.xlane.xlu0 %6444
  %v6446 = vsel %vm594, %v6395, 0.0
  %v6447 = vadd.f32 %v6394, %v6446
  %6448 = vadd.xlane.f32.xlu0 %v6447
  %v6449 = vpop.xlane.xlu0 %6448
  %v6450 = vsel %vm594, %v6397, 0.0
  %v6451 = vadd.f32 %v6396, %v6450
  %6452 = vadd.xlane.f32.xlu0 %v6451
  %v6453 = vpop.xlane.xlu0 %6452
  %v6454 = vsel %vm594, %v6399, 0.0
  %v6455 = vadd.f32 %v6398, %v6454
  %6456 = vadd.xlane.f32.xlu0 %v6455
  %v6457 = vpop.xlane.xlu0 %6456
  %v6458 = vsel %vm594, %v6401, 0.0
  %v6459 = vadd.f32 %v6400, %v6458
  %6460 = vadd.xlane.f32.xlu0 %v6459
  %v6461 = vpop.xlane.xlu0 %6460
  %v6462 = vsel %vm594, %v6403, 0.0
  %v6463 = vadd.f32 %v6402, %v6462
  %6464 = vadd.xlane.f32.xlu0 %v6463
  %v6465 = vpop.xlane.xlu0 %6464
  %v6466 = vsel %vm594, %v6405, 0.0
  %v6467 = vadd.f32 %v6404, %v6466
  %6468 = vadd.xlane.f32.xlu0 %v6467
  %v6469 = vpop.xlane.xlu0 %6468
  %v6470 = vmul.f32 %v6409, %v6409
  %v6471 = vmul.f32 %v6413, %v6413
  %v6472 = vmul.f32 %v6417, %v6417
  %v6473 = vmul.f32 %v6421, %v6421
  %v6474 = vmul.f32 %v6425, %v6425
  %v6475 = vmul.f32 %v6429, %v6429
  %v6476 = vmul.f32 %v6433, %v6433
  %v6477 = vmul.f32 %v6437, %v6437
  %v6478 = vmul.f32 %v6441, %v6441
  %v6479 = vmul.f32 %v6445, %v6445
  %v6480 = vmul.f32 %v6449, %v6449
  %v6481 = vmul.f32 %v6453, %v6453
  %v6482 = vmul.f32 %v6457, %v6457
  %v6483 = vmul.f32 %v6461, %v6461
  %v6484 = vmul.f32 %v6465, %v6465
  %v6485 = vmul.f32 %v6469, %v6469
  %v6486 = vmul.f32 %v6470, %v6409
  %v6487 = vmul.f32 %v6471, %v6413
  %v6488 = vmul.f32 %v6472, %v6417
  %v6489 = vmul.f32 %v6473, %v6421
  %v6490 = vmul.f32 %v6474, %v6425
  %v6491 = vmul.f32 %v6475, %v6429
  %v6492 = vmul.f32 %v6476, %v6433
  %v6493 = vmul.f32 %v6477, %v6437
  %v6494 = vmul.f32 %v6478, %v6441
  %v6495 = vmul.f32 %v6479, %v6445
  %v6496 = vmul.f32 %v6480, %v6449
  %v6497 = vmul.f32 %v6481, %v6453
  %v6498 = vmul.f32 %v6482, %v6457
  %v6499 = vmul.f32 %v6483, %v6461
  %v6500 = vmul.f32 %v6484, %v6465
  %v6501 = vmul.f32 %v6485, %v6469
  %v6502 = vadd.f32 %v6470, 1e-07
  %v6503 = vadd.f32 %v6471, 1e-07
  %v6504 = vadd.f32 %v6472, 1e-07
  %v6505 = vadd.f32 %v6473, 1e-07
  %v6506 = vadd.f32 %v6474, 1e-07
  %v6507 = vadd.f32 %v6475, 1e-07
  %v6508 = vadd.f32 %v6476, 1e-07
  %v6509 = vadd.f32 %v6477, 1e-07
  %v6510 = vadd.f32 %v6478, 1e-07
  %v6511 = vadd.f32 %v6479, 1e-07
  %v6512 = vadd.f32 %v6480, 1e-07
  %v6513 = vadd.f32 %v6481, 1e-07
  %v6514 = vadd.f32 %v6482, 1e-07
  %v6515 = vadd.f32 %v6483, 1e-07
  %v6516 = vadd.f32 %v6484, 1e-07
  %v6517 = vadd.f32 %v6485, 1e-07
  %v6518 = vrsqrt.pop %v6502
  %v6519 = vrsqrt.pop %v6503
  %v6520 = vrsqrt.pop %v6504
  %v6521 = vrsqrt.pop %v6505
  %v6522 = vrsqrt.pop %v6506
  %v6523 = vrsqrt.pop %v6507
  %v6524 = vrsqrt.pop %v6508
  %v6525 = vrsqrt.pop %v6509
  %v6526 = vrsqrt.pop %v6510
  %v6527 = vrsqrt.pop %v6511
  %v6528 = vrsqrt.pop %v6512
  %v6529 = vrsqrt.pop %v6513
  %v6530 = vrsqrt.pop %v6514
  %v6531 = vrsqrt.pop %v6515
  %v6532 = vrsqrt.pop %v6516
  %v6533 = vrsqrt.pop %v6517
  %v6534 = vmul.f32 %v6486, %v6518
  %v6535 = vmul.f32 %v6487, %v6519
  %v6536 = vmul.f32 %v6488, %v6520
  %v6537 = vmul.f32 %v6489, %v6521
  %v6538 = vmul.f32 %v6490, %v6522
  %v6539 = vmul.f32 %v6491, %v6523
  %v6540 = vmul.f32 %v6492, %v6524
  %v6541 = vmul.f32 %v6493, %v6525
  %v6542 = vmul.f32 %v6494, %v6526
  %v6543 = vmul.f32 %v6495, %v6527
  %v6544 = vmul.f32 %v6496, %v6528
  %v6545 = vmul.f32 %v6497, %v6529
  %v6546 = vmul.f32 %v6498, %v6530
  %v6547 = vmul.f32 %v6499, %v6531
  %v6548 = vmul.f32 %v6500, %v6532
  %v6549 = vmul.f32 %v6501, %v6533
  %v6550 = vadd.f32 %v6470, 1.0
  %v6551 = vadd.f32 %v6471, 1.0
  %v6552 = vadd.f32 %v6472, 1.0
  %v6553 = vadd.f32 %v6473, 1.0
  %v6554 = vadd.f32 %v6474, 1.0
  %v6555 = vadd.f32 %v6475, 1.0
  %v6556 = vadd.f32 %v6476, 1.0
  %v6557 = vadd.f32 %v6477, 1.0
  %v6558 = vadd.f32 %v6478, 1.0
  %v6559 = vadd.f32 %v6479, 1.0
  %v6560 = vadd.f32 %v6480, 1.0
  %v6561 = vadd.f32 %v6481, 1.0
  %v6562 = vadd.f32 %v6482, 1.0
  %v6563 = vadd.f32 %v6483, 1.0
  %v6564 = vadd.f32 %v6484, 1.0
  %v6565 = vadd.f32 %v6485, 1.0
  %v6566 = vrcp.pop %v6550
  %v6567 = vrcp.pop %v6551
  %v6568 = vrcp.pop %v6552
  %v6569 = vrcp.pop %v6553
  %v6570 = vrcp.pop %v6554
  %v6571 = vrcp.pop %v6555
  %v6572 = vrcp.pop %v6556
  %v6573 = vrcp.pop %v6557
  %v6574 = vrcp.pop %v6558
  %v6575 = vrcp.pop %v6559
  %v6576 = vrcp.pop %v6560
  %v6577 = vrcp.pop %v6561
  %v6578 = vrcp.pop %v6562
  %v6579 = vrcp.pop %v6563
  %v6580 = vrcp.pop %v6564
  %v6581 = vrcp.pop %v6565
  %v6582 = vmul.f32 %v6534, %v6566
  %v6583 = vmul.f32 %v6535, %v6567
  %v6584 = vmul.f32 %v6536, %v6568
  %v6585 = vmul.f32 %v6537, %v6569
  %v6586 = vmul.f32 %v6538, %v6570
  %v6587 = vmul.f32 %v6539, %v6571
  %v6588 = vmul.f32 %v6540, %v6572
  %v6589 = vmul.f32 %v6541, %v6573
  %v6590 = vmul.f32 %v6542, %v6574
  %v6591 = vmul.f32 %v6543, %v6575
  %v6592 = vmul.f32 %v6544, %v6576
  %v6593 = vmul.f32 %v6545, %v6577
  %v6594 = vmul.f32 %v6546, %v6578
  %v6595 = vmul.f32 %v6547, %v6579
  %v6596 = vmul.f32 %v6548, %v6580
  %v6597 = vmul.f32 %v6549, %v6581
  %v6598 = vmul.f32 %v6369, %v2788
  %v6599 = vmul.f32 %v6370, %v2789
  %v6600 = vmul.f32 %v6369, %v2790
  %v6601 = vmul.f32 %v6370, %v2791
  %v6602 = vmul.f32 %v6369, %v2792
  %v6603 = vmul.f32 %v6370, %v2793
  %v6604 = vmul.f32 %v6369, %v2794
  %v6605 = vmul.f32 %v6370, %v2795
  %v6606 = vmul.f32 %v6369, %v2796
  %v6607 = vmul.f32 %v6370, %v2797
  %v6608 = vmul.f32 %v6369, %v2798
  %v6609 = vmul.f32 %v6370, %v2799
  %v6610 = vmul.f32 %v6369, %v2800
  %v6611 = vmul.f32 %v6370, %v2801
  %v6612 = vmul.f32 %v6369, %v2802
  %v6613 = vmul.f32 %v6370, %v2803
  %v6614 = vmul.f32 %v6372, %v2804
  %v6615 = vmul.f32 %v6373, %v2805
  %v6616 = vmul.f32 %v6372, %v2806
  %v6617 = vmul.f32 %v6373, %v2807
  %v6618 = vmul.f32 %v6372, %v2808
  %v6619 = vmul.f32 %v6373, %v2809
  %v6620 = vmul.f32 %v6372, %v2810
  %v6621 = vmul.f32 %v6373, %v2811
  %v6622 = vmul.f32 %v6372, %v2812
  %v6623 = vmul.f32 %v6373, %v2813
  %v6624 = vmul.f32 %v6372, %v2814
  %v6625 = vmul.f32 %v6373, %v2815
  %v6626 = vmul.f32 %v6372, %v2816
  %v6627 = vmul.f32 %v6373, %v2817
  %v6628 = vmul.f32 %v6372, %v2818
  %v6629 = vmul.f32 %v6373, %v2819
  %v6630 = vsel %vm594, %v6599, 0.0
  %v6631 = vadd.f32 %v6598, %v6630
  %6632 = vadd.xlane.f32.xlu0 %v6631
  %v6633 = vpop.xlane.xlu0 %6632
  %v6634 = vsel %vm594, %v6601, 0.0
  %v6635 = vadd.f32 %v6600, %v6634
  %6636 = vadd.xlane.f32.xlu0 %v6635
  %v6637 = vpop.xlane.xlu0 %6636
  %v6638 = vsel %vm594, %v6603, 0.0
  %v6639 = vadd.f32 %v6602, %v6638
  %6640 = vadd.xlane.f32.xlu0 %v6639
  %v6641 = vpop.xlane.xlu0 %6640
  %v6642 = vsel %vm594, %v6605, 0.0
  %v6643 = vadd.f32 %v6604, %v6642
  %6644 = vadd.xlane.f32.xlu0 %v6643
  %v6645 = vpop.xlane.xlu0 %6644
  %v6646 = vsel %vm594, %v6607, 0.0
  %v6647 = vadd.f32 %v6606, %v6646
  %6648 = vadd.xlane.f32.xlu0 %v6647
  %v6649 = vpop.xlane.xlu0 %6648
  %v6650 = vsel %vm594, %v6609, 0.0
  %v6651 = vadd.f32 %v6608, %v6650
  %6652 = vadd.xlane.f32.xlu0 %v6651
  %v6653 = vpop.xlane.xlu0 %6652
  %v6654 = vsel %vm594, %v6611, 0.0
  %v6655 = vadd.f32 %v6610, %v6654
  %6656 = vadd.xlane.f32.xlu0 %v6655
  %v6657 = vpop.xlane.xlu0 %6656
  %v6658 = vsel %vm594, %v6613, 0.0
  %v6659 = vadd.f32 %v6612, %v6658
  %6660 = vadd.xlane.f32.xlu0 %v6659
  %v6661 = vpop.xlane.xlu0 %6660
  %v6662 = vsel %vm594, %v6615, 0.0
  %v6663 = vadd.f32 %v6614, %v6662
  %6664 = vadd.xlane.f32.xlu0 %v6663
  %v6665 = vpop.xlane.xlu0 %6664
  %v6666 = vsel %vm594, %v6617, 0.0
  %v6667 = vadd.f32 %v6616, %v6666
  %6668 = vadd.xlane.f32.xlu0 %v6667
  %v6669 = vpop.xlane.xlu0 %6668
  %v6670 = vsel %vm594, %v6619, 0.0
  %v6671 = vadd.f32 %v6618, %v6670
  %6672 = vadd.xlane.f32.xlu0 %v6671
  %v6673 = vpop.xlane.xlu0 %6672
  %v6674 = vsel %vm594, %v6621, 0.0
  %v6675 = vadd.f32 %v6620, %v6674
  %6676 = vadd.xlane.f32.xlu0 %v6675
  %v6677 = vpop.xlane.xlu0 %6676
  %v6678 = vsel %vm594, %v6623, 0.0
  %v6679 = vadd.f32 %v6622, %v6678
  %6680 = vadd.xlane.f32.xlu0 %v6679
  %v6681 = vpop.xlane.xlu0 %6680
  %v6682 = vsel %vm594, %v6625, 0.0
  %v6683 = vadd.f32 %v6624, %v6682
  %6684 = vadd.xlane.f32.xlu0 %v6683
  %v6685 = vpop.xlane.xlu0 %6684
  %v6686 = vsel %vm594, %v6627, 0.0
  %v6687 = vadd.f32 %v6626, %v6686
  %6688 = vadd.xlane.f32.xlu0 %v6687
  %v6689 = vpop.xlane.xlu0 %6688
  %v6690 = vsel %vm594, %v6629, 0.0
  %v6691 = vadd.f32 %v6628, %v6690
  %6692 = vadd.xlane.f32.xlu0 %v6691
  %v6693 = vpop.xlane.xlu0 %6692
  %v6694 = vmul.f32 %v6633, %v6633
  %v6695 = vmul.f32 %v6637, %v6637
  %v6696 = vmul.f32 %v6641, %v6641
  %v6697 = vmul.f32 %v6645, %v6645
  %v6698 = vmul.f32 %v6649, %v6649
  %v6699 = vmul.f32 %v6653, %v6653
  %v6700 = vmul.f32 %v6657, %v6657
  %v6701 = vmul.f32 %v6661, %v6661
  %v6702 = vmul.f32 %v6665, %v6665
  %v6703 = vmul.f32 %v6669, %v6669
  %v6704 = vmul.f32 %v6673, %v6673
  %v6705 = vmul.f32 %v6677, %v6677
  %v6706 = vmul.f32 %v6681, %v6681
  %v6707 = vmul.f32 %v6685, %v6685
  %v6708 = vmul.f32 %v6689, %v6689
  %v6709 = vmul.f32 %v6693, %v6693
  %v6710 = vmul.f32 %v6694, %v6633
  %v6711 = vmul.f32 %v6695, %v6637
  %v6712 = vmul.f32 %v6696, %v6641
  %v6713 = vmul.f32 %v6697, %v6645
  %v6714 = vmul.f32 %v6698, %v6649
  %v6715 = vmul.f32 %v6699, %v6653
  %v6716 = vmul.f32 %v6700, %v6657
  %v6717 = vmul.f32 %v6701, %v6661
  %v6718 = vmul.f32 %v6702, %v6665
  %v6719 = vmul.f32 %v6703, %v6669
  %v6720 = vmul.f32 %v6704, %v6673
  %v6721 = vmul.f32 %v6705, %v6677
  %v6722 = vmul.f32 %v6706, %v6681
  %v6723 = vmul.f32 %v6707, %v6685
  %v6724 = vmul.f32 %v6708, %v6689
  %v6725 = vmul.f32 %v6709, %v6693
  %v6726 = vadd.f32 %v6694, 1e-07
  %v6727 = vadd.f32 %v6695, 1e-07
  %v6728 = vadd.f32 %v6696, 1e-07
  %v6729 = vadd.f32 %v6697, 1e-07
  %v6730 = vadd.f32 %v6698, 1e-07
  %v6731 = vadd.f32 %v6699, 1e-07
  %v6732 = vadd.f32 %v6700, 1e-07
  %v6733 = vadd.f32 %v6701, 1e-07
  %v6734 = vadd.f32 %v6702, 1e-07
  %v6735 = vadd.f32 %v6703, 1e-07
  %v6736 = vadd.f32 %v6704, 1e-07
  %v6737 = vadd.f32 %v6705, 1e-07
  %v6738 = vadd.f32 %v6706, 1e-07
  %v6739 = vadd.f32 %v6707, 1e-07
  %v6740 = vadd.f32 %v6708, 1e-07
  %v6741 = vadd.f32 %v6709, 1e-07
  %v6742 = vrsqrt.pop %v6726
  %v6743 = vrsqrt.pop %v6727
  %v6744 = vrsqrt.pop %v6728
  %v6745 = vrsqrt.pop %v6729
  %v6746 = vrsqrt.pop %v6730
  %v6747 = vrsqrt.pop %v6731
  %v6748 = vrsqrt.pop %v6732
  %v6749 = vrsqrt.pop %v6733
  %v6750 = vrsqrt.pop %v6734
  %v6751 = vrsqrt.pop %v6735
  %v6752 = vrsqrt.pop %v6736
  %v6753 = vrsqrt.pop %v6737
  %v6754 = vrsqrt.pop %v6738
  %v6755 = vrsqrt.pop %v6739
  %v6756 = vrsqrt.pop %v6740
  %v6757 = vrsqrt.pop %v6741
  %v6758 = vmul.f32 %v6710, %v6742
  %v6759 = vmul.f32 %v6711, %v6743
  %v6760 = vmul.f32 %v6712, %v6744
  %v6761 = vmul.f32 %v6713, %v6745
  %v6762 = vmul.f32 %v6714, %v6746
  %v6763 = vmul.f32 %v6715, %v6747
  %v6764 = vmul.f32 %v6716, %v6748
  %v6765 = vmul.f32 %v6717, %v6749
  %v6766 = vmul.f32 %v6718, %v6750
  %v6767 = vmul.f32 %v6719, %v6751
  %v6768 = vmul.f32 %v6720, %v6752
  %v6769 = vmul.f32 %v6721, %v6753
  %v6770 = vmul.f32 %v6722, %v6754
  %v6771 = vmul.f32 %v6723, %v6755
  %v6772 = vmul.f32 %v6724, %v6756
  %v6773 = vmul.f32 %v6725, %v6757
  %v6774 = vadd.f32 %v6694, 1.0
  %v6775 = vadd.f32 %v6695, 1.0
  %v6776 = vadd.f32 %v6696, 1.0
  %v6777 = vadd.f32 %v6697, 1.0
  %v6778 = vadd.f32 %v6698, 1.0
  %v6779 = vadd.f32 %v6699, 1.0
  %v6780 = vadd.f32 %v6700, 1.0
  %v6781 = vadd.f32 %v6701, 1.0
  %v6782 = vadd.f32 %v6702, 1.0
  %v6783 = vadd.f32 %v6703, 1.0
  %v6784 = vadd.f32 %v6704, 1.0
  %v6785 = vadd.f32 %v6705, 1.0
  %v6786 = vadd.f32 %v6706, 1.0
  %v6787 = vadd.f32 %v6707, 1.0
  %v6788 = vadd.f32 %v6708, 1.0
  %v6789 = vadd.f32 %v6709, 1.0
  %v6790 = vrcp.pop %v6774
  %v6791 = vrcp.pop %v6775
  %v6792 = vrcp.pop %v6776
  %v6793 = vrcp.pop %v6777
  %v6794 = vrcp.pop %v6778
  %v6795 = vrcp.pop %v6779
  %v6796 = vrcp.pop %v6780
  %v6797 = vrcp.pop %v6781
  %v6798 = vrcp.pop %v6782
  %v6799 = vrcp.pop %v6783
  %v6800 = vrcp.pop %v6784
  %v6801 = vrcp.pop %v6785
  %v6802 = vrcp.pop %v6786
  %v6803 = vrcp.pop %v6787
  %v6804 = vrcp.pop %v6788
  %v6805 = vrcp.pop %v6789
  %v6806 = vmul.f32 %v6758, %v6790
  %v6807 = vmul.f32 %v6759, %v6791
  %v6808 = vmul.f32 %v6760, %v6792
  %v6809 = vmul.f32 %v6761, %v6793
  %v6810 = vmul.f32 %v6762, %v6794
  %v6811 = vmul.f32 %v6763, %v6795
  %v6812 = vmul.f32 %v6764, %v6796
  %v6813 = vmul.f32 %v6765, %v6797
  %v6814 = vmul.f32 %v6766, %v6798
  %v6815 = vmul.f32 %v6767, %v6799
  %v6816 = vmul.f32 %v6768, %v6800
  %v6817 = vmul.f32 %v6769, %v6801
  %v6818 = vmul.f32 %v6770, %v6802
  %v6819 = vmul.f32 %v6771, %v6803
  %v6820 = vmul.f32 %v6772, %v6804
  %v6821 = vmul.f32 %v6773, %v6805
  %v6822 = vmul.f32 %v6369, %v3332
  %v6823 = vmul.f32 %v6370, %v3333
  %v6824 = vmul.f32 %v6369, %v3334
  %v6825 = vmul.f32 %v6370, %v3335
  %v6826 = vmul.f32 %v6369, %v3336
  %v6827 = vmul.f32 %v6370, %v3337
  %v6828 = vmul.f32 %v6369, %v3338
  %v6829 = vmul.f32 %v6370, %v3339
  %v6830 = vmul.f32 %v6369, %v3340
  %v6831 = vmul.f32 %v6370, %v3341
  %v6832 = vmul.f32 %v6369, %v3342
  %v6833 = vmul.f32 %v6370, %v3343
  %v6834 = vmul.f32 %v6369, %v3344
  %v6835 = vmul.f32 %v6370, %v3345
  %v6836 = vmul.f32 %v6369, %v3346
  %v6837 = vmul.f32 %v6370, %v3347
  %v6838 = vmul.f32 %v6372, %v3348
  %v6839 = vmul.f32 %v6373, %v3349
  %v6840 = vmul.f32 %v6372, %v3350
  %v6841 = vmul.f32 %v6373, %v3351
  %v6842 = vmul.f32 %v6372, %v3352
  %v6843 = vmul.f32 %v6373, %v3353
  %v6844 = vmul.f32 %v6372, %v3354
  %v6845 = vmul.f32 %v6373, %v3355
  %v6846 = vmul.f32 %v6372, %v3356
  %v6847 = vmul.f32 %v6373, %v3357
  %v6848 = vmul.f32 %v6372, %v3358
  %v6849 = vmul.f32 %v6373, %v3359
  %v6850 = vmul.f32 %v6372, %v3360
  %v6851 = vmul.f32 %v6373, %v3361
  %v6852 = vmul.f32 %v6372, %v3362
  %v6853 = vmul.f32 %v6373, %v3363
  %v6854 = vsel %vm594, %v6823, 0.0
  %v6855 = vadd.f32 %v6822, %v6854
  %6856 = vadd.xlane.f32.xlu0 %v6855
  %v6857 = vpop.xlane.xlu0 %6856
  %v6858 = vsel %vm594, %v6825, 0.0
  %v6859 = vadd.f32 %v6824, %v6858
  %6860 = vadd.xlane.f32.xlu0 %v6859
  %v6861 = vpop.xlane.xlu0 %6860
  %v6862 = vsel %vm594, %v6827, 0.0
  %v6863 = vadd.f32 %v6826, %v6862
  %6864 = vadd.xlane.f32.xlu0 %v6863
  %v6865 = vpop.xlane.xlu0 %6864
  %v6866 = vsel %vm594, %v6829, 0.0
  %v6867 = vadd.f32 %v6828, %v6866
  %6868 = vadd.xlane.f32.xlu0 %v6867
  %v6869 = vpop.xlane.xlu0 %6868
  %v6870 = vsel %vm594, %v6831, 0.0
  %v6871 = vadd.f32 %v6830, %v6870
  %6872 = vadd.xlane.f32.xlu0 %v6871
  %v6873 = vpop.xlane.xlu0 %6872
  %v6874 = vsel %vm594, %v6833, 0.0
  %v6875 = vadd.f32 %v6832, %v6874
  %6876 = vadd.xlane.f32.xlu0 %v6875
  %v6877 = vpop.xlane.xlu0 %6876
  %v6878 = vsel %vm594, %v6835, 0.0
  %v6879 = vadd.f32 %v6834, %v6878
  %6880 = vadd.xlane.f32.xlu0 %v6879
  %v6881 = vpop.xlane.xlu0 %6880
  %v6882 = vsel %vm594, %v6837, 0.0
  %v6883 = vadd.f32 %v6836, %v6882
  %6884 = vadd.xlane.f32.xlu0 %v6883
  %v6885 = vpop.xlane.xlu0 %6884
  %v6886 = vsel %vm594, %v6839, 0.0
  %v6887 = vadd.f32 %v6838, %v6886
  %6888 = vadd.xlane.f32.xlu0 %v6887
  %v6889 = vpop.xlane.xlu0 %6888
  %v6890 = vsel %vm594, %v6841, 0.0
  %v6891 = vadd.f32 %v6840, %v6890
  %6892 = vadd.xlane.f32.xlu0 %v6891
  %v6893 = vpop.xlane.xlu0 %6892
  %v6894 = vsel %vm594, %v6843, 0.0
  %v6895 = vadd.f32 %v6842, %v6894
  %6896 = vadd.xlane.f32.xlu0 %v6895
  %v6897 = vpop.xlane.xlu0 %6896
  %v6898 = vsel %vm594, %v6845, 0.0
  %v6899 = vadd.f32 %v6844, %v6898
  %6900 = vadd.xlane.f32.xlu0 %v6899
  %v6901 = vpop.xlane.xlu0 %6900
  %v6902 = vsel %vm594, %v6847, 0.0
  %v6903 = vadd.f32 %v6846, %v6902
  %6904 = vadd.xlane.f32.xlu0 %v6903
  %v6905 = vpop.xlane.xlu0 %6904
  %v6906 = vsel %vm594, %v6849, 0.0
  %v6907 = vadd.f32 %v6848, %v6906
  %6908 = vadd.xlane.f32.xlu0 %v6907
  %v6909 = vpop.xlane.xlu0 %6908
  %v6910 = vsel %vm594, %v6851, 0.0
  %v6911 = vadd.f32 %v6850, %v6910
  %6912 = vadd.xlane.f32.xlu0 %v6911
  %v6913 = vpop.xlane.xlu0 %6912
  %v6914 = vsel %vm594, %v6853, 0.0
  %v6915 = vadd.f32 %v6852, %v6914
  %6916 = vadd.xlane.f32.xlu0 %v6915
  %v6917 = vpop.xlane.xlu0 %6916
  %v6918 = vmul.f32 %v6857, %v6857
  %v6919 = vmul.f32 %v6861, %v6861
  %v6920 = vmul.f32 %v6865, %v6865
  %v6921 = vmul.f32 %v6869, %v6869
  %v6922 = vmul.f32 %v6873, %v6873
  %v6923 = vmul.f32 %v6877, %v6877
  %v6924 = vmul.f32 %v6881, %v6881
  %v6925 = vmul.f32 %v6885, %v6885
  %v6926 = vmul.f32 %v6889, %v6889
  %v6927 = vmul.f32 %v6893, %v6893
  %v6928 = vmul.f32 %v6897, %v6897
  %v6929 = vmul.f32 %v6901, %v6901
  %v6930 = vmul.f32 %v6905, %v6905
  %v6931 = vmul.f32 %v6909, %v6909
  %v6932 = vmul.f32 %v6913, %v6913
  %v6933 = vmul.f32 %v6917, %v6917
  %v6934 = vmul.f32 %v6918, %v6857
  %v6935 = vmul.f32 %v6919, %v6861
  %v6936 = vmul.f32 %v6920, %v6865
  %v6937 = vmul.f32 %v6921, %v6869
  %v6938 = vmul.f32 %v6922, %v6873
  %v6939 = vmul.f32 %v6923, %v6877
  %v6940 = vmul.f32 %v6924, %v6881
  %v6941 = vmul.f32 %v6925, %v6885
  %v6942 = vmul.f32 %v6926, %v6889
  %v6943 = vmul.f32 %v6927, %v6893
  %v6944 = vmul.f32 %v6928, %v6897
  %v6945 = vmul.f32 %v6929, %v6901
  %v6946 = vmul.f32 %v6930, %v6905
  %v6947 = vmul.f32 %v6931, %v6909
  %v6948 = vmul.f32 %v6932, %v6913
  %v6949 = vmul.f32 %v6933, %v6917
  %v6950 = vadd.f32 %v6918, 1e-07
  %v6951 = vadd.f32 %v6919, 1e-07
  %v6952 = vadd.f32 %v6920, 1e-07
  %v6953 = vadd.f32 %v6921, 1e-07
  %v6954 = vadd.f32 %v6922, 1e-07
  %v6955 = vadd.f32 %v6923, 1e-07
  %v6956 = vadd.f32 %v6924, 1e-07
  %v6957 = vadd.f32 %v6925, 1e-07
  %v6958 = vadd.f32 %v6926, 1e-07
  %v6959 = vadd.f32 %v6927, 1e-07
  %v6960 = vadd.f32 %v6928, 1e-07
  %v6961 = vadd.f32 %v6929, 1e-07
  %v6962 = vadd.f32 %v6930, 1e-07
  %v6963 = vadd.f32 %v6931, 1e-07
  %v6964 = vadd.f32 %v6932, 1e-07
  %v6965 = vadd.f32 %v6933, 1e-07
  %v6966 = vrsqrt.pop %v6950
  %v6967 = vrsqrt.pop %v6951
  %v6968 = vrsqrt.pop %v6952
  %v6969 = vrsqrt.pop %v6953
  %v6970 = vrsqrt.pop %v6954
  %v6971 = vrsqrt.pop %v6955
  %v6972 = vrsqrt.pop %v6956
  %v6973 = vrsqrt.pop %v6957
  %v6974 = vrsqrt.pop %v6958
  %v6975 = vrsqrt.pop %v6959
  %v6976 = vrsqrt.pop %v6960
  %v6977 = vrsqrt.pop %v6961
  %v6978 = vrsqrt.pop %v6962
  %v6979 = vrsqrt.pop %v6963
  %v6980 = vrsqrt.pop %v6964
  %v6981 = vrsqrt.pop %v6965
  %v6982 = vmul.f32 %v6934, %v6966
  %v6983 = vmul.f32 %v6935, %v6967
  %v6984 = vmul.f32 %v6936, %v6968
  %v6985 = vmul.f32 %v6937, %v6969
  %v6986 = vmul.f32 %v6938, %v6970
  %v6987 = vmul.f32 %v6939, %v6971
  %v6988 = vmul.f32 %v6940, %v6972
  %v6989 = vmul.f32 %v6941, %v6973
  %v6990 = vmul.f32 %v6942, %v6974
  %v6991 = vmul.f32 %v6943, %v6975
  %v6992 = vmul.f32 %v6944, %v6976
  %v6993 = vmul.f32 %v6945, %v6977
  %v6994 = vmul.f32 %v6946, %v6978
  %v6995 = vmul.f32 %v6947, %v6979
  %v6996 = vmul.f32 %v6948, %v6980
  %v6997 = vmul.f32 %v6949, %v6981
  %v6998 = vadd.f32 %v6918, 1.0
  %v6999 = vadd.f32 %v6919, 1.0
  %v7000 = vadd.f32 %v6920, 1.0
  %v7001 = vadd.f32 %v6921, 1.0
  %v7002 = vadd.f32 %v6922, 1.0
  %v7003 = vadd.f32 %v6923, 1.0
  %v7004 = vadd.f32 %v6924, 1.0
  %v7005 = vadd.f32 %v6925, 1.0
  %v7006 = vadd.f32 %v6926, 1.0
  %v7007 = vadd.f32 %v6927, 1.0
  %v7008 = vadd.f32 %v6928, 1.0
  %v7009 = vadd.f32 %v6929, 1.0
  %v7010 = vadd.f32 %v6930, 1.0
  %v7011 = vadd.f32 %v6931, 1.0
  %v7012 = vadd.f32 %v6932, 1.0
  %v7013 = vadd.f32 %v6933, 1.0
  %v7014 = vrcp.pop %v6998
  %v7015 = vrcp.pop %v6999
  %v7016 = vrcp.pop %v7000
  %v7017 = vrcp.pop %v7001
  %v7018 = vrcp.pop %v7002
  %v7019 = vrcp.pop %v7003
  %v7020 = vrcp.pop %v7004
  %v7021 = vrcp.pop %v7005
  %v7022 = vrcp.pop %v7006
  %v7023 = vrcp.pop %v7007
  %v7024 = vrcp.pop %v7008
  %v7025 = vrcp.pop %v7009
  %v7026 = vrcp.pop %v7010
  %v7027 = vrcp.pop %v7011
  %v7028 = vrcp.pop %v7012
  %v7029 = vrcp.pop %v7013
  %v7030 = vmul.f32 %v6982, %v7014
  %v7031 = vmul.f32 %v6983, %v7015
  %v7032 = vmul.f32 %v6984, %v7016
  %v7033 = vmul.f32 %v6985, %v7017
  %v7034 = vmul.f32 %v6986, %v7018
  %v7035 = vmul.f32 %v6987, %v7019
  %v7036 = vmul.f32 %v6988, %v7020
  %v7037 = vmul.f32 %v6989, %v7021
  %v7038 = vmul.f32 %v6990, %v7022
  %v7039 = vmul.f32 %v6991, %v7023
  %v7040 = vmul.f32 %v6992, %v7024
  %v7041 = vmul.f32 %v6993, %v7025
  %v7042 = vmul.f32 %v6994, %v7026
  %v7043 = vmul.f32 %v6995, %v7027
  %v7044 = vmul.f32 %v6996, %v7028
  %v7045 = vmul.f32 %v6997, %v7029
  %v7046 = vmul.f32 %v6369, %v3876
  %v7047 = vmul.f32 %v6370, %v3877
  %v7048 = vmul.f32 %v6369, %v3878
  %v7049 = vmul.f32 %v6370, %v3879
  %v7050 = vmul.f32 %v6369, %v3880
  %v7051 = vmul.f32 %v6370, %v3881
  %v7052 = vmul.f32 %v6369, %v3882
  %v7053 = vmul.f32 %v6370, %v3883
  %v7054 = vmul.f32 %v6369, %v3884
  %v7055 = vmul.f32 %v6370, %v3885
  %v7056 = vmul.f32 %v6369, %v3886
  %v7057 = vmul.f32 %v6370, %v3887
  %v7058 = vmul.f32 %v6369, %v3888
  %v7059 = vmul.f32 %v6370, %v3889
  %v7060 = vmul.f32 %v6369, %v3890
  %v7061 = vmul.f32 %v6370, %v3891
  %v7062 = vmul.f32 %v6372, %v3892
  %v7063 = vmul.f32 %v6373, %v3893
  %v7064 = vmul.f32 %v6372, %v3894
  %v7065 = vmul.f32 %v6373, %v3895
  %v7066 = vmul.f32 %v6372, %v3896
  %v7067 = vmul.f32 %v6373, %v3897
  %v7068 = vmul.f32 %v6372, %v3898
  %v7069 = vmul.f32 %v6373, %v3899
  %v7070 = vmul.f32 %v6372, %v3900
  %v7071 = vmul.f32 %v6373, %v3901
  %v7072 = vmul.f32 %v6372, %v3902
  %v7073 = vmul.f32 %v6373, %v3903
  %v7074 = vmul.f32 %v6372, %v3904
  %v7075 = vmul.f32 %v6373, %v3905
  %v7076 = vmul.f32 %v6372, %v3906
  %v7077 = vmul.f32 %v6373, %v3907
  %v7078 = vsel %vm594, %v7047, 0.0
  %v7079 = vadd.f32 %v7046, %v7078
  %7080 = vadd.xlane.f32.xlu0 %v7079
  %v7081 = vpop.xlane.xlu0 %7080
  %v7082 = vsel %vm594, %v7049, 0.0
  %v7083 = vadd.f32 %v7048, %v7082
  %7084 = vadd.xlane.f32.xlu0 %v7083
  %v7085 = vpop.xlane.xlu0 %7084
  %v7086 = vsel %vm594, %v7051, 0.0
  %v7087 = vadd.f32 %v7050, %v7086
  %7088 = vadd.xlane.f32.xlu0 %v7087
  %v7089 = vpop.xlane.xlu0 %7088
  %v7090 = vsel %vm594, %v7053, 0.0
  %v7091 = vadd.f32 %v7052, %v7090
  %7092 = vadd.xlane.f32.xlu0 %v7091
  %v7093 = vpop.xlane.xlu0 %7092
  %v7094 = vsel %vm594, %v7055, 0.0
  %v7095 = vadd.f32 %v7054, %v7094
  %7096 = vadd.xlane.f32.xlu0 %v7095
  %v7097 = vpop.xlane.xlu0 %7096
  %v7098 = vsel %vm594, %v7057, 0.0
  %v7099 = vadd.f32 %v7056, %v7098
  %7100 = vadd.xlane.f32.xlu0 %v7099
  %v7101 = vpop.xlane.xlu0 %7100
  %v7102 = vsel %vm594, %v7059, 0.0
  %v7103 = vadd.f32 %v7058, %v7102
  %7104 = vadd.xlane.f32.xlu0 %v7103
  %v7105 = vpop.xlane.xlu0 %7104
  %v7106 = vsel %vm594, %v7061, 0.0
  %v7107 = vadd.f32 %v7060, %v7106
  %7108 = vadd.xlane.f32.xlu0 %v7107
  %v7109 = vpop.xlane.xlu0 %7108
  %v7110 = vsel %vm594, %v7063, 0.0
  %v7111 = vadd.f32 %v7062, %v7110
  %7112 = vadd.xlane.f32.xlu0 %v7111
  %v7113 = vpop.xlane.xlu0 %7112
  %v7114 = vsel %vm594, %v7065, 0.0
  %v7115 = vadd.f32 %v7064, %v7114
  %7116 = vadd.xlane.f32.xlu0 %v7115
  %v7117 = vpop.xlane.xlu0 %7116
  %v7118 = vsel %vm594, %v7067, 0.0
  %v7119 = vadd.f32 %v7066, %v7118
  %7120 = vadd.xlane.f32.xlu0 %v7119
  %v7121 = vpop.xlane.xlu0 %7120
  %v7122 = vsel %vm594, %v7069, 0.0
  %v7123 = vadd.f32 %v7068, %v7122
  %7124 = vadd.xlane.f32.xlu0 %v7123
  %v7125 = vpop.xlane.xlu0 %7124
  %v7126 = vsel %vm594, %v7071, 0.0
  %v7127 = vadd.f32 %v7070, %v7126
  %7128 = vadd.xlane.f32.xlu0 %v7127
  %v7129 = vpop.xlane.xlu0 %7128
  %v7130 = vsel %vm594, %v7073, 0.0
  %v7131 = vadd.f32 %v7072, %v7130
  %7132 = vadd.xlane.f32.xlu0 %v7131
  %v7133 = vpop.xlane.xlu0 %7132
  %v7134 = vsel %vm594, %v7075, 0.0
  %v7135 = vadd.f32 %v7074, %v7134
  %7136 = vadd.xlane.f32.xlu0 %v7135
  %v7137 = vpop.xlane.xlu0 %7136
  %v7138 = vsel %vm594, %v7077, 0.0
  %v7139 = vadd.f32 %v7076, %v7138
  %7140 = vadd.xlane.f32.xlu0 %v7139
  %v7141 = vpop.xlane.xlu0 %7140
  %v7142 = vmul.f32 %v7081, %v7081
  %v7143 = vmul.f32 %v7085, %v7085
  %v7144 = vmul.f32 %v7089, %v7089
  %v7145 = vmul.f32 %v7093, %v7093
  %v7146 = vmul.f32 %v7097, %v7097
  %v7147 = vmul.f32 %v7101, %v7101
  %v7148 = vmul.f32 %v7105, %v7105
  %v7149 = vmul.f32 %v7109, %v7109
  %v7150 = vmul.f32 %v7113, %v7113
  %v7151 = vmul.f32 %v7117, %v7117
  %v7152 = vmul.f32 %v7121, %v7121
  %v7153 = vmul.f32 %v7125, %v7125
  %v7154 = vmul.f32 %v7129, %v7129
  %v7155 = vmul.f32 %v7133, %v7133
  %v7156 = vmul.f32 %v7137, %v7137
  %v7157 = vmul.f32 %v7141, %v7141
  %v7158 = vmul.f32 %v7142, %v7081
  %v7159 = vmul.f32 %v7143, %v7085
  %v7160 = vmul.f32 %v7144, %v7089
  %v7161 = vmul.f32 %v7145, %v7093
  %v7162 = vmul.f32 %v7146, %v7097
  %v7163 = vmul.f32 %v7147, %v7101
  %v7164 = vmul.f32 %v7148, %v7105
  %v7165 = vmul.f32 %v7149, %v7109
  %v7166 = vmul.f32 %v7150, %v7113
  %v7167 = vmul.f32 %v7151, %v7117
  %v7168 = vmul.f32 %v7152, %v7121
  %v7169 = vmul.f32 %v7153, %v7125
  %v7170 = vmul.f32 %v7154, %v7129
  %v7171 = vmul.f32 %v7155, %v7133
  %v7172 = vmul.f32 %v7156, %v7137
  %v7173 = vmul.f32 %v7157, %v7141
  %v7174 = vadd.f32 %v7142, 1e-07
  %v7175 = vadd.f32 %v7143, 1e-07
  %v7176 = vadd.f32 %v7144, 1e-07
  %v7177 = vadd.f32 %v7145, 1e-07
  %v7178 = vadd.f32 %v7146, 1e-07
  %v7179 = vadd.f32 %v7147, 1e-07
  %v7180 = vadd.f32 %v7148, 1e-07
  %v7181 = vadd.f32 %v7149, 1e-07
  %v7182 = vadd.f32 %v7150, 1e-07
  %v7183 = vadd.f32 %v7151, 1e-07
  %v7184 = vadd.f32 %v7152, 1e-07
  %v7185 = vadd.f32 %v7153, 1e-07
  %v7186 = vadd.f32 %v7154, 1e-07
  %v7187 = vadd.f32 %v7155, 1e-07
  %v7188 = vadd.f32 %v7156, 1e-07
  %v7189 = vadd.f32 %v7157, 1e-07
  %v7190 = vrsqrt.pop %v7174
  %v7191 = vrsqrt.pop %v7175
  %v7192 = vrsqrt.pop %v7176
  %v7193 = vrsqrt.pop %v7177
  %v7194 = vrsqrt.pop %v7178
  %v7195 = vrsqrt.pop %v7179
  %v7196 = vrsqrt.pop %v7180
  %v7197 = vrsqrt.pop %v7181
  %v7198 = vrsqrt.pop %v7182
  %v7199 = vrsqrt.pop %v7183
  %v7200 = vrsqrt.pop %v7184
  %v7201 = vrsqrt.pop %v7185
  %v7202 = vrsqrt.pop %v7186
  %v7203 = vrsqrt.pop %v7187
  %v7204 = vrsqrt.pop %v7188
  %v7205 = vrsqrt.pop %v7189
  %v7206 = vmul.f32 %v7158, %v7190
  %v7207 = vmul.f32 %v7159, %v7191
  %v7208 = vmul.f32 %v7160, %v7192
  %v7209 = vmul.f32 %v7161, %v7193
  %v7210 = vmul.f32 %v7162, %v7194
  %v7211 = vmul.f32 %v7163, %v7195
  %v7212 = vmul.f32 %v7164, %v7196
  %v7213 = vmul.f32 %v7165, %v7197
  %v7214 = vmul.f32 %v7166, %v7198
  %v7215 = vmul.f32 %v7167, %v7199
  %v7216 = vmul.f32 %v7168, %v7200
  %v7217 = vmul.f32 %v7169, %v7201
  %v7218 = vmul.f32 %v7170, %v7202
  %v7219 = vmul.f32 %v7171, %v7203
  %v7220 = vmul.f32 %v7172, %v7204
  %v7221 = vmul.f32 %v7173, %v7205
  %v7222 = vadd.f32 %v7142, 1.0
  %v7223 = vadd.f32 %v7143, 1.0
  %v7224 = vadd.f32 %v7144, 1.0
  %v7225 = vadd.f32 %v7145, 1.0
  %v7226 = vadd.f32 %v7146, 1.0
  %v7227 = vadd.f32 %v7147, 1.0
  %v7228 = vadd.f32 %v7148, 1.0
  %v7229 = vadd.f32 %v7149, 1.0
  %v7230 = vadd.f32 %v7150, 1.0
  %v7231 = vadd.f32 %v7151, 1.0
  %v7232 = vadd.f32 %v7152, 1.0
  %v7233 = vadd.f32 %v7153, 1.0
  %v7234 = vadd.f32 %v7154, 1.0
  %v7235 = vadd.f32 %v7155, 1.0
  %v7236 = vadd.f32 %v7156, 1.0
  %v7237 = vadd.f32 %v7157, 1.0
  %v7238 = vrcp.pop %v7222
  %v7239 = vrcp.pop %v7223
  %v7240 = vrcp.pop %v7224
  %v7241 = vrcp.pop %v7225
  %v7242 = vrcp.pop %v7226
  %v7243 = vrcp.pop %v7227
  %v7244 = vrcp.pop %v7228
  %v7245 = vrcp.pop %v7229
  %v7246 = vrcp.pop %v7230
  %v7247 = vrcp.pop %v7231
  %v7248 = vrcp.pop %v7232
  %v7249 = vrcp.pop %v7233
  %v7250 = vrcp.pop %v7234
  %v7251 = vrcp.pop %v7235
  %v7252 = vrcp.pop %v7236
  %v7253 = vrcp.pop %v7237
  %v7254 = vmul.f32 %v7206, %v7238
  %v7255 = vmul.f32 %v7207, %v7239
  %v7256 = vmul.f32 %v7208, %v7240
  %v7257 = vmul.f32 %v7209, %v7241
  %v7258 = vmul.f32 %v7210, %v7242
  %v7259 = vmul.f32 %v7211, %v7243
  %v7260 = vmul.f32 %v7212, %v7244
  %v7261 = vmul.f32 %v7213, %v7245
  %v7262 = vmul.f32 %v7214, %v7246
  %v7263 = vmul.f32 %v7215, %v7247
  %v7264 = vmul.f32 %v7216, %v7248
  %v7265 = vmul.f32 %v7217, %v7249
  %v7266 = vmul.f32 %v7218, %v7250
  %v7267 = vmul.f32 %v7219, %v7251
  %v7268 = vmul.f32 %v7220, %v7252
  %v7269 = vmul.f32 %v7221, %v7253
  %vm7270 = vcmask 7168
  %v7271 = vsel %vm7270, %v6582, %v6806
  %v7272 = vsel %vm7270, %v6583, %v6807
  %v7273 = vsel %vm7270, %v6584, %v6808
  %v7274 = vsel %vm7270, %v6585, %v6809
  %v7275 = vsel %vm7270, %v6586, %v6810
  %v7276 = vsel %vm7270, %v6587, %v6811
  %v7277 = vsel %vm7270, %v6588, %v6812
  %v7278 = vsel %vm7270, %v6589, %v6813
  %v7279 = vsel %vm7270, %v6590, %v6814
  %v7280 = vsel %vm7270, %v6591, %v6815
  %v7281 = vsel %vm7270, %v6592, %v6816
  %v7282 = vsel %vm7270, %v6593, %v6817
  %v7283 = vsel %vm7270, %v6594, %v6818
  %v7284 = vsel %vm7270, %v6595, %v6819
  %v7285 = vsel %vm7270, %v6596, %v6820
  %v7286 = vsel %vm7270, %v6597, %v6821
  %vm7287 = vcmask 15360
  %v7288 = vsel %vm7287, %v7271, %v7030
  %v7289 = vsel %vm7287, %v7272, %v7031
  %v7290 = vsel %vm7287, %v7273, %v7032
  %v7291 = vsel %vm7287, %v7274, %v7033
  %v7292 = vsel %vm7287, %v7275, %v7034
  %v7293 = vsel %vm7287, %v7276, %v7035
  %v7294 = vsel %vm7287, %v7277, %v7036
  %v7295 = vsel %vm7287, %v7278, %v7037
  %v7296 = vsel %vm7287, %v7279, %v7038
  %v7297 = vsel %vm7287, %v7280, %v7039
  %v7298 = vsel %vm7287, %v7281, %v7040
  %v7299 = vsel %vm7287, %v7282, %v7041
  %v7300 = vsel %vm7287, %v7283, %v7042
  %v7301 = vsel %vm7287, %v7284, %v7043
  %v7302 = vsel %vm7287, %v7285, %v7044
  %v7303 = vsel %vm7287, %v7286, %v7045
  %vm7304 = vcmask 23552
  %v7305 = vsel %vm7304, %v7288, %v7254
  %v7306 = vsel %vm7304, %v7289, %v7255
  %v7307 = vsel %vm7304, %v7290, %v7256
  %v7308 = vsel %vm7304, %v7291, %v7257
  %v7309 = vsel %vm7304, %v7292, %v7258
  %v7310 = vsel %vm7304, %v7293, %v7259
  %v7311 = vsel %vm7304, %v7294, %v7260
  %v7312 = vsel %vm7304, %v7295, %v7261
  %v7313 = vsel %vm7304, %v7296, %v7262
  %v7314 = vsel %vm7304, %v7297, %v7263
  %v7315 = vsel %vm7304, %v7298, %v7264
  %v7316 = vsel %vm7304, %v7299, %v7265
  %v7317 = vsel %vm7304, %v7300, %v7266
  %v7318 = vsel %vm7304, %v7301, %v7267
  %v7319 = vsel %vm7304, %v7302, %v7268
  %v7320 = vsel %vm7304, %v7303, %v7269
  %vm7321 = vcmask 31744
  %7322 = vst.msk [vmem:[%s12] sm:$0xff] %vm7321, %v7305
  %7323 = vst.msk [vmem:[%s12 + $0x8] sm:$0xff] %vm7321, %v7306
  %7324 = vst.msk [vmem:[%s12 + $0x10] sm:$0xff] %vm7321, %v7307
  %7325 = vst.msk [vmem:[%s12 + $0x18] sm:$0xff] %vm7321, %v7308
  %7326 = vst.msk [vmem:[%s12 + $0x20] sm:$0xff] %vm7321, %v7309
  %7327 = vst.msk [vmem:[%s12 + $0x28] sm:$0xff] %vm7321, %v7310
  %7328 = vst.msk [vmem:[%s12 + $0x30] sm:$0xff] %vm7321, %v7311
  %7329 = vst.msk [vmem:[%s12 + $0x38] sm:$0xff] %vm7321, %v7312
  %7330 = vst.msk [vmem:[%s12 + $0x40] sm:$0xff] %vm7321, %v7313
  %7331 = vst.msk [vmem:[%s12 + $0x48] sm:$0xff] %vm7321, %v7314
  %7332 = vst.msk [vmem:[%s12 + $0x50] sm:$0xff] %vm7321, %v7315
  %7333 = vst.msk [vmem:[%s12 + $0x58] sm:$0xff] %vm7321, %v7316
  %7334 = vst.msk [vmem:[%s12 + $0x60] sm:$0xff] %vm7321, %v7317
  %7335 = vst.msk [vmem:[%s12 + $0x68] sm:$0xff] %vm7321, %v7318
  %7336 = vst.msk [vmem:[%s12 + $0x70] sm:$0xff] %vm7321, %v7319
  %7337 = vst.msk [vmem:[%s12 + $0x78] sm:$0xff] %vm7321, %v7320
  // Predicated region
  $region50: #{capsnet_forward.1} parent=0 // pred_check
    _
  $region51: #{capsnet_forward.1} parent=0 // pred_check_branch
    %7339 = sbr.rel (0) target = $region53
  $region52: #{capsnet_forward.1} parent=0 // pred_region
    _
  $region53: #{capsnet_forward.1} parent=0 // pred_fallthru
    _
  // Predicated region
  $region54: #{capsnet_forward.1} parent=0 // pred_check
    _
  $region55: #{capsnet_forward.1} parent=0 // pred_check_branch
    %7341 = sbr.rel (0) target = $region57
  $region56: #{capsnet_forward.1} parent=0 // pred_region
    _
  $region57: #{capsnet_forward.1} parent=0 // pred_fallthru
    _

</llo_original>
